<compile_context>
chip_gen: v5e
topology: v5e:2x2
jax: 0.10.0
libtpu: 0.0.40
codegen_flags: <defaults>
</compile_context>

<pallas_src>
import math

import numpy as np
import jax
import jax.numpy as jnp
from jax import lax
from jax.experimental import pallas as pl
from jax.experimental.pallas import tpu as pltpu

# ------------------------------ configuration -------------------------------
B = 2              # batch
C_IN = 4           # input channels (module slices channel 1, repeats to 3)
IMG = 32           # stand-in for image_size=256
PATCH = 8          # stand-in for vit_l patch_size=16
GRID = IMG // PATCH            # 4 x 4 patches
N_TOK = GRID * GRID            # 16 image tokens
EMBED = 32         # stand-in for vit_l embed_dim=1024
HEADS = 4
HEAD_DIM = EMBED // HEADS
SCALE = 1.0 / math.sqrt(HEAD_DIM)
DEPTH = 2          # stand-in for vit_l depth=24
MLP_RATIO = 4
ADAPTER_DIM = 8    # encoder_adapter=True bottleneck dim
OUT_CH = 32        # stand-in for SAM neck / prompt dim 256
NUM_MASK_TOKENS = 4
NUM_DEC_TOKENS = 1 + NUM_MASK_TOKENS
UPSCALE_CH = OUT_CH // 4
DEC_HEADS = 4      # decoder attention head config (independent of encoder)
DEC_HEAD_DIM = OUT_CH // DEC_HEADS
DEC_SCALE = 1.0 / math.sqrt(DEC_HEAD_DIM)
EPS_ENC = 1e-6     # build_sam: LayerNorm(eps=1e-6) in ViT blocks and neck
EPS_DEC = 1e-5     # mask decoder: nn.LayerNorm default
VMEM_BUDGET = 32 * 1024 * 1024

BF16 = jnp.bfloat16
F32 = jnp.float32

# --------------------- host-side constant matrices ---------------------------
def _bilinear_matrix_np(out_size, in_size):
    # matches F.interpolate(mode="bilinear", align_corners=False)
    o = np.arange(out_size, dtype=np.float64)
    src = np.clip((o + 0.5) * in_size / out_size - 0.5, 0.0, in_size - 1)
    lo = np.floor(src).astype(np.int64)
    hi = np.minimum(lo + 1, in_size - 1)
    frac = (src - lo).astype(np.float32)
    W = np.zeros((out_size, in_size), np.float32)
    W[np.arange(out_size), lo] += 1.0 - frac
    W[np.arange(out_size), hi] += frac
    return W


def _fused_resize_matrix_np():
    # (4x4 -> 16x16) then (16x16 -> 32x32), both bilinear align_corners=False,
    # composed into one (16, 1024) flat4 -> flat32 matrix.
    w16 = _bilinear_matrix_np(GRID * 4, GRID)        # (16, 4)
    w32 = _bilinear_matrix_np(IMG, GRID * 4)         # (32, 16)
    k1 = np.kron(w16, w16)                           # (256, 16)
    k2 = np.kron(w32, w32)                           # (1024, 256)
    return np.ascontiguousarray((k2 @ k1).T)         # (16, 1024)


_RESIZE_KT_NP = _fused_resize_matrix_np()            # (16, 1024)


# --------------------------- in-kernel helpers --------------------------------
def _ln(x, g, b, eps):
    mu = jnp.mean(x, axis=-1, keepdims=True)
    xc = x - mu
    var = jnp.mean(xc * xc, axis=-1, keepdims=True)
    return xc * lax.rsqrt(var + eps) * g + b


def _gelu(x):
    # TODO(synk): PyTorch nn.GELU default is the exact erf form; tanh approx here.
    return jax.nn.gelu(x, approximate=True)


def _softmax(s):
    s = s - jnp.max(s, axis=-1, keepdims=True)
    p = jnp.exp(s)
    return p * pl.reciprocal(jnp.sum(p, axis=-1, keepdims=True), approx=True)


def _attn(q, k, v, wo, bo, n_heads, head_dim, scale):
    # q: (nq, D) f32, k/v: (nk, D) f32, wo: (D, D) bf16, bo: (1, D) f32.
    # Per-head scores/softmax/PV, then ONE full-contraction output projection
    # on the concatenated (nq, D) context (single MXU matmul, no per-head
    # projection accumulation).
    qb = (q * scale).astype(BF16)
    kb = k.astype(BF16)
    vb = v.astype(BF16)
    ctxs = []
    for h in range(n_heads):
        sl = slice(h * head_dim, (h + 1) * head_dim)
        s = jnp.einsum("qd,kd->qk", qb[:, sl], kb[:, sl],
                       preferred_element_type=F32)
        p = _softmax(s)
        ctxs.append(jnp.dot(p.astype(BF16), vb[:, sl],
                            preferred_element_type=F32))
    ctx = jnp.concatenate(ctxs, axis=-1)                      # (nq, D)
    return jnp.dot(ctx.astype(BF16), wo, preferred_element_type=F32) + bo


# -------------------- fused image-encoder kernel ------------------------------
# grid = (B, DEPTH); batch "parallel", depth "arbitrary".  Activation (N_TOK,
# EMBED) stays resident in VMEM scratch across the depth axis; per-layer
# weights are streamed via BlockSpec index_map (d, 0, 0).
def _encoder_kernel(
    patches_ref, pew_ref, peb_ref, pos_ref,
    ln_g_ref, ln_b_ref,
    qkv_w_ref, qkv_b_ref, proj_w_ref, proj_b_ref,
    fc1_w_ref, fc1_b_ref, fc2_w_ref, fc2_b_ref,
    add_w_ref, add_b_ref, adu_w_ref, adu_b_ref,
    n1w_ref, n1b_ref, ng1_ref, nb1_ref,
    n2w_ref, n2b_ref, ng2_ref, nb2_ref,
    out_ref, x_scr,
):
    d = pl.program_id(1)

    # patch embedding (preprocessing folded into pew/peb) + positional embedding
    @pl.when(d == 0)
    def _():
        x_scr[...] = (jnp.dot(patches_ref[...], pew_ref[...],
                              preferred_element_type=F32)
                      + peb_ref[...] + pos_ref[...])

    x = x_scr[...]

    # ---- attention (pre-LN) ----
    # TODO(synk): vit_l window attention and relative-position bias omitted.
    xn = _ln(x, ln_g_ref[0:1, :], ln_b_ref[0:1, :], EPS_ENC)
    qkv = jnp.dot(xn.astype(BF16), qkv_w_ref[...],
                  preferred_element_type=F32) + qkv_b_ref[...]
    attn = _attn(qkv[:, 0:EMBED], qkv[:, EMBED:2 * EMBED],
                 qkv[:, 2 * EMBED:3 * EMBED],
                 proj_w_ref[...], proj_b_ref[...], HEADS, HEAD_DIM, SCALE)
    x = x + attn

    # ---- MLP + parallel bottleneck adapter (encoder_adapter=True) ----
    xn2 = _ln(x, ln_g_ref[1:2, :], ln_b_ref[1:2, :], EPS_ENC)
    xb = xn2.astype(BF16)
    h1 = _gelu(jnp.dot(xb, fc1_w_ref[...], preferred_element_type=F32)
               + fc1_b_ref[...])
    mlp = jnp.dot(h1.astype(BF16), fc2_w_ref[...],
                  preferred_element_type=F32) + fc2_b_ref[...]
    a1 = _gelu(jnp.dot(xb, add_w_ref[...], preferred_element_type=F32)
               + add_b_ref[...])
    ad = jnp.dot(a1.astype(BF16), adu_w_ref[...],
                 preferred_element_type=F32) + adu_b_ref[...]
    x = x + mlp + 0.5 * ad
    x_scr[...] = x

    # ---- SAM neck (last depth step only) ----
    # TODO(synk): SAM neck's second conv is 3x3; implemented pointwise here.
    @pl.when(d == pl.num_programs(1) - 1)
    def _():
        y = jnp.dot(x.astype(BF16), n1w_ref[...],
                    preferred_element_type=F32) + n1b_ref[...]
        y = _ln(y, ng1_ref[...], nb1_ref[...], EPS_ENC)
        y = jnp.dot(y.astype(BF16), n2w_ref[...],
                    preferred_element_type=F32) + n2b_ref[...]
        y = _ln(y, ng2_ref[...], nb2_ref[...], EPS_ENC)
        out_ref[...] = y


# ---------------------- fused mask-decoder kernel -----------------------------
# grid = (B,), batch "parallel"; everything per batch, no batch masks needed.
def _decoder_kernel(
    img_ref, pos_ref, nomask_ref, tok_ref,
    aw_ref, ab_ref, lg_ref, lb_ref,
    m1w_ref, m1b_ref, m2w_ref, m2b_ref,
    upw_ref, upb_ref, h1w_ref, h1b_ref, h2w_ref, h2b_ref,
    kt_ref, out_ref,
):
    aw = aw_ref[...]          # (4, 4, D, D) bf16: module x {q, k, v, o}
    ab = ab_ref[...]          # (4, 4, 1, D) f32
    lg = lg_ref[...]          # (5, 1, D)
    lb = lb_ref[...]

    src = img_ref[...] + nomask_ref[...]      # dense "no-mask" prompt embedding
    pos = pos_ref[...]                        # (N_TOK, D) image PE
    t = tok_ref[...]                          # (NUM_DEC_TOKENS, D)

    def attn_mod(mi, q_in, k_in, v_in):
        q = jnp.dot(q_in.astype(BF16), aw[mi, 0],
                    preferred_element_type=F32) + ab[mi, 0]
        k = jnp.dot(k_in.astype(BF16), aw[mi, 1],
                    preferred_element_type=F32) + ab[mi, 1]
        v = jnp.dot(v_in.astype(BF16), aw[mi, 2],
                    preferred_element_type=F32) + ab[mi, 2]
        return _attn(q, k, v, aw[mi, 3], ab[mi, 3],
                     DEC_HEADS, DEC_HEAD_DIM, DEC_SCALE)

    # ---- two-way transformer layer ----
    # TODO(synk): SAM uses a depth-2 TwoWayTransformer; a single layer is used here.
    t = _ln(t + attn_mod(0, t, t, t), lg[0], lb[0], EPS_DEC)
    ks = src + pos
    t = _ln(t + attn_mod(1, t, ks, src), lg[1], lb[1], EPS_DEC)
    mh = _gelu(jnp.dot(t.astype(BF16), m1w_ref[...],
                       preferred_element_type=F32) + m1b_ref[...])
    mlp = jnp.dot(mh.astype(BF16), m2w_ref[...],
                  preferred_element_type=F32) + m2b_ref[...]
    t = _ln(t + mlp, lg[2], lb[2], EPS_DEC)
    src = _ln(src + attn_mod(2, src + pos, t, t), lg[3], lb[3], EPS_DEC)
    t = _ln(t + attn_mod(3, t, src + pos, src), lg[4], lb[4], EPS_DEC)

    # ---- mask head: 1x1 upscale proj + hypernetwork MLP ----
    # TODO(synk): SAM's ConvTranspose2d x4 upscaling and per-token 3-layer
    # hyper-MLPs are replaced by a 1x1 projection + fused bilinear resize and a
    # shared 2-layer MLP.
    up = _gelu(jnp.dot(src.astype(BF16), upw_ref[...],
                       preferred_element_type=F32) + upb_ref[...])   # (N_TOK, C')
    hh = _gelu(jnp.dot(t.astype(BF16), h1w_ref[...],
                       preferred_element_type=F32) + h1b_ref[...])
    hyper = jnp.dot(hh.astype(BF16), h2w_ref[...],
                    preferred_element_type=F32) + h2b_ref[...]       # (5, C')

    # multimask_output=False -> mask token 0 (decoder token index 1)
    hb = hyper[1:2, :]                                               # (1, C')
    m4 = jnp.einsum("mc,pc->mp", hb, up,
                    preferred_element_type=F32)                      # (1, 16)
    # fused 4x4 -> 16x16 -> 32x32 bilinear upsample; single lane-dense store
    out_ref[...] = jnp.dot(m4, kt_ref[...], preferred_element_type=F32)


# ------------------------------ glue (XLA) ------------------------------------
def dense_pe(gauss):
    # PositionEmbeddingRandom (prompt encoder's image PE) - tiny, computed once.
    ys = (jnp.arange(GRID, dtype=F32) + 0.5) / GRID
    gy, gx = jnp.meshgrid(ys, ys, indexing="ij")
    coords = jnp.stack([gx, gy], axis=-1) * 2.0 - 1.0          # (GRID, GRID, 2)
    proj = 2.0 * jnp.pi * (coords @ gauss)                     # (GRID, GRID, OUT/2)
    pe = jnp.concatenate([jnp.sin(proj), jnp.cos(proj)], axis=-1)
    return pe.reshape(N_TOK, OUT_CH)


def _dspec(*tail):
    # depth-stacked per-layer weight: (DEPTH, *tail) -> (tail) block at layer d
    zeros = (0,) * len(tail)
    return pl.BlockSpec((None,) + tail, lambda b, d: (d,) + zeros)


def _cspec(*shape):
    # constant (batch/depth-invariant) full-array block, encoder grid (b, d)
    zeros = (0,) * len(shape)
    return pl.BlockSpec(shape, lambda b, d: zeros)


def _dcspec(*shape):
    # constant full-array block, decoder grid (b,)
    zeros = (0,) * len(shape)
    return pl.BlockSpec(shape, lambda b: zeros)


def forward(x, params):
    # x: (B, C_IN, IMG, IMG), NCHW, float32
    # ---- preprocessing (x[:,1:2] -> repeat 3ch -> (x-mean)/std) folded into
    #      the patch-embed weights (the whole chain is linear per pixel). ----
    mean = jnp.asarray([123.675, 116.28, 103.53], F32)
    std = jnp.asarray([58.395, 57.12, 57.375], F32)
    w3 = params["patch_embed_w"].reshape(3, PATCH * PATCH, EMBED)
    pe_w = jnp.einsum("cpe,c->pe", w3, 1.0 / std).astype(BF16)          # (P*P, E)
    pe_b = params["patch_embed_b"] - jnp.einsum("cpe,c->e", w3, mean / std)[None, :]

    # unfold raw channel-1 image into patches (layout plumbing only)
    x1 = x[:, 1, :, :]                                                  # (B, IMG, IMG)
    patches = x1.reshape(B, GRID, PATCH, GRID, PATCH).transpose(0, 1, 3, 2, 4)
    patches = patches.reshape(B, N_TOK, PATCH * PATCH).astype(BF16)

    # ---- fused image encoder: grid (B, DEPTH), weights streamed per layer ----
    enc_args = (
        patches, pe_w, pe_b, params["pos_embed"],
        params["ln_g"], params["ln_b"],
        params["qkv_w"], params["qkv_b"], params["proj_w"], params["proj_b"],
        params["fc1_w"], params["fc1_b"], params["fc2_w"], params["fc2_b"],
        params["ad_down_w"], params["ad_down_b"],
        params["ad_up_w"], params["ad_up_b"],
        params["neck1_w"], params["neck1_b"],
        params["neck_ln1_g"], params["neck_ln1_b"],
        params["neck2_w"], params["neck2_b"],
        params["neck_ln2_g"], params["neck_ln2_b"],
    )
    PP = PATCH * PATCH
    enc_in_specs = [
        pl.BlockSpec((None, N_TOK, PP), lambda b, d: (b, 0, 0)),   # patches
        _cspec(PP, EMBED),                                         # pe_w
        _cspec(1, EMBED),                                          # pe_b
        _cspec(N_TOK, EMBED),                                      # pos_embed
        _dspec(2, EMBED), _dspec(2, EMBED),                        # ln_g, ln_b
        _dspec(EMBED, 3 * EMBED), _dspec(1, 3 * EMBED),            # qkv
        _dspec(EMBED, EMBED), _dspec(1, EMBED),                    # proj
        _dspec(EMBED, MLP_RATIO * EMBED), _dspec(1, MLP_RATIO * EMBED),  # fc1
        _dspec(MLP_RATIO * EMBED, EMBED), _dspec(1, EMBED),        # fc2
        _dspec(EMBED, ADAPTER_DIM), _dspec(1, ADAPTER_DIM),        # adapter down
        _dspec(ADAPTER_DIM, EMBED), _dspec(1, EMBED),              # adapter up
        _cspec(EMBED, OUT_CH), _cspec(1, OUT_CH),                  # neck1
        _cspec(1, OUT_CH), _cspec(1, OUT_CH),                      # neck ln1
        _cspec(OUT_CH, OUT_CH), _cspec(1, OUT_CH),                 # neck2
        _cspec(1, OUT_CH), _cspec(1, OUT_CH),                      # neck ln2
    ]
    img_emb = pl.pallas_call(
        _encoder_kernel,
        out_shape=jax.ShapeDtypeStruct((B, N_TOK, OUT_CH), F32),
        grid_spec=pltpu.PrefetchScalarGridSpec(
            num_scalar_prefetch=0,
            grid=(B, DEPTH),
            in_specs=enc_in_specs,
            out_specs=pl.BlockSpec((None, N_TOK, OUT_CH), lambda b, d: (b, 0, 0)),
            scratch_shapes=[pltpu.VMEM((N_TOK, EMBED), F32)],
        ),
        compiler_params=pltpu.CompilerParams(
            dimension_semantics=("parallel", "arbitrary"),
            vmem_limit_bytes=VMEM_BUDGET),
    )(*enc_args)

    # ---- prompt-less dense embeddings + image PE (tiny glue, untiled) ----
    image_pe = dense_pe(params["pe_gaussian"])                          # (N, OUT)

    # ---- fused mask decoder + hypernet head + bilinear upsample ----
    dec_args = (
        img_emb, image_pe, params["no_mask_embed"], params["dec_tokens"],
        params["dec_attn_w"], params["dec_attn_b"],
        params["dec_ln_g"], params["dec_ln_b"],
        params["mlp1_w"], params["mlp1_b"], params["mlp2_w"], params["mlp2_b"],
        params["upscale_w"], params["upscale_b"],
        params["hyper1_w"], params["hyper1_b"],
        params["hyper2_w"], params["hyper2_b"],
        jnp.asarray(_RESIZE_KT_NP),
    )
    dec_in_specs = [
        pl.BlockSpec((None, N_TOK, OUT_CH), lambda b: (b, 0, 0)),  # img_emb
        _dcspec(N_TOK, OUT_CH),                                    # image_pe
        _dcspec(1, OUT_CH),                                        # no_mask_embed
        _dcspec(NUM_DEC_TOKENS, OUT_CH),                           # dec_tokens
        _dcspec(4, 4, OUT_CH, OUT_CH),                             # dec_attn_w
        _dcspec(4, 4, 1, OUT_CH),                                  # dec_attn_b
        _dcspec(5, 1, OUT_CH), _dcspec(5, 1, OUT_CH),              # dec_ln
        _dcspec(OUT_CH, 4 * OUT_CH), _dcspec(1, 4 * OUT_CH),       # mlp1
        _dcspec(4 * OUT_CH, OUT_CH), _dcspec(1, OUT_CH),           # mlp2
        _dcspec(OUT_CH, UPSCALE_CH), _dcspec(1, UPSCALE_CH),       # upscale
        _dcspec(OUT_CH, OUT_CH), _dcspec(1, OUT_CH),               # hyper1
        _dcspec(OUT_CH, UPSCALE_CH), _dcspec(1, UPSCALE_CH),       # hyper2
        _dcspec(N_TOK, IMG * IMG),                                 # fused resize
    ]
    masks = pl.pallas_call(
        _decoder_kernel,
        out_shape=jax.ShapeDtypeStruct((B, 1, IMG * IMG), F32),
        grid_spec=pltpu.PrefetchScalarGridSpec(
            num_scalar_prefetch=0,
            grid=(B,),
            in_specs=dec_in_specs,
            out_specs=pl.BlockSpec((None, 1, IMG * IMG), lambda b: (b, 0, 0)),
        ),
        compiler_params=pltpu.CompilerParams(
            dimension_semantics=("parallel",),
            vmem_limit_bytes=VMEM_BUDGET),
    )(*dec_args)

    # TODO(synk): original SAM thresholds masks (> mask_threshold); logits returned.
    return masks.reshape(B, 1, IMG, IMG)


# ------------------------------- parameters ----------------------------------
def init_params(key):
    keys = iter(jax.random.split(key, 32))

    def w(shape, scale=0.02, dtype=BF16):
        return (jax.random.normal(next(keys), shape, F32) * scale).astype(dtype)

    params = {
        # patch embed (3-channel weights, f32; preprocessing folded at runtime)
        "patch_embed_w": w((3 * PATCH * PATCH, EMBED), dtype=F32),
        "patch_embed_b": jnp.zeros((1, EMBED), F32),
        "pos_embed": w((N_TOK, EMBED), dtype=F32),
        # encoder blocks, stacked over depth (matmul weights bf16, rest f32)
        "ln_g": jnp.ones((DEPTH, 2, EMBED), F32),
        "ln_b": jnp.zeros((DEPTH, 2, EMBED), F32),
        "qkv_w": w((DEPTH, EMBED, 3 * EMBED)),
        "qkv_b": jnp.zeros((DEPTH, 1, 3 * EMBED), F32),
        "proj_w": w((DEPTH, EMBED, EMBED)),
        "proj_b": jnp.zeros((DEPTH, 1, EMBED), F32),
        "fc1_w": w((DEPTH, EMBED, MLP_RATIO * EMBED)),
        "fc1_b": jnp.zeros((DEPTH, 1, MLP_RATIO * EMBED), F32),
        "fc2_w": w((DEPTH, MLP_RATIO * EMBED, EMBED)),
        "fc2_b": jnp.zeros((DEPTH, 1, EMBED), F32),
        "ad_down_w": w((DEPTH, EMBED, ADAPTER_DIM)),
        "ad_down_b": jnp.zeros((DEPTH, 1, ADAPTER_DIM), F32),
        "ad_up_w": w((DEPTH, ADAPTER_DIM, EMBED)),
        "ad_up_b": jnp.zeros((DEPTH, 1, EMBED), F32),
        # neck
        "neck1_w": w((EMBED, OUT_CH)),
        "neck1_b": jnp.zeros((1, OUT_CH), F32),
        "neck_ln1_g": jnp.ones((1, OUT_CH), F32),
        "neck_ln1_b": jnp.zeros((1, OUT_CH), F32),
        "neck2_w": w((OUT_CH, OUT_CH)),
        "neck2_b": jnp.zeros((1, OUT_CH), F32),
        "neck_ln2_g": jnp.ones((1, OUT_CH), F32),
        "neck_ln2_b": jnp.zeros((1, OUT_CH), F32),
        # prompt encoder (no prompts)
        "no_mask_embed": w((1, OUT_CH), dtype=F32),
        "pe_gaussian": jax.random.normal(next(keys), (2, OUT_CH // 2), F32),
        # mask decoder (one two-way layer): 4 attention modules x {q,k,v,o}
        "dec_tokens": w((NUM_DEC_TOKENS, OUT_CH), dtype=F32),
        "dec_attn_w": w((4, 4, OUT_CH, OUT_CH)),
        "dec_attn_b": jnp.zeros((4, 4, 1, OUT_CH), F32),
        "dec_ln_g": jnp.ones((5, 1, OUT_CH), F32),
        "dec_ln_b": jnp.zeros((5, 1, OUT_CH), F32),
        "mlp1_w": w((OUT_CH, 4 * OUT_CH)),
        "mlp1_b": jnp.zeros((1, 4 * OUT_CH), F32),
        "mlp2_w": w((4 * OUT_CH, OUT_CH)),
        "mlp2_b": jnp.zeros((1, OUT_CH), F32),
        "upscale_w": w((OUT_CH, UPSCALE_CH)),
        "upscale_b": jnp.zeros((1, UPSCALE_CH), F32),
        "hyper1_w": w((OUT_CH, OUT_CH)),
        "hyper1_b": jnp.zeros((1, OUT_CH), F32),
        "hyper2_w": w((OUT_CH, UPSCALE_CH)),
        "hyper2_b": jnp.zeros((1, UPSCALE_CH), F32),
    }
    return params


# ---------------------------------- main --------------------------------------
if __name__ == "__main__":
    root = jax.random.PRNGKey(0)
    pkey, xkey = jax.random.split(root)
    params = init_params(pkey)
    x = jax.random.normal(xkey, (B, C_IN, IMG, IMG), F32)

    masks = jax.jit(forward)(x, params)
    masks = jax.block_until_ready(masks)
    assert masks.shape == (B, 1, IMG, IMG), masks.shape
    assert masks.dtype == F32
    print("KERNEL_OK")
</pallas_src>

<mosaic_0001>
module attributes {stable_mosaic.version = 11 : i64} {
  func.func @_encoder_kernel(%arg0: i32, %arg1: i32, %arg2: memref<1x16x64xbf16, #tpu.memory_space<vmem>>, %arg3: memref<64x32xbf16, #tpu.memory_space<vmem>>, %arg4: memref<1x32xf32, #tpu.memory_space<vmem>>, %arg5: memref<16x32xf32, #tpu.memory_space<vmem>>, %arg6: memref<1x2x32xf32, #tpu.memory_space<vmem>>, %arg7: memref<1x2x32xf32, #tpu.memory_space<vmem>>, %arg8: memref<1x32x96xbf16, #tpu.memory_space<vmem>>, %arg9: memref<1x1x96xf32, #tpu.memory_space<vmem>>, %arg10: memref<1x32x32xbf16, #tpu.memory_space<vmem>>, %arg11: memref<1x1x32xf32, #tpu.memory_space<vmem>>, %arg12: memref<1x32x128xbf16, #tpu.memory_space<vmem>>, %arg13: memref<1x1x128xf32, #tpu.memory_space<vmem>>, %arg14: memref<1x128x32xbf16, #tpu.memory_space<vmem>>, %arg15: memref<1x1x32xf32, #tpu.memory_space<vmem>>, %arg16: memref<1x32x8xbf16, #tpu.memory_space<vmem>>, %arg17: memref<1x1x8xf32, #tpu.memory_space<vmem>>, %arg18: memref<1x8x32xbf16, #tpu.memory_space<vmem>>, %arg19: memref<1x1x32xf32, #tpu.memory_space<vmem>>, %arg20: memref<32x32xbf16, #tpu.memory_space<vmem>>, %arg21: memref<1x32xf32, #tpu.memory_space<vmem>>, %arg22: memref<1x32xf32, #tpu.memory_space<vmem>>, %arg23: memref<1x32xf32, #tpu.memory_space<vmem>>, %arg24: memref<32x32xbf16, #tpu.memory_space<vmem>>, %arg25: memref<1x32xf32, #tpu.memory_space<vmem>>, %arg26: memref<1x32xf32, #tpu.memory_space<vmem>>, %arg27: memref<1x32xf32, #tpu.memory_space<vmem>>, %arg28: memref<1x16x32xf32, #tpu.memory_space<vmem>>, %arg29: memref<16x32xf32, #tpu.memory_space<vmem>>) attributes {dimension_semantics = [#tpu.dimension_semantics<parallel>, #tpu.dimension_semantics<arbitrary>], iteration_bounds = array<i64: 2, 2>, scalar_prefetch = 0 : i64, scratch_operands = 1 : i64, tpu.core_type = #tpu.core_type<tc>, window_params = [{transform_indices = @transform_0, window_bounds = array<i64: 1, 16, 64>}, {pipeline_mode = #tpu.pipeline_mode<synchronous>, transform_indices = @transform_1, window_bounds = array<i64: 64, 32>}, {pipeline_mode = #tpu.pipeline_mode<synchronous>, transform_indices = @transform_2, window_bounds = array<i64: 1, 32>}, {pipeline_mode = #tpu.pipeline_mode<synchronous>, transform_indices = @transform_3, window_bounds = array<i64: 16, 32>}, {transform_indices = @transform_4, window_bounds = array<i64: 1, 2, 32>}, {transform_indices = @transform_5, window_bounds = array<i64: 1, 2, 32>}, {transform_indices = @transform_6, window_bounds = array<i64: 1, 32, 96>}, {transform_indices = @transform_7, window_bounds = array<i64: 1, 1, 96>}, {transform_indices = @transform_8, window_bounds = array<i64: 1, 32, 32>}, {transform_indices = @transform_9, window_bounds = array<i64: 1, 1, 32>}, {transform_indices = @transform_10, window_bounds = array<i64: 1, 32, 128>}, {transform_indices = @transform_11, window_bounds = array<i64: 1, 1, 128>}, {transform_indices = @transform_12, window_bounds = array<i64: 1, 128, 32>}, {transform_indices = @transform_13, window_bounds = array<i64: 1, 1, 32>}, {transform_indices = @transform_14, window_bounds = array<i64: 1, 32, 8>}, {transform_indices = @transform_15, window_bounds = array<i64: 1, 1, 8>}, {transform_indices = @transform_16, window_bounds = array<i64: 1, 8, 32>}, {transform_indices = @transform_17, window_bounds = array<i64: 1, 1, 32>}, {pipeline_mode = #tpu.pipeline_mode<synchronous>, transform_indices = @transform_18, window_bounds = array<i64: 32, 32>}, {pipeline_mode = #tpu.pipeline_mode<synchronous>, transform_indices = @transform_19, window_bounds = array<i64: 1, 32>}, {pipeline_mode = #tpu.pipeline_mode<synchronous>, transform_indices = @transform_20, window_bounds = array<i64: 1, 32>}, {pipeline_mode = #tpu.pipeline_mode<synchronous>, transform_indices = @transform_21, window_bounds = array<i64: 1, 32>}, {pipeline_mode = #tpu.pipeline_mode<synchronous>, transform_indices = @transform_22, window_bounds = array<i64: 32, 32>}, {pipeline_mode = #tpu.pipeline_mode<synchronous>, transform_indices = @transform_23, window_bounds = array<i64: 1, 32>}, {pipeline_mode = #tpu.pipeline_mode<synchronous>, transform_indices = @transform_24, window_bounds = array<i64: 1, 32>}, {pipeline_mode = #tpu.pipeline_mode<synchronous>, transform_indices = @transform_25, window_bounds = array<i64: 1, 32>}, {transform_indices = @transform_26, window_bounds = array<i64: 1, 16, 32>}]} {
    %c0_i32 = arith.constant 0 : i32
    %0 = arith.cmpi eq, %arg1, %c0_i32 : i32
    %1 = arith.extui %0 : i1 to i32
    %c0_i32_0 = arith.constant 0 : i32
    %2 = arith.cmpi ne, %1, %c0_i32_0 : i32
    scf.if %2 {
      %c0_93 = arith.constant 0 : index
      %c0_94 = arith.constant 0 : index
      %c0_95 = arith.constant 0 : index
      %207 = vector.load %arg2[%c0_93, %c0_94, %c0_95] : memref<1x16x64xbf16, #tpu.memory_space<vmem>>, vector<1x16x64xbf16>
      %208 = vector.shape_cast %207 : vector<1x16x64xbf16> to vector<16x64xbf16>
      %c0_96 = arith.constant 0 : index
      %c0_97 = arith.constant 0 : index
      %209 = vector.load %arg3[%c0_96, %c0_97] : memref<64x32xbf16, #tpu.memory_space<vmem>>, vector<64x32xbf16>
      %cst_98 = arith.constant dense<0.000000e+00> : vector<16x32xf32>
      %210 = tpu.matmul %208, %209, %cst_98 {dimension_numbers = #tpu.dot_dimension_numbers<[1], [0], [0], [1], [0, 0, 1, 1], [], []>} : vector<16x64xbf16>, vector<64x32xbf16>, vector<16x32xf32> -> vector<16x32xf32>
      %c0_99 = arith.constant 0 : index
      %c0_100 = arith.constant 0 : index
      %211 = vector.load %arg4[%c0_99, %c0_100] : memref<1x32xf32, #tpu.memory_space<vmem>>, vector<1x32xf32>
      %212 = vector.broadcast %211 : vector<1x32xf32> to vector<16x32xf32>
      %213 = arith.addf %210, %212 : vector<16x32xf32>
      %c0_101 = arith.constant 0 : index
      %c0_102 = arith.constant 0 : index
      %214 = vector.load %arg5[%c0_101, %c0_102] : memref<16x32xf32, #tpu.memory_space<vmem>>, vector<16x32xf32>
      %215 = arith.addf %213, %214 : vector<16x32xf32>
      %c0_103 = arith.constant 0 : index
      %c0_104 = arith.constant 0 : index
      %216 = vector.load %arg29[%c0_103, %c0_104] : memref<16x32xf32, #tpu.memory_space<vmem>>, vector<16x32xf32>
      tpu.vector_store %arg29[%c0_103, %c0_104], %215 {strides = array<i32>} : memref<16x32xf32, #tpu.memory_space<vmem>>, vector<16x32xf32>,
    } else {
    }
    %c0 = arith.constant 0 : index
    %c0_1 = arith.constant 0 : index
    %3 = vector.load %arg29[%c0, %c0_1] : memref<16x32xf32, #tpu.memory_space<vmem>>, vector<16x32xf32>
    %c0_2 = arith.constant 0 : index
    %c0_3 = arith.constant 0 : index
    %c0_4 = arith.constant 0 : index
    %4 = vector.load %arg6[%c0_2, %c0_3, %c0_4] : memref<1x2x32xf32, #tpu.memory_space<vmem>>, vector<1x1x32xf32>
    %5 = vector.shape_cast %4 : vector<1x1x32xf32> to vector<1x32xf32>
    %c0_5 = arith.constant 0 : index
    %c0_6 = arith.constant 0 : index
    %c0_7 = arith.constant 0 : index
    %6 = vector.load %arg7[%c0_5, %c0_6, %c0_7] : memref<1x2x32xf32, #tpu.memory_space<vmem>>, vector<1x1x32xf32>
    %7 = vector.shape_cast %6 : vector<1x1x32xf32> to vector<1x32xf32>
    %cst = arith.constant dense<0.000000e+00> : vector<16xf32>
    %8 = vector.multi_reduction <add>, %3, %cst [1] : vector<16x32xf32> to vector<16xf32>
    %9 = vector.shape_cast %8 : vector<16xf32> to vector<16x1xf32>
    %cst_8 = arith.constant 3.200000e+01 : f32
    %10 = vector.broadcast %cst_8 : f32 to vector<16x1xf32>
    %11 = arith.divf %9, %10 : vector<16x1xf32>
    %12 = vector.broadcast %11 : vector<16x1xf32> to vector<16x32xf32>
    %13 = arith.subf %3, %12 : vector<16x32xf32>
    %14 = arith.mulf %13, %13 : vector<16x32xf32>
    %cst_9 = arith.constant dense<0.000000e+00> : vector<16xf32>
    %15 = vector.multi_reduction <add>, %14, %cst_9 [1] : vector<16x32xf32> to vector<16xf32>
    %16 = vector.shape_cast %15 : vector<16xf32> to vector<16x1xf32>
    %cst_10 = arith.constant 3.200000e+01 : f32
    %17 = vector.broadcast %cst_10 : f32 to vector<16x1xf32>
    %18 = arith.divf %16, %17 : vector<16x1xf32>
    %cst_11 = arith.constant 9.99999997E-7 : f32
    %19 = vector.broadcast %cst_11 : f32 to vector<16x1xf32>
    %20 = arith.addf %18, %19 : vector<16x1xf32>
    %21 = math.rsqrt %20 : vector<16x1xf32>
    %22 = vector.broadcast %21 : vector<16x1xf32> to vector<16x32xf32>
    %23 = arith.mulf %13, %22 : vector<16x32xf32>
    %24 = vector.broadcast %5 : vector<1x32xf32> to vector<16x32xf32>
    %25 = arith.mulf %23, %24 : vector<16x32xf32>
    %26 = vector.broadcast %7 : vector<1x32xf32> to vector<16x32xf32>
    %27 = arith.addf %25, %26 : vector<16x32xf32>
    %28 = arith.truncf %27 : vector<16x32xf32> to vector<16x32xbf16>
    %c0_12 = arith.constant 0 : index
    %c0_13 = arith.constant 0 : index
    %c0_14 = arith.constant 0 : index
    %29 = vector.load %arg8[%c0_12, %c0_13, %c0_14] : memref<1x32x96xbf16, #tpu.memory_space<vmem>>, vector<1x32x96xbf16>
    %30 = vector.shape_cast %29 : vector<1x32x96xbf16> to vector<32x96xbf16>
    %cst_15 = arith.constant dense<0.000000e+00> : vector<16x96xf32>
    %31 = tpu.matmul %28, %30, %cst_15 {dimension_numbers = #tpu.dot_dimension_numbers<[1], [0], [0], [1], [0, 0, 1, 1], [], []>} : vector<16x32xbf16>, vector<32x96xbf16>, vector<16x96xf32> -> vector<16x96xf32>
    %c0_16 = arith.constant 0 : index
    %c0_17 = arith.constant 0 : index
    %c0_18 = arith.constant 0 : index
    %32 = vector.load %arg9[%c0_16, %c0_17, %c0_18] : memref<1x1x96xf32, #tpu.memory_space<vmem>>, vector<1x1x96xf32>
    %33 = vector.shape_cast %32 : vector<1x1x96xf32> to vector<1x96xf32>
    %34 = vector.broadcast %33 : vector<1x96xf32> to vector<16x96xf32>
    %35 = arith.addf %31, %34 : vector<16x96xf32>
    %36 = vector.extract_strided_slice %35 {offsets = [0, 0], sizes = [16, 32], strides = [1, 1]} : vector<16x96xf32> to vector<16x32xf32>
    %37 = vector.extract_strided_slice %35 {offsets = [0, 32], sizes = [16, 32], strides = [1, 1]} : vector<16x96xf32> to vector<16x32xf32>
    %38 = vector.extract_strided_slice %35 {offsets = [0, 64], sizes = [16, 32], strides = [1, 1]} : vector<16x96xf32> to vector<16x32xf32>
    %c0_19 = arith.constant 0 : index
    %c0_20 = arith.constant 0 : index
    %c0_21 = arith.constant 0 : index
    %39 = vector.load %arg10[%c0_19, %c0_20, %c0_21] : memref<1x32x32xbf16, #tpu.memory_space<vmem>>, vector<1x32x32xbf16>
    %40 = vector.shape_cast %39 : vector<1x32x32xbf16> to vector<32x32xbf16>
    %c0_22 = arith.constant 0 : index
    %c0_23 = arith.constant 0 : index
    %c0_24 = arith.constant 0 : index
    %41 = vector.load %arg11[%c0_22, %c0_23, %c0_24] : memref<1x1x32xf32, #tpu.memory_space<vmem>>, vector<1x1x32xf32>
    %42 = vector.shape_cast %41 : vector<1x1x32xf32> to vector<1x32xf32>
    %cst_25 = arith.constant 0.353553385 : f32
    %43 = vector.broadcast %cst_25 : f32 to vector<16x32xf32>
    %44 = arith.mulf %36, %43 : vector<16x32xf32>
    %45 = arith.truncf %44 : vector<16x32xf32> to vector<16x32xbf16>
    %46 = arith.truncf %37 : vector<16x32xf32> to vector<16x32xbf16>
    %47 = arith.truncf %38 : vector<16x32xf32> to vector<16x32xbf16>
    %48 = vector.extract_strided_slice %45 {offsets = [0, 0], sizes = [16, 8], strides = [1, 1]} : vector<16x32xbf16> to vector<16x8xbf16>
    %49 = vector.extract_strided_slice %46 {offsets = [0, 0], sizes = [16, 8], strides = [1, 1]} : vector<16x32xbf16> to vector<16x8xbf16>
    "tpu.trace_start"() <{level = 10 : i32, message = "qd,kd->qk"}> : () -> ()
    %cst_26 = arith.constant dense<0.000000e+00> : vector<16x16xf32>
    %50 = tpu.matmul %48, %49, %cst_26 {dimension_numbers = #tpu.dot_dimension_numbers<[1], [1], [0], [0], [0, 0, 1, 0], [], []>} : vector<16x8xbf16>, vector<16x8xbf16>, vector<16x16xf32> -> vector<16x16xf32>
    "tpu.trace_stop"() : () -> ()
    %cst_27 = arith.constant dense<0xFF800000> : vector<16xf32>
    %51 = vector.multi_reduction <maximumf>, %50, %cst_27 [1] : vector<16x16xf32> to vector<16xf32>
    %52 = vector.shape_cast %51 : vector<16xf32> to vector<16x1xf32>
    %53 = vector.broadcast %52 : vector<16x1xf32> to vector<16x16xf32>
    %54 = arith.subf %50, %53 : vector<16x16xf32>
    %55 = math.exp %54 : vector<16x16xf32>
    %cst_28 = arith.constant dense<0.000000e+00> : vector<16xf32>
    %56 = vector.multi_reduction <add>, %55, %cst_28 [1] : vector<16x16xf32> to vector<16xf32>
    %57 = vector.shape_cast %56 : vector<16xf32> to vector<16x1xf32>
    %58 = tpu.reciprocal %57 {approx = true} : vector<16x1xf32> -> vector<16x1xf32>
    %59 = vector.broadcast %58 : vector<16x1xf32> to vector<16x16xf32>
    %60 = arith.mulf %55, %59 : vector<16x16xf32>
    %61 = arith.truncf %60 : vector<16x16xf32> to vector<16x16xbf16>
    %62 = vector.extract_strided_slice %47 {offsets = [0, 0], sizes = [16, 8], strides = [1, 1]} : vector<16x32xbf16> to vector<16x8xbf16>
    %cst_29 = arith.constant dense<0.000000e+00> : vector<16x8xf32>
    %63 = tpu.matmul %61, %62, %cst_29 {dimension_numbers = #tpu.dot_dimension_numbers<[1], [0], [0], [1], [0, 0, 1, 1], [], []>} : vector<16x16xbf16>, vector<16x8xbf16>, vector<16x8xf32> -> vector<16x8xf32>
    %64 = vector.extract_strided_slice %45 {offsets = [0, 8], sizes = [16, 8], strides = [1, 1]} : vector<16x32xbf16> to vector<16x8xbf16>
    %65 = vector.extract_strided_slice %46 {offsets = [0, 8], sizes = [16, 8], strides = [1, 1]} : vector<16x32xbf16> to vector<16x8xbf16>
    "tpu.trace_start"() <{level = 10 : i32, message = "qd,kd->qk"}> : () -> ()
    %cst_30 = arith.constant dense<0.000000e+00> : vector<16x16xf32>
    %66 = tpu.matmul %64, %65, %cst_30 {dimension_numbers = #tpu.dot_dimension_numbers<[1], [1], [0], [0], [0, 0, 1, 0], [], []>} : vector<16x8xbf16>, vector<16x8xbf16>, vector<16x16xf32> -> vector<16x16xf32>
    "tpu.trace_stop"() : () -> ()
    %cst_31 = arith.constant dense<0xFF800000> : vector<16xf32>
    %67 = vector.multi_reduction <maximumf>, %66, %cst_31 [1] : vector<16x16xf32> to vector<16xf32>
    %68 = vector.shape_cast %67 : vector<16xf32> to vector<16x1xf32>
    %69 = vector.broadcast %68 : vector<16x1xf32> to vector<16x16xf32>
    %70 = arith.subf %66, %69 : vector<16x16xf32>
    %71 = math.exp %70 : vector<16x16xf32>
    %cst_32 = arith.constant dense<0.000000e+00> : vector<16xf32>
    %72 = vector.multi_reduction <add>, %71, %cst_32 [1] : vector<16x16xf32> to vector<16xf32>
    %73 = vector.shape_cast %72 : vector<16xf32> to vector<16x1xf32>
    %74 = tpu.reciprocal %73 {approx = true} : vector<16x1xf32> -> vector<16x1xf32>
    %75 = vector.broadcast %74 : vector<16x1xf32> to vector<16x16xf32>
    %76 = arith.mulf %71, %75 : vector<16x16xf32>
    %77 = arith.truncf %76 : vector<16x16xf32> to vector<16x16xbf16>
    %78 = vector.extract_strided_slice %47 {offsets = [0, 8], sizes = [16, 8], strides = [1, 1]} : vector<16x32xbf16> to vector<16x8xbf16>
    %cst_33 = arith.constant dense<0.000000e+00> : vector<16x8xf32>
    %79 = tpu.matmul %77, %78, %cst_33 {dimension_numbers = #tpu.dot_dimension_numbers<[1], [0], [0], [1], [0, 0, 1, 1], [], []>} : vector<16x16xbf16>, vector<16x8xbf16>, vector<16x8xf32> -> vector<16x8xf32>
    %80 = vector.extract_strided_slice %45 {offsets = [0, 16], sizes = [16, 8], strides = [1, 1]} : vector<16x32xbf16> to vector<16x8xbf16>
    %81 = vector.extract_strided_slice %46 {offsets = [0, 16], sizes = [16, 8], strides = [1, 1]} : vector<16x32xbf16> to vector<16x8xbf16>
    "tpu.trace_start"() <{level = 10 : i32, message = "qd,kd->qk"}> : () -> ()
    %cst_34 = arith.constant dense<0.000000e+00> : vector<16x16xf32>
    %82 = tpu.matmul %80, %81, %cst_34 {dimension_numbers = #tpu.dot_dimension_numbers<[1], [1], [0], [0], [0, 0, 1, 0], [], []>} : vector<16x8xbf16>, vector<16x8xbf16>, vector<16x16xf32> -> vector<16x16xf32>
    "tpu.trace_stop"() : () -> ()
    %cst_35 = arith.constant dense<0xFF800000> : vector<16xf32>
    %83 = vector.multi_reduction <maximumf>, %82, %cst_35 [1] : vector<16x16xf32> to vector<16xf32>
    %84 = vector.shape_cast %83 : vector<16xf32> to vector<16x1xf32>
    %85 = vector.broadcast %84 : vector<16x1xf32> to vector<16x16xf32>
    %86 = arith.subf %82, %85 : vector<16x16xf32>
    %87 = math.exp %86 : vector<16x16xf32>
    %cst_36 = arith.constant dense<0.000000e+00> : vector<16xf32>
    %88 = vector.multi_reduction <add>, %87, %cst_36 [1] : vector<16x16xf32> to vector<16xf32>
    %89 = vector.shape_cast %88 : vector<16xf32> to vector<16x1xf32>
    %90 = tpu.reciprocal %89 {approx = true} : vector<16x1xf32> -> vector<16x1xf32>
    %91 = vector.broadcast %90 : vector<16x1xf32> to vector<16x16xf32>
    %92 = arith.mulf %87, %91 : vector<16x16xf32>
    %93 = arith.truncf %92 : vector<16x16xf32> to vector<16x16xbf16>
    %94 = vector.extract_strided_slice %47 {offsets = [0, 16], sizes = [16, 8], strides = [1, 1]} : vector<16x32xbf16> to vector<16x8xbf16>
    %cst_37 = arith.constant dense<0.000000e+00> : vector<16x8xf32>
    %95 = tpu.matmul %93, %94, %cst_37 {dimension_numbers = #tpu.dot_dimension_numbers<[1], [0], [0], [1], [0, 0, 1, 1], [], []>} : vector<16x16xbf16>, vector<16x8xbf16>, vector<16x8xf32> -> vector<16x8xf32>
    %96 = vector.extract_strided_slice %45 {offsets = [0, 24], sizes = [16, 8], strides = [1, 1]} : vector<16x32xbf16> to vector<16x8xbf16>
    %97 = vector.extract_strided_slice %46 {offsets = [0, 24], sizes = [16, 8], strides = [1, 1]} : vector<16x32xbf16> to vector<16x8xbf16>
    "tpu.trace_start"() <{level = 10 : i32, message = "qd,kd->qk"}> : () -> ()
    %cst_38 = arith.constant dense<0.000000e+00> : vector<16x16xf32>
    %98 = tpu.matmul %96, %97, %cst_38 {dimension_numbers = #tpu.dot_dimension_numbers<[1], [1], [0], [0], [0, 0, 1, 0], [], []>} : vector<16x8xbf16>, vector<16x8xbf16>, vector<16x16xf32> -> vector<16x16xf32>
    "tpu.trace_stop"() : () -> ()
    %cst_39 = arith.constant dense<0xFF800000> : vector<16xf32>
    %99 = vector.multi_reduction <maximumf>, %98, %cst_39 [1] : vector<16x16xf32> to vector<16xf32>
    %100 = vector.shape_cast %99 : vector<16xf32> to vector<16x1xf32>
    %101 = vector.broadcast %100 : vector<16x1xf32> to vector<16x16xf32>
    %102 = arith.subf %98, %101 : vector<16x16xf32>
    %103 = math.exp %102 : vector<16x16xf32>
    %cst_40 = arith.constant dense<0.000000e+00> : vector<16xf32>
    %104 = vector.multi_reduction <add>, %103, %cst_40 [1] : vector<16x16xf32> to vector<16xf32>
    %105 = vector.shape_cast %104 : vector<16xf32> to vector<16x1xf32>
    %106 = tpu.reciprocal %105 {approx = true} : vector<16x1xf32> -> vector<16x1xf32>
    %107 = vector.broadcast %106 : vector<16x1xf32> to vector<16x16xf32>
    %108 = arith.mulf %103, %107 : vector<16x16xf32>
    %109 = arith.truncf %108 : vector<16x16xf32> to vector<16x16xbf16>
    %110 = vector.extract_strided_slice %47 {offsets = [0, 24], sizes = [16, 8], strides = [1, 1]} : vector<16x32xbf16> to vector<16x8xbf16>
    %cst_41 = arith.constant dense<0.000000e+00> : vector<16x8xf32>
    %111 = tpu.matmul %109, %110, %cst_41 {dimension_numbers = #tpu.dot_dimension_numbers<[1], [0], [0], [1], [0, 0, 1, 1], [], []>} : vector<16x16xbf16>, vector<16x8xbf16>, vector<16x8xf32> -> vector<16x8xf32>
    %112 = tpu.concatenate %63, %79, %95, %111 in 1 : vector<16x8xf32>, vector<16x8xf32>, vector<16x8xf32>, vector<16x8xf32> -> vector<16x32xf32>
    %113 = arith.truncf %112 : vector<16x32xf32> to vector<16x32xbf16>
    %cst_42 = arith.constant dense<0.000000e+00> : vector<16x32xf32>
    %114 = tpu.matmul %113, %40, %cst_42 {dimension_numbers = #tpu.dot_dimension_numbers<[1], [0], [0], [1], [0, 0, 1, 1], [], []>} : vector<16x32xbf16>, vector<32x32xbf16>, vector<16x32xf32> -> vector<16x32xf32>
    %115 = vector.broadcast %42 : vector<1x32xf32> to vector<16x32xf32>
    %116 = arith.addf %114, %115 : vector<16x32xf32>
    %117 = arith.addf %3, %116 : vector<16x32xf32>
    %c0_43 = arith.constant 0 : index
    %c1 = arith.constant 1 : index
    %c0_44 = arith.constant 0 : index
    %118 = vector.load %arg6[%c0_43, %c1, %c0_44] : memref<1x2x32xf32, #tpu.memory_space<vmem>>, vector<1x1x32xf32>
    %119 = vector.shape_cast %118 : vector<1x1x32xf32> to vector<1x32xf32>
    %c0_45 = arith.constant 0 : index
    %c1_46 = arith.constant 1 : index
    %c0_47 = arith.constant 0 : index
    %120 = vector.load %arg7[%c0_45, %c1_46, %c0_47] : memref<1x2x32xf32, #tpu.memory_space<vmem>>, vector<1x1x32xf32>
    %121 = vector.shape_cast %120 : vector<1x1x32xf32> to vector<1x32xf32>
    %cst_48 = arith.constant dense<0.000000e+00> : vector<16xf32>
    %122 = vector.multi_reduction <add>, %117, %cst_48 [1] : vector<16x32xf32> to vector<16xf32>
    %123 = vector.shape_cast %122 : vector<16xf32> to vector<16x1xf32>
    %cst_49 = arith.constant 3.200000e+01 : f32
    %124 = vector.broadcast %cst_49 : f32 to vector<16x1xf32>
    %125 = arith.divf %123, %124 : vector<16x1xf32>
    %126 = vector.broadcast %125 : vector<16x1xf32> to vector<16x32xf32>
    %127 = arith.subf %117, %126 : vector<16x32xf32>
    %128 = arith.mulf %127, %127 : vector<16x32xf32>
    %cst_50 = arith.constant dense<0.000000e+00> : vector<16xf32>
    %129 = vector.multi_reduction <add>, %128, %cst_50 [1] : vector<16x32xf32> to vector<16xf32>
    %130 = vector.shape_cast %129 : vector<16xf32> to vector<16x1xf32>
    %cst_51 = arith.constant 3.200000e+01 : f32
    %131 = vector.broadcast %cst_51 : f32 to vector<16x1xf32>
    %132 = arith.divf %130, %131 : vector<16x1xf32>
    %cst_52 = arith.constant 9.99999997E-7 : f32
    %133 = vector.broadcast %cst_52 : f32 to vector<16x1xf32>
    %134 = arith.addf %132, %133 : vector<16x1xf32>
    %135 = math.rsqrt %134 : vector<16x1xf32>
    %136 = vector.broadcast %135 : vector<16x1xf32> to vector<16x32xf32>
    %137 = arith.mulf %127, %136 : vector<16x32xf32>
    %138 = vector.broadcast %119 : vector<1x32xf32> to vector<16x32xf32>
    %139 = arith.mulf %137, %138 : vector<16x32xf32>
    %140 = vector.broadcast %121 : vector<1x32xf32> to vector<16x32xf32>
    %141 = arith.addf %139, %140 : vector<16x32xf32>
    %142 = arith.truncf %141 : vector<16x32xf32> to vector<16x32xbf16>
    %c0_53 = arith.constant 0 : index
    %c0_54 = arith.constant 0 : index
    %c0_55 = arith.constant 0 : index
    %143 = vector.load %arg12[%c0_53, %c0_54, %c0_55] : memref<1x32x128xbf16, #tpu.memory_space<vmem>>, vector<1x32x128xbf16>
    %144 = vector.shape_cast %143 : vector<1x32x128xbf16> to vector<32x128xbf16>
    %cst_56 = arith.constant dense<0.000000e+00> : vector<16x128xf32>
    %145 = tpu.matmul %142, %144, %cst_56 {dimension_numbers = #tpu.dot_dimension_numbers<[1], [0], [0], [1], [0, 0, 1, 1], [], []>} : vector<16x32xbf16>, vector<32x128xbf16>, vector<16x128xf32> -> vector<16x128xf32>
    %c0_57 = arith.constant 0 : index
    %c0_58 = arith.constant 0 : index
    %c0_59 = arith.constant 0 : index
    %146 = vector.load %arg13[%c0_57, %c0_58, %c0_59] : memref<1x1x128xf32, #tpu.memory_space<vmem>>, vector<1x1x128xf32>
    %147 = vector.shape_cast %146 : vector<1x1x128xf32> to vector<1x128xf32>
    %148 = vector.broadcast %147 : vector<1x128xf32> to vector<16x128xf32>
    %149 = arith.addf %145, %148 : vector<16x128xf32>
    %150 = arith.mulf %149, %149 : vector<16x128xf32>
    %151 = arith.mulf %149, %150 : vector<16x128xf32>
    %cst_60 = arith.constant 4.471500e-02 : f32
    %152 = vector.broadcast %cst_60 : f32 to vector<16x128xf32>
    %153 = arith.mulf %152, %151 : vector<16x128xf32>
    %154 = arith.addf %149, %153 : vector<16x128xf32>
    %cst_61 = arith.constant 0.797884583 : f32
    %155 = vector.broadcast %cst_61 : f32 to vector<16x128xf32>
    %156 = arith.mulf %155, %154 : vector<16x128xf32>
    %157 = math.tanh %156 : vector<16x128xf32>
    %cst_62 = arith.constant 1.000000e+00 : f32
    %158 = vector.broadcast %cst_62 : f32 to vector<16x128xf32>
    %159 = arith.addf %158, %157 : vector<16x128xf32>
    %cst_63 = arith.constant 5.000000e-01 : f32
    %160 = vector.broadcast %cst_63 : f32 to vector<16x128xf32>
    %161 = arith.mulf %160, %159 : vector<16x128xf32>
    %162 = arith.mulf %149, %161 : vector<16x128xf32>
    %163 = arith.truncf %162 : vector<16x128xf32> to vector<16x128xbf16>
    %c0_64 = arith.constant 0 : index
    %c0_65 = arith.constant 0 : index
    %c0_66 = arith.constant 0 : index
    %164 = vector.load %arg14[%c0_64, %c0_65, %c0_66] : memref<1x128x32xbf16, #tpu.memory_space<vmem>>, vector<1x128x32xbf16>
    %165 = vector.shape_cast %164 : vector<1x128x32xbf16> to vector<128x32xbf16>
    %cst_67 = arith.constant dense<0.000000e+00> : vector<16x32xf32>
    %166 = tpu.matmul %163, %165, %cst_67 {dimension_numbers = #tpu.dot_dimension_numbers<[1], [0], [0], [1], [0, 0, 1, 1], [], []>} : vector<16x128xbf16>, vector<128x32xbf16>, vector<16x32xf32> -> vector<16x32xf32>
    %c0_68 = arith.constant 0 : index
    %c0_69 = arith.constant 0 : index
    %c0_70 = arith.constant 0 : index
    %167 = vector.load %arg15[%c0_68, %c0_69, %c0_70] : memref<1x1x32xf32, #tpu.memory_space<vmem>>, vector<1x1x32xf32>
    %168 = vector.shape_cast %167 : vector<1x1x32xf32> to vector<1x32xf32>
    %169 = vector.broadcast %168 : vector<1x32xf32> to vector<16x32xf32>
    %170 = arith.addf %166, %169 : vector<16x32xf32>
    %c0_71 = arith.constant 0 : index
    %c0_72 = arith.constant 0 : index
    %c0_73 = arith.constant 0 : index
    %171 = vector.load %arg16[%c0_71, %c0_72, %c0_73] : memref<1x32x8xbf16, #tpu.memory_space<vmem>>, vector<1x32x8xbf16>
    %172 = vector.shape_cast %171 : vector<1x32x8xbf16> to vector<32x8xbf16>
    %cst_74 = arith.constant dense<0.000000e+00> : vector<16x8xf32>
    %173 = tpu.matmul %142, %172, %cst_74 {dimension_numbers = #tpu.dot_dimension_numbers<[1], [0], [0], [1], [0, 0, 1, 1], [], []>} : vector<16x32xbf16>, vector<32x8xbf16>, vector<16x8xf32> -> vector<16x8xf32>
    %c0_75 = arith.constant 0 : index
    %c0_76 = arith.constant 0 : index
    %c0_77 = arith.constant 0 : index
    %174 = vector.load %arg17[%c0_75, %c0_76, %c0_77] : memref<1x1x8xf32, #tpu.memory_space<vmem>>, vector<1x1x8xf32>
    %175 = vector.shape_cast %174 : vector<1x1x8xf32> to vector<1x8xf32>
    %176 = vector.broadcast %175 : vector<1x8xf32> to vector<16x8xf32>
    %177 = arith.addf %173, %176 : vector<16x8xf32>
    %178 = arith.mulf %177, %177 : vector<16x8xf32>
    %179 = arith.mulf %177, %178 : vector<16x8xf32>
    %cst_78 = arith.constant 4.471500e-02 : f32
    %180 = vector.broadcast %cst_78 : f32 to vector<16x8xf32>
    %181 = arith.mulf %180, %179 : vector<16x8xf32>
    %182 = arith.addf %177, %181 : vector<16x8xf32>
    %cst_79 = arith.constant 0.797884583 : f32
    %183 = vector.broadcast %cst_79 : f32 to vector<16x8xf32>
    %184 = arith.mulf %183, %182 : vector<16x8xf32>
    %185 = math.tanh %184 : vector<16x8xf32>
    %cst_80 = arith.constant 1.000000e+00 : f32
    %186 = vector.broadcast %cst_80 : f32 to vector<16x8xf32>
    %187 = arith.addf %186, %185 : vector<16x8xf32>
    %cst_81 = arith.constant 5.000000e-01 : f32
    %188 = vector.broadcast %cst_81 : f32 to vector<16x8xf32>
    %189 = arith.mulf %188, %187 : vector<16x8xf32>
    %190 = arith.mulf %177, %189 : vector<16x8xf32>
    %191 = arith.truncf %190 : vector<16x8xf32> to vector<16x8xbf16>
    %c0_82 = arith.constant 0 : index
    %c0_83 = arith.constant 0 : index
    %c0_84 = arith.constant 0 : index
    %192 = vector.load %arg18[%c0_82, %c0_83, %c0_84] : memref<1x8x32xbf16, #tpu.memory_space<vmem>>, vector<1x8x32xbf16>
    %193 = vector.shape_cast %192 : vector<1x8x32xbf16> to vector<8x32xbf16>
    %cst_85 = arith.constant dense<0.000000e+00> : vector<16x32xf32>
    %194 = tpu.matmul %191, %193, %cst_85 {dimension_numbers = #tpu.dot_dimension_numbers<[1], [0], [0], [1], [0, 0, 1, 1], [], []>} : vector<16x8xbf16>, vector<8x32xbf16>, vector<16x32xf32> -> vector<16x32xf32>
    %c0_86 = arith.constant 0 : index
    %c0_87 = arith.constant 0 : index
    %c0_88 = arith.constant 0 : index
    %195 = vector.load %arg19[%c0_86, %c0_87, %c0_88] : memref<1x1x32xf32, #tpu.memory_space<vmem>>, vector<1x1x32xf32>
    %196 = vector.shape_cast %195 : vector<1x1x32xf32> to vector<1x32xf32>
    %197 = vector.broadcast %196 : vector<1x32xf32> to vector<16x32xf32>
    %198 = arith.addf %194, %197 : vector<16x32xf32>
    %199 = arith.addf %117, %170 : vector<16x32xf32>
    %cst_89 = arith.constant 5.000000e-01 : f32
    %200 = vector.broadcast %cst_89 : f32 to vector<16x32xf32>
    %201 = arith.mulf %200, %198 : vector<16x32xf32>
    %202 = arith.addf %199, %201 : vector<16x32xf32>
    %c0_90 = arith.constant 0 : index
    %c0_91 = arith.constant 0 : index
    %203 = vector.load %arg29[%c0_90, %c0_91] : memref<16x32xf32, #tpu.memory_space<vmem>>, vector<16x32xf32>
    tpu.vector_store %arg29[%c0_90, %c0_91], %202 {strides = array<i32>} : memref<16x32xf32, #tpu.memory_space<vmem>>, vector<16x32xf32>,
    %c1_i32 = arith.constant 1 : i32
    %204 = arith.cmpi eq, %arg1, %c1_i32 : i32
    %205 = arith.extui %204 : i1 to i32
    %c0_i32_92 = arith.constant 0 : i32
    %206 = arith.cmpi ne, %205, %c0_i32_92 : i32
    scf.if %206 {
      %207 = arith.truncf %202 : vector<16x32xf32> to vector<16x32xbf16>
      %c0_93 = arith.constant 0 : index
      %c0_94 = arith.constant 0 : index
      %208 = vector.load %arg20[%c0_93, %c0_94] : memref<32x32xbf16, #tpu.memory_space<vmem>>, vector<32x32xbf16>
      %cst_95 = arith.constant dense<0.000000e+00> : vector<16x32xf32>
      %209 = tpu.matmul %207, %208, %cst_95 {dimension_numbers = #tpu.dot_dimension_numbers<[1], [0], [0], [1], [0, 0, 1, 1], [], []>} : vector<16x32xbf16>, vector<32x32xbf16>, vector<16x32xf32> -> vector<16x32xf32>
      %c0_96 = arith.constant 0 : index
      %c0_97 = arith.constant 0 : index
      %210 = vector.load %arg21[%c0_96, %c0_97] : memref<1x32xf32, #tpu.memory_space<vmem>>, vector<1x32xf32>
      %211 = vector.broadcast %210 : vector<1x32xf32> to vector<16x32xf32>
      %212 = arith.addf %209, %211 : vector<16x32xf32>
      %c0_98 = arith.constant 0 : index
      %c0_99 = arith.constant 0 : index
      %213 = vector.load %arg22[%c0_98, %c0_99] : memref<1x32xf32, #tpu.memory_space<vmem>>, vector<1x32xf32>
      %c0_100 = arith.constant 0 : index
      %c0_101 = arith.constant 0 : index
      %214 = vector.load %arg23[%c0_100, %c0_101] : memref<1x32xf32, #tpu.memory_space<vmem>>, vector<1x32xf32>
      %cst_102 = arith.constant dense<0.000000e+00> : vector<16xf32>
      %215 = vector.multi_reduction <add>, %212, %cst_102 [1] : vector<16x32xf32> to vector<16xf32>
      %216 = vector.shape_cast %215 : vector<16xf32> to vector<16x1xf32>
      %cst_103 = arith.constant 3.200000e+01 : f32
      %217 = vector.broadcast %cst_103 : f32 to vector<16x1xf32>
      %218 = arith.divf %216, %217 : vector<16x1xf32>
      %219 = vector.broadcast %218 : vector<16x1xf32> to vector<16x32xf32>
      %220 = arith.subf %212, %219 : vector<16x32xf32>
      %221 = arith.mulf %220, %220 : vector<16x32xf32>
      %cst_104 = arith.constant dense<0.000000e+00> : vector<16xf32>
      %222 = vector.multi_reduction <add>, %221, %cst_104 [1] : vector<16x32xf32> to vector<16xf32>
      %223 = vector.shape_cast %222 : vector<16xf32> to vector<16x1xf32>
      %cst_105 = arith.constant 3.200000e+01 : f32
      %224 = vector.broadcast %cst_105 : f32 to vector<16x1xf32>
      %225 = arith.divf %223, %224 : vector<16x1xf32>
      %cst_106 = arith.constant 9.99999997E-7 : f32
      %226 = vector.broadcast %cst_106 : f32 to vector<16x1xf32>
      %227 = arith.addf %225, %226 : vector<16x1xf32>
      %228 = math.rsqrt %227 : vector<16x1xf32>
      %229 = vector.broadcast %228 : vector<16x1xf32> to vector<16x32xf32>
      %230 = arith.mulf %220, %229 : vector<16x32xf32>
      %231 = vector.broadcast %213 : vector<1x32xf32> to vector<16x32xf32>
      %232 = arith.mulf %230, %231 : vector<16x32xf32>
      %233 = vector.broadcast %214 : vector<1x32xf32> to vector<16x32xf32>
      %234 = arith.addf %232, %233 : vector<16x32xf32>
      %235 = arith.truncf %234 : vector<16x32xf32> to vector<16x32xbf16>
      %c0_107 = arith.constant 0 : index
      %c0_108 = arith.constant 0 : index
      %236 = vector.load %arg24[%c0_107, %c0_108] : memref<32x32xbf16, #tpu.memory_space<vmem>>, vector<32x32xbf16>
      %cst_109 = arith.constant dense<0.000000e+00> : vector<16x32xf32>
      %237 = tpu.matmul %235, %236, %cst_109 {dimension_numbers = #tpu.dot_dimension_numbers<[1], [0], [0], [1], [0, 0, 1, 1], [], []>} : vector<16x32xbf16>, vector<32x32xbf16>, vector<16x32xf32> -> vector<16x32xf32>
      %c0_110 = arith.constant 0 : index
      %c0_111 = arith.constant 0 : index
      %238 = vector.load %arg25[%c0_110, %c0_111] : memref<1x32xf32, #tpu.memory_space<vmem>>, vector<1x32xf32>
      %239 = vector.broadcast %238 : vector<1x32xf32> to vector<16x32xf32>
      %240 = arith.addf %237, %239 : vector<16x32xf32>
      %c0_112 = arith.constant 0 : index
      %c0_113 = arith.constant 0 : index
      %241 = vector.load %arg26[%c0_112, %c0_113] : memref<1x32xf32, #tpu.memory_space<vmem>>, vector<1x32xf32>
      %c0_114 = arith.constant 0 : index
      %c0_115 = arith.constant 0 : index
      %242 = vector.load %arg27[%c0_114, %c0_115] : memref<1x32xf32, #tpu.memory_space<vmem>>, vector<1x32xf32>
      %cst_116 = arith.constant dense<0.000000e+00> : vector<16xf32>
      %243 = vector.multi_reduction <add>, %240, %cst_116 [1] : vector<16x32xf32> to vector<16xf32>
      %244 = vector.shape_cast %243 : vector<16xf32> to vector<16x1xf32>
      %cst_117 = arith.constant 3.200000e+01 : f32
      %245 = vector.broadcast %cst_117 : f32 to vector<16x1xf32>
      %246 = arith.divf %244, %245 : vector<16x1xf32>
      %247 = vector.broadcast %246 : vector<16x1xf32> to vector<16x32xf32>
      %248 = arith.subf %240, %247 : vector<16x32xf32>
      %249 = arith.mulf %248, %248 : vector<16x32xf32>
      %cst_118 = arith.constant dense<0.000000e+00> : vector<16xf32>
      %250 = vector.multi_reduction <add>, %249, %cst_118 [1] : vector<16x32xf32> to vector<16xf32>
      %251 = vector.shape_cast %250 : vector<16xf32> to vector<16x1xf32>
      %cst_119 = arith.constant 3.200000e+01 : f32
      %252 = vector.broadcast %cst_119 : f32 to vector<16x1xf32>
      %253 = arith.divf %251, %252 : vector<16x1xf32>
      %cst_120 = arith.constant 9.99999997E-7 : f32
      %254 = vector.broadcast %cst_120 : f32 to vector<16x1xf32>
      %255 = arith.addf %253, %254 : vector<16x1xf32>
      %256 = math.rsqrt %255 : vector<16x1xf32>
      %257 = vector.broadcast %256 : vector<16x1xf32> to vector<16x32xf32>
      %258 = arith.mulf %248, %257 : vector<16x32xf32>
      %259 = vector.broadcast %241 : vector<1x32xf32> to vector<16x32xf32>
      %260 = arith.mulf %258, %259 : vector<16x32xf32>
      %261 = vector.broadcast %242 : vector<1x32xf32> to vector<16x32xf32>
      %262 = arith.addf %260, %261 : vector<16x32xf32>
      %c0_121 = arith.constant 0 : index
      %c0_122 = arith.constant 0 : index
      %c0_123 = arith.constant 0 : index
      %263 = vector.load %arg28[%c0_121, %c0_122, %c0_123] : memref<1x16x32xf32, #tpu.memory_space<vmem>>, vector<1x16x32xf32>
      %264 = vector.shape_cast %263 : vector<1x16x32xf32> to vector<16x32xf32>
      %265 = vector.shape_cast %262 : vector<16x32xf32> to vector<1x16x32xf32>
      tpu.vector_store %arg28[%c0_121, %c0_122, %c0_123], %265 {strides = array<i32>} : memref<1x16x32xf32, #tpu.memory_space<vmem>>, vector<1x16x32xf32>,
    } else {
    }
    return
  }
  func.func @transform_0(%arg0: i32, %arg1: i32) -> (i32, i32, i32) {
    %c0_i32 = arith.constant 0 : i32
    %c0_i32_0 = arith.constant 0 : i32
    %c0_i32_1 = arith.constant 0 : i32
    return %arg0, %c0_i32, %c0_i32_0 : i32, i32, i32
  }
  func.func @transform_1(%arg0: i32, %arg1: i32) -> (i32, i32) {
    %c0_i32 = arith.constant 0 : i32
    %c0_i32_0 = arith.constant 0 : i32
    %c0_i32_1 = arith.constant 0 : i32
    return %c0_i32, %c0_i32_0 : i32, i32
  }
  func.func @transform_2(%arg0: i32, %arg1: i32) -> (i32, i32) {
    %c0_i32 = arith.constant 0 : i32
    %c0_i32_0 = arith.constant 0 : i32
    %c0_i32_1 = arith.constant 0 : i32
    return %c0_i32, %c0_i32_0 : i32, i32
  }
  func.func @transform_3(%arg0: i32, %arg1: i32) -> (i32, i32) {
    %c0_i32 = arith.constant 0 : i32
    %c0_i32_0 = arith.constant 0 : i32
    %c0_i32_1 = arith.constant 0 : i32
    return %c0_i32, %c0_i32_0 : i32, i32
  }
  func.func @transform_4(%arg0: i32, %arg1: i32) -> (i32, i32, i32) {
    %c0_i32 = arith.constant 0 : i32
    %c0_i32_0 = arith.constant 0 : i32
    %c0_i32_1 = arith.constant 0 : i32
    return %arg1, %c0_i32, %c0_i32_0 : i32, i32, i32
  }
  func.func @transform_5(%arg0: i32, %arg1: i32) -> (i32, i32, i32) {
    %c0_i32 = arith.constant 0 : i32
    %c0_i32_0 = arith.constant 0 : i32
    %c0_i32_1 = arith.constant 0 : i32
    return %arg1, %c0_i32, %c0_i32_0 : i32, i32, i32
  }
  func.func @transform_6(%arg0: i32, %arg1: i32) -> (i32, i32, i32) {
    %c0_i32 = arith.constant 0 : i32
    %c0_i32_0 = arith.constant 0 : i32
    %c0_i32_1 = arith.constant 0 : i32
    return %arg1, %c0_i32, %c0_i32_0 : i32, i32, i32
  }
  func.func @transform_7(%arg0: i32, %arg1: i32) -> (i32, i32, i32) {
    %c0_i32 = arith.constant 0 : i32
    %c0_i32_0 = arith.constant 0 : i32
    %c0_i32_1 = arith.constant 0 : i32
    return %arg1, %c0_i32, %c0_i32_0 : i32, i32, i32
  }
  func.func @transform_8(%arg0: i32, %arg1: i32) -> (i32, i32, i32) {
    %c0_i32 = arith.constant 0 : i32
    %c0_i32_0 = arith.constant 0 : i32
    %c0_i32_1 = arith.constant 0 : i32
    return %arg1, %c0_i32, %c0_i32_0 : i32, i32, i32
  }
  func.func @transform_9(%arg0: i32, %arg1: i32) -> (i32, i32, i32) {
    %c0_i32 = arith.constant 0 : i32
    %c0_i32_0 = arith.constant 0 : i32
    %c0_i32_1 = arith.constant 0 : i32
    return %arg1, %c0_i32, %c0_i32_0 : i32, i32, i32
  }
  func.func @transform_10(%arg0: i32, %arg1: i32) -> (i32, i32, i32) {
    %c0_i32 = arith.constant 0 : i32
    %c0_i32_0 = arith.constant 0 : i32
    %c0_i32_1 = arith.constant 0 : i32
    return %arg1, %c0_i32, %c0_i32_0 : i32, i32, i32
  }
  func.func @transform_11(%arg0: i32, %arg1: i32) -> (i32, i32, i32) {
    %c0_i32 = arith.constant 0 : i32
    %c0_i32_0 = arith.constant 0 : i32
    %c0_i32_1 = arith.constant 0 : i32
    return %arg1, %c0_i32, %c0_i32_0 : i32, i32, i32
  }
  func.func @transform_12(%arg0: i32, %arg1: i32) -> (i32, i32, i32) {
    %c0_i32 = arith.constant 0 : i32
    %c0_i32_0 = arith.constant 0 : i32
    %c0_i32_1 = arith.constant 0 : i32
    return %arg1, %c0_i32, %c0_i32_0 : i32, i32, i32
  }
  func.func @transform_13(%arg0: i32, %arg1: i32) -> (i32, i32, i32) {
    %c0_i32 = arith.constant 0 : i32
    %c0_i32_0 = arith.constant 0 : i32
    %c0_i32_1 = arith.constant 0 : i32
    return %arg1, %c0_i32, %c0_i32_0 : i32, i32, i32
  }
  func.func @transform_14(%arg0: i32, %arg1: i32) -> (i32, i32, i32) {
    %c0_i32 = arith.constant 0 : i32
    %c0_i32_0 = arith.constant 0 : i32
    %c0_i32_1 = arith.constant 0 : i32
    return %arg1, %c0_i32, %c0_i32_0 : i32, i32, i32
  }
  func.func @transform_15(%arg0: i32, %arg1: i32) -> (i32, i32, i32) {
    %c0_i32 = arith.constant 0 : i32
    %c0_i32_0 = arith.constant 0 : i32
    %c0_i32_1 = arith.constant 0 : i32
    return %arg1, %c0_i32, %c0_i32_0 : i32, i32, i32
  }
  func.func @transform_16(%arg0: i32, %arg1: i32) -> (i32, i32, i32) {
    %c0_i32 = arith.constant 0 : i32
    %c0_i32_0 = arith.constant 0 : i32
    %c0_i32_1 = arith.constant 0 : i32
    return %arg1, %c0_i32, %c0_i32_0 : i32, i32, i32
  }
  func.func @transform_17(%arg0: i32, %arg1: i32) -> (i32, i32, i32) {
    %c0_i32 = arith.constant 0 : i32
    %c0_i32_0 = arith.constant 0 : i32
    %c0_i32_1 = arith.constant 0 : i32
    return %arg1, %c0_i32, %c0_i32_0 : i32, i32, i32
  }
  func.func @transform_18(%arg0: i32, %arg1: i32) -> (i32, i32) {
    %c0_i32 = arith.constant 0 : i32
    %c0_i32_0 = arith.constant 0 : i32
    %c0_i32_1 = arith.constant 0 : i32
    return %c0_i32, %c0_i32_0 : i32, i32
  }
  func.func @transform_19(%arg0: i32, %arg1: i32) -> (i32, i32) {
    %c0_i32 = arith.constant 0 : i32
    %c0_i32_0 = arith.constant 0 : i32
    %c0_i32_1 = arith.constant 0 : i32
    return %c0_i32, %c0_i32_0 : i32, i32
  }
  func.func @transform_20(%arg0: i32, %arg1: i32) -> (i32, i32) {
    %c0_i32 = arith.constant 0 : i32
    %c0_i32_0 = arith.constant 0 : i32
    %c0_i32_1 = arith.constant 0 : i32
    return %c0_i32, %c0_i32_0 : i32, i32
  }
  func.func @transform_21(%arg0: i32, %arg1: i32) -> (i32, i32) {
    %c0_i32 = arith.constant 0 : i32
    %c0_i32_0 = arith.constant 0 : i32
    %c0_i32_1 = arith.constant 0 : i32
    return %c0_i32, %c0_i32_0 : i32, i32
  }
  func.func @transform_22(%arg0: i32, %arg1: i32) -> (i32, i32) {
    %c0_i32 = arith.constant 0 : i32
    %c0_i32_0 = arith.constant 0 : i32
    %c0_i32_1 = arith.constant 0 : i32
    return %c0_i32, %c0_i32_0 : i32, i32
  }
  func.func @transform_23(%arg0: i32, %arg1: i32) -> (i32, i32) {
    %c0_i32 = arith.constant 0 : i32
    %c0_i32_0 = arith.constant 0 : i32
    %c0_i32_1 = arith.constant 0 : i32
    return %c0_i32, %c0_i32_0 : i32, i32
  }
  func.func @transform_24(%arg0: i32, %arg1: i32) -> (i32, i32) {
    %c0_i32 = arith.constant 0 : i32
    %c0_i32_0 = arith.constant 0 : i32
    %c0_i32_1 = arith.constant 0 : i32
    return %c0_i32, %c0_i32_0 : i32, i32
  }
  func.func @transform_25(%arg0: i32, %arg1: i32) -> (i32, i32) {
    %c0_i32 = arith.constant 0 : i32
    %c0_i32_0 = arith.constant 0 : i32
    %c0_i32_1 = arith.constant 0 : i32
    return %c0_i32, %c0_i32_0 : i32, i32
  }
  func.func @transform_26(%arg0: i32, %arg1: i32) -> (i32, i32, i32) {
    %c0_i32 = arith.constant 0 : i32
    %c0_i32_0 = arith.constant 0 : i32
    %c0_i32_1 = arith.constant 0 : i32
    return %arg0, %c0_i32, %c0_i32_0 : i32, i32, i32
  }
}

module attributes {stable_mosaic.version = 11 : i64} {
  func.func @_decoder_kernel(%arg0: i32, %arg1: memref<1x16x32xf32, #tpu.memory_space<vmem>>, %arg2: memref<16x32xf32, #tpu.memory_space<vmem>>, %arg3: memref<1x32xf32, #tpu.memory_space<vmem>>, %arg4: memref<5x32xf32, #tpu.memory_space<vmem>>, %arg5: memref<4x4x32x32xbf16, #tpu.memory_space<vmem>>, %arg6: memref<4x4x1x32xf32, #tpu.memory_space<vmem>>, %arg7: memref<5x1x32xf32, #tpu.memory_space<vmem>>, %arg8: memref<5x1x32xf32, #tpu.memory_space<vmem>>, %arg9: memref<32x128xbf16, #tpu.memory_space<vmem>>, %arg10: memref<1x128xf32, #tpu.memory_space<vmem>>, %arg11: memref<128x32xbf16, #tpu.memory_space<vmem>>, %arg12: memref<1x32xf32, #tpu.memory_space<vmem>>, %arg13: memref<32x8xbf16, #tpu.memory_space<vmem>>, %arg14: memref<1x8xf32, #tpu.memory_space<vmem>>, %arg15: memref<32x32xbf16, #tpu.memory_space<vmem>>, %arg16: memref<1x32xf32, #tpu.memory_space<vmem>>, %arg17: memref<32x8xbf16, #tpu.memory_space<vmem>>, %arg18: memref<1x8xf32, #tpu.memory_space<vmem>>, %arg19: memref<16x1024xf32, #tpu.memory_space<vmem>>, %arg20: memref<1x1x1024xf32, #tpu.memory_space<vmem>>) attributes {dimension_semantics = [#tpu.dimension_semantics<parallel>], iteration_bounds = array<i64: 2>, scalar_prefetch = 0 : i64, scratch_operands = 0 : i64, tpu.core_type = #tpu.core_type<tc>, window_params = [{transform_indices = @transform_0, window_bounds = array<i64: 1, 16, 32>}, {pipeline_mode = #tpu.pipeline_mode<synchronous>, transform_indices = @transform_1, window_bounds = array<i64: 16, 32>}, {pipeline_mode = #tpu.pipeline_mode<synchronous>, transform_indices = @transform_2, window_bounds = array<i64: 1, 32>}, {pipeline_mode = #tpu.pipeline_mode<synchronous>, transform_indices = @transform_3, window_bounds = array<i64: 5, 32>}, {pipeline_mode = #tpu.pipeline_mode<synchronous>, transform_indices = @transform_4, window_bounds = array<i64: 4, 4, 32, 32>}, {pipeline_mode = #tpu.pipeline_mode<synchronous>, transform_indices = @transform_5, window_bounds = array<i64: 4, 4, 1, 32>}, {pipeline_mode = #tpu.pipeline_mode<synchronous>, transform_indices = @transform_6, window_bounds = array<i64: 5, 1, 32>}, {pipeline_mode = #tpu.pipeline_mode<synchronous>, transform_indices = @transform_7, window_bounds = array<i64: 5, 1, 32>}, {pipeline_mode = #tpu.pipeline_mode<synchronous>, transform_indices = @transform_8, window_bounds = array<i64: 32, 128>}, {pipeline_mode = #tpu.pipeline_mode<synchronous>, transform_indices = @transform_9, window_bounds = array<i64: 1, 128>}, {pipeline_mode = #tpu.pipeline_mode<synchronous>, transform_indices = @transform_10, window_bounds = array<i64: 128, 32>}, {pipeline_mode = #tpu.pipeline_mode<synchronous>, transform_indices = @transform_11, window_bounds = array<i64: 1, 32>}, {pipeline_mode = #tpu.pipeline_mode<synchronous>, transform_indices = @transform_12, window_bounds = array<i64: 32, 8>}, {pipeline_mode = #tpu.pipeline_mode<synchronous>, transform_indices = @transform_13, window_bounds = array<i64: 1, 8>}, {pipeline_mode = #tpu.pipeline_mode<synchronous>, transform_indices = @transform_14, window_bounds = array<i64: 32, 32>}, {pipeline_mode = #tpu.pipeline_mode<synchronous>, transform_indices = @transform_15, window_bounds = array<i64: 1, 32>}, {pipeline_mode = #tpu.pipeline_mode<synchronous>, transform_indices = @transform_16, window_bounds = array<i64: 32, 8>}, {pipeline_mode = #tpu.pipeline_mode<synchronous>, transform_indices = @transform_17, window_bounds = array<i64: 1, 8>}, {pipeline_mode = #tpu.pipeline_mode<synchronous>, transform_indices = @transform_18, window_bounds = array<i64: 16, 1024>}, {transform_indices = @transform_19, window_bounds = array<i64: 1, 1, 1024>}]} {
    %c0 = arith.constant 0 : index
    %c0_0 = arith.constant 0 : index
    %c0_1 = arith.constant 0 : index
    %c0_2 = arith.constant 0 : index
    %0 = vector.load %arg5[%c0, %c0_0, %c0_1, %c0_2] : memref<4x4x32x32xbf16, #tpu.memory_space<vmem>>, vector<4x4x32x32xbf16>
    %c0_3 = arith.constant 0 : index
    %c0_4 = arith.constant 0 : index
    %c0_5 = arith.constant 0 : index
    %c0_6 = arith.constant 0 : index
    %1 = vector.load %arg6[%c0_3, %c0_4, %c0_5, %c0_6] : memref<4x4x1x32xf32, #tpu.memory_space<vmem>>, vector<4x4x1x32xf32>
    %c0_7 = arith.constant 0 : index
    %c0_8 = arith.constant 0 : index
    %c0_9 = arith.constant 0 : index
    %2 = vector.load %arg7[%c0_7, %c0_8, %c0_9] : memref<5x1x32xf32, #tpu.memory_space<vmem>>, vector<5x1x32xf32>
    %c0_10 = arith.constant 0 : index
    %c0_11 = arith.constant 0 : index
    %c0_12 = arith.constant 0 : index
    %3 = vector.load %arg8[%c0_10, %c0_11, %c0_12] : memref<5x1x32xf32, #tpu.memory_space<vmem>>, vector<5x1x32xf32>
    %c0_13 = arith.constant 0 : index
    %c0_14 = arith.constant 0 : index
    %c0_15 = arith.constant 0 : index
    %4 = vector.load %arg1[%c0_13, %c0_14, %c0_15] : memref<1x16x32xf32, #tpu.memory_space<vmem>>, vector<1x16x32xf32>
    %5 = vector.shape_cast %4 : vector<1x16x32xf32> to vector<16x32xf32>
    %c0_16 = arith.constant 0 : index
    %c0_17 = arith.constant 0 : index
    %6 = vector.load %arg3[%c0_16, %c0_17] : memref<1x32xf32, #tpu.memory_space<vmem>>, vector<1x32xf32>
    %7 = vector.broadcast %6 : vector<1x32xf32> to vector<16x32xf32>
    %8 = arith.addf %5, %7 : vector<16x32xf32>
    %c0_18 = arith.constant 0 : index
    %c0_19 = arith.constant 0 : index
    %9 = vector.load %arg2[%c0_18, %c0_19] : memref<16x32xf32, #tpu.memory_space<vmem>>, vector<16x32xf32>
    %c0_20 = arith.constant 0 : index
    %c0_21 = arith.constant 0 : index
    %10 = vector.load %arg4[%c0_20, %c0_21] : memref<5x32xf32, #tpu.memory_space<vmem>>, vector<5x32xf32>
    %11 = arith.truncf %10 : vector<5x32xf32> to vector<5x32xbf16>
    %12 = vector.extract_strided_slice %0 {offsets = [0, 0, 0, 0], sizes = [1, 1, 32, 32], strides = [1, 1, 1, 1]} : vector<4x4x32x32xbf16> to vector<1x1x32x32xbf16>
    %13 = vector.shape_cast %12 : vector<1x1x32x32xbf16> to vector<32x32xbf16>
    %cst = arith.constant dense<0.000000e+00> : vector<5x32xf32>
    %14 = tpu.matmul %11, %13, %cst {dimension_numbers = #tpu.dot_dimension_numbers<[1], [0], [0], [1], [0, 0, 1, 1], [], []>} : vector<5x32xbf16>, vector<32x32xbf16>, vector<5x32xf32> -> vector<5x32xf32>
    %15 = vector.extract_strided_slice %1 {offsets = [0, 0, 0, 0], sizes = [1, 1, 1, 32], strides = [1, 1, 1, 1]} : vector<4x4x1x32xf32> to vector<1x1x1x32xf32>
    %16 = vector.shape_cast %15 : vector<1x1x1x32xf32> to vector<1x32xf32>
    %17 = vector.broadcast %16 : vector<1x32xf32> to vector<5x32xf32>
    %18 = arith.addf %14, %17 : vector<5x32xf32>
    %19 = arith.truncf %10 : vector<5x32xf32> to vector<5x32xbf16>
    %20 = vector.extract_strided_slice %0 {offsets = [0, 1, 0, 0], sizes = [1, 1, 32, 32], strides = [1, 1, 1, 1]} : vector<4x4x32x32xbf16> to vector<1x1x32x32xbf16>
    %21 = vector.shape_cast %20 : vector<1x1x32x32xbf16> to vector<32x32xbf16>
    %cst_22 = arith.constant dense<0.000000e+00> : vector<5x32xf32>
    %22 = tpu.matmul %19, %21, %cst_22 {dimension_numbers = #tpu.dot_dimension_numbers<[1], [0], [0], [1], [0, 0, 1, 1], [], []>} : vector<5x32xbf16>, vector<32x32xbf16>, vector<5x32xf32> -> vector<5x32xf32>
    %23 = vector.extract_strided_slice %1 {offsets = [0, 1, 0, 0], sizes = [1, 1, 1, 32], strides = [1, 1, 1, 1]} : vector<4x4x1x32xf32> to vector<1x1x1x32xf32>
    %24 = vector.shape_cast %23 : vector<1x1x1x32xf32> to vector<1x32xf32>
    %25 = vector.broadcast %24 : vector<1x32xf32> to vector<5x32xf32>
    %26 = arith.addf %22, %25 : vector<5x32xf32>
    %27 = arith.truncf %10 : vector<5x32xf32> to vector<5x32xbf16>
    %28 = vector.extract_strided_slice %0 {offsets = [0, 2, 0, 0], sizes = [1, 1, 32, 32], strides = [1, 1, 1, 1]} : vector<4x4x32x32xbf16> to vector<1x1x32x32xbf16>
    %29 = vector.shape_cast %28 : vector<1x1x32x32xbf16> to vector<32x32xbf16>
    %cst_23 = arith.constant dense<0.000000e+00> : vector<5x32xf32>
    %30 = tpu.matmul %27, %29, %cst_23 {dimension_numbers = #tpu.dot_dimension_numbers<[1], [0], [0], [1], [0, 0, 1, 1], [], []>} : vector<5x32xbf16>, vector<32x32xbf16>, vector<5x32xf32> -> vector<5x32xf32>
    %31 = vector.extract_strided_slice %1 {offsets = [0, 2, 0, 0], sizes = [1, 1, 1, 32], strides = [1, 1, 1, 1]} : vector<4x4x1x32xf32> to vector<1x1x1x32xf32>
    %32 = vector.shape_cast %31 : vector<1x1x1x32xf32> to vector<1x32xf32>
    %33 = vector.broadcast %32 : vector<1x32xf32> to vector<5x32xf32>
    %34 = arith.addf %30, %33 : vector<5x32xf32>
    %35 = vector.extract_strided_slice %0 {offsets = [0, 3, 0, 0], sizes = [1, 1, 32, 32], strides = [1, 1, 1, 1]} : vector<4x4x32x32xbf16> to vector<1x1x32x32xbf16>
    %36 = vector.shape_cast %35 : vector<1x1x32x32xbf16> to vector<32x32xbf16>
    %37 = vector.extract_strided_slice %1 {offsets = [0, 3, 0, 0], sizes = [1, 1, 1, 32], strides = [1, 1, 1, 1]} : vector<4x4x1x32xf32> to vector<1x1x1x32xf32>
    %38 = vector.shape_cast %37 : vector<1x1x1x32xf32> to vector<1x32xf32>
    %cst_24 = arith.constant 0.353553385 : f32
    %39 = vector.broadcast %cst_24 : f32 to vector<5x32xf32>
    %40 = arith.mulf %18, %39 : vector<5x32xf32>
    %41 = arith.truncf %40 : vector<5x32xf32> to vector<5x32xbf16>
    %42 = arith.truncf %26 : vector<5x32xf32> to vector<5x32xbf16>
    %43 = arith.truncf %34 : vector<5x32xf32> to vector<5x32xbf16>
    %44 = vector.extract_strided_slice %41 {offsets = [0, 0], sizes = [5, 8], strides = [1, 1]} : vector<5x32xbf16> to vector<5x8xbf16>
    %45 = vector.extract_strided_slice %42 {offsets = [0, 0], sizes = [5, 8], strides = [1, 1]} : vector<5x32xbf16> to vector<5x8xbf16>
    "tpu.trace_start"() <{level = 10 : i32, message = "qd,kd->qk"}> : () -> ()
    %cst_25 = arith.constant dense<0.000000e+00> : vector<5x5xf32>
    %46 = tpu.matmul %44, %45, %cst_25 {dimension_numbers = #tpu.dot_dimension_numbers<[1], [1], [0], [0], [0, 0, 1, 0], [], []>} : vector<5x8xbf16>, vector<5x8xbf16>, vector<5x5xf32> -> vector<5x5xf32>
    "tpu.trace_stop"() : () -> ()
    %cst_26 = arith.constant dense<0xFF800000> : vector<5xf32>
    %47 = vector.multi_reduction <maximumf>, %46, %cst_26 [1] : vector<5x5xf32> to vector<5xf32>
    %48 = vector.shape_cast %47 : vector<5xf32> to vector<5x1xf32>
    %49 = vector.broadcast %48 : vector<5x1xf32> to vector<5x5xf32>
    %50 = arith.subf %46, %49 : vector<5x5xf32>
    %51 = math.exp %50 : vector<5x5xf32>
    %cst_27 = arith.constant dense<0.000000e+00> : vector<5xf32>
    %52 = vector.multi_reduction <add>, %51, %cst_27 [1] : vector<5x5xf32> to vector<5xf32>
    %53 = vector.shape_cast %52 : vector<5xf32> to vector<5x1xf32>
    %54 = tpu.reciprocal %53 {approx = true} : vector<5x1xf32> -> vector<5x1xf32>
    %55 = vector.broadcast %54 : vector<5x1xf32> to vector<5x5xf32>
    %56 = arith.mulf %51, %55 : vector<5x5xf32>
    %57 = arith.truncf %56 : vector<5x5xf32> to vector<5x5xbf16>
    %58 = vector.extract_strided_slice %43 {offsets = [0, 0], sizes = [5, 8], strides = [1, 1]} : vector<5x32xbf16> to vector<5x8xbf16>
    %cst_28 = arith.constant dense<0.000000e+00> : vector<5x8xf32>
    %59 = tpu.matmul %57, %58, %cst_28 {dimension_numbers = #tpu.dot_dimension_numbers<[1], [0], [0], [1], [0, 0, 1, 1], [], []>} : vector<5x5xbf16>, vector<5x8xbf16>, vector<5x8xf32> -> vector<5x8xf32>
    %60 = vector.extract_strided_slice %41 {offsets = [0, 8], sizes = [5, 8], strides = [1, 1]} : vector<5x32xbf16> to vector<5x8xbf16>
    %61 = vector.extract_strided_slice %42 {offsets = [0, 8], sizes = [5, 8], strides = [1, 1]} : vector<5x32xbf16> to vector<5x8xbf16>
    "tpu.trace_start"() <{level = 10 : i32, message = "qd,kd->qk"}> : () -> ()
    %cst_29 = arith.constant dense<0.000000e+00> : vector<5x5xf32>
    %62 = tpu.matmul %60, %61, %cst_29 {dimension_numbers = #tpu.dot_dimension_numbers<[1], [1], [0], [0], [0, 0, 1, 0], [], []>} : vector<5x8xbf16>, vector<5x8xbf16>, vector<5x5xf32> -> vector<5x5xf32>
    "tpu.trace_stop"() : () -> ()
    %cst_30 = arith.constant dense<0xFF800000> : vector<5xf32>
    %63 = vector.multi_reduction <maximumf>, %62, %cst_30 [1] : vector<5x5xf32> to vector<5xf32>
    %64 = vector.shape_cast %63 : vector<5xf32> to vector<5x1xf32>
    %65 = vector.broadcast %64 : vector<5x1xf32> to vector<5x5xf32>
    %66 = arith.subf %62, %65 : vector<5x5xf32>
    %67 = math.exp %66 : vector<5x5xf32>
    %cst_31 = arith.constant dense<0.000000e+00> : vector<5xf32>
    %68 = vector.multi_reduction <add>, %67, %cst_31 [1] : vector<5x5xf32> to vector<5xf32>
    %69 = vector.shape_cast %68 : vector<5xf32> to vector<5x1xf32>
    %70 = tpu.reciprocal %69 {approx = true} : vector<5x1xf32> -> vector<5x1xf32>
    %71 = vector.broadcast %70 : vector<5x1xf32> to vector<5x5xf32>
    %72 = arith.mulf %67, %71 : vector<5x5xf32>
    %73 = arith.truncf %72 : vector<5x5xf32> to vector<5x5xbf16>
    %74 = vector.extract_strided_slice %43 {offsets = [0, 8], sizes = [5, 8], strides = [1, 1]} : vector<5x32xbf16> to vector<5x8xbf16>
    %cst_32 = arith.constant dense<0.000000e+00> : vector<5x8xf32>
    %75 = tpu.matmul %73, %74, %cst_32 {dimension_numbers = #tpu.dot_dimension_numbers<[1], [0], [0], [1], [0, 0, 1, 1], [], []>} : vector<5x5xbf16>, vector<5x8xbf16>, vector<5x8xf32> -> vector<5x8xf32>
    %76 = vector.extract_strided_slice %41 {offsets = [0, 16], sizes = [5, 8], strides = [1, 1]} : vector<5x32xbf16> to vector<5x8xbf16>
    %77 = vector.extract_strided_slice %42 {offsets = [0, 16], sizes = [5, 8], strides = [1, 1]} : vector<5x32xbf16> to vector<5x8xbf16>
    "tpu.trace_start"() <{level = 10 : i32, message = "qd,kd->qk"}> : () -> ()
    %cst_33 = arith.constant dense<0.000000e+00> : vector<5x5xf32>
    %78 = tpu.matmul %76, %77, %cst_33 {dimension_numbers = #tpu.dot_dimension_numbers<[1], [1], [0], [0], [0, 0, 1, 0], [], []>} : vector<5x8xbf16>, vector<5x8xbf16>, vector<5x5xf32> -> vector<5x5xf32>
    "tpu.trace_stop"() : () -> ()
    %cst_34 = arith.constant dense<0xFF800000> : vector<5xf32>
    %79 = vector.multi_reduction <maximumf>, %78, %cst_34 [1] : vector<5x5xf32> to vector<5xf32>
    %80 = vector.shape_cast %79 : vector<5xf32> to vector<5x1xf32>
    %81 = vector.broadcast %80 : vector<5x1xf32> to vector<5x5xf32>
    %82 = arith.subf %78, %81 : vector<5x5xf32>
    %83 = math.exp %82 : vector<5x5xf32>
    %cst_35 = arith.constant dense<0.000000e+00> : vector<5xf32>
    %84 = vector.multi_reduction <add>, %83, %cst_35 [1] : vector<5x5xf32> to vector<5xf32>
    %85 = vector.shape_cast %84 : vector<5xf32> to vector<5x1xf32>
    %86 = tpu.reciprocal %85 {approx = true} : vector<5x1xf32> -> vector<5x1xf32>
    %87 = vector.broadcast %86 : vector<5x1xf32> to vector<5x5xf32>
    %88 = arith.mulf %83, %87 : vector<5x5xf32>
    %89 = arith.truncf %88 : vector<5x5xf32> to vector<5x5xbf16>
    %90 = vector.extract_strided_slice %43 {offsets = [0, 16], sizes = [5, 8], strides = [1, 1]} : vector<5x32xbf16> to vector<5x8xbf16>
    %cst_36 = arith.constant dense<0.000000e+00> : vector<5x8xf32>
    %91 = tpu.matmul %89, %90, %cst_36 {dimension_numbers = #tpu.dot_dimension_numbers<[1], [0], [0], [1], [0, 0, 1, 1], [], []>} : vector<5x5xbf16>, vector<5x8xbf16>, vector<5x8xf32> -> vector<5x8xf32>
    %92 = vector.extract_strided_slice %41 {offsets = [0, 24], sizes = [5, 8], strides = [1, 1]} : vector<5x32xbf16> to vector<5x8xbf16>
    %93 = vector.extract_strided_slice %42 {offsets = [0, 24], sizes = [5, 8], strides = [1, 1]} : vector<5x32xbf16> to vector<5x8xbf16>
    "tpu.trace_start"() <{level = 10 : i32, message = "qd,kd->qk"}> : () -> ()
    %cst_37 = arith.constant dense<0.000000e+00> : vector<5x5xf32>
    %94 = tpu.matmul %92, %93, %cst_37 {dimension_numbers = #tpu.dot_dimension_numbers<[1], [1], [0], [0], [0, 0, 1, 0], [], []>} : vector<5x8xbf16>, vector<5x8xbf16>, vector<5x5xf32> -> vector<5x5xf32>
    "tpu.trace_stop"() : () -> ()
    %cst_38 = arith.constant dense<0xFF800000> : vector<5xf32>
    %95 = vector.multi_reduction <maximumf>, %94, %cst_38 [1] : vector<5x5xf32> to vector<5xf32>
    %96 = vector.shape_cast %95 : vector<5xf32> to vector<5x1xf32>
    %97 = vector.broadcast %96 : vector<5x1xf32> to vector<5x5xf32>
    %98 = arith.subf %94, %97 : vector<5x5xf32>
    %99 = math.exp %98 : vector<5x5xf32>
    %cst_39 = arith.constant dense<0.000000e+00> : vector<5xf32>
    %100 = vector.multi_reduction <add>, %99, %cst_39 [1] : vector<5x5xf32> to vector<5xf32>
    %101 = vector.shape_cast %100 : vector<5xf32> to vector<5x1xf32>
    %102 = tpu.reciprocal %101 {approx = true} : vector<5x1xf32> -> vector<5x1xf32>
    %103 = vector.broadcast %102 : vector<5x1xf32> to vector<5x5xf32>
    %104 = arith.mulf %99, %103 : vector<5x5xf32>
    %105 = arith.truncf %104 : vector<5x5xf32> to vector<5x5xbf16>
    %106 = vector.extract_strided_slice %43 {offsets = [0, 24], sizes = [5, 8], strides = [1, 1]} : vector<5x32xbf16> to vector<5x8xbf16>
    %cst_40 = arith.constant dense<0.000000e+00> : vector<5x8xf32>
    %107 = tpu.matmul %105, %106, %cst_40 {dimension_numbers = #tpu.dot_dimension_numbers<[1], [0], [0], [1], [0, 0, 1, 1], [], []>} : vector<5x5xbf16>, vector<5x8xbf16>, vector<5x8xf32> -> vector<5x8xf32>
    %108 = tpu.concatenate %59, %75, %91, %107 in 1 : vector<5x8xf32>, vector<5x8xf32>, vector<5x8xf32>, vector<5x8xf32> -> vector<5x32xf32>
    %109 = arith.truncf %108 : vector<5x32xf32> to vector<5x32xbf16>
    %cst_41 = arith.constant dense<0.000000e+00> : vector<5x32xf32>
    %110 = tpu.matmul %109, %36, %cst_41 {dimension_numbers = #tpu.dot_dimension_numbers<[1], [0], [0], [1], [0, 0, 1, 1], [], []>} : vector<5x32xbf16>, vector<32x32xbf16>, vector<5x32xf32> -> vector<5x32xf32>
    %111 = vector.broadcast %38 : vector<1x32xf32> to vector<5x32xf32>
    %112 = arith.addf %110, %111 : vector<5x32xf32>
    %113 = arith.addf %10, %112 : vector<5x32xf32>
    %114 = vector.extract_strided_slice %2 {offsets = [0, 0, 0], sizes = [1, 1, 32], strides = [1, 1, 1]} : vector<5x1x32xf32> to vector<1x1x32xf32>
    %115 = vector.shape_cast %114 : vector<1x1x32xf32> to vector<1x32xf32>
    %116 = vector.extract_strided_slice %3 {offsets = [0, 0, 0], sizes = [1, 1, 32], strides = [1, 1, 1]} : vector<5x1x32xf32> to vector<1x1x32xf32>
    %117 = vector.shape_cast %116 : vector<1x1x32xf32> to vector<1x32xf32>
    %cst_42 = arith.constant dense<0.000000e+00> : vector<5xf32>
    %118 = vector.multi_reduction <add>, %113, %cst_42 [1] : vector<5x32xf32> to vector<5xf32>
    %119 = vector.shape_cast %118 : vector<5xf32> to vector<5x1xf32>
    %cst_43 = arith.constant 3.200000e+01 : f32
    %120 = vector.broadcast %cst_43 : f32 to vector<5x1xf32>
    %121 = arith.divf %119, %120 : vector<5x1xf32>
    %122 = vector.broadcast %121 : vector<5x1xf32> to vector<5x32xf32>
    %123 = arith.subf %113, %122 : vector<5x32xf32>
    %124 = arith.mulf %123, %123 : vector<5x32xf32>
    %cst_44 = arith.constant dense<0.000000e+00> : vector<5xf32>
    %125 = vector.multi_reduction <add>, %124, %cst_44 [1] : vector<5x32xf32> to vector<5xf32>
    %126 = vector.shape_cast %125 : vector<5xf32> to vector<5x1xf32>
    %cst_45 = arith.constant 3.200000e+01 : f32
    %127 = vector.broadcast %cst_45 : f32 to vector<5x1xf32>
    %128 = arith.divf %126, %127 : vector<5x1xf32>
    %cst_46 = arith.constant 9.99999974E-6 : f32
    %129 = vector.broadcast %cst_46 : f32 to vector<5x1xf32>
    %130 = arith.addf %128, %129 : vector<5x1xf32>
    %131 = math.rsqrt %130 : vector<5x1xf32>
    %132 = vector.broadcast %131 : vector<5x1xf32> to vector<5x32xf32>
    %133 = arith.mulf %123, %132 : vector<5x32xf32>
    %134 = vector.broadcast %115 : vector<1x32xf32> to vector<5x32xf32>
    %135 = arith.mulf %133, %134 : vector<5x32xf32>
    %136 = vector.broadcast %117 : vector<1x32xf32> to vector<5x32xf32>
    %137 = arith.addf %135, %136 : vector<5x32xf32>
    %138 = arith.addf %8, %9 : vector<16x32xf32>
    %139 = arith.truncf %137 : vector<5x32xf32> to vector<5x32xbf16>
    %140 = vector.extract_strided_slice %0 {offsets = [1, 0, 0, 0], sizes = [1, 1, 32, 32], strides = [1, 1, 1, 1]} : vector<4x4x32x32xbf16> to vector<1x1x32x32xbf16>
    %141 = vector.shape_cast %140 : vector<1x1x32x32xbf16> to vector<32x32xbf16>
    %cst_47 = arith.constant dense<0.000000e+00> : vector<5x32xf32>
    %142 = tpu.matmul %139, %141, %cst_47 {dimension_numbers = #tpu.dot_dimension_numbers<[1], [0], [0], [1], [0, 0, 1, 1], [], []>} : vector<5x32xbf16>, vector<32x32xbf16>, vector<5x32xf32> -> vector<5x32xf32>
    %143 = vector.extract_strided_slice %1 {offsets = [1, 0, 0, 0], sizes = [1, 1, 1, 32], strides = [1, 1, 1, 1]} : vector<4x4x1x32xf32> to vector<1x1x1x32xf32>
    %144 = vector.shape_cast %143 : vector<1x1x1x32xf32> to vector<1x32xf32>
    %145 = vector.broadcast %144 : vector<1x32xf32> to vector<5x32xf32>
    %146 = arith.addf %142, %145 : vector<5x32xf32>
    %147 = arith.truncf %138 : vector<16x32xf32> to vector<16x32xbf16>
    %148 = vector.extract_strided_slice %0 {offsets = [1, 1, 0, 0], sizes = [1, 1, 32, 32], strides = [1, 1, 1, 1]} : vector<4x4x32x32xbf16> to vector<1x1x32x32xbf16>
    %149 = vector.shape_cast %148 : vector<1x1x32x32xbf16> to vector<32x32xbf16>
    %cst_48 = arith.constant dense<0.000000e+00> : vector<16x32xf32>
    %150 = tpu.matmul %147, %149, %cst_48 {dimension_numbers = #tpu.dot_dimension_numbers<[1], [0], [0], [1], [0, 0, 1, 1], [], []>} : vector<16x32xbf16>, vector<32x32xbf16>, vector<16x32xf32> -> vector<16x32xf32>
    %151 = vector.extract_strided_slice %1 {offsets = [1, 1, 0, 0], sizes = [1, 1, 1, 32], strides = [1, 1, 1, 1]} : vector<4x4x1x32xf32> to vector<1x1x1x32xf32>
    %152 = vector.shape_cast %151 : vector<1x1x1x32xf32> to vector<1x32xf32>
    %153 = vector.broadcast %152 : vector<1x32xf32> to vector<16x32xf32>
    %154 = arith.addf %150, %153 : vector<16x32xf32>
    %155 = arith.truncf %8 : vector<16x32xf32> to vector<16x32xbf16>
    %156 = vector.extract_strided_slice %0 {offsets = [1, 2, 0, 0], sizes = [1, 1, 32, 32], strides = [1, 1, 1, 1]} : vector<4x4x32x32xbf16> to vector<1x1x32x32xbf16>
    %157 = vector.shape_cast %156 : vector<1x1x32x32xbf16> to vector<32x32xbf16>
    %cst_49 = arith.constant dense<0.000000e+00> : vector<16x32xf32>
    %158 = tpu.matmul %155, %157, %cst_49 {dimension_numbers = #tpu.dot_dimension_numbers<[1], [0], [0], [1], [0, 0, 1, 1], [], []>} : vector<16x32xbf16>, vector<32x32xbf16>, vector<16x32xf32> -> vector<16x32xf32>
    %159 = vector.extract_strided_slice %1 {offsets = [1, 2, 0, 0], sizes = [1, 1, 1, 32], strides = [1, 1, 1, 1]} : vector<4x4x1x32xf32> to vector<1x1x1x32xf32>
    %160 = vector.shape_cast %159 : vector<1x1x1x32xf32> to vector<1x32xf32>
    %161 = vector.broadcast %160 : vector<1x32xf32> to vector<16x32xf32>
    %162 = arith.addf %158, %161 : vector<16x32xf32>
    %163 = vector.extract_strided_slice %0 {offsets = [1, 3, 0, 0], sizes = [1, 1, 32, 32], strides = [1, 1, 1, 1]} : vector<4x4x32x32xbf16> to vector<1x1x32x32xbf16>
    %164 = vector.shape_cast %163 : vector<1x1x32x32xbf16> to vector<32x32xbf16>
    %165 = vector.extract_strided_slice %1 {offsets = [1, 3, 0, 0], sizes = [1, 1, 1, 32], strides = [1, 1, 1, 1]} : vector<4x4x1x32xf32> to vector<1x1x1x32xf32>
    %166 = vector.shape_cast %165 : vector<1x1x1x32xf32> to vector<1x32xf32>
    %cst_50 = arith.constant 0.353553385 : f32
    %167 = vector.broadcast %cst_50 : f32 to vector<5x32xf32>
    %168 = arith.mulf %146, %167 : vector<5x32xf32>
    %169 = arith.truncf %168 : vector<5x32xf32> to vector<5x32xbf16>
    %170 = arith.truncf %154 : vector<16x32xf32> to vector<16x32xbf16>
    %171 = arith.truncf %162 : vector<16x32xf32> to vector<16x32xbf16>
    %172 = vector.extract_strided_slice %169 {offsets = [0, 0], sizes = [5, 8], strides = [1, 1]} : vector<5x32xbf16> to vector<5x8xbf16>
    %173 = vector.extract_strided_slice %170 {offsets = [0, 0], sizes = [16, 8], strides = [1, 1]} : vector<16x32xbf16> to vector<16x8xbf16>
    "tpu.trace_start"() <{level = 10 : i32, message = "qd,kd->qk"}> : () -> ()
    %cst_51 = arith.constant dense<0.000000e+00> : vector<5x16xf32>
    %174 = tpu.matmul %172, %173, %cst_51 {dimension_numbers = #tpu.dot_dimension_numbers<[1], [1], [0], [0], [0, 0, 1, 0], [], []>} : vector<5x8xbf16>, vector<16x8xbf16>, vector<5x16xf32> -> vector<5x16xf32>
    "tpu.trace_stop"() : () -> ()
    %cst_52 = arith.constant dense<0xFF800000> : vector<5xf32>
    %175 = vector.multi_reduction <maximumf>, %174, %cst_52 [1] : vector<5x16xf32> to vector<5xf32>
    %176 = vector.shape_cast %175 : vector<5xf32> to vector<5x1xf32>
    %177 = vector.broadcast %176 : vector<5x1xf32> to vector<5x16xf32>
    %178 = arith.subf %174, %177 : vector<5x16xf32>
    %179 = math.exp %178 : vector<5x16xf32>
    %cst_53 = arith.constant dense<0.000000e+00> : vector<5xf32>
    %180 = vector.multi_reduction <add>, %179, %cst_53 [1] : vector<5x16xf32> to vector<5xf32>
    %181 = vector.shape_cast %180 : vector<5xf32> to vector<5x1xf32>
    %182 = tpu.reciprocal %181 {approx = true} : vector<5x1xf32> -> vector<5x1xf32>
    %183 = vector.broadcast %182 : vector<5x1xf32> to vector<5x16xf32>
    %184 = arith.mulf %179, %183 : vector<5x16xf32>
    %185 = arith.truncf %184 : vector<5x16xf32> to vector<5x16xbf16>
    %186 = vector.extract_strided_slice %171 {offsets = [0, 0], sizes = [16, 8], strides = [1, 1]} : vector<16x32xbf16> to vector<16x8xbf16>
    %cst_54 = arith.constant dense<0.000000e+00> : vector<5x8xf32>
    %187 = tpu.matmul %185, %186, %cst_54 {dimension_numbers = #tpu.dot_dimension_numbers<[1], [0], [0], [1], [0, 0, 1, 1], [], []>} : vector<5x16xbf16>, vector<16x8xbf16>, vector<5x8xf32> -> vector<5x8xf32>
    %188 = vector.extract_strided_slice %169 {offsets = [0, 8], sizes = [5, 8], strides = [1, 1]} : vector<5x32xbf16> to vector<5x8xbf16>
    %189 = vector.extract_strided_slice %170 {offsets = [0, 8], sizes = [16, 8], strides = [1, 1]} : vector<16x32xbf16> to vector<16x8xbf16>
    "tpu.trace_start"() <{level = 10 : i32, message = "qd,kd->qk"}> : () -> ()
    %cst_55 = arith.constant dense<0.000000e+00> : vector<5x16xf32>
    %190 = tpu.matmul %188, %189, %cst_55 {dimension_numbers = #tpu.dot_dimension_numbers<[1], [1], [0], [0], [0, 0, 1, 0], [], []>} : vector<5x8xbf16>, vector<16x8xbf16>, vector<5x16xf32> -> vector<5x16xf32>
    "tpu.trace_stop"() : () -> ()
    %cst_56 = arith.constant dense<0xFF800000> : vector<5xf32>
    %191 = vector.multi_reduction <maximumf>, %190, %cst_56 [1] : vector<5x16xf32> to vector<5xf32>
    %192 = vector.shape_cast %191 : vector<5xf32> to vector<5x1xf32>
    %193 = vector.broadcast %192 : vector<5x1xf32> to vector<5x16xf32>
    %194 = arith.subf %190, %193 : vector<5x16xf32>
    %195 = math.exp %194 : vector<5x16xf32>
    %cst_57 = arith.constant dense<0.000000e+00> : vector<5xf32>
    %196 = vector.multi_reduction <add>, %195, %cst_57 [1] : vector<5x16xf32> to vector<5xf32>
    %197 = vector.shape_cast %196 : vector<5xf32> to vector<5x1xf32>
    %198 = tpu.reciprocal %197 {approx = true} : vector<5x1xf32> -> vector<5x1xf32>
    %199 = vector.broadcast %198 : vector<5x1xf32> to vector<5x16xf32>
    %200 = arith.mulf %195, %199 : vector<5x16xf32>
    %201 = arith.truncf %200 : vector<5x16xf32> to vector<5x16xbf16>
    %202 = vector.extract_strided_slice %171 {offsets = [0, 8], sizes = [16, 8], strides = [1, 1]} : vector<16x32xbf16> to vector<16x8xbf16>
    %cst_58 = arith.constant dense<0.000000e+00> : vector<5x8xf32>
    %203 = tpu.matmul %201, %202, %cst_58 {dimension_numbers = #tpu.dot_dimension_numbers<[1], [0], [0], [1], [0, 0, 1, 1], [], []>} : vector<5x16xbf16>, vector<16x8xbf16>, vector<5x8xf32> -> vector<5x8xf32>
    %204 = vector.extract_strided_slice %169 {offsets = [0, 16], sizes = [5, 8], strides = [1, 1]} : vector<5x32xbf16> to vector<5x8xbf16>
    %205 = vector.extract_strided_slice %170 {offsets = [0, 16], sizes = [16, 8], strides = [1, 1]} : vector<16x32xbf16> to vector<16x8xbf16>
    "tpu.trace_start"() <{level = 10 : i32, message = "qd,kd->qk"}> : () -> ()
    %cst_59 = arith.constant dense<0.000000e+00> : vector<5x16xf32>
    %206 = tpu.matmul %204, %205, %cst_59 {dimension_numbers = #tpu.dot_dimension_numbers<[1], [1], [0], [0], [0, 0, 1, 0], [], []>} : vector<5x8xbf16>, vector<16x8xbf16>, vector<5x16xf32> -> vector<5x16xf32>
    "tpu.trace_stop"() : () -> ()
    %cst_60 = arith.constant dense<0xFF800000> : vector<5xf32>
    %207 = vector.multi_reduction <maximumf>, %206, %cst_60 [1] : vector<5x16xf32> to vector<5xf32>
    %208 = vector.shape_cast %207 : vector<5xf32> to vector<5x1xf32>
    %209 = vector.broadcast %208 : vector<5x1xf32> to vector<5x16xf32>
    %210 = arith.subf %206, %209 : vector<5x16xf32>
    %211 = math.exp %210 : vector<5x16xf32>
    %cst_61 = arith.constant dense<0.000000e+00> : vector<5xf32>
    %212 = vector.multi_reduction <add>, %211, %cst_61 [1] : vector<5x16xf32> to vector<5xf32>
    %213 = vector.shape_cast %212 : vector<5xf32> to vector<5x1xf32>
    %214 = tpu.reciprocal %213 {approx = true} : vector<5x1xf32> -> vector<5x1xf32>
    %215 = vector.broadcast %214 : vector<5x1xf32> to vector<5x16xf32>
    %216 = arith.mulf %211, %215 : vector<5x16xf32>
    %217 = arith.truncf %216 : vector<5x16xf32> to vector<5x16xbf16>
    %218 = vector.extract_strided_slice %171 {offsets = [0, 16], sizes = [16, 8], strides = [1, 1]} : vector<16x32xbf16> to vector<16x8xbf16>
    %cst_62 = arith.constant dense<0.000000e+00> : vector<5x8xf32>
    %219 = tpu.matmul %217, %218, %cst_62 {dimension_numbers = #tpu.dot_dimension_numbers<[1], [0], [0], [1], [0, 0, 1, 1], [], []>} : vector<5x16xbf16>, vector<16x8xbf16>, vector<5x8xf32> -> vector<5x8xf32>
    %220 = vector.extract_strided_slice %169 {offsets = [0, 24], sizes = [5, 8], strides = [1, 1]} : vector<5x32xbf16> to vector<5x8xbf16>
    %221 = vector.extract_strided_slice %170 {offsets = [0, 24], sizes = [16, 8], strides = [1, 1]} : vector<16x32xbf16> to vector<16x8xbf16>
    "tpu.trace_start"() <{level = 10 : i32, message = "qd,kd->qk"}> : () -> ()
    %cst_63 = arith.constant dense<0.000000e+00> : vector<5x16xf32>
    %222 = tpu.matmul %220, %221, %cst_63 {dimension_numbers = #tpu.dot_dimension_numbers<[1], [1], [0], [0], [0, 0, 1, 0], [], []>} : vector<5x8xbf16>, vector<16x8xbf16>, vector<5x16xf32> -> vector<5x16xf32>
    "tpu.trace_stop"() : () -> ()
    %cst_64 = arith.constant dense<0xFF800000> : vector<5xf32>
    %223 = vector.multi_reduction <maximumf>, %222, %cst_64 [1] : vector<5x16xf32> to vector<5xf32>
    %224 = vector.shape_cast %223 : vector<5xf32> to vector<5x1xf32>
    %225 = vector.broadcast %224 : vector<5x1xf32> to vector<5x16xf32>
    %226 = arith.subf %222, %225 : vector<5x16xf32>
    %227 = math.exp %226 : vector<5x16xf32>
    %cst_65 = arith.constant dense<0.000000e+00> : vector<5xf32>
    %228 = vector.multi_reduction <add>, %227, %cst_65 [1] : vector<5x16xf32> to vector<5xf32>
    %229 = vector.shape_cast %228 : vector<5xf32> to vector<5x1xf32>
    %230 = tpu.reciprocal %229 {approx = true} : vector<5x1xf32> -> vector<5x1xf32>
    %231 = vector.broadcast %230 : vector<5x1xf32> to vector<5x16xf32>
    %232 = arith.mulf %227, %231 : vector<5x16xf32>
    %233 = arith.truncf %232 : vector<5x16xf32> to vector<5x16xbf16>
    %234 = vector.extract_strided_slice %171 {offsets = [0, 24], sizes = [16, 8], strides = [1, 1]} : vector<16x32xbf16> to vector<16x8xbf16>
    %cst_66 = arith.constant dense<0.000000e+00> : vector<5x8xf32>
    %235 = tpu.matmul %233, %234, %cst_66 {dimension_numbers = #tpu.dot_dimension_numbers<[1], [0], [0], [1], [0, 0, 1, 1], [], []>} : vector<5x16xbf16>, vector<16x8xbf16>, vector<5x8xf32> -> vector<5x8xf32>
    %236 = tpu.concatenate %187, %203, %219, %235 in 1 : vector<5x8xf32>, vector<5x8xf32>, vector<5x8xf32>, vector<5x8xf32> -> vector<5x32xf32>
    %237 = arith.truncf %236 : vector<5x32xf32> to vector<5x32xbf16>
    %cst_67 = arith.constant dense<0.000000e+00> : vector<5x32xf32>
    %238 = tpu.matmul %237, %164, %cst_67 {dimension_numbers = #tpu.dot_dimension_numbers<[1], [0], [0], [1], [0, 0, 1, 1], [], []>} : vector<5x32xbf16>, vector<32x32xbf16>, vector<5x32xf32> -> vector<5x32xf32>
    %239 = vector.broadcast %166 : vector<1x32xf32> to vector<5x32xf32>
    %240 = arith.addf %238, %239 : vector<5x32xf32>
    %241 = arith.addf %137, %240 : vector<5x32xf32>
    %242 = vector.extract_strided_slice %2 {offsets = [1, 0, 0], sizes = [1, 1, 32], strides = [1, 1, 1]} : vector<5x1x32xf32> to vector<1x1x32xf32>
    %243 = vector.shape_cast %242 : vector<1x1x32xf32> to vector<1x32xf32>
    %244 = vector.extract_strided_slice %3 {offsets = [1, 0, 0], sizes = [1, 1, 32], strides = [1, 1, 1]} : vector<5x1x32xf32> to vector<1x1x32xf32>
    %245 = vector.shape_cast %244 : vector<1x1x32xf32> to vector<1x32xf32>
    %cst_68 = arith.constant dense<0.000000e+00> : vector<5xf32>
    %246 = vector.multi_reduction <add>, %241, %cst_68 [1] : vector<5x32xf32> to vector<5xf32>
    %247 = vector.shape_cast %246 : vector<5xf32> to vector<5x1xf32>
    %cst_69 = arith.constant 3.200000e+01 : f32
    %248 = vector.broadcast %cst_69 : f32 to vector<5x1xf32>
    %249 = arith.divf %247, %248 : vector<5x1xf32>
    %250 = vector.broadcast %249 : vector<5x1xf32> to vector<5x32xf32>
    %251 = arith.subf %241, %250 : vector<5x32xf32>
    %252 = arith.mulf %251, %251 : vector<5x32xf32>
    %cst_70 = arith.constant dense<0.000000e+00> : vector<5xf32>
    %253 = vector.multi_reduction <add>, %252, %cst_70 [1] : vector<5x32xf32> to vector<5xf32>
    %254 = vector.shape_cast %253 : vector<5xf32> to vector<5x1xf32>
    %cst_71 = arith.constant 3.200000e+01 : f32
    %255 = vector.broadcast %cst_71 : f32 to vector<5x1xf32>
    %256 = arith.divf %254, %255 : vector<5x1xf32>
    %cst_72 = arith.constant 9.99999974E-6 : f32
    %257 = vector.broadcast %cst_72 : f32 to vector<5x1xf32>
    %258 = arith.addf %256, %257 : vector<5x1xf32>
    %259 = math.rsqrt %258 : vector<5x1xf32>
    %260 = vector.broadcast %259 : vector<5x1xf32> to vector<5x32xf32>
    %261 = arith.mulf %251, %260 : vector<5x32xf32>
    %262 = vector.broadcast %243 : vector<1x32xf32> to vector<5x32xf32>
    %263 = arith.mulf %261, %262 : vector<5x32xf32>
    %264 = vector.broadcast %245 : vector<1x32xf32> to vector<5x32xf32>
    %265 = arith.addf %263, %264 : vector<5x32xf32>
    %266 = arith.truncf %265 : vector<5x32xf32> to vector<5x32xbf16>
    %c0_73 = arith.constant 0 : index
    %c0_74 = arith.constant 0 : index
    %267 = vector.load %arg9[%c0_73, %c0_74] : memref<32x128xbf16, #tpu.memory_space<vmem>>, vector<32x128xbf16>
    %cst_75 = arith.constant dense<0.000000e+00> : vector<5x128xf32>
    %268 = tpu.matmul %266, %267, %cst_75 {dimension_numbers = #tpu.dot_dimension_numbers<[1], [0], [0], [1], [0, 0, 1, 1], [], []>} : vector<5x32xbf16>, vector<32x128xbf16>, vector<5x128xf32> -> vector<5x128xf32>
    %c0_76 = arith.constant 0 : index
    %c0_77 = arith.constant 0 : index
    %269 = vector.load %arg10[%c0_76, %c0_77] : memref<1x128xf32, #tpu.memory_space<vmem>>, vector<1x128xf32>
    %270 = vector.broadcast %269 : vector<1x128xf32> to vector<5x128xf32>
    %271 = arith.addf %268, %270 : vector<5x128xf32>
    %272 = arith.mulf %271, %271 : vector<5x128xf32>
    %273 = arith.mulf %271, %272 : vector<5x128xf32>
    %cst_78 = arith.constant 4.471500e-02 : f32
    %274 = vector.broadcast %cst_78 : f32 to vector<5x128xf32>
    %275 = arith.mulf %274, %273 : vector<5x128xf32>
    %276 = arith.addf %271, %275 : vector<5x128xf32>
    %cst_79 = arith.constant 0.797884583 : f32
    %277 = vector.broadcast %cst_79 : f32 to vector<5x128xf32>
    %278 = arith.mulf %277, %276 : vector<5x128xf32>
    %279 = math.tanh %278 : vector<5x128xf32>
    %cst_80 = arith.constant 1.000000e+00 : f32
    %280 = vector.broadcast %cst_80 : f32 to vector<5x128xf32>
    %281 = arith.addf %280, %279 : vector<5x128xf32>
    %cst_81 = arith.constant 5.000000e-01 : f32
    %282 = vector.broadcast %cst_81 : f32 to vector<5x128xf32>
    %283 = arith.mulf %282, %281 : vector<5x128xf32>
    %284 = arith.mulf %271, %283 : vector<5x128xf32>
    %285 = arith.truncf %284 : vector<5x128xf32> to vector<5x128xbf16>
    %c0_82 = arith.constant 0 : index
    %c0_83 = arith.constant 0 : index
    %286 = vector.load %arg11[%c0_82, %c0_83] : memref<128x32xbf16, #tpu.memory_space<vmem>>, vector<128x32xbf16>
    %cst_84 = arith.constant dense<0.000000e+00> : vector<5x32xf32>
    %287 = tpu.matmul %285, %286, %cst_84 {dimension_numbers = #tpu.dot_dimension_numbers<[1], [0], [0], [1], [0, 0, 1, 1], [], []>} : vector<5x128xbf16>, vector<128x32xbf16>, vector<5x32xf32> -> vector<5x32xf32>
    %c0_85 = arith.constant 0 : index
    %c0_86 = arith.constant 0 : index
    %288 = vector.load %arg12[%c0_85, %c0_86] : memref<1x32xf32, #tpu.memory_space<vmem>>, vector<1x32xf32>
    %289 = vector.broadcast %288 : vector<1x32xf32> to vector<5x32xf32>
    %290 = arith.addf %287, %289 : vector<5x32xf32>
    %291 = arith.addf %265, %290 : vector<5x32xf32>
    %292 = vector.extract_strided_slice %2 {offsets = [2, 0, 0], sizes = [1, 1, 32], strides = [1, 1, 1]} : vector<5x1x32xf32> to vector<1x1x32xf32>
    %293 = vector.shape_cast %292 : vector<1x1x32xf32> to vector<1x32xf32>
    %294 = vector.extract_strided_slice %3 {offsets = [2, 0, 0], sizes = [1, 1, 32], strides = [1, 1, 1]} : vector<5x1x32xf32> to vector<1x1x32xf32>
    %295 = vector.shape_cast %294 : vector<1x1x32xf32> to vector<1x32xf32>
    %cst_87 = arith.constant dense<0.000000e+00> : vector<5xf32>
    %296 = vector.multi_reduction <add>, %291, %cst_87 [1] : vector<5x32xf32> to vector<5xf32>
    %297 = vector.shape_cast %296 : vector<5xf32> to vector<5x1xf32>
    %cst_88 = arith.constant 3.200000e+01 : f32
    %298 = vector.broadcast %cst_88 : f32 to vector<5x1xf32>
    %299 = arith.divf %297, %298 : vector<5x1xf32>
    %300 = vector.broadcast %299 : vector<5x1xf32> to vector<5x32xf32>
    %301 = arith.subf %291, %300 : vector<5x32xf32>
    %302 = arith.mulf %301, %301 : vector<5x32xf32>
    %cst_89 = arith.constant dense<0.000000e+00> : vector<5xf32>
    %303 = vector.multi_reduction <add>, %302, %cst_89 [1] : vector<5x32xf32> to vector<5xf32>
    %304 = vector.shape_cast %303 : vector<5xf32> to vector<5x1xf32>
    %cst_90 = arith.constant 3.200000e+01 : f32
    %305 = vector.broadcast %cst_90 : f32 to vector<5x1xf32>
    %306 = arith.divf %304, %305 : vector<5x1xf32>
    %cst_91 = arith.constant 9.99999974E-6 : f32
    %307 = vector.broadcast %cst_91 : f32 to vector<5x1xf32>
    %308 = arith.addf %306, %307 : vector<5x1xf32>
    %309 = math.rsqrt %308 : vector<5x1xf32>
    %310 = vector.broadcast %309 : vector<5x1xf32> to vector<5x32xf32>
    %311 = arith.mulf %301, %310 : vector<5x32xf32>
    %312 = vector.broadcast %293 : vector<1x32xf32> to vector<5x32xf32>
    %313 = arith.mulf %311, %312 : vector<5x32xf32>
    %314 = vector.broadcast %295 : vector<1x32xf32> to vector<5x32xf32>
    %315 = arith.addf %313, %314 : vector<5x32xf32>
    %316 = arith.addf %8, %9 : vector<16x32xf32>
    %317 = arith.truncf %316 : vector<16x32xf32> to vector<16x32xbf16>
    %318 = vector.extract_strided_slice %0 {offsets = [2, 0, 0, 0], sizes = [1, 1, 32, 32], strides = [1, 1, 1, 1]} : vector<4x4x32x32xbf16> to vector<1x1x32x32xbf16>
    %319 = vector.shape_cast %318 : vector<1x1x32x32xbf16> to vector<32x32xbf16>
    %cst_92 = arith.constant dense<0.000000e+00> : vector<16x32xf32>
    %320 = tpu.matmul %317, %319, %cst_92 {dimension_numbers = #tpu.dot_dimension_numbers<[1], [0], [0], [1], [0, 0, 1, 1], [], []>} : vector<16x32xbf16>, vector<32x32xbf16>, vector<16x32xf32> -> vector<16x32xf32>
    %321 = vector.extract_strided_slice %1 {offsets = [2, 0, 0, 0], sizes = [1, 1, 1, 32], strides = [1, 1, 1, 1]} : vector<4x4x1x32xf32> to vector<1x1x1x32xf32>
    %322 = vector.shape_cast %321 : vector<1x1x1x32xf32> to vector<1x32xf32>
    %323 = vector.broadcast %322 : vector<1x32xf32> to vector<16x32xf32>
    %324 = arith.addf %320, %323 : vector<16x32xf32>
    %325 = arith.truncf %315 : vector<5x32xf32> to vector<5x32xbf16>
    %326 = vector.extract_strided_slice %0 {offsets = [2, 1, 0, 0], sizes = [1, 1, 32, 32], strides = [1, 1, 1, 1]} : vector<4x4x32x32xbf16> to vector<1x1x32x32xbf16>
    %327 = vector.shape_cast %326 : vector<1x1x32x32xbf16> to vector<32x32xbf16>
    %cst_93 = arith.constant dense<0.000000e+00> : vector<5x32xf32>
    %328 = tpu.matmul %325, %327, %cst_93 {dimension_numbers = #tpu.dot_dimension_numbers<[1], [0], [0], [1], [0, 0, 1, 1], [], []>} : vector<5x32xbf16>, vector<32x32xbf16>, vector<5x32xf32> -> vector<5x32xf32>
    %329 = vector.extract_strided_slice %1 {offsets = [2, 1, 0, 0], sizes = [1, 1, 1, 32], strides = [1, 1, 1, 1]} : vector<4x4x1x32xf32> to vector<1x1x1x32xf32>
    %330 = vector.shape_cast %329 : vector<1x1x1x32xf32> to vector<1x32xf32>
    %331 = vector.broadcast %330 : vector<1x32xf32> to vector<5x32xf32>
    %332 = arith.addf %328, %331 : vector<5x32xf32>
    %333 = arith.truncf %315 : vector<5x32xf32> to vector<5x32xbf16>
    %334 = vector.extract_strided_slice %0 {offsets = [2, 2, 0, 0], sizes = [1, 1, 32, 32], strides = [1, 1, 1, 1]} : vector<4x4x32x32xbf16> to vector<1x1x32x32xbf16>
    %335 = vector.shape_cast %334 : vector<1x1x32x32xbf16> to vector<32x32xbf16>
    %cst_94 = arith.constant dense<0.000000e+00> : vector<5x32xf32>
    %336 = tpu.matmul %333, %335, %cst_94 {dimension_numbers = #tpu.dot_dimension_numbers<[1], [0], [0], [1], [0, 0, 1, 1], [], []>} : vector<5x32xbf16>, vector<32x32xbf16>, vector<5x32xf32> -> vector<5x32xf32>
    %337 = vector.extract_strided_slice %1 {offsets = [2, 2, 0, 0], sizes = [1, 1, 1, 32], strides = [1, 1, 1, 1]} : vector<4x4x1x32xf32> to vector<1x1x1x32xf32>
    %338 = vector.shape_cast %337 : vector<1x1x1x32xf32> to vector<1x32xf32>
    %339 = vector.broadcast %338 : vector<1x32xf32> to vector<5x32xf32>
    %340 = arith.addf %336, %339 : vector<5x32xf32>
    %341 = vector.extract_strided_slice %0 {offsets = [2, 3, 0, 0], sizes = [1, 1, 32, 32], strides = [1, 1, 1, 1]} : vector<4x4x32x32xbf16> to vector<1x1x32x32xbf16>
    %342 = vector.shape_cast %341 : vector<1x1x32x32xbf16> to vector<32x32xbf16>
    %343 = vector.extract_strided_slice %1 {offsets = [2, 3, 0, 0], sizes = [1, 1, 1, 32], strides = [1, 1, 1, 1]} : vector<4x4x1x32xf32> to vector<1x1x1x32xf32>
    %344 = vector.shape_cast %343 : vector<1x1x1x32xf32> to vector<1x32xf32>
    %cst_95 = arith.constant 0.353553385 : f32
    %345 = vector.broadcast %cst_95 : f32 to vector<16x32xf32>
    %346 = arith.mulf %324, %345 : vector<16x32xf32>
    %347 = arith.truncf %346 : vector<16x32xf32> to vector<16x32xbf16>
    %348 = arith.truncf %332 : vector<5x32xf32> to vector<5x32xbf16>
    %349 = arith.truncf %340 : vector<5x32xf32> to vector<5x32xbf16>
    %350 = vector.extract_strided_slice %347 {offsets = [0, 0], sizes = [16, 8], strides = [1, 1]} : vector<16x32xbf16> to vector<16x8xbf16>
    %351 = vector.extract_strided_slice %348 {offsets = [0, 0], sizes = [5, 8], strides = [1, 1]} : vector<5x32xbf16> to vector<5x8xbf16>
    "tpu.trace_start"() <{level = 10 : i32, message = "qd,kd->qk"}> : () -> ()
    %cst_96 = arith.constant dense<0.000000e+00> : vector<16x5xf32>
    %352 = tpu.matmul %350, %351, %cst_96 {dimension_numbers = #tpu.dot_dimension_numbers<[1], [1], [0], [0], [0, 0, 1, 0], [], []>} : vector<16x8xbf16>, vector<5x8xbf16>, vector<16x5xf32> -> vector<16x5xf32>
    "tpu.trace_stop"() : () -> ()
    %cst_97 = arith.constant dense<0xFF800000> : vector<16xf32>
    %353 = vector.multi_reduction <maximumf>, %352, %cst_97 [1] : vector<16x5xf32> to vector<16xf32>
    %354 = vector.shape_cast %353 : vector<16xf32> to vector<16x1xf32>
    %355 = vector.broadcast %354 : vector<16x1xf32> to vector<16x5xf32>
    %356 = arith.subf %352, %355 : vector<16x5xf32>
    %357 = math.exp %356 : vector<16x5xf32>
    %cst_98 = arith.constant dense<0.000000e+00> : vector<16xf32>
    %358 = vector.multi_reduction <add>, %357, %cst_98 [1] : vector<16x5xf32> to vector<16xf32>
    %359 = vector.shape_cast %358 : vector<16xf32> to vector<16x1xf32>
    %360 = tpu.reciprocal %359 {approx = true} : vector<16x1xf32> -> vector<16x1xf32>
    %361 = vector.broadcast %360 : vector<16x1xf32> to vector<16x5xf32>
    %362 = arith.mulf %357, %361 : vector<16x5xf32>
    %363 = arith.truncf %362 : vector<16x5xf32> to vector<16x5xbf16>
    %364 = vector.extract_strided_slice %349 {offsets = [0, 0], sizes = [5, 8], strides = [1, 1]} : vector<5x32xbf16> to vector<5x8xbf16>
    %cst_99 = arith.constant dense<0.000000e+00> : vector<16x8xf32>
    %365 = tpu.matmul %363, %364, %cst_99 {dimension_numbers = #tpu.dot_dimension_numbers<[1], [0], [0], [1], [0, 0, 1, 1], [], []>} : vector<16x5xbf16>, vector<5x8xbf16>, vector<16x8xf32> -> vector<16x8xf32>
    %366 = vector.extract_strided_slice %347 {offsets = [0, 8], sizes = [16, 8], strides = [1, 1]} : vector<16x32xbf16> to vector<16x8xbf16>
    %367 = vector.extract_strided_slice %348 {offsets = [0, 8], sizes = [5, 8], strides = [1, 1]} : vector<5x32xbf16> to vector<5x8xbf16>
    "tpu.trace_start"() <{level = 10 : i32, message = "qd,kd->qk"}> : () -> ()
    %cst_100 = arith.constant dense<0.000000e+00> : vector<16x5xf32>
    %368 = tpu.matmul %366, %367, %cst_100 {dimension_numbers = #tpu.dot_dimension_numbers<[1], [1], [0], [0], [0, 0, 1, 0], [], []>} : vector<16x8xbf16>, vector<5x8xbf16>, vector<16x5xf32> -> vector<16x5xf32>
    "tpu.trace_stop"() : () -> ()
    %cst_101 = arith.constant dense<0xFF800000> : vector<16xf32>
    %369 = vector.multi_reduction <maximumf>, %368, %cst_101 [1] : vector<16x5xf32> to vector<16xf32>
    %370 = vector.shape_cast %369 : vector<16xf32> to vector<16x1xf32>
    %371 = vector.broadcast %370 : vector<16x1xf32> to vector<16x5xf32>
    %372 = arith.subf %368, %371 : vector<16x5xf32>
    %373 = math.exp %372 : vector<16x5xf32>
    %cst_102 = arith.constant dense<0.000000e+00> : vector<16xf32>
    %374 = vector.multi_reduction <add>, %373, %cst_102 [1] : vector<16x5xf32> to vector<16xf32>
    %375 = vector.shape_cast %374 : vector<16xf32> to vector<16x1xf32>
    %376 = tpu.reciprocal %375 {approx = true} : vector<16x1xf32> -> vector<16x1xf32>
    %377 = vector.broadcast %376 : vector<16x1xf32> to vector<16x5xf32>
    %378 = arith.mulf %373, %377 : vector<16x5xf32>
    %379 = arith.truncf %378 : vector<16x5xf32> to vector<16x5xbf16>
    %380 = vector.extract_strided_slice %349 {offsets = [0, 8], sizes = [5, 8], strides = [1, 1]} : vector<5x32xbf16> to vector<5x8xbf16>
    %cst_103 = arith.constant dense<0.000000e+00> : vector<16x8xf32>
    %381 = tpu.matmul %379, %380, %cst_103 {dimension_numbers = #tpu.dot_dimension_numbers<[1], [0], [0], [1], [0, 0, 1, 1], [], []>} : vector<16x5xbf16>, vector<5x8xbf16>, vector<16x8xf32> -> vector<16x8xf32>
    %382 = vector.extract_strided_slice %347 {offsets = [0, 16], sizes = [16, 8], strides = [1, 1]} : vector<16x32xbf16> to vector<16x8xbf16>
    %383 = vector.extract_strided_slice %348 {offsets = [0, 16], sizes = [5, 8], strides = [1, 1]} : vector<5x32xbf16> to vector<5x8xbf16>
    "tpu.trace_start"() <{level = 10 : i32, message = "qd,kd->qk"}> : () -> ()
    %cst_104 = arith.constant dense<0.000000e+00> : vector<16x5xf32>
    %384 = tpu.matmul %382, %383, %cst_104 {dimension_numbers = #tpu.dot_dimension_numbers<[1], [1], [0], [0], [0, 0, 1, 0], [], []>} : vector<16x8xbf16>, vector<5x8xbf16>, vector<16x5xf32> -> vector<16x5xf32>
    "tpu.trace_stop"() : () -> ()
    %cst_105 = arith.constant dense<0xFF800000> : vector<16xf32>
    %385 = vector.multi_reduction <maximumf>, %384, %cst_105 [1] : vector<16x5xf32> to vector<16xf32>
    %386 = vector.shape_cast %385 : vector<16xf32> to vector<16x1xf32>
    %387 = vector.broadcast %386 : vector<16x1xf32> to vector<16x5xf32>
    %388 = arith.subf %384, %387 : vector<16x5xf32>
    %389 = math.exp %388 : vector<16x5xf32>
    %cst_106 = arith.constant dense<0.000000e+00> : vector<16xf32>
    %390 = vector.multi_reduction <add>, %389, %cst_106 [1] : vector<16x5xf32> to vector<16xf32>
    %391 = vector.shape_cast %390 : vector<16xf32> to vector<16x1xf32>
    %392 = tpu.reciprocal %391 {approx = true} : vector<16x1xf32> -> vector<16x1xf32>
    %393 = vector.broadcast %392 : vector<16x1xf32> to vector<16x5xf32>
    %394 = arith.mulf %389, %393 : vector<16x5xf32>
    %395 = arith.truncf %394 : vector<16x5xf32> to vector<16x5xbf16>
    %396 = vector.extract_strided_slice %349 {offsets = [0, 16], sizes = [5, 8], strides = [1, 1]} : vector<5x32xbf16> to vector<5x8xbf16>
    %cst_107 = arith.constant dense<0.000000e+00> : vector<16x8xf32>
    %397 = tpu.matmul %395, %396, %cst_107 {dimension_numbers = #tpu.dot_dimension_numbers<[1], [0], [0], [1], [0, 0, 1, 1], [], []>} : vector<16x5xbf16>, vector<5x8xbf16>, vector<16x8xf32> -> vector<16x8xf32>
    %398 = vector.extract_strided_slice %347 {offsets = [0, 24], sizes = [16, 8], strides = [1, 1]} : vector<16x32xbf16> to vector<16x8xbf16>
    %399 = vector.extract_strided_slice %348 {offsets = [0, 24], sizes = [5, 8], strides = [1, 1]} : vector<5x32xbf16> to vector<5x8xbf16>
    "tpu.trace_start"() <{level = 10 : i32, message = "qd,kd->qk"}> : () -> ()
    %cst_108 = arith.constant dense<0.000000e+00> : vector<16x5xf32>
    %400 = tpu.matmul %398, %399, %cst_108 {dimension_numbers = #tpu.dot_dimension_numbers<[1], [1], [0], [0], [0, 0, 1, 0], [], []>} : vector<16x8xbf16>, vector<5x8xbf16>, vector<16x5xf32> -> vector<16x5xf32>
    "tpu.trace_stop"() : () -> ()
    %cst_109 = arith.constant dense<0xFF800000> : vector<16xf32>
    %401 = vector.multi_reduction <maximumf>, %400, %cst_109 [1] : vector<16x5xf32> to vector<16xf32>
    %402 = vector.shape_cast %401 : vector<16xf32> to vector<16x1xf32>
    %403 = vector.broadcast %402 : vector<16x1xf32> to vector<16x5xf32>
    %404 = arith.subf %400, %403 : vector<16x5xf32>
    %405 = math.exp %404 : vector<16x5xf32>
    %cst_110 = arith.constant dense<0.000000e+00> : vector<16xf32>
    %406 = vector.multi_reduction <add>, %405, %cst_110 [1] : vector<16x5xf32> to vector<16xf32>
    %407 = vector.shape_cast %406 : vector<16xf32> to vector<16x1xf32>
    %408 = tpu.reciprocal %407 {approx = true} : vector<16x1xf32> -> vector<16x1xf32>
    %409 = vector.broadcast %408 : vector<16x1xf32> to vector<16x5xf32>
    %410 = arith.mulf %405, %409 : vector<16x5xf32>
    %411 = arith.truncf %410 : vector<16x5xf32> to vector<16x5xbf16>
    %412 = vector.extract_strided_slice %349 {offsets = [0, 24], sizes = [5, 8], strides = [1, 1]} : vector<5x32xbf16> to vector<5x8xbf16>
    %cst_111 = arith.constant dense<0.000000e+00> : vector<16x8xf32>
    %413 = tpu.matmul %411, %412, %cst_111 {dimension_numbers = #tpu.dot_dimension_numbers<[1], [0], [0], [1], [0, 0, 1, 1], [], []>} : vector<16x5xbf16>, vector<5x8xbf16>, vector<16x8xf32> -> vector<16x8xf32>
    %414 = tpu.concatenate %365, %381, %397, %413 in 1 : vector<16x8xf32>, vector<16x8xf32>, vector<16x8xf32>, vector<16x8xf32> -> vector<16x32xf32>
    %415 = arith.truncf %414 : vector<16x32xf32> to vector<16x32xbf16>
    %cst_112 = arith.constant dense<0.000000e+00> : vector<16x32xf32>
    %416 = tpu.matmul %415, %342, %cst_112 {dimension_numbers = #tpu.dot_dimension_numbers<[1], [0], [0], [1], [0, 0, 1, 1], [], []>} : vector<16x32xbf16>, vector<32x32xbf16>, vector<16x32xf32> -> vector<16x32xf32>
    %417 = vector.broadcast %344 : vector<1x32xf32> to vector<16x32xf32>
    %418 = arith.addf %416, %417 : vector<16x32xf32>
    %419 = arith.addf %8, %418 : vector<16x32xf32>
    %420 = vector.extract_strided_slice %2 {offsets = [3, 0, 0], sizes = [1, 1, 32], strides = [1, 1, 1]} : vector<5x1x32xf32> to vector<1x1x32xf32>
    %421 = vector.shape_cast %420 : vector<1x1x32xf32> to vector<1x32xf32>
    %422 = vector.extract_strided_slice %3 {offsets = [3, 0, 0], sizes = [1, 1, 32], strides = [1, 1, 1]} : vector<5x1x32xf32> to vector<1x1x32xf32>
    %423 = vector.shape_cast %422 : vector<1x1x32xf32> to vector<1x32xf32>
    %cst_113 = arith.constant dense<0.000000e+00> : vector<16xf32>
    %424 = vector.multi_reduction <add>, %419, %cst_113 [1] : vector<16x32xf32> to vector<16xf32>
    %425 = vector.shape_cast %424 : vector<16xf32> to vector<16x1xf32>
    %cst_114 = arith.constant 3.200000e+01 : f32
    %426 = vector.broadcast %cst_114 : f32 to vector<16x1xf32>
    %427 = arith.divf %425, %426 : vector<16x1xf32>
    %428 = vector.broadcast %427 : vector<16x1xf32> to vector<16x32xf32>
    %429 = arith.subf %419, %428 : vector<16x32xf32>
    %430 = arith.mulf %429, %429 : vector<16x32xf32>
    %cst_115 = arith.constant dense<0.000000e+00> : vector<16xf32>
    %431 = vector.multi_reduction <add>, %430, %cst_115 [1] : vector<16x32xf32> to vector<16xf32>
    %432 = vector.shape_cast %431 : vector<16xf32> to vector<16x1xf32>
    %cst_116 = arith.constant 3.200000e+01 : f32
    %433 = vector.broadcast %cst_116 : f32 to vector<16x1xf32>
    %434 = arith.divf %432, %433 : vector<16x1xf32>
    %cst_117 = arith.constant 9.99999974E-6 : f32
    %435 = vector.broadcast %cst_117 : f32 to vector<16x1xf32>
    %436 = arith.addf %434, %435 : vector<16x1xf32>
    %437 = math.rsqrt %436 : vector<16x1xf32>
    %438 = vector.broadcast %437 : vector<16x1xf32> to vector<16x32xf32>
    %439 = arith.mulf %429, %438 : vector<16x32xf32>
    %440 = vector.broadcast %421 : vector<1x32xf32> to vector<16x32xf32>
    %441 = arith.mulf %439, %440 : vector<16x32xf32>
    %442 = vector.broadcast %423 : vector<1x32xf32> to vector<16x32xf32>
    %443 = arith.addf %441, %442 : vector<16x32xf32>
    %444 = arith.addf %443, %9 : vector<16x32xf32>
    %445 = arith.truncf %315 : vector<5x32xf32> to vector<5x32xbf16>
    %446 = vector.extract_strided_slice %0 {offsets = [3, 0, 0, 0], sizes = [1, 1, 32, 32], strides = [1, 1, 1, 1]} : vector<4x4x32x32xbf16> to vector<1x1x32x32xbf16>
    %447 = vector.shape_cast %446 : vector<1x1x32x32xbf16> to vector<32x32xbf16>
    %cst_118 = arith.constant dense<0.000000e+00> : vector<5x32xf32>
    %448 = tpu.matmul %445, %447, %cst_118 {dimension_numbers = #tpu.dot_dimension_numbers<[1], [0], [0], [1], [0, 0, 1, 1], [], []>} : vector<5x32xbf16>, vector<32x32xbf16>, vector<5x32xf32> -> vector<5x32xf32>
    %449 = vector.extract_strided_slice %1 {offsets = [3, 0, 0, 0], sizes = [1, 1, 1, 32], strides = [1, 1, 1, 1]} : vector<4x4x1x32xf32> to vector<1x1x1x32xf32>
    %450 = vector.shape_cast %449 : vector<1x1x1x32xf32> to vector<1x32xf32>
    %451 = vector.broadcast %450 : vector<1x32xf32> to vector<5x32xf32>
    %452 = arith.addf %448, %451 : vector<5x32xf32>
    %453 = arith.truncf %444 : vector<16x32xf32> to vector<16x32xbf16>
    %454 = vector.extract_strided_slice %0 {offsets = [3, 1, 0, 0], sizes = [1, 1, 32, 32], strides = [1, 1, 1, 1]} : vector<4x4x32x32xbf16> to vector<1x1x32x32xbf16>
    %455 = vector.shape_cast %454 : vector<1x1x32x32xbf16> to vector<32x32xbf16>
    %cst_119 = arith.constant dense<0.000000e+00> : vector<16x32xf32>
    %456 = tpu.matmul %453, %455, %cst_119 {dimension_numbers = #tpu.dot_dimension_numbers<[1], [0], [0], [1], [0, 0, 1, 1], [], []>} : vector<16x32xbf16>, vector<32x32xbf16>, vector<16x32xf32> -> vector<16x32xf32>
    %457 = vector.extract_strided_slice %1 {offsets = [3, 1, 0, 0], sizes = [1, 1, 1, 32], strides = [1, 1, 1, 1]} : vector<4x4x1x32xf32> to vector<1x1x1x32xf32>
    %458 = vector.shape_cast %457 : vector<1x1x1x32xf32> to vector<1x32xf32>
    %459 = vector.broadcast %458 : vector<1x32xf32> to vector<16x32xf32>
    %460 = arith.addf %456, %459 : vector<16x32xf32>
    %461 = arith.truncf %443 : vector<16x32xf32> to vector<16x32xbf16>
    %462 = vector.extract_strided_slice %0 {offsets = [3, 2, 0, 0], sizes = [1, 1, 32, 32], strides = [1, 1, 1, 1]} : vector<4x4x32x32xbf16> to vector<1x1x32x32xbf16>
    %463 = vector.shape_cast %462 : vector<1x1x32x32xbf16> to vector<32x32xbf16>
    %cst_120 = arith.constant dense<0.000000e+00> : vector<16x32xf32>
    %464 = tpu.matmul %461, %463, %cst_120 {dimension_numbers = #tpu.dot_dimension_numbers<[1], [0], [0], [1], [0, 0, 1, 1], [], []>} : vector<16x32xbf16>, vector<32x32xbf16>, vector<16x32xf32> -> vector<16x32xf32>
    %465 = vector.extract_strided_slice %1 {offsets = [3, 2, 0, 0], sizes = [1, 1, 1, 32], strides = [1, 1, 1, 1]} : vector<4x4x1x32xf32> to vector<1x1x1x32xf32>
    %466 = vector.shape_cast %465 : vector<1x1x1x32xf32> to vector<1x32xf32>
    %467 = vector.broadcast %466 : vector<1x32xf32> to vector<16x32xf32>
    %468 = arith.addf %464, %467 : vector<16x32xf32>
    %469 = vector.extract_strided_slice %0 {offsets = [3, 3, 0, 0], sizes = [1, 1, 32, 32], strides = [1, 1, 1, 1]} : vector<4x4x32x32xbf16> to vector<1x1x32x32xbf16>
    %470 = vector.shape_cast %469 : vector<1x1x32x32xbf16> to vector<32x32xbf16>
    %471 = vector.extract_strided_slice %1 {offsets = [3, 3, 0, 0], sizes = [1, 1, 1, 32], strides = [1, 1, 1, 1]} : vector<4x4x1x32xf32> to vector<1x1x1x32xf32>
    %472 = vector.shape_cast %471 : vector<1x1x1x32xf32> to vector<1x32xf32>
    %cst_121 = arith.constant 0.353553385 : f32
    %473 = vector.broadcast %cst_121 : f32 to vector<5x32xf32>
    %474 = arith.mulf %452, %473 : vector<5x32xf32>
    %475 = arith.truncf %474 : vector<5x32xf32> to vector<5x32xbf16>
    %476 = arith.truncf %460 : vector<16x32xf32> to vector<16x32xbf16>
    %477 = arith.truncf %468 : vector<16x32xf32> to vector<16x32xbf16>
    %478 = vector.extract_strided_slice %475 {offsets = [0, 0], sizes = [5, 8], strides = [1, 1]} : vector<5x32xbf16> to vector<5x8xbf16>
    %479 = vector.extract_strided_slice %476 {offsets = [0, 0], sizes = [16, 8], strides = [1, 1]} : vector<16x32xbf16> to vector<16x8xbf16>
    "tpu.trace_start"() <{level = 10 : i32, message = "qd,kd->qk"}> : () -> ()
    %cst_122 = arith.constant dense<0.000000e+00> : vector<5x16xf32>
    %480 = tpu.matmul %478, %479, %cst_122 {dimension_numbers = #tpu.dot_dimension_numbers<[1], [1], [0], [0], [0, 0, 1, 0], [], []>} : vector<5x8xbf16>, vector<16x8xbf16>, vector<5x16xf32> -> vector<5x16xf32>
    "tpu.trace_stop"() : () -> ()
    %cst_123 = arith.constant dense<0xFF800000> : vector<5xf32>
    %481 = vector.multi_reduction <maximumf>, %480, %cst_123 [1] : vector<5x16xf32> to vector<5xf32>
    %482 = vector.shape_cast %481 : vector<5xf32> to vector<5x1xf32>
    %483 = vector.broadcast %482 : vector<5x1xf32> to vector<5x16xf32>
    %484 = arith.subf %480, %483 : vector<5x16xf32>
    %485 = math.exp %484 : vector<5x16xf32>
    %cst_124 = arith.constant dense<0.000000e+00> : vector<5xf32>
    %486 = vector.multi_reduction <add>, %485, %cst_124 [1] : vector<5x16xf32> to vector<5xf32>
    %487 = vector.shape_cast %486 : vector<5xf32> to vector<5x1xf32>
    %488 = tpu.reciprocal %487 {approx = true} : vector<5x1xf32> -> vector<5x1xf32>
    %489 = vector.broadcast %488 : vector<5x1xf32> to vector<5x16xf32>
    %490 = arith.mulf %485, %489 : vector<5x16xf32>
    %491 = arith.truncf %490 : vector<5x16xf32> to vector<5x16xbf16>
    %492 = vector.extract_strided_slice %477 {offsets = [0, 0], sizes = [16, 8], strides = [1, 1]} : vector<16x32xbf16> to vector<16x8xbf16>
    %cst_125 = arith.constant dense<0.000000e+00> : vector<5x8xf32>
    %493 = tpu.matmul %491, %492, %cst_125 {dimension_numbers = #tpu.dot_dimension_numbers<[1], [0], [0], [1], [0, 0, 1, 1], [], []>} : vector<5x16xbf16>, vector<16x8xbf16>, vector<5x8xf32> -> vector<5x8xf32>
    %494 = vector.extract_strided_slice %475 {offsets = [0, 8], sizes = [5, 8], strides = [1, 1]} : vector<5x32xbf16> to vector<5x8xbf16>
    %495 = vector.extract_strided_slice %476 {offsets = [0, 8], sizes = [16, 8], strides = [1, 1]} : vector<16x32xbf16> to vector<16x8xbf16>
    "tpu.trace_start"() <{level = 10 : i32, message = "qd,kd->qk"}> : () -> ()
    %cst_126 = arith.constant dense<0.000000e+00> : vector<5x16xf32>
    %496 = tpu.matmul %494, %495, %cst_126 {dimension_numbers = #tpu.dot_dimension_numbers<[1], [1], [0], [0], [0, 0, 1, 0], [], []>} : vector<5x8xbf16>, vector<16x8xbf16>, vector<5x16xf32> -> vector<5x16xf32>
    "tpu.trace_stop"() : () -> ()
    %cst_127 = arith.constant dense<0xFF800000> : vector<5xf32>
    %497 = vector.multi_reduction <maximumf>, %496, %cst_127 [1] : vector<5x16xf32> to vector<5xf32>
    %498 = vector.shape_cast %497 : vector<5xf32> to vector<5x1xf32>
    %499 = vector.broadcast %498 : vector<5x1xf32> to vector<5x16xf32>
    %500 = arith.subf %496, %499 : vector<5x16xf32>
    %501 = math.exp %500 : vector<5x16xf32>
    %cst_128 = arith.constant dense<0.000000e+00> : vector<5xf32>
    %502 = vector.multi_reduction <add>, %501, %cst_128 [1] : vector<5x16xf32> to vector<5xf32>
    %503 = vector.shape_cast %502 : vector<5xf32> to vector<5x1xf32>
    %504 = tpu.reciprocal %503 {approx = true} : vector<5x1xf32> -> vector<5x1xf32>
    %505 = vector.broadcast %504 : vector<5x1xf32> to vector<5x16xf32>
    %506 = arith.mulf %501, %505 : vector<5x16xf32>
    %507 = arith.truncf %506 : vector<5x16xf32> to vector<5x16xbf16>
    %508 = vector.extract_strided_slice %477 {offsets = [0, 8], sizes = [16, 8], strides = [1, 1]} : vector<16x32xbf16> to vector<16x8xbf16>
    %cst_129 = arith.constant dense<0.000000e+00> : vector<5x8xf32>
    %509 = tpu.matmul %507, %508, %cst_129 {dimension_numbers = #tpu.dot_dimension_numbers<[1], [0], [0], [1], [0, 0, 1, 1], [], []>} : vector<5x16xbf16>, vector<16x8xbf16>, vector<5x8xf32> -> vector<5x8xf32>
    %510 = vector.extract_strided_slice %475 {offsets = [0, 16], sizes = [5, 8], strides = [1, 1]} : vector<5x32xbf16> to vector<5x8xbf16>
    %511 = vector.extract_strided_slice %476 {offsets = [0, 16], sizes = [16, 8], strides = [1, 1]} : vector<16x32xbf16> to vector<16x8xbf16>
    "tpu.trace_start"() <{level = 10 : i32, message = "qd,kd->qk"}> : () -> ()
    %cst_130 = arith.constant dense<0.000000e+00> : vector<5x16xf32>
    %512 = tpu.matmul %510, %511, %cst_130 {dimension_numbers = #tpu.dot_dimension_numbers<[1], [1], [0], [0], [0, 0, 1, 0], [], []>} : vector<5x8xbf16>, vector<16x8xbf16>, vector<5x16xf32> -> vector<5x16xf32>
    "tpu.trace_stop"() : () -> ()
    %cst_131 = arith.constant dense<0xFF800000> : vector<5xf32>
    %513 = vector.multi_reduction <maximumf>, %512, %cst_131 [1] : vector<5x16xf32> to vector<5xf32>
    %514 = vector.shape_cast %513 : vector<5xf32> to vector<5x1xf32>
    %515 = vector.broadcast %514 : vector<5x1xf32> to vector<5x16xf32>
    %516 = arith.subf %512, %515 : vector<5x16xf32>
    %517 = math.exp %516 : vector<5x16xf32>
    %cst_132 = arith.constant dense<0.000000e+00> : vector<5xf32>
    %518 = vector.multi_reduction <add>, %517, %cst_132 [1] : vector<5x16xf32> to vector<5xf32>
    %519 = vector.shape_cast %518 : vector<5xf32> to vector<5x1xf32>
    %520 = tpu.reciprocal %519 {approx = true} : vector<5x1xf32> -> vector<5x1xf32>
    %521 = vector.broadcast %520 : vector<5x1xf32> to vector<5x16xf32>
    %522 = arith.mulf %517, %521 : vector<5x16xf32>
    %523 = arith.truncf %522 : vector<5x16xf32> to vector<5x16xbf16>
    %524 = vector.extract_strided_slice %477 {offsets = [0, 16], sizes = [16, 8], strides = [1, 1]} : vector<16x32xbf16> to vector<16x8xbf16>
    %cst_133 = arith.constant dense<0.000000e+00> : vector<5x8xf32>
    %525 = tpu.matmul %523, %524, %cst_133 {dimension_numbers = #tpu.dot_dimension_numbers<[1], [0], [0], [1], [0, 0, 1, 1], [], []>} : vector<5x16xbf16>, vector<16x8xbf16>, vector<5x8xf32> -> vector<5x8xf32>
    %526 = vector.extract_strided_slice %475 {offsets = [0, 24], sizes = [5, 8], strides = [1, 1]} : vector<5x32xbf16> to vector<5x8xbf16>
    %527 = vector.extract_strided_slice %476 {offsets = [0, 24], sizes = [16, 8], strides = [1, 1]} : vector<16x32xbf16> to vector<16x8xbf16>
    "tpu.trace_start"() <{level = 10 : i32, message = "qd,kd->qk"}> : () -> ()
    %cst_134 = arith.constant dense<0.000000e+00> : vector<5x16xf32>
    %528 = tpu.matmul %526, %527, %cst_134 {dimension_numbers = #tpu.dot_dimension_numbers<[1], [1], [0], [0], [0, 0, 1, 0], [], []>} : vector<5x8xbf16>, vector<16x8xbf16>, vector<5x16xf32> -> vector<5x16xf32>
    "tpu.trace_stop"() : () -> ()
    %cst_135 = arith.constant dense<0xFF800000> : vector<5xf32>
    %529 = vector.multi_reduction <maximumf>, %528, %cst_135 [1] : vector<5x16xf32> to vector<5xf32>
    %530 = vector.shape_cast %529 : vector<5xf32> to vector<5x1xf32>
    %531 = vector.broadcast %530 : vector<5x1xf32> to vector<5x16xf32>
    %532 = arith.subf %528, %531 : vector<5x16xf32>
    %533 = math.exp %532 : vector<5x16xf32>
    %cst_136 = arith.constant dense<0.000000e+00> : vector<5xf32>
    %534 = vector.multi_reduction <add>, %533, %cst_136 [1] : vector<5x16xf32> to vector<5xf32>
    %535 = vector.shape_cast %534 : vector<5xf32> to vector<5x1xf32>
    %536 = tpu.reciprocal %535 {approx = true} : vector<5x1xf32> -> vector<5x1xf32>
    %537 = vector.broadcast %536 : vector<5x1xf32> to vector<5x16xf32>
    %538 = arith.mulf %533, %537 : vector<5x16xf32>
    %539 = arith.truncf %538 : vector<5x16xf32> to vector<5x16xbf16>
    %540 = vector.extract_strided_slice %477 {offsets = [0, 24], sizes = [16, 8], strides = [1, 1]} : vector<16x32xbf16> to vector<16x8xbf16>
    %cst_137 = arith.constant dense<0.000000e+00> : vector<5x8xf32>
    %541 = tpu.matmul %539, %540, %cst_137 {dimension_numbers = #tpu.dot_dimension_numbers<[1], [0], [0], [1], [0, 0, 1, 1], [], []>} : vector<5x16xbf16>, vector<16x8xbf16>, vector<5x8xf32> -> vector<5x8xf32>
    %542 = tpu.concatenate %493, %509, %525, %541 in 1 : vector<5x8xf32>, vector<5x8xf32>, vector<5x8xf32>, vector<5x8xf32> -> vector<5x32xf32>
    %543 = arith.truncf %542 : vector<5x32xf32> to vector<5x32xbf16>
    %cst_138 = arith.constant dense<0.000000e+00> : vector<5x32xf32>
    %544 = tpu.matmul %543, %470, %cst_138 {dimension_numbers = #tpu.dot_dimension_numbers<[1], [0], [0], [1], [0, 0, 1, 1], [], []>} : vector<5x32xbf16>, vector<32x32xbf16>, vector<5x32xf32> -> vector<5x32xf32>
    %545 = vector.broadcast %472 : vector<1x32xf32> to vector<5x32xf32>
    %546 = arith.addf %544, %545 : vector<5x32xf32>
    %547 = arith.addf %315, %546 : vector<5x32xf32>
    %548 = vector.extract_strided_slice %2 {offsets = [4, 0, 0], sizes = [1, 1, 32], strides = [1, 1, 1]} : vector<5x1x32xf32> to vector<1x1x32xf32>
    %549 = vector.shape_cast %548 : vector<1x1x32xf32> to vector<1x32xf32>
    %550 = vector.extract_strided_slice %3 {offsets = [4, 0, 0], sizes = [1, 1, 32], strides = [1, 1, 1]} : vector<5x1x32xf32> to vector<1x1x32xf32>
    %551 = vector.shape_cast %550 : vector<1x1x32xf32> to vector<1x32xf32>
    %cst_139 = arith.constant dense<0.000000e+00> : vector<5xf32>
    %552 = vector.multi_reduction <add>, %547, %cst_139 [1] : vector<5x32xf32> to vector<5xf32>
    %553 = vector.shape_cast %552 : vector<5xf32> to vector<5x1xf32>
    %cst_140 = arith.constant 3.200000e+01 : f32
    %554 = vector.broadcast %cst_140 : f32 to vector<5x1xf32>
    %555 = arith.divf %553, %554 : vector<5x1xf32>
    %556 = vector.broadcast %555 : vector<5x1xf32> to vector<5x32xf32>
    %557 = arith.subf %547, %556 : vector<5x32xf32>
    %558 = arith.mulf %557, %557 : vector<5x32xf32>
    %cst_141 = arith.constant dense<0.000000e+00> : vector<5xf32>
    %559 = vector.multi_reduction <add>, %558, %cst_141 [1] : vector<5x32xf32> to vector<5xf32>
    %560 = vector.shape_cast %559 : vector<5xf32> to vector<5x1xf32>
    %cst_142 = arith.constant 3.200000e+01 : f32
    %561 = vector.broadcast %cst_142 : f32 to vector<5x1xf32>
    %562 = arith.divf %560, %561 : vector<5x1xf32>
    %cst_143 = arith.constant 9.99999974E-6 : f32
    %563 = vector.broadcast %cst_143 : f32 to vector<5x1xf32>
    %564 = arith.addf %562, %563 : vector<5x1xf32>
    %565 = math.rsqrt %564 : vector<5x1xf32>
    %566 = vector.broadcast %565 : vector<5x1xf32> to vector<5x32xf32>
    %567 = arith.mulf %557, %566 : vector<5x32xf32>
    %568 = vector.broadcast %549 : vector<1x32xf32> to vector<5x32xf32>
    %569 = arith.mulf %567, %568 : vector<5x32xf32>
    %570 = vector.broadcast %551 : vector<1x32xf32> to vector<5x32xf32>
    %571 = arith.addf %569, %570 : vector<5x32xf32>
    %572 = arith.truncf %443 : vector<16x32xf32> to vector<16x32xbf16>
    %c0_144 = arith.constant 0 : index
    %c0_145 = arith.constant 0 : index
    %573 = vector.load %arg13[%c0_144, %c0_145] : memref<32x8xbf16, #tpu.memory_space<vmem>>, vector<32x8xbf16>
    %cst_146 = arith.constant dense<0.000000e+00> : vector<16x8xf32>
    %574 = tpu.matmul %572, %573, %cst_146 {dimension_numbers = #tpu.dot_dimension_numbers<[1], [0], [0], [1], [0, 0, 1, 1], [], []>} : vector<16x32xbf16>, vector<32x8xbf16>, vector<16x8xf32> -> vector<16x8xf32>
    %c0_147 = arith.constant 0 : index
    %c0_148 = arith.constant 0 : index
    %575 = vector.load %arg14[%c0_147, %c0_148] : memref<1x8xf32, #tpu.memory_space<vmem>>, vector<1x8xf32>
    %576 = vector.broadcast %575 : vector<1x8xf32> to vector<16x8xf32>
    %577 = arith.addf %574, %576 : vector<16x8xf32>
    %578 = arith.mulf %577, %577 : vector<16x8xf32>
    %579 = arith.mulf %577, %578 : vector<16x8xf32>
    %cst_149 = arith.constant 4.471500e-02 : f32
    %580 = vector.broadcast %cst_149 : f32 to vector<16x8xf32>
    %581 = arith.mulf %580, %579 : vector<16x8xf32>
    %582 = arith.addf %577, %581 : vector<16x8xf32>
    %cst_150 = arith.constant 0.797884583 : f32
    %583 = vector.broadcast %cst_150 : f32 to vector<16x8xf32>
    %584 = arith.mulf %583, %582 : vector<16x8xf32>
    %585 = math.tanh %584 : vector<16x8xf32>
    %cst_151 = arith.constant 1.000000e+00 : f32
    %586 = vector.broadcast %cst_151 : f32 to vector<16x8xf32>
    %587 = arith.addf %586, %585 : vector<16x8xf32>
    %cst_152 = arith.constant 5.000000e-01 : f32
    %588 = vector.broadcast %cst_152 : f32 to vector<16x8xf32>
    %589 = arith.mulf %588, %587 : vector<16x8xf32>
    %590 = arith.mulf %577, %589 : vector<16x8xf32>
    %591 = arith.truncf %571 : vector<5x32xf32> to vector<5x32xbf16>
    %c0_153 = arith.constant 0 : index
    %c0_154 = arith.constant 0 : index
    %592 = vector.load %arg15[%c0_153, %c0_154] : memref<32x32xbf16, #tpu.memory_space<vmem>>, vector<32x32xbf16>
    %cst_155 = arith.constant dense<0.000000e+00> : vector<5x32xf32>
    %593 = tpu.matmul %591, %592, %cst_155 {dimension_numbers = #tpu.dot_dimension_numbers<[1], [0], [0], [1], [0, 0, 1, 1], [], []>} : vector<5x32xbf16>, vector<32x32xbf16>, vector<5x32xf32> -> vector<5x32xf32>
    %c0_156 = arith.constant 0 : index
    %c0_157 = arith.constant 0 : index
    %594 = vector.load %arg16[%c0_156, %c0_157] : memref<1x32xf32, #tpu.memory_space<vmem>>, vector<1x32xf32>
    %595 = vector.broadcast %594 : vector<1x32xf32> to vector<5x32xf32>
    %596 = arith.addf %593, %595 : vector<5x32xf32>
    %597 = arith.mulf %596, %596 : vector<5x32xf32>
    %598 = arith.mulf %596, %597 : vector<5x32xf32>
    %cst_158 = arith.constant 4.471500e-02 : f32
    %599 = vector.broadcast %cst_158 : f32 to vector<5x32xf32>
    %600 = arith.mulf %599, %598 : vector<5x32xf32>
    %601 = arith.addf %596, %600 : vector<5x32xf32>
    %cst_159 = arith.constant 0.797884583 : f32
    %602 = vector.broadcast %cst_159 : f32 to vector<5x32xf32>
    %603 = arith.mulf %602, %601 : vector<5x32xf32>
    %604 = math.tanh %603 : vector<5x32xf32>
    %cst_160 = arith.constant 1.000000e+00 : f32
    %605 = vector.broadcast %cst_160 : f32 to vector<5x32xf32>
    %606 = arith.addf %605, %604 : vector<5x32xf32>
    %cst_161 = arith.constant 5.000000e-01 : f32
    %607 = vector.broadcast %cst_161 : f32 to vector<5x32xf32>
    %608 = arith.mulf %607, %606 : vector<5x32xf32>
    %609 = arith.mulf %596, %608 : vector<5x32xf32>
    %610 = arith.truncf %609 : vector<5x32xf32> to vector<5x32xbf16>
    %c0_162 = arith.constant 0 : index
    %c0_163 = arith.constant 0 : index
    %611 = vector.load %arg17[%c0_162, %c0_163] : memref<32x8xbf16, #tpu.memory_space<vmem>>, vector<32x8xbf16>
    %cst_164 = arith.constant dense<0.000000e+00> : vector<5x8xf32>
    %612 = tpu.matmul %610, %611, %cst_164 {dimension_numbers = #tpu.dot_dimension_numbers<[1], [0], [0], [1], [0, 0, 1, 1], [], []>} : vector<5x32xbf16>, vector<32x8xbf16>, vector<5x8xf32> -> vector<5x8xf32>
    %c0_165 = arith.constant 0 : index
    %c0_166 = arith.constant 0 : index
    %613 = vector.load %arg18[%c0_165, %c0_166] : memref<1x8xf32, #tpu.memory_space<vmem>>, vector<1x8xf32>
    %614 = vector.broadcast %613 : vector<1x8xf32> to vector<5x8xf32>
    %615 = arith.addf %612, %614 : vector<5x8xf32>
    %616 = vector.extract_strided_slice %615 {offsets = [1, 0], sizes = [1, 8], strides = [1, 1]} : vector<5x8xf32> to vector<1x8xf32>
    "tpu.trace_start"() <{level = 10 : i32, message = "mc,pc->mp"}> : () -> ()
    %cst_167 = arith.constant dense<0.000000e+00> : vector<1x16xf32>
    %617 = tpu.matmul %616, %590, %cst_167 {dimension_numbers = #tpu.dot_dimension_numbers<[1], [1], [0], [0], [0, 0, 1, 0], [], []>} : vector<1x8xf32>, vector<16x8xf32>, vector<1x16xf32> -> vector<1x16xf32>
    "tpu.trace_stop"() : () -> ()
    %c0_168 = arith.constant 0 : index
    %c0_169 = arith.constant 0 : index
    %618 = vector.load %arg19[%c0_168, %c0_169] : memref<16x1024xf32, #tpu.memory_space<vmem>>, vector<16x1024xf32>
    %cst_170 = arith.constant dense<0.000000e+00> : vector<1x1024xf32>
    %619 = tpu.matmul %617, %618, %cst_170 {dimension_numbers = #tpu.dot_dimension_numbers<[1], [0], [0], [1], [0, 0, 1, 1], [], []>} : vector<1x16xf32>, vector<16x1024xf32>, vector<1x1024xf32> -> vector<1x1024xf32>
    %c0_171 = arith.constant 0 : index
    %c0_172 = arith.constant 0 : index
    %c0_173 = arith.constant 0 : index
    %620 = vector.load %arg20[%c0_171, %c0_172, %c0_173] : memref<1x1x1024xf32, #tpu.memory_space<vmem>>, vector<1x1x1024xf32>
    %621 = vector.shape_cast %620 : vector<1x1x1024xf32> to vector<1x1024xf32>
    %622 = vector.shape_cast %619 : vector<1x1024xf32> to vector<1x1x1024xf32>
    tpu.vector_store %arg20[%c0_171, %c0_172, %c0_173], %622 {strides = array<i32>} : memref<1x1x1024xf32, #tpu.memory_space<vmem>>, vector<1x1x1024xf32>,
    return
  }
  func.func @transform_0(%arg0: i32) -> (i32, i32, i32) {
    %c0_i32 = arith.constant 0 : i32
    %c0_i32_0 = arith.constant 0 : i32
    %c0_i32_1 = arith.constant 0 : i32
    return %arg0, %c0_i32, %c0_i32_0 : i32, i32, i32
  }
  func.func @transform_1(%arg0: i32) -> (i32, i32) {
    %c0_i32 = arith.constant 0 : i32
    %c0_i32_0 = arith.constant 0 : i32
    %c0_i32_1 = arith.constant 0 : i32
    return %c0_i32, %c0_i32_0 : i32, i32
  }
  func.func @transform_2(%arg0: i32) -> (i32, i32) {
    %c0_i32 = arith.constant 0 : i32
    %c0_i32_0 = arith.constant 0 : i32
    %c0_i32_1 = arith.constant 0 : i32
    return %c0_i32, %c0_i32_0 : i32, i32
  }
  func.func @transform_3(%arg0: i32) -> (i32, i32) {
    %c0_i32 = arith.constant 0 : i32
    %c0_i32_0 = arith.constant 0 : i32
    %c0_i32_1 = arith.constant 0 : i32
    return %c0_i32, %c0_i32_0 : i32, i32
  }
  func.func @transform_4(%arg0: i32) -> (i32, i32, i32, i32) {
    %c0_i32 = arith.constant 0 : i32
    %c0_i32_0 = arith.constant 0 : i32
    %c0_i32_1 = arith.constant 0 : i32
    %c0_i32_2 = arith.constant 0 : i32
    %c0_i32_3 = arith.constant 0 : i32
    return %c0_i32, %c0_i32_0, %c0_i32_1, %c0_i32_2 : i32, i32, i32, i32
  }
  func.func @transform_5(%arg0: i32) -> (i32, i32, i32, i32) {
    %c0_i32 = arith.constant 0 : i32
    %c0_i32_0 = arith.constant 0 : i32
    %c0_i32_1 = arith.constant 0 : i32
    %c0_i32_2 = arith.constant 0 : i32
    %c0_i32_3 = arith.constant 0 : i32
    return %c0_i32, %c0_i32_0, %c0_i32_1, %c0_i32_2 : i32, i32, i32, i32
  }
  func.func @transform_6(%arg0: i32) -> (i32, i32, i32) {
    %c0_i32 = arith.constant 0 : i32
    %c0_i32_0 = arith.constant 0 : i32
    %c0_i32_1 = arith.constant 0 : i32
    %c0_i32_2 = arith.constant 0 : i32
    return %c0_i32, %c0_i32_0, %c0_i32_1 : i32, i32, i32
  }
  func.func @transform_7(%arg0: i32) -> (i32, i32, i32) {
    %c0_i32 = arith.constant 0 : i32
    %c0_i32_0 = arith.constant 0 : i32
    %c0_i32_1 = arith.constant 0 : i32
    %c0_i32_2 = arith.constant 0 : i32
    return %c0_i32, %c0_i32_0, %c0_i32_1 : i32, i32, i32
  }
  func.func @transform_8(%arg0: i32) -> (i32, i32) {
    %c0_i32 = arith.constant 0 : i32
    %c0_i32_0 = arith.constant 0 : i32
    %c0_i32_1 = arith.constant 0 : i32
    return %c0_i32, %c0_i32_0 : i32, i32
  }
  func.func @transform_9(%arg0: i32) -> (i32, i32) {
    %c0_i32 = arith.constant 0 : i32
    %c0_i32_0 = arith.constant 0 : i32
    %c0_i32_1 = arith.constant 0 : i32
    return %c0_i32, %c0_i32_0 : i32, i32
  }
  func.func @transform_10(%arg0: i32) -> (i32, i32) {
    %c0_i32 = arith.constant 0 : i32
    %c0_i32_0 = arith.constant 0 : i32
    %c0_i32_1 = arith.constant 0 : i32
    return %c0_i32, %c0_i32_0 : i32, i32
  }
  func.func @transform_11(%arg0: i32) -> (i32, i32) {
    %c0_i32 = arith.constant 0 : i32
    %c0_i32_0 = arith.constant 0 : i32
    %c0_i32_1 = arith.constant 0 : i32
    return %c0_i32, %c0_i32_0 : i32, i32
  }
  func.func @transform_12(%arg0: i32) -> (i32, i32) {
    %c0_i32 = arith.constant 0 : i32
    %c0_i32_0 = arith.constant 0 : i32
    %c0_i32_1 = arith.constant 0 : i32
    return %c0_i32, %c0_i32_0 : i32, i32
  }
  func.func @transform_13(%arg0: i32) -> (i32, i32) {
    %c0_i32 = arith.constant 0 : i32
    %c0_i32_0 = arith.constant 0 : i32
    %c0_i32_1 = arith.constant 0 : i32
    return %c0_i32, %c0_i32_0 : i32, i32
  }
  func.func @transform_14(%arg0: i32) -> (i32, i32) {
    %c0_i32 = arith.constant 0 : i32
    %c0_i32_0 = arith.constant 0 : i32
    %c0_i32_1 = arith.constant 0 : i32
    return %c0_i32, %c0_i32_0 : i32, i32
  }
  func.func @transform_15(%arg0: i32) -> (i32, i32) {
    %c0_i32 = arith.constant 0 : i32
    %c0_i32_0 = arith.constant 0 : i32
    %c0_i32_1 = arith.constant 0 : i32
    return %c0_i32, %c0_i32_0 : i32, i32
  }
  func.func @transform_16(%arg0: i32) -> (i32, i32) {
    %c0_i32 = arith.constant 0 : i32
    %c0_i32_0 = arith.constant 0 : i32
    %c0_i32_1 = arith.constant 0 : i32
    return %c0_i32, %c0_i32_0 : i32, i32
  }
  func.func @transform_17(%arg0: i32) -> (i32, i32) {
    %c0_i32 = arith.constant 0 : i32
    %c0_i32_0 = arith.constant 0 : i32
    %c0_i32_1 = arith.constant 0 : i32
    return %c0_i32, %c0_i32_0 : i32, i32
  }
  func.func @transform_18(%arg0: i32) -> (i32, i32) {
    %c0_i32 = arith.constant 0 : i32
    %c0_i32_0 = arith.constant 0 : i32
    %c0_i32_1 = arith.constant 0 : i32
    return %c0_i32, %c0_i32_0 : i32, i32
  }
  func.func @transform_19(%arg0: i32) -> (i32, i32, i32) {
    %c0_i32 = arith.constant 0 : i32
    %c0_i32_0 = arith.constant 0 : i32
    %c0_i32_1 = arith.constant 0 : i32
    return %arg0, %c0_i32, %c0_i32_0 : i32, i32, i32
  }
}

</mosaic_0001>

<llo_original>
// kernel: forward.2
$region0: #{forward.2}
  #allocation0 [shape = 'u32[]', space=smem, size = 0x4, offset = 0x4, fixed_abs, tag = 'smem constant byte address 0x4 - core index']
  #allocation1 [shape = 'u32[72,128]{1,0:T(1,128)}', space=vmem, size = 0x9000, scoped, tag = 'internal scratch']
  #allocation2 [shape = 'f32[16,32]{1,0:T(8,128)}', space=vmem, size = 0x2000, scoped, tag = 'scratch operand']
  %s0 = inlined_call_operand.vmem [shape: bf16[2,16,64], index: 0, kind: input, shape index: {}]
  %s1 = inlined_call_operand.vmem [shape: bf16[64,32], index: 1, kind: input, shape index: {}]
  %s2 = inlined_call_operand.vmem [shape: f32[1,32], index: 2, kind: input, shape index: {}]
  %s3 = inlined_call_operand.vmem [shape: f32[16,32], index: 3, kind: input, shape index: {}]
  %s4 = inlined_call_operand.vmem [shape: f32[2,2,32], index: 4, kind: input, shape index: {}]
  %s5 = inlined_call_operand.vmem [shape: f32[2,2,32], index: 5, kind: input, shape index: {}]
  %s6 = inlined_call_operand.vmem [shape: bf16[2,32,96], index: 6, kind: input, shape index: {}]
  %s7 = inlined_call_operand.vmem [shape: f32[2,1,96], index: 7, kind: input, shape index: {}]
  %s8 = inlined_call_operand.vmem [shape: bf16[2,32,32], index: 8, kind: input, shape index: {}]
  %s9 = inlined_call_operand.vmem [shape: f32[2,1,32], index: 9, kind: input, shape index: {}]
  %s10 = inlined_call_operand.vmem [shape: bf16[2,32,128], index: 10, kind: input, shape index: {}]
  %s11 = inlined_call_operand.vmem [shape: f32[2,1,128], index: 11, kind: input, shape index: {}]
  %s12 = inlined_call_operand.vmem [shape: bf16[2,128,32], index: 12, kind: input, shape index: {}]
  %s13 = inlined_call_operand.vmem [shape: f32[2,1,32], index: 13, kind: input, shape index: {}]
  %s14 = inlined_call_operand.vmem [shape: bf16[2,32,8], index: 14, kind: input, shape index: {}]
  %s15 = inlined_call_operand.vmem [shape: f32[2,1,8], index: 15, kind: input, shape index: {}]
  %s16 = inlined_call_operand.vmem [shape: bf16[2,8,32], index: 16, kind: input, shape index: {}]
  %s17 = inlined_call_operand.vmem [shape: f32[2,1,32], index: 17, kind: input, shape index: {}]
  %s18 = inlined_call_operand.vmem [shape: bf16[32,32], index: 18, kind: input, shape index: {}]
  %s19 = inlined_call_operand.vmem [shape: f32[1,32], index: 19, kind: input, shape index: {}]
  %s20 = inlined_call_operand.vmem [shape: f32[1,32], index: 20, kind: input, shape index: {}]
  %s21 = inlined_call_operand.vmem [shape: f32[1,32], index: 21, kind: input, shape index: {}]
  %s22 = inlined_call_operand.vmem [shape: bf16[32,32], index: 22, kind: input, shape index: {}]
  %s23 = inlined_call_operand.vmem [shape: f32[1,32], index: 23, kind: input, shape index: {}]
  %s24 = inlined_call_operand.vmem [shape: f32[1,32], index: 24, kind: input, shape index: {}]
  %s25 = inlined_call_operand.vmem [shape: f32[1,32], index: 25, kind: input, shape index: {}]
  %s26 = inlined_call_operand.vmem [shape: f32[2,16,32], index: 26, kind: output, shape index: {}]
  %s27 = sld [smem:[#allocation0]]
  $region145: #{forward.2} parent=0
    _
  %s29 = ssub.s32 1, %s27
  %s30 = scalar_select 0, %s29, %s27
  loop: start=0, step=1, limit=6
  $region2: #{forward.2} parent=0 // loop_pre_header
    _
  $region3: #{forward.2} parent=0 // loop_header
    %s32 = sphi 0, %s36
    %p33 = scmp.ge.s32.totalorder %s32, 6
    %s39 = sphi 0, %s51
    %s40 = sphi 0, %s47
    %s41 = sphi 0, %s39
    %s42 = sphi 0, %s40
    %s43 = sphi 0, %s41
    %s44 = sphi 0, %s42
    %s54 = sphi 0, %s56
    %s57 = sphi 0, %s54
    %s58 = sphi 0, %s57
    %s74 = sphi 0, %s58
    %s78 = sphi 0, %s78
    %s80 = sphi 0, %s78
    %s81 = sphi 0, %s80
    %s95 = sphi 0, %s81
    %s99 = sphi 0, %s99
    %s101 = sphi 0, %s99
    %s102 = sphi 0, %s101
    %s116 = sphi 0, %s102
    %s120 = sphi 0, %s120
    %s122 = sphi 0, %s120
    %s123 = sphi 0, %s122
    %s137 = sphi 0, %s123
    %s143 = sphi 0, %s145
    %s146 = sphi 0, %s143
    %s147 = sphi 0, %s146
    %s163 = sphi 0, %s147
    %s169 = sphi 0, %s171
    %s172 = sphi 0, %s169
    %s173 = sphi 0, %s172
    %s189 = sphi 0, %s173
    %s195 = sphi 0, %s197
    %s198 = sphi 0, %s195
    %s199 = sphi 0, %s198
    %s215 = sphi 0, %s199
    %s221 = sphi 0, %s223
    %s224 = sphi 0, %s221
    %s225 = sphi 0, %s224
    %s241 = sphi 0, %s225
    %s247 = sphi 0, %s249
    %s250 = sphi 0, %s247
    %s251 = sphi 0, %s250
    %s267 = sphi 0, %s251
    %s273 = sphi 0, %s275
    %s276 = sphi 0, %s273
    %s277 = sphi 0, %s276
    %s293 = sphi 0, %s277
    %s299 = sphi 0, %s301
    %s302 = sphi 0, %s299
    %s303 = sphi 0, %s302
    %s319 = sphi 0, %s303
    %s325 = sphi 0, %s327
    %s328 = sphi 0, %s325
    %s329 = sphi 0, %s328
    %s345 = sphi 0, %s329
    %s351 = sphi 0, %s353
    %s354 = sphi 0, %s351
    %s355 = sphi 0, %s354
    %s371 = sphi 0, %s355
    %s377 = sphi 0, %s379
    %s380 = sphi 0, %s377
    %s381 = sphi 0, %s380
    %s397 = sphi 0, %s381
    %s403 = sphi 0, %s405
    %s406 = sphi 0, %s403
    %s407 = sphi 0, %s406
    %s423 = sphi 0, %s407
    %s429 = sphi 0, %s431
    %s432 = sphi 0, %s429
    %s433 = sphi 0, %s432
    %s449 = sphi 0, %s433
    %s455 = sphi 0, %s457
    %s458 = sphi 0, %s455
    %s459 = sphi 0, %s458
    %s475 = sphi 0, %s459
    %s481 = sphi 0, %s483
    %s484 = sphi 0, %s481
    %s485 = sphi 0, %s484
    %s501 = sphi 0, %s485
    %s505 = sphi 0, %s505
    %s507 = sphi 0, %s505
    %s508 = sphi 0, %s507
    %s522 = sphi 0, %s508
    %s526 = sphi 0, %s526
    %s528 = sphi 0, %s526
    %s529 = sphi 0, %s528
    %s543 = sphi 0, %s529
    %s547 = sphi 0, %s547
    %s549 = sphi 0, %s547
    %s550 = sphi 0, %s549
    %s564 = sphi 0, %s550
    %s568 = sphi 0, %s568
    %s570 = sphi 0, %s568
    %s571 = sphi 0, %s570
    %s585 = sphi 0, %s571
    %s589 = sphi 0, %s589
    %s591 = sphi 0, %s589
    %s592 = sphi 0, %s591
    %s606 = sphi 0, %s592
    %s610 = sphi 0, %s610
    %s612 = sphi 0, %s610
    %s613 = sphi 0, %s612
    %s627 = sphi 0, %s613
    %s631 = sphi 0, %s631
    %s633 = sphi 0, %s631
    %s634 = sphi 0, %s633
    %s648 = sphi 0, %s634
    %s652 = sphi 0, %s652
    %s654 = sphi 0, %s652
    %s655 = sphi 0, %s654
    %s669 = sphi 0, %s655
    %s675 = sphi 0, %s677
    %s678 = sphi 0, %s675
    %s679 = sphi 0, %s678
    %s695 = sphi 0, %s679
  $region4: #{forward.2} parent=0 // loop_header_branch
    %35 = sbr.rel (%p33) target = $region8
  $region5: #{forward.2} parent=0 // loop_body
    %s37 = ssub.s32 %s32, 1
    %s38 = ssub.s32 %s32, 2
    %s45 = sadd.s32 1, %s40
    %p46 = scmp.ge.s32.totalorder %s45, 2
    %s47 = scalar_select %p46, 0, %s45
    %s48 = sadd.s32 1, %s39
    %s49 = scalar_select %p46, %s48, %s39
    %p50 = scmp.ge.s32.totalorder %s49, 2
    %s51 = scalar_select %p50, 0, %s49
    %s52 = ssub.s32 %s39, %s51
    %p53 = scmp.eq.s32.totalorder %s52, 0
    %s55 = sadd.s32 %s54, 1
    %s56 = scalar_select %p53, %s54, %s55
    %p59 = pneg %p53
    %p60 = scmp.eq.s32.totalorder %s32, 3
    %p61 = por %p59, %p60
    %p62 = scmp.ne.s32.totalorder %s54, %s57
    %p63 = scmp.eq.s32.totalorder %s32, 0
    %p64 = por %p62, %p63
    %p65 = scmp.ne.s32.totalorder %s54, %s57
    %p66 = scmp.eq.s32.totalorder %s37, 3
    %p67 = por %p65, %p66
    %p68 = scmp.ne.s32.totalorder %s57, %s58
    %p69 = scmp.eq.s32.totalorder %s37, 0
    %p70 = por %p68, %p69
    %p71 = scmp.ne.s32.totalorder %s57, %s58
    %p72 = scmp.eq.s32.totalorder %s38, 3
    %p73 = por %p71, %p72
    %p75 = scmp.ne.s32.totalorder %s58, %s74
    %p76 = scmp.eq.s32.totalorder %s38, 0
    %p77 = por %p75, %p76
    %s79 = sadd.s32 %s78, 1
    %p82 = scmp.eq.s32.totalorder %s32, 3
    %p83 = scmp.ne.s32.totalorder %s78, %s80
    %p84 = scmp.eq.s32.totalorder %s32, 0
    %p85 = por %p83, %p84
    %p86 = scmp.ne.s32.totalorder %s78, %s80
    %p87 = scmp.eq.s32.totalorder %s37, 3
    %p88 = por %p86, %p87
    %p89 = scmp.ne.s32.totalorder %s80, %s81
    %p90 = scmp.eq.s32.totalorder %s37, 0
    %p91 = por %p89, %p90
    %p92 = scmp.ne.s32.totalorder %s80, %s81
    %p93 = scmp.eq.s32.totalorder %s38, 3
    %p94 = por %p92, %p93
    %p96 = scmp.ne.s32.totalorder %s81, %s95
    %p97 = scmp.eq.s32.totalorder %s38, 0
    %p98 = por %p96, %p97
    %s100 = sadd.s32 %s99, 1
    %p103 = scmp.eq.s32.totalorder %s32, 3
    %p104 = scmp.ne.s32.totalorder %s99, %s101
    %p105 = scmp.eq.s32.totalorder %s32, 0
    %p106 = por %p104, %p105
    %p107 = scmp.ne.s32.totalorder %s99, %s101
    %p108 = scmp.eq.s32.totalorder %s37, 3
    %p109 = por %p107, %p108
    %p110 = scmp.ne.s32.totalorder %s101, %s102
    %p111 = scmp.eq.s32.totalorder %s37, 0
    %p112 = por %p110, %p111
    %p113 = scmp.ne.s32.totalorder %s101, %s102
    %p114 = scmp.eq.s32.totalorder %s38, 3
    %p115 = por %p113, %p114
    %p117 = scmp.ne.s32.totalorder %s102, %s116
    %p118 = scmp.eq.s32.totalorder %s38, 0
    %p119 = por %p117, %p118
    %s121 = sadd.s32 %s120, 1
    %p124 = scmp.eq.s32.totalorder %s32, 3
    %p125 = scmp.ne.s32.totalorder %s120, %s122
    %p126 = scmp.eq.s32.totalorder %s32, 0
    %p127 = por %p125, %p126
    %p128 = scmp.ne.s32.totalorder %s120, %s122
    %p129 = scmp.eq.s32.totalorder %s37, 3
    %p130 = por %p128, %p129
    %p131 = scmp.ne.s32.totalorder %s122, %s123
    %p132 = scmp.eq.s32.totalorder %s37, 0
    %p133 = por %p131, %p132
    %p134 = scmp.ne.s32.totalorder %s122, %s123
    %p135 = scmp.eq.s32.totalorder %s38, 3
    %p136 = por %p134, %p135
    %p138 = scmp.ne.s32.totalorder %s123, %s137
    %p139 = scmp.eq.s32.totalorder %s38, 0
    %p140 = por %p138, %p139
    %s141 = ssub.s32 %s40, %s47
    %p142 = scmp.eq.s32.totalorder %s141, 0
    %s144 = sadd.s32 %s143, 1
    %s145 = scalar_select %p142, %s143, %s144
    %p148 = pneg %p142
    %p149 = scmp.eq.s32.totalorder %s32, 3
    %p150 = por %p148, %p149
    %p151 = scmp.ne.s32.totalorder %s143, %s146
    %p152 = scmp.eq.s32.totalorder %s32, 0
    %p153 = por %p151, %p152
    %p154 = scmp.ne.s32.totalorder %s143, %s146
    %p155 = scmp.eq.s32.totalorder %s37, 3
    %p156 = por %p154, %p155
    %p157 = scmp.ne.s32.totalorder %s146, %s147
    %p158 = scmp.eq.s32.totalorder %s37, 0
    %p159 = por %p157, %p158
    %p160 = scmp.ne.s32.totalorder %s146, %s147
    %p161 = scmp.eq.s32.totalorder %s38, 3
    %p162 = por %p160, %p161
    %p164 = scmp.ne.s32.totalorder %s147, %s163
    %p165 = scmp.eq.s32.totalorder %s38, 0
    %p166 = por %p164, %p165
    %s167 = ssub.s32 %s40, %s47
    %p168 = scmp.eq.s32.totalorder %s167, 0
    %s170 = sadd.s32 %s169, 1
    %s171 = scalar_select %p168, %s169, %s170
    %p174 = pneg %p168
    %p175 = scmp.eq.s32.totalorder %s32, 3
    %p176 = por %p174, %p175
    %p177 = scmp.ne.s32.totalorder %s169, %s172
    %p178 = scmp.eq.s32.totalorder %s32, 0
    %p179 = por %p177, %p178
    %p180 = scmp.ne.s32.totalorder %s169, %s172
    %p181 = scmp.eq.s32.totalorder %s37, 3
    %p182 = por %p180, %p181
    %p183 = scmp.ne.s32.totalorder %s172, %s173
    %p184 = scmp.eq.s32.totalorder %s37, 0
    %p185 = por %p183, %p184
    %p186 = scmp.ne.s32.totalorder %s172, %s173
    %p187 = scmp.eq.s32.totalorder %s38, 3
    %p188 = por %p186, %p187
    %p190 = scmp.ne.s32.totalorder %s173, %s189
    %p191 = scmp.eq.s32.totalorder %s38, 0
    %p192 = por %p190, %p191
    %s193 = ssub.s32 %s40, %s47
    %p194 = scmp.eq.s32.totalorder %s193, 0
    %s196 = sadd.s32 %s195, 1
    %s197 = scalar_select %p194, %s195, %s196
    %p200 = pneg %p194
    %p201 = scmp.eq.s32.totalorder %s32, 3
    %p202 = por %p200, %p201
    %p203 = scmp.ne.s32.totalorder %s195, %s198
    %p204 = scmp.eq.s32.totalorder %s32, 0
    %p205 = por %p203, %p204
    %p206 = scmp.ne.s32.totalorder %s195, %s198
    %p207 = scmp.eq.s32.totalorder %s37, 3
    %p208 = por %p206, %p207
    %p209 = scmp.ne.s32.totalorder %s198, %s199
    %p210 = scmp.eq.s32.totalorder %s37, 0
    %p211 = por %p209, %p210
    %p212 = scmp.ne.s32.totalorder %s198, %s199
    %p213 = scmp.eq.s32.totalorder %s38, 3
    %p214 = por %p212, %p213
    %p216 = scmp.ne.s32.totalorder %s199, %s215
    %p217 = scmp.eq.s32.totalorder %s38, 0
    %p218 = por %p216, %p217
    %s219 = ssub.s32 %s40, %s47
    %p220 = scmp.eq.s32.totalorder %s219, 0
    %s222 = sadd.s32 %s221, 1
    %s223 = scalar_select %p220, %s221, %s222
    %p226 = pneg %p220
    %p227 = scmp.eq.s32.totalorder %s32, 3
    %p228 = por %p226, %p227
    %p229 = scmp.ne.s32.totalorder %s221, %s224
    %p230 = scmp.eq.s32.totalorder %s32, 0
    %p231 = por %p229, %p230
    %p232 = scmp.ne.s32.totalorder %s221, %s224
    %p233 = scmp.eq.s32.totalorder %s37, 3
    %p234 = por %p232, %p233
    %p235 = scmp.ne.s32.totalorder %s224, %s225
    %p236 = scmp.eq.s32.totalorder %s37, 0
    %p237 = por %p235, %p236
    %p238 = scmp.ne.s32.totalorder %s224, %s225
    %p239 = scmp.eq.s32.totalorder %s38, 3
    %p240 = por %p238, %p239
    %p242 = scmp.ne.s32.totalorder %s225, %s241
    %p243 = scmp.eq.s32.totalorder %s38, 0
    %p244 = por %p242, %p243
    %s245 = ssub.s32 %s40, %s47
    %p246 = scmp.eq.s32.totalorder %s245, 0
    %s248 = sadd.s32 %s247, 1
    %s249 = scalar_select %p246, %s247, %s248
    %p252 = pneg %p246
    %p253 = scmp.eq.s32.totalorder %s32, 3
    %p254 = por %p252, %p253
    %p255 = scmp.ne.s32.totalorder %s247, %s250
    %p256 = scmp.eq.s32.totalorder %s32, 0
    %p257 = por %p255, %p256
    %p258 = scmp.ne.s32.totalorder %s247, %s250
    %p259 = scmp.eq.s32.totalorder %s37, 3
    %p260 = por %p258, %p259
    %p261 = scmp.ne.s32.totalorder %s250, %s251
    %p262 = scmp.eq.s32.totalorder %s37, 0
    %p263 = por %p261, %p262
    %p264 = scmp.ne.s32.totalorder %s250, %s251
    %p265 = scmp.eq.s32.totalorder %s38, 3
    %p266 = por %p264, %p265
    %p268 = scmp.ne.s32.totalorder %s251, %s267
    %p269 = scmp.eq.s32.totalorder %s38, 0
    %p270 = por %p268, %p269
    %s271 = ssub.s32 %s40, %s47
    %p272 = scmp.eq.s32.totalorder %s271, 0
    %s274 = sadd.s32 %s273, 1
    %s275 = scalar_select %p272, %s273, %s274
    %p278 = pneg %p272
    %p279 = scmp.eq.s32.totalorder %s32, 3
    %p280 = por %p278, %p279
    %p281 = scmp.ne.s32.totalorder %s273, %s276
    %p282 = scmp.eq.s32.totalorder %s32, 0
    %p283 = por %p281, %p282
    %p284 = scmp.ne.s32.totalorder %s273, %s276
    %p285 = scmp.eq.s32.totalorder %s37, 3
    %p286 = por %p284, %p285
    %p287 = scmp.ne.s32.totalorder %s276, %s277
    %p288 = scmp.eq.s32.totalorder %s37, 0
    %p289 = por %p287, %p288
    %p290 = scmp.ne.s32.totalorder %s276, %s277
    %p291 = scmp.eq.s32.totalorder %s38, 3
    %p292 = por %p290, %p291
    %p294 = scmp.ne.s32.totalorder %s277, %s293
    %p295 = scmp.eq.s32.totalorder %s38, 0
    %p296 = por %p294, %p295
    %s297 = ssub.s32 %s40, %s47
    %p298 = scmp.eq.s32.totalorder %s297, 0
    %s300 = sadd.s32 %s299, 1
    %s301 = scalar_select %p298, %s299, %s300
    %p304 = pneg %p298
    %p305 = scmp.eq.s32.totalorder %s32, 3
    %p306 = por %p304, %p305
    %p307 = scmp.ne.s32.totalorder %s299, %s302
    %p308 = scmp.eq.s32.totalorder %s32, 0
    %p309 = por %p307, %p308
    %p310 = scmp.ne.s32.totalorder %s299, %s302
    %p311 = scmp.eq.s32.totalorder %s37, 3
    %p312 = por %p310, %p311
    %p313 = scmp.ne.s32.totalorder %s302, %s303
    %p314 = scmp.eq.s32.totalorder %s37, 0
    %p315 = por %p313, %p314
    %p316 = scmp.ne.s32.totalorder %s302, %s303
    %p317 = scmp.eq.s32.totalorder %s38, 3
    %p318 = por %p316, %p317
    %p320 = scmp.ne.s32.totalorder %s303, %s319
    %p321 = scmp.eq.s32.totalorder %s38, 0
    %p322 = por %p320, %p321
    %s323 = ssub.s32 %s40, %s47
    %p324 = scmp.eq.s32.totalorder %s323, 0
    %s326 = sadd.s32 %s325, 1
    %s327 = scalar_select %p324, %s325, %s326
    %p330 = pneg %p324
    %p331 = scmp.eq.s32.totalorder %s32, 3
    %p332 = por %p330, %p331
    %p333 = scmp.ne.s32.totalorder %s325, %s328
    %p334 = scmp.eq.s32.totalorder %s32, 0
    %p335 = por %p333, %p334
    %p336 = scmp.ne.s32.totalorder %s325, %s328
    %p337 = scmp.eq.s32.totalorder %s37, 3
    %p338 = por %p336, %p337
    %p339 = scmp.ne.s32.totalorder %s328, %s329
    %p340 = scmp.eq.s32.totalorder %s37, 0
    %p341 = por %p339, %p340
    %p342 = scmp.ne.s32.totalorder %s328, %s329
    %p343 = scmp.eq.s32.totalorder %s38, 3
    %p344 = por %p342, %p343
    %p346 = scmp.ne.s32.totalorder %s329, %s345
    %p347 = scmp.eq.s32.totalorder %s38, 0
    %p348 = por %p346, %p347
    %s349 = ssub.s32 %s40, %s47
    %p350 = scmp.eq.s32.totalorder %s349, 0
    %s352 = sadd.s32 %s351, 1
    %s353 = scalar_select %p350, %s351, %s352
    %p356 = pneg %p350
    %p357 = scmp.eq.s32.totalorder %s32, 3
    %p358 = por %p356, %p357
    %p359 = scmp.ne.s32.totalorder %s351, %s354
    %p360 = scmp.eq.s32.totalorder %s32, 0
    %p361 = por %p359, %p360
    %p362 = scmp.ne.s32.totalorder %s351, %s354
    %p363 = scmp.eq.s32.totalorder %s37, 3
    %p364 = por %p362, %p363
    %p365 = scmp.ne.s32.totalorder %s354, %s355
    %p366 = scmp.eq.s32.totalorder %s37, 0
    %p367 = por %p365, %p366
    %p368 = scmp.ne.s32.totalorder %s354, %s355
    %p369 = scmp.eq.s32.totalorder %s38, 3
    %p370 = por %p368, %p369
    %p372 = scmp.ne.s32.totalorder %s355, %s371
    %p373 = scmp.eq.s32.totalorder %s38, 0
    %p374 = por %p372, %p373
    %s375 = ssub.s32 %s40, %s47
    %p376 = scmp.eq.s32.totalorder %s375, 0
    %s378 = sadd.s32 %s377, 1
    %s379 = scalar_select %p376, %s377, %s378
    %p382 = pneg %p376
    %p383 = scmp.eq.s32.totalorder %s32, 3
    %p384 = por %p382, %p383
    %p385 = scmp.ne.s32.totalorder %s377, %s380
    %p386 = scmp.eq.s32.totalorder %s32, 0
    %p387 = por %p385, %p386
    %p388 = scmp.ne.s32.totalorder %s377, %s380
    %p389 = scmp.eq.s32.totalorder %s37, 3
    %p390 = por %p388, %p389
    %p391 = scmp.ne.s32.totalorder %s380, %s381
    %p392 = scmp.eq.s32.totalorder %s37, 0
    %p393 = por %p391, %p392
    %p394 = scmp.ne.s32.totalorder %s380, %s381
    %p395 = scmp.eq.s32.totalorder %s38, 3
    %p396 = por %p394, %p395
    %p398 = scmp.ne.s32.totalorder %s381, %s397
    %p399 = scmp.eq.s32.totalorder %s38, 0
    %p400 = por %p398, %p399
    %s401 = ssub.s32 %s40, %s47
    %p402 = scmp.eq.s32.totalorder %s401, 0
    %s404 = sadd.s32 %s403, 1
    %s405 = scalar_select %p402, %s403, %s404
    %p408 = pneg %p402
    %p409 = scmp.eq.s32.totalorder %s32, 3
    %p410 = por %p408, %p409
    %p411 = scmp.ne.s32.totalorder %s403, %s406
    %p412 = scmp.eq.s32.totalorder %s32, 0
    %p413 = por %p411, %p412
    %p414 = scmp.ne.s32.totalorder %s403, %s406
    %p415 = scmp.eq.s32.totalorder %s37, 3
    %p416 = por %p414, %p415
    %p417 = scmp.ne.s32.totalorder %s406, %s407
    %p418 = scmp.eq.s32.totalorder %s37, 0
    %p419 = por %p417, %p418
    %p420 = scmp.ne.s32.totalorder %s406, %s407
    %p421 = scmp.eq.s32.totalorder %s38, 3
    %p422 = por %p420, %p421
    %p424 = scmp.ne.s32.totalorder %s407, %s423
    %p425 = scmp.eq.s32.totalorder %s38, 0
    %p426 = por %p424, %p425
    %s427 = ssub.s32 %s40, %s47
    %p428 = scmp.eq.s32.totalorder %s427, 0
    %s430 = sadd.s32 %s429, 1
    %s431 = scalar_select %p428, %s429, %s430
    %p434 = pneg %p428
    %p435 = scmp.eq.s32.totalorder %s32, 3
    %p436 = por %p434, %p435
    %p437 = scmp.ne.s32.totalorder %s429, %s432
    %p438 = scmp.eq.s32.totalorder %s32, 0
    %p439 = por %p437, %p438
    %p440 = scmp.ne.s32.totalorder %s429, %s432
    %p441 = scmp.eq.s32.totalorder %s37, 3
    %p442 = por %p440, %p441
    %p443 = scmp.ne.s32.totalorder %s432, %s433
    %p444 = scmp.eq.s32.totalorder %s37, 0
    %p445 = por %p443, %p444
    %p446 = scmp.ne.s32.totalorder %s432, %s433
    %p447 = scmp.eq.s32.totalorder %s38, 3
    %p448 = por %p446, %p447
    %p450 = scmp.ne.s32.totalorder %s433, %s449
    %p451 = scmp.eq.s32.totalorder %s38, 0
    %p452 = por %p450, %p451
    %s453 = ssub.s32 %s40, %s47
    %p454 = scmp.eq.s32.totalorder %s453, 0
    %s456 = sadd.s32 %s455, 1
    %s457 = scalar_select %p454, %s455, %s456
    %p460 = pneg %p454
    %p461 = scmp.eq.s32.totalorder %s32, 3
    %p462 = por %p460, %p461
    %p463 = scmp.ne.s32.totalorder %s455, %s458
    %p464 = scmp.eq.s32.totalorder %s32, 0
    %p465 = por %p463, %p464
    %p466 = scmp.ne.s32.totalorder %s455, %s458
    %p467 = scmp.eq.s32.totalorder %s37, 3
    %p468 = por %p466, %p467
    %p469 = scmp.ne.s32.totalorder %s458, %s459
    %p470 = scmp.eq.s32.totalorder %s37, 0
    %p471 = por %p469, %p470
    %p472 = scmp.ne.s32.totalorder %s458, %s459
    %p473 = scmp.eq.s32.totalorder %s38, 3
    %p474 = por %p472, %p473
    %p476 = scmp.ne.s32.totalorder %s459, %s475
    %p477 = scmp.eq.s32.totalorder %s38, 0
    %p478 = por %p476, %p477
    %s479 = ssub.s32 %s40, %s47
    %p480 = scmp.eq.s32.totalorder %s479, 0
    %s482 = sadd.s32 %s481, 1
    %s483 = scalar_select %p480, %s481, %s482
    %p486 = pneg %p480
    %p487 = scmp.eq.s32.totalorder %s32, 3
    %p488 = por %p486, %p487
    %p489 = scmp.ne.s32.totalorder %s481, %s484
    %p490 = scmp.eq.s32.totalorder %s32, 0
    %p491 = por %p489, %p490
    %p492 = scmp.ne.s32.totalorder %s481, %s484
    %p493 = scmp.eq.s32.totalorder %s37, 3
    %p494 = por %p492, %p493
    %p495 = scmp.ne.s32.totalorder %s484, %s485
    %p496 = scmp.eq.s32.totalorder %s37, 0
    %p497 = por %p495, %p496
    %p498 = scmp.ne.s32.totalorder %s484, %s485
    %p499 = scmp.eq.s32.totalorder %s38, 3
    %p500 = por %p498, %p499
    %p502 = scmp.ne.s32.totalorder %s485, %s501
    %p503 = scmp.eq.s32.totalorder %s38, 0
    %p504 = por %p502, %p503
    %s506 = sadd.s32 %s505, 1
    %p509 = scmp.eq.s32.totalorder %s32, 3
    %p510 = scmp.ne.s32.totalorder %s505, %s507
    %p511 = scmp.eq.s32.totalorder %s32, 0
    %p512 = por %p510, %p511
    %p513 = scmp.ne.s32.totalorder %s505, %s507
    %p514 = scmp.eq.s32.totalorder %s37, 3
    %p515 = por %p513, %p514
    %p516 = scmp.ne.s32.totalorder %s507, %s508
    %p517 = scmp.eq.s32.totalorder %s37, 0
    %p518 = por %p516, %p517
    %p519 = scmp.ne.s32.totalorder %s507, %s508
    %p520 = scmp.eq.s32.totalorder %s38, 3
    %p521 = por %p519, %p520
    %p523 = scmp.ne.s32.totalorder %s508, %s522
    %p524 = scmp.eq.s32.totalorder %s38, 0
    %p525 = por %p523, %p524
    %s527 = sadd.s32 %s526, 1
    %p530 = scmp.eq.s32.totalorder %s32, 3
    %p531 = scmp.ne.s32.totalorder %s526, %s528
    %p532 = scmp.eq.s32.totalorder %s32, 0
    %p533 = por %p531, %p532
    %p534 = scmp.ne.s32.totalorder %s526, %s528
    %p535 = scmp.eq.s32.totalorder %s37, 3
    %p536 = por %p534, %p535
    %p537 = scmp.ne.s32.totalorder %s528, %s529
    %p538 = scmp.eq.s32.totalorder %s37, 0
    %p539 = por %p537, %p538
    %p540 = scmp.ne.s32.totalorder %s528, %s529
    %p541 = scmp.eq.s32.totalorder %s38, 3
    %p542 = por %p540, %p541
    %p544 = scmp.ne.s32.totalorder %s529, %s543
    %p545 = scmp.eq.s32.totalorder %s38, 0
    %p546 = por %p544, %p545
    %s548 = sadd.s32 %s547, 1
    %p551 = scmp.eq.s32.totalorder %s32, 3
    %p552 = scmp.ne.s32.totalorder %s547, %s549
    %p553 = scmp.eq.s32.totalorder %s32, 0
    %p554 = por %p552, %p553
    %p555 = scmp.ne.s32.totalorder %s547, %s549
    %p556 = scmp.eq.s32.totalorder %s37, 3
    %p557 = por %p555, %p556
    %p558 = scmp.ne.s32.totalorder %s549, %s550
    %p559 = scmp.eq.s32.totalorder %s37, 0
    %p560 = por %p558, %p559
    %p561 = scmp.ne.s32.totalorder %s549, %s550
    %p562 = scmp.eq.s32.totalorder %s38, 3
    %p563 = por %p561, %p562
    %p565 = scmp.ne.s32.totalorder %s550, %s564
    %p566 = scmp.eq.s32.totalorder %s38, 0
    %p567 = por %p565, %p566
    %s569 = sadd.s32 %s568, 1
    %p572 = scmp.eq.s32.totalorder %s32, 3
    %p573 = scmp.ne.s32.totalorder %s568, %s570
    %p574 = scmp.eq.s32.totalorder %s32, 0
    %p575 = por %p573, %p574
    %p576 = scmp.ne.s32.totalorder %s568, %s570
    %p577 = scmp.eq.s32.totalorder %s37, 3
    %p578 = por %p576, %p577
    %p579 = scmp.ne.s32.totalorder %s570, %s571
    %p580 = scmp.eq.s32.totalorder %s37, 0
    %p581 = por %p579, %p580
    %p582 = scmp.ne.s32.totalorder %s570, %s571
    %p583 = scmp.eq.s32.totalorder %s38, 3
    %p584 = por %p582, %p583
    %p586 = scmp.ne.s32.totalorder %s571, %s585
    %p587 = scmp.eq.s32.totalorder %s38, 0
    %p588 = por %p586, %p587
    %s590 = sadd.s32 %s589, 1
    %p593 = scmp.eq.s32.totalorder %s32, 3
    %p594 = scmp.ne.s32.totalorder %s589, %s591
    %p595 = scmp.eq.s32.totalorder %s32, 0
    %p596 = por %p594, %p595
    %p597 = scmp.ne.s32.totalorder %s589, %s591
    %p598 = scmp.eq.s32.totalorder %s37, 3
    %p599 = por %p597, %p598
    %p600 = scmp.ne.s32.totalorder %s591, %s592
    %p601 = scmp.eq.s32.totalorder %s37, 0
    %p602 = por %p600, %p601
    %p603 = scmp.ne.s32.totalorder %s591, %s592
    %p604 = scmp.eq.s32.totalorder %s38, 3
    %p605 = por %p603, %p604
    %p607 = scmp.ne.s32.totalorder %s592, %s606
    %p608 = scmp.eq.s32.totalorder %s38, 0
    %p609 = por %p607, %p608
    %s611 = sadd.s32 %s610, 1
    %p614 = scmp.eq.s32.totalorder %s32, 3
    %p615 = scmp.ne.s32.totalorder %s610, %s612
    %p616 = scmp.eq.s32.totalorder %s32, 0
    %p617 = por %p615, %p616
    %p618 = scmp.ne.s32.totalorder %s610, %s612
    %p619 = scmp.eq.s32.totalorder %s37, 3
    %p620 = por %p618, %p619
    %p621 = scmp.ne.s32.totalorder %s612, %s613
    %p622 = scmp.eq.s32.totalorder %s37, 0
    %p623 = por %p621, %p622
    %p624 = scmp.ne.s32.totalorder %s612, %s613
    %p625 = scmp.eq.s32.totalorder %s38, 3
    %p626 = por %p624, %p625
    %p628 = scmp.ne.s32.totalorder %s613, %s627
    %p629 = scmp.eq.s32.totalorder %s38, 0
    %p630 = por %p628, %p629
    %s632 = sadd.s32 %s631, 1
    %p635 = scmp.eq.s32.totalorder %s32, 3
    %p636 = scmp.ne.s32.totalorder %s631, %s633
    %p637 = scmp.eq.s32.totalorder %s32, 0
    %p638 = por %p636, %p637
    %p639 = scmp.ne.s32.totalorder %s631, %s633
    %p640 = scmp.eq.s32.totalorder %s37, 3
    %p641 = por %p639, %p640
    %p642 = scmp.ne.s32.totalorder %s633, %s634
    %p643 = scmp.eq.s32.totalorder %s37, 0
    %p644 = por %p642, %p643
    %p645 = scmp.ne.s32.totalorder %s633, %s634
    %p646 = scmp.eq.s32.totalorder %s38, 3
    %p647 = por %p645, %p646
    %p649 = scmp.ne.s32.totalorder %s634, %s648
    %p650 = scmp.eq.s32.totalorder %s38, 0
    %p651 = por %p649, %p650
    %s653 = sadd.s32 %s652, 1
    %p656 = scmp.eq.s32.totalorder %s32, 3
    %p657 = scmp.ne.s32.totalorder %s652, %s654
    %p658 = scmp.eq.s32.totalorder %s32, 0
    %p659 = por %p657, %p658
    %p660 = scmp.ne.s32.totalorder %s652, %s654
    %p661 = scmp.eq.s32.totalorder %s37, 3
    %p662 = por %p660, %p661
    %p663 = scmp.ne.s32.totalorder %s654, %s655
    %p664 = scmp.eq.s32.totalorder %s37, 0
    %p665 = por %p663, %p664
    %p666 = scmp.ne.s32.totalorder %s654, %s655
    %p667 = scmp.eq.s32.totalorder %s38, 3
    %p668 = por %p666, %p667
    %p670 = scmp.ne.s32.totalorder %s655, %s669
    %p671 = scmp.eq.s32.totalorder %s38, 0
    %p672 = por %p670, %p671
    %s673 = ssub.s32 %s39, %s51
    %p674 = scmp.eq.s32.totalorder %s673, 0
    %s676 = sadd.s32 %s675, 1
    %s677 = scalar_select %p674, %s675, %s676
    %p680 = pneg %p674
    %p681 = scmp.eq.s32.totalorder %s32, 3
    %p682 = por %p680, %p681
    %p683 = scmp.ne.s32.totalorder %s675, %s678
    %p684 = scmp.eq.s32.totalorder %s32, 0
    %p685 = por %p683, %p684
    %p686 = scmp.ne.s32.totalorder %s675, %s678
    %p687 = scmp.eq.s32.totalorder %s37, 3
    %p688 = por %p686, %p687
    %p689 = scmp.ne.s32.totalorder %s678, %s679
    %p690 = scmp.eq.s32.totalorder %s37, 0
    %p691 = por %p689, %p690
    %p692 = scmp.ne.s32.totalorder %s678, %s679
    %p693 = scmp.eq.s32.totalorder %s38, 3
    %p694 = por %p692, %p693
    %p696 = scmp.ne.s32.totalorder %s679, %s695
    %p697 = scmp.eq.s32.totalorder %s38, 0
    %p698 = por %p696, %p697
    %p699 = scmp.le.s32.totalorder 1, %s32
    %p700 = scmp.lt.s32.totalorder %s32, 5
    %p701 = pnand %p699, %p700
    %p702 = pneg %p701
    // Predicated region
    $region9: #{forward.2} parent=5 // pred_check
      _
    $region10: #{forward.2} parent=5 // pred_check_branch
      %704 = sbr.rel (%p701) target = $region12
    $region11: #{forward.2} parent=5 // pred_region
      %s705 = ssub.s32 %s32, 1
      // Predicated region
      $region13: #{forward.2} parent=11 // pred_check
        %p706 = pneg %p91
      $region14: #{forward.2} parent=11 // pred_check_branch
        %708 = sbr.rel (%p706) target = $region16
      $region15: #{forward.2} parent=11 // pred_region
        _
      $region16: #{forward.2} parent=11 // pred_fallthru
        _
      // Predicated region
      $region17: #{forward.2} parent=11 // pred_check
        %p709 = pneg %p112
      $region18: #{forward.2} parent=11 // pred_check_branch
        %711 = sbr.rel (%p709) target = $region20
      $region19: #{forward.2} parent=11 // pred_region
        _
      $region20: #{forward.2} parent=11 // pred_fallthru
        _
      // Predicated region
      $region21: #{forward.2} parent=11 // pred_check
        %p712 = pneg %p133
      $region22: #{forward.2} parent=11 // pred_check_branch
        %714 = sbr.rel (%p712) target = $region24
      $region23: #{forward.2} parent=11 // pred_region
        _
      $region24: #{forward.2} parent=11 // pred_fallthru
        _
      // Predicated region
      $region25: #{forward.2} parent=11 // pred_check
        %p715 = pneg %p518
      $region26: #{forward.2} parent=11 // pred_check_branch
        %717 = sbr.rel (%p715) target = $region28
      $region27: #{forward.2} parent=11 // pred_region
        _
      $region28: #{forward.2} parent=11 // pred_fallthru
        _
      // Predicated region
      $region29: #{forward.2} parent=11 // pred_check
        %p718 = pneg %p539
      $region30: #{forward.2} parent=11 // pred_check_branch
        %720 = sbr.rel (%p718) target = $region32
      $region31: #{forward.2} parent=11 // pred_region
        _
      $region32: #{forward.2} parent=11 // pred_fallthru
        _
      // Predicated region
      $region33: #{forward.2} parent=11 // pred_check
        %p721 = pneg %p560
      $region34: #{forward.2} parent=11 // pred_check_branch
        %723 = sbr.rel (%p721) target = $region36
      $region35: #{forward.2} parent=11 // pred_region
        _
      $region36: #{forward.2} parent=11 // pred_fallthru
        _
      // Predicated region
      $region37: #{forward.2} parent=11 // pred_check
        %p724 = pneg %p581
      $region38: #{forward.2} parent=11 // pred_check_branch
        %726 = sbr.rel (%p724) target = $region40
      $region39: #{forward.2} parent=11 // pred_region
        _
      $region40: #{forward.2} parent=11 // pred_fallthru
        _
      // Predicated region
      $region41: #{forward.2} parent=11 // pred_check
        %p727 = pneg %p602
      $region42: #{forward.2} parent=11 // pred_check_branch
        %729 = sbr.rel (%p727) target = $region44
      $region43: #{forward.2} parent=11 // pred_region
        _
      $region44: #{forward.2} parent=11 // pred_fallthru
        _
      // Predicated region
      $region45: #{forward.2} parent=11 // pred_check
        %p730 = pneg %p623
      $region46: #{forward.2} parent=11 // pred_check_branch
        %732 = sbr.rel (%p730) target = $region48
      $region47: #{forward.2} parent=11 // pred_region
        _
      $region48: #{forward.2} parent=11 // pred_fallthru
        _
      // Predicated region
      $region49: #{forward.2} parent=11 // pred_check
        %p733 = pneg %p644
      $region50: #{forward.2} parent=11 // pred_check_branch
        %735 = sbr.rel (%p733) target = $region52
      $region51: #{forward.2} parent=11 // pred_region
        _
      $region52: #{forward.2} parent=11 // pred_fallthru
        _
      // Predicated region
      $region53: #{forward.2} parent=11 // pred_check
        %p736 = pneg %p665
      $region54: #{forward.2} parent=11 // pred_check_branch
        %738 = sbr.rel (%p736) target = $region56
      $region55: #{forward.2} parent=11 // pred_region
        _
      $region56: #{forward.2} parent=11 // pred_fallthru
        _
    $region12: #{forward.2} parent=5 // pred_fallthru
      _
    %p739 = scmp.lt.s32.totalorder %s32, 4
    // Predicated region
    $region57: #{forward.2} parent=5 // pred_check
      %p740 = pneg %p739
    $region58: #{forward.2} parent=5 // pred_check_branch
      %742 = sbr.rel (%p740) target = $region60
    $region59: #{forward.2} parent=5 // pred_region
      // Predicated region
      $region61: #{forward.2} parent=59 // pred_check
        %p743 = pneg %p64
      $region62: #{forward.2} parent=59 // pred_check_branch
        %745 = sbr.rel (%p743) target = $region64
      $region63: #{forward.2} parent=59 // pred_region
        %p746 = scmp.lt.s32.totalorder %s39, 1
        %s747 = scalar_select %p746, %s39, 1
        %s748 = smul.addr %s747, 2
        %s749 = smul.addr %s748, 4
        %s750 = scalar_lea.vmem %s0, %s749
      $region64: #{forward.2} parent=59 // pred_fallthru
        _
      // Predicated region
      $region65: #{forward.2} parent=59 // pred_check
        %p751 = pneg %p153
      $region66: #{forward.2} parent=59 // pred_check_branch
        %753 = sbr.rel (%p751) target = $region68
      $region67: #{forward.2} parent=59 // pred_region
        %p754 = scmp.lt.s32.totalorder %s40, 1
        %s755 = scalar_select %p754, %s40, 1
        %s756 = smul.addr %s755, 2
        %s757 = scalar_lea.vmem %s4, %s756
      $region68: #{forward.2} parent=59 // pred_fallthru
        _
      // Predicated region
      $region69: #{forward.2} parent=59 // pred_check
        %p758 = pneg %p179
      $region70: #{forward.2} parent=59 // pred_check_branch
        %760 = sbr.rel (%p758) target = $region72
      $region71: #{forward.2} parent=59 // pred_region
        %p761 = scmp.lt.s32.totalorder %s40, 1
        %s762 = scalar_select %p761, %s40, 1
        %s763 = smul.addr %s762, 2
        %s764 = scalar_lea.vmem %s5, %s763
      $region72: #{forward.2} parent=59 // pred_fallthru
        _
      // Predicated region
      $region73: #{forward.2} parent=59 // pred_check
        %p765 = pneg %p205
      $region74: #{forward.2} parent=59 // pred_check_branch
        %767 = sbr.rel (%p765) target = $region76
      $region75: #{forward.2} parent=59 // pred_region
        %p768 = scmp.lt.s32.totalorder %s40, 1
        %s769 = scalar_select %p768, %s40, 1
        %s770 = smul.addr %s769, 4
        %s771 = smul.addr %s770, 4
        %s772 = scalar_lea.vmem %s6, %s771
      $region76: #{forward.2} parent=59 // pred_fallthru
        _
      // Predicated region
      $region77: #{forward.2} parent=59 // pred_check
        %p773 = pneg %p231
      $region78: #{forward.2} parent=59 // pred_check_branch
        %775 = sbr.rel (%p773) target = $region80
      $region79: #{forward.2} parent=59 // pred_region
        %p776 = scmp.lt.s32.totalorder %s40, 1
        %s777 = scalar_select %p776, %s40, 1
        %s778 = scalar_lea.vmem %s7, %s777
      $region80: #{forward.2} parent=59 // pred_fallthru
        _
      // Predicated region
      $region81: #{forward.2} parent=59 // pred_check
        %p779 = pneg %p257
      $region82: #{forward.2} parent=59 // pred_check_branch
        %781 = sbr.rel (%p779) target = $region84
      $region83: #{forward.2} parent=59 // pred_region
        %p782 = scmp.lt.s32.totalorder %s40, 1
        %s783 = scalar_select %p782, %s40, 1
        %s784 = smul.addr %s783, 4
        %s785 = smul.addr %s784, 4
        %s786 = scalar_lea.vmem %s8, %s785
      $region84: #{forward.2} parent=59 // pred_fallthru
        _
      // Predicated region
      $region85: #{forward.2} parent=59 // pred_check
        %p787 = pneg %p283
      $region86: #{forward.2} parent=59 // pred_check_branch
        %789 = sbr.rel (%p787) target = $region88
      $region87: #{forward.2} parent=59 // pred_region
        %p790 = scmp.lt.s32.totalorder %s40, 1
        %s791 = scalar_select %p790, %s40, 1
        %s792 = scalar_lea.vmem %s9, %s791
      $region88: #{forward.2} parent=59 // pred_fallthru
        _
      // Predicated region
      $region89: #{forward.2} parent=59 // pred_check
        %p793 = pneg %p309
      $region90: #{forward.2} parent=59 // pred_check_branch
        %795 = sbr.rel (%p793) target = $region92
      $region91: #{forward.2} parent=59 // pred_region
        %p796 = scmp.lt.s32.totalorder %s40, 1
        %s797 = scalar_select %p796, %s40, 1
        %s798 = smul.addr %s797, 4
        %s799 = smul.addr %s798, 4
        %s800 = scalar_lea.vmem %s10, %s799
      $region92: #{forward.2} parent=59 // pred_fallthru
        _
      // Predicated region
      $region93: #{forward.2} parent=59 // pred_check
        %p801 = pneg %p335
      $region94: #{forward.2} parent=59 // pred_check_branch
        %803 = sbr.rel (%p801) target = $region96
      $region95: #{forward.2} parent=59 // pred_region
        %p804 = scmp.lt.s32.totalorder %s40, 1
        %s805 = scalar_select %p804, %s40, 1
        %s806 = scalar_lea.vmem %s11, %s805
      $region96: #{forward.2} parent=59 // pred_fallthru
        _
      // Predicated region
      $region97: #{forward.2} parent=59 // pred_check
        %p807 = pneg %p361
      $region98: #{forward.2} parent=59 // pred_check_branch
        %809 = sbr.rel (%p807) target = $region100
      $region99: #{forward.2} parent=59 // pred_region
        %p810 = scmp.lt.s32.totalorder %s40, 1
        %s811 = scalar_select %p810, %s40, 1
        %s812 = smul.addr %s811, 16
        %s813 = smul.addr %s812, 4
        %s814 = scalar_lea.vmem %s12, %s813
      $region100: #{forward.2} parent=59 // pred_fallthru
        _
      // Predicated region
      $region101: #{forward.2} parent=59 // pred_check
        %p815 = pneg %p387
      $region102: #{forward.2} parent=59 // pred_check_branch
        %817 = sbr.rel (%p815) target = $region104
      $region103: #{forward.2} parent=59 // pred_region
        %p818 = scmp.lt.s32.totalorder %s40, 1
        %s819 = scalar_select %p818, %s40, 1
        %s820 = scalar_lea.vmem %s13, %s819
      $region104: #{forward.2} parent=59 // pred_fallthru
        _
      // Predicated region
      $region105: #{forward.2} parent=59 // pred_check
        %p821 = pneg %p413
      $region106: #{forward.2} parent=59 // pred_check_branch
        %823 = sbr.rel (%p821) target = $region108
      $region107: #{forward.2} parent=59 // pred_region
        %p824 = scmp.lt.s32.totalorder %s40, 1
        %s825 = scalar_select %p824, %s40, 1
        %s826 = smul.addr %s825, 4
        %s827 = smul.addr %s826, 4
        %s828 = scalar_lea.vmem %s14, %s827
      $region108: #{forward.2} parent=59 // pred_fallthru
        _
      // Predicated region
      $region109: #{forward.2} parent=59 // pred_check
        %p829 = pneg %p439
      $region110: #{forward.2} parent=59 // pred_check_branch
        %831 = sbr.rel (%p829) target = $region112
      $region111: #{forward.2} parent=59 // pred_region
        %p832 = scmp.lt.s32.totalorder %s40, 1
        %s833 = scalar_select %p832, %s40, 1
        %s834 = scalar_lea.vmem %s15, %s833
      $region112: #{forward.2} parent=59 // pred_fallthru
        _
      // Predicated region
      $region113: #{forward.2} parent=59 // pred_check
        %p835 = pneg %p465
      $region114: #{forward.2} parent=59 // pred_check_branch
        %837 = sbr.rel (%p835) target = $region116
      $region115: #{forward.2} parent=59 // pred_region
        %p838 = scmp.lt.s32.totalorder %s40, 1
        %s839 = scalar_select %p838, %s40, 1
        %s840 = smul.addr %s839, 4
        %s841 = scalar_lea.vmem %s16, %s840
      $region116: #{forward.2} parent=59 // pred_fallthru
        _
      // Predicated region
      $region117: #{forward.2} parent=59 // pred_check
        %p842 = pneg %p491
      $region118: #{forward.2} parent=59 // pred_check_branch
        %844 = sbr.rel (%p842) target = $region120
      $region119: #{forward.2} parent=59 // pred_region
        %p845 = scmp.lt.s32.totalorder %s40, 1
        %s846 = scalar_select %p845, %s40, 1
        %s847 = scalar_lea.vmem %s17, %s846
      $region120: #{forward.2} parent=59 // pred_fallthru
        _
    $region60: #{forward.2} parent=5 // pred_fallthru
      _
    %p848 = scmp.le.s32.totalorder 1, %s32
    %p849 = scmp.lt.s32.totalorder %s32, 5
    %p850 = pnand %p848, %p849
    %p851 = pneg %p850
    // Predicated region
    $region121: #{forward.2} parent=5 // pred_check
      _
    $region122: #{forward.2} parent=5 // pred_check_branch
      %853 = sbr.rel (%p850) target = $region124
    $region123: #{forward.2} parent=5 // pred_region
      %s854 = ssub.s32 %s32, 1
      %p855 = scmp.lt.s32.totalorder %s41, 1
      %s856 = scalar_select %p855, %s41, 1
      %s857 = smul.addr %s856, 2
      %s858 = smul.addr %s857, 4
      %s859 = scalar_lea.vmem %s0, %s858
      %p860 = pneg %p70
      %p861 = pneg %p67
      %p862 = pneg %p91
      %p863 = pneg %p88
      %p864 = pneg %p112
      %p865 = pneg %p109
      %p866 = pneg %p133
      %p867 = pneg %p130
      %p868 = scmp.lt.s32.totalorder %s42, 1
      %s869 = scalar_select %p868, %s42, 1
      %s870 = smul.addr %s869, 2
      %s871 = scalar_lea.vmem %s4, %s870
      %p872 = pneg %p159
      %p873 = pneg %p156
      %p874 = scmp.lt.s32.totalorder %s42, 1
      %s875 = scalar_select %p874, %s42, 1
      %s876 = smul.addr %s875, 2
      %s877 = scalar_lea.vmem %s5, %s876
      %p878 = pneg %p185
      %p879 = pneg %p182
      %p880 = scmp.lt.s32.totalorder %s42, 1
      %s881 = scalar_select %p880, %s42, 1
      %s882 = smul.addr %s881, 4
      %s883 = smul.addr %s882, 4
      %s884 = scalar_lea.vmem %s6, %s883
      %p885 = pneg %p211
      %p886 = pneg %p208
      %p887 = scmp.lt.s32.totalorder %s42, 1
      %s888 = scalar_select %p887, %s42, 1
      %s889 = scalar_lea.vmem %s7, %s888
      %p890 = pneg %p237
      %p891 = pneg %p234
      %p892 = scmp.lt.s32.totalorder %s42, 1
      %s893 = scalar_select %p892, %s42, 1
      %s894 = smul.addr %s893, 4
      %s895 = smul.addr %s894, 4
      %s896 = scalar_lea.vmem %s8, %s895
      %p897 = pneg %p263
      %p898 = pneg %p260
      %p899 = scmp.lt.s32.totalorder %s42, 1
      %s900 = scalar_select %p899, %s42, 1
      %s901 = scalar_lea.vmem %s9, %s900
      %p902 = pneg %p289
      %p903 = pneg %p286
      %p904 = scmp.lt.s32.totalorder %s42, 1
      %s905 = scalar_select %p904, %s42, 1
      %s906 = smul.addr %s905, 4
      %s907 = smul.addr %s906, 4
      %s908 = scalar_lea.vmem %s10, %s907
      %p909 = pneg %p315
      %p910 = pneg %p312
      %p911 = scmp.lt.s32.totalorder %s42, 1
      %s912 = scalar_select %p911, %s42, 1
      %s913 = scalar_lea.vmem %s11, %s912
      %p914 = pneg %p341
      %p915 = pneg %p338
      %p916 = scmp.lt.s32.totalorder %s42, 1
      %s917 = scalar_select %p916, %s42, 1
      %s918 = smul.addr %s917, 16
      %s919 = smul.addr %s918, 4
      %s920 = scalar_lea.vmem %s12, %s919
      %p921 = pneg %p367
      %p922 = pneg %p364
      %p923 = scmp.lt.s32.totalorder %s42, 1
      %s924 = scalar_select %p923, %s42, 1
      %s925 = scalar_lea.vmem %s13, %s924
      %p926 = pneg %p393
      %p927 = pneg %p390
      %p928 = scmp.lt.s32.totalorder %s42, 1
      %s929 = scalar_select %p928, %s42, 1
      %s930 = smul.addr %s929, 4
      %s931 = smul.addr %s930, 4
      %s932 = scalar_lea.vmem %s14, %s931
      %p933 = pneg %p419
      %p934 = pneg %p416
      %p935 = scmp.lt.s32.totalorder %s42, 1
      %s936 = scalar_select %p935, %s42, 1
      %s937 = scalar_lea.vmem %s15, %s936
      %p938 = pneg %p445
      %p939 = pneg %p442
      %p940 = scmp.lt.s32.totalorder %s42, 1
      %s941 = scalar_select %p940, %s42, 1
      %s942 = smul.addr %s941, 4
      %s943 = scalar_lea.vmem %s16, %s942
      %p944 = pneg %p471
      %p945 = pneg %p468
      %p946 = scmp.lt.s32.totalorder %s42, 1
      %s947 = scalar_select %p946, %s42, 1
      %s948 = scalar_lea.vmem %s17, %s947
      %p949 = pneg %p497
      %p950 = pneg %p494
      %p951 = pneg %p518
      %p952 = pneg %p515
      %p953 = pneg %p539
      %p954 = pneg %p536
      %p955 = pneg %p560
      %p956 = pneg %p557
      %p957 = pneg %p581
      %p958 = pneg %p578
      %p959 = pneg %p602
      %p960 = pneg %p599
      %p961 = pneg %p623
      %p962 = pneg %p620
      %p963 = pneg %p644
      %p964 = pneg %p641
      %p965 = pneg %p665
      %p966 = pneg %p662
      %p967 = pneg %p691
      %p968 = pneg %p688
      %p969 = scmp.lt.s32.totalorder %s41, 1
      %s970 = scalar_select %p969, %s41, 1
      %s971 = smul.addr %s970, 2
      %s972 = smul.addr %s971, 8
      %s973 = scalar_lea.vmem %s26, %s972
      %p974 = scmp.lt.s32.totalorder %s41, 1
      %s975 = scalar_select %p974, %s41, 1
      %s976 = smul.addr %s975, 2
      %s977 = smul.addr %s976, 4
      %s978 = scalar_lea.vmem %s0, %s977
      %p979 = scmp.lt.s32.totalorder %s42, 1
      %s980 = scalar_select %p979, %s42, 1
      %s981 = smul.addr %s980, 2
      %s982 = scalar_lea.vmem %s4, %s981
      %p983 = scmp.lt.s32.totalorder %s42, 1
      %s984 = scalar_select %p983, %s42, 1
      %s985 = smul.addr %s984, 2
      %s986 = scalar_lea.vmem %s5, %s985
      %p987 = scmp.lt.s32.totalorder %s42, 1
      %s988 = scalar_select %p987, %s42, 1
      %s989 = smul.addr %s988, 4
      %s990 = smul.addr %s989, 4
      %s991 = scalar_lea.vmem %s6, %s990
      %p992 = scmp.lt.s32.totalorder %s42, 1
      %s993 = scalar_select %p992, %s42, 1
      %s994 = scalar_lea.vmem %s7, %s993
      %p995 = scmp.lt.s32.totalorder %s42, 1
      %s996 = scalar_select %p995, %s42, 1
      %s997 = smul.addr %s996, 4
      %s998 = smul.addr %s997, 4
      %s999 = scalar_lea.vmem %s8, %s998
      %p1000 = scmp.lt.s32.totalorder %s42, 1
      %s1001 = scalar_select %p1000, %s42, 1
      %s1002 = scalar_lea.vmem %s9, %s1001
      %p1003 = scmp.lt.s32.totalorder %s42, 1
      %s1004 = scalar_select %p1003, %s42, 1
      %s1005 = smul.addr %s1004, 4
      %s1006 = smul.addr %s1005, 4
      %s1007 = scalar_lea.vmem %s10, %s1006
      %p1008 = scmp.lt.s32.totalorder %s42, 1
      %s1009 = scalar_select %p1008, %s42, 1
      %s1010 = scalar_lea.vmem %s11, %s1009
      %p1011 = scmp.lt.s32.totalorder %s42, 1
      %s1012 = scalar_select %p1011, %s42, 1
      %s1013 = smul.addr %s1012, 16
      %s1014 = smul.addr %s1013, 4
      %s1015 = scalar_lea.vmem %s12, %s1014
      %p1016 = scmp.lt.s32.totalorder %s42, 1
      %s1017 = scalar_select %p1016, %s42, 1
      %s1018 = scalar_lea.vmem %s13, %s1017
      %p1019 = scmp.lt.s32.totalorder %s42, 1
      %s1020 = scalar_select %p1019, %s42, 1
      %s1021 = smul.addr %s1020, 4
      %s1022 = smul.addr %s1021, 4
      %s1023 = scalar_lea.vmem %s14, %s1022
      %p1024 = scmp.lt.s32.totalorder %s42, 1
      %s1025 = scalar_select %p1024, %s42, 1
      %s1026 = scalar_lea.vmem %s15, %s1025
      %p1027 = scmp.lt.s32.totalorder %s42, 1
      %s1028 = scalar_select %p1027, %s42, 1
      %s1029 = smul.addr %s1028, 4
      %s1030 = scalar_lea.vmem %s16, %s1029
      %p1031 = scmp.lt.s32.totalorder %s42, 1
      %s1032 = scalar_select %p1031, %s42, 1
      %s1033 = scalar_lea.vmem %s17, %s1032
      %p1034 = scmp.lt.s32.totalorder %s41, 1
      %s1035 = scalar_select %p1034, %s41, 1
      %s1036 = smul.addr %s1035, 2
      %s1037 = smul.addr %s1036, 8
      %s1038 = scalar_lea.vmem %s26, %s1037
      %p1040 = scmp.eq.s32.totalorder %s42, 0
      // Predicated region
      $region125: #{forward.2} parent=123 // pred_check
        %p1041 = pneg %p1040
      $region126: #{forward.2} parent=123 // pred_check_branch
        %1043 = sbr.rel (%p1041) target = $region128
      $region127: #{forward.2} parent=123 // pred_region
        %v1044 = vld [vmem:[%s978] sm:$0xf]
        %v1045 = vld [vmem:[%s978 + $0x4] sm:$0xf]
        %v1046 = vld [vmem:[%s1] sm:$0xf]
        %v1047 = vld [vmem:[%s1 + $0x4] sm:$0xf]
        %v1048 = vld [vmem:[%s1 + $0x8] sm:$0xf]
        %v1049 = vld [vmem:[%s1 + $0xc] sm:$0xf]
        %v1050 = vld [vmem:[%s1 + $0x10] sm:$0xf]
        %v1051 = vld [vmem:[%s1 + $0x14] sm:$0xf]
        %v1052 = vld [vmem:[%s1 + $0x18] sm:$0xf]
        %v1053 = vld [vmem:[%s1 + $0x1c] sm:$0xf]
        %v1054 = vld [vmem:[%s2] sm:$0x1]
        %v1056 = vperm.slane %v1054, 0
        %v1060 = vunpack.c.l.b16 %v1044
        %v1061 = vunpack.c.l.b16 %v1045
        %v1062 = vpack.c.b16 %v1061, %v1060
        %v1071 = vunpack.c.l.b16 %v1046
        %v1072 = vunpack.c.l.b16 %v1047
        %v1073 = vunpack.c.l.b16 %v1048
        %v1074 = vunpack.c.l.b16 %v1049
        %v1075 = vunpack.c.l.b16 %v1050
        %v1076 = vunpack.c.l.b16 %v1051
        %v1077 = vunpack.c.l.b16 %v1052
        %v1078 = vunpack.c.l.b16 %v1053
        %v1079 = vpack.c.b16 %v1072, %v1071
        %v1080 = vpack.c.b16 %v1074, %v1073
        %v1081 = vpack.c.b16 %v1076, %v1075
        %v1082 = vpack.c.b16 %v1078, %v1077
        %vm1087 = vcmask 523264
        %v1089 = vsel %vm1087, %v1062, 0
        %1091 = vmatpush.bf16.msra.mxu0 0
        %1092 = vmatpush.bf16.msra.mxu0 0
        %1093 = vmatpush.bf16.msra.mxu0 0
        %1094 = vmatpush.bf16.msra.mxu0 0
        %1095 = vmatpush.bf16.msra.mxu0 %v1082
        %1096 = vmatpush.bf16.msra.mxu0 %v1081
        %1097 = vmatpush.bf16.msra.mxu0 %v1080
        %1098 = vmatpush.bf16.msra.mxu0 %v1079
        %1099 = vmatmul.bf16.gmra.mxu0 %v1089
        %v1100 = vpop.f32.mrf.mxu0
        %v1101 = vadd.f32 %v1056, %v1100
        %v1102 = vpop.f32.mrf.mxu0
        %v1103 = vadd.f32 %v1056, %v1102
        %1104 = vdwg.mxu0
        %v1105 = vld [vmem:[%s3] sm:$0xff]
        %v1106 = vld [vmem:[%s3 + $0x8] sm:$0xff]
        %v1107 = vadd.f32 %v1101, %v1105
        %v1108 = vadd.f32 %v1103, %v1106
        %vm1109 = vcmask 261120
        %1110 = vst.msk [vmem:[#allocation2] sm:$0xff] %vm1109, %v1107
        %1111 = vst.msk [vmem:[#allocation2 + $0x8] sm:$0xff] %vm1109, %v1108
      $region128: #{forward.2} parent=123 // pred_fallthru
        _
      %v1112 = vld [vmem:[#allocation2] sm:$0xff]
      %v1113 = vld [vmem:[#allocation2 + $0x8] sm:$0xff]
      %v1114 = vld [vmem:[%s982] sm:$0x1]
      %v1115 = vld [vmem:[%s986] sm:$0x1]
      %vm1116 = vcmask 261120
      %v1117 = vsel %vm1116, %v1112, 0.0
      %1118 = vadd.xlane.f32.xlu0 %v1117
      %v1119 = vpop.xlane.xlu0 %1118
      %v1120 = vsel %vm1116, %v1113, 0.0
      %1121 = vadd.xlane.f32.xlu0 %v1120
      %v1122 = vpop.xlane.xlu0 %1121
      %v1123 = vrcp.pop 32.0
      %v1124 = vmul.f32 32.0, %v1123
      %v1125 = vsub.f32 1.0, %v1124
      %v1126 = vmul.f32 %v1123, %v1125
      %v1127 = vadd.f32 %v1123, %v1126
      %vm1128 = vweird.f32 %v1123
      %v1129 = vsel %vm1128, %v1123, %v1127
      %v1130 = vmul.f32 %v1119, %v1129
      %v1131 = vmul.f32 %v1122, %v1129
      %v1132 = vsub.f32 %v1112, %v1130
      %v1133 = vsub.f32 %v1113, %v1131
      %v1134 = vmul.f32 %v1132, %v1132
      %v1135 = vmul.f32 %v1133, %v1133
      %v1136 = vsel %vm1116, %v1134, 0.0
      %1137 = vadd.xlane.f32.xlu0 %v1136
      %v1138 = vpop.xlane.xlu0 %1137
      %v1139 = vsel %vm1116, %v1135, 0.0
      %1140 = vadd.xlane.f32.xlu0 %v1139
      %v1141 = vpop.xlane.xlu0 %1140
      %v1142 = vmul.f32 %v1138, %v1129
      %v1143 = vmul.f32 %v1141, %v1129
      %v1144 = vadd.f32 %v1142, 1e-06
      %v1145 = vadd.f32 %v1143, 1e-06
      %v1146 = vrsqrt.pop %v1144
      %v1147 = vmul.f32 %v1146, %v1144
      %v1148 = vmul.f32 %v1147, %v1146
      %v1149 = vmul.f32 0.5, %v1148
      %v1150 = vsub.f32 1.5, %v1149
      %v1151 = vmul.f32 %v1146, %v1150
      %vm1152 = vweird.f32 %v1144
      %vm1153 = vweird.f32 %v1146
      %vm1154 = vmor %vm1152, %vm1153
      %v1155 = vsel %vm1154, %v1146, %v1151
      %v1156 = vrsqrt.pop %v1145
      %v1157 = vmul.f32 %v1156, %v1145
      %v1158 = vmul.f32 %v1157, %v1156
      %v1159 = vmul.f32 0.5, %v1158
      %v1160 = vsub.f32 1.5, %v1159
      %v1161 = vmul.f32 %v1156, %v1160
      %vm1162 = vweird.f32 %v1145
      %vm1163 = vweird.f32 %v1156
      %vm1164 = vmor %vm1162, %vm1163
      %v1165 = vsel %vm1164, %v1156, %v1161
      %v1166 = vmul.f32 %v1132, %v1155
      %v1167 = vmul.f32 %v1133, %v1165
      %v1168 = vperm.slane %v1114, 0
      %v1169 = vmul.f32 %v1166, %v1168
      %v1170 = vmul.f32 %v1167, %v1168
      %v1171 = vperm.slane %v1115, 0
      %v1172 = vadd.f32 %v1169, %v1171
      %v1173 = vadd.f32 %v1170, %v1171
      %v1174 = vpack.c.bf16 %v1173, %v1172
      %v1175 = vld [vmem:[%s991] sm:$0xf]
      %v1176 = vld [vmem:[%s991 + $0x4] sm:$0xf]
      %v1177 = vld [vmem:[%s991 + $0x8] sm:$0xf]
      %v1178 = vld [vmem:[%s991 + $0xc] sm:$0xf]
      %v1179 = vld [vmem:[%s994] sm:$0x1]
      %v1181 = vperm.slane %v1179, 0
      %v1187 = vunpack.c.l.b16 %v1175
      %v1188 = vunpack.c.l.b16 %v1176
      %v1189 = vunpack.c.l.b16 %v1177
      %v1190 = vunpack.c.l.b16 %v1178
      %v1191 = vpack.c.b16 %v1188, %v1187
      %v1192 = vpack.c.b16 %v1190, %v1189
      %v1196 = vsel %vm1116, %v1174, 0
      %1198 = vmatpush.bf16.msra.mxu0 0
      %1199 = vmatpush.bf16.msra.mxu0 0
      %1200 = vmatpush.bf16.msra.mxu0 0
      %1201 = vmatpush.bf16.msra.mxu0 0
      %1202 = vmatpush.bf16.msra.mxu0 0
      %1203 = vmatpush.bf16.msra.mxu0 0
      %1204 = vmatpush.bf16.msra.mxu0 %v1192
      %1205 = vmatpush.bf16.msra.mxu0 %v1191
      %1206 = vmatmul.bf16.gmra.mxu0 %v1196
      %v1207 = vpop.f32.mrf.mxu0
      %v1208 = vadd.f32 %v1181, %v1207
      %v1209 = vpop.f32.mrf.mxu0
      %v1210 = vadd.f32 %v1181, %v1209
      %1211 = vdwg.mxu0
      %v1212 = vld [vmem:[%s999] sm:$0xf]
      %v1213 = vld [vmem:[%s999 + $0x4] sm:$0xf]
      %v1214 = vld [vmem:[%s999 + $0x8] sm:$0xf]
      %v1215 = vld [vmem:[%s999 + $0xc] sm:$0xf]
      %v1216 = vld [vmem:[%s1002] sm:$0x1]
      %v1217 = vmul.f32 %v1208, 0.35355338
      %v1218 = vmul.f32 %v1210, 0.35355338
      %v1219 = vpack.c.bf16 %v1217, %v1217
      %v1220 = vpack.c.bf16 %v1218, %v1218
      %v1221 = vpack.c.bf16 %v1208, %v1208
      %v1222 = vpack.c.bf16 %v1210, %v1210
      %v1225 = vunpack.c.l.b16 %v1219
      %v1226 = vunpack.c.l.b16 %v1220
      %v1227 = vpack.c.b16 %v1226, %v1225
      %v1230 = vunpack.c.l.b16 %v1221
      %v1231 = vunpack.c.l.b16 %v1222
      %v1232 = vpack.c.b16 %v1231, %v1230
      %1233 = vrot.lane.b32.xlu0 %v1232, 96
      %v1234 = vpop.permute.xlu0 %1233
      %vm1235 = vcmask 64512
      %v1237 = vsel %vm1235, %v1227, 0
      %v1240 = vsel %vm1235, %v1234, 0
      %1242 = vmatpush.bf16.xpose.msra.mxu0 0
      %1243 = vmatpush.bf16.xpose.msra.mxu0 0
      %1244 = vmatpush.bf16.xpose.msra.mxu0 0
      %1245 = vmatpush.bf16.xpose.msra.mxu0 0
      %1246 = vmatpush.bf16.xpose.msra.mxu0 0
      %1247 = vmatpush.bf16.xpose.msra.mxu0 0
      %1248 = vmatpush.bf16.xpose.msra.mxu0 0
      %1249 = vmatpush.bf16.xpose.msra.mxu0 %v1240
      %1250 = vmatmul.bf16.gmra.mxu0 %v1237
      %v1251 = vpop.f32.mrf.mxu0
      %v1252 = vadd.f32 0.0, %v1251
      %v1253 = vpop.f32.mrf.mxu0
      %v1254 = vadd.f32 0.0, %v1253
      %1255 = vdwg.mxu0
      %vm1256 = vcmask 130048
      %v1257 = vsel %vm1256, %v1252, -inf
      %1258 = vmax.xlane.f32.xlu0 %v1257
      %v1259 = vpop.xlane.xlu0 %1258
      %v1260 = vsel %vm1256, %v1254, -inf
      %1261 = vmax.xlane.f32.xlu0 %v1260
      %v1262 = vpop.xlane.xlu0 %1261
      %v1263 = vsub.f32 %v1252, %v1259
      %v1264 = vsub.f32 %v1254, %v1262
      %v1265 = vmul.f32 %v1263, 1.442695
      %v1266 = vpow.pop %v1265
      %v1267 = vmul.f32 %v1264, 1.442695
      %v1268 = vpow.pop %v1267
      %v1269 = vsel %vm1256, %v1266, 0.0
      %1270 = vadd.xlane.f32.xlu0 %v1269
      %v1271 = vpop.xlane.xlu0 %1270
      %v1272 = vsel %vm1256, %v1268, 0.0
      %1273 = vadd.xlane.f32.xlu0 %v1272
      %v1274 = vpop.xlane.xlu0 %1273
      %v1275 = vrcp.pop %v1271
      %v1276 = vrcp.pop %v1274
      %v1277 = vmul.f32 %v1266, %v1275
      %v1278 = vmul.f32 %v1268, %v1276
      %v1279 = vpack.c.bf16 %v1278, %v1277
      %1280 = vrot.lane.b32.xlu0 %v1232, 64
      %v1281 = vpop.permute.xlu0 %1280
      %v1284 = vsel %vm1256, %v1279, 0
      %1286 = vmatpush.bf16.msra.mxu0 0
      %1287 = vmatpush.bf16.msra.mxu0 0
      %1288 = vmatpush.bf16.msra.mxu0 0
      %1289 = vmatpush.bf16.msra.mxu0 0
      %1290 = vmatpush.bf16.msra.mxu0 0
      %1291 = vmatpush.bf16.msra.mxu0 0
      %1292 = vmatpush.bf16.msra.mxu0 0
      %1293 = vmatpush.bf16.msra.mxu0 %v1281
      %1294 = vmatmul.bf16.gmra.mxu0 %v1284
      %v1295 = vpop.f32.mrf.mxu0
      %v1296 = vadd.f32 0.0, %v1295
      %v1297 = vpop.f32.mrf.mxu0
      %v1298 = vadd.f32 0.0, %v1297
      %1299 = vdwg.mxu0
      %1300 = vrot.lane.b32.xlu0 %v1227, 120
      %v1301 = vpop.permute.xlu0 %1300
      %1302 = vrot.lane.b32.xlu0 %v1232, 88
      %v1303 = vpop.permute.xlu0 %1302
      %v1305 = vsel %vm1235, %v1301, 0
      %v1308 = vsel %vm1235, %v1303, 0
      %1310 = vmatpush.bf16.xpose.msra.mxu0 0
      %1311 = vmatpush.bf16.xpose.msra.mxu0 0
      %1312 = vmatpush.bf16.xpose.msra.mxu0 0
      %1313 = vmatpush.bf16.xpose.msra.mxu0 0
      %1314 = vmatpush.bf16.xpose.msra.mxu0 0
      %1315 = vmatpush.bf16.xpose.msra.mxu0 0
      %1316 = vmatpush.bf16.xpose.msra.mxu0 0
      %1317 = vmatpush.bf16.xpose.msra.mxu0 %v1308
      %1318 = vmatmul.bf16.gmra.mxu0 %v1305
      %v1319 = vpop.f32.mrf.mxu0
      %v1320 = vadd.f32 0.0, %v1319
      %v1321 = vpop.f32.mrf.mxu0
      %v1322 = vadd.f32 0.0, %v1321
      %1323 = vdwg.mxu0
      %v1324 = vsel %vm1256, %v1320, -inf
      %1325 = vmax.xlane.f32.xlu0 %v1324
      %v1326 = vpop.xlane.xlu0 %1325
      %v1327 = vsel %vm1256, %v1322, -inf
      %1328 = vmax.xlane.f32.xlu0 %v1327
      %v1329 = vpop.xlane.xlu0 %1328
      %v1330 = vsub.f32 %v1320, %v1326
      %v1331 = vsub.f32 %v1322, %v1329
      %v1332 = vmul.f32 %v1330, 1.442695
      %v1333 = vpow.pop %v1332
      %v1334 = vmul.f32 %v1331, 1.442695
      %v1335 = vpow.pop %v1334
      %v1336 = vsel %vm1256, %v1333, 0.0
      %1337 = vadd.xlane.f32.xlu0 %v1336
      %v1338 = vpop.xlane.xlu0 %1337
      %v1339 = vsel %vm1256, %v1335, 0.0
      %1340 = vadd.xlane.f32.xlu0 %v1339
      %v1341 = vpop.xlane.xlu0 %1340
      %v1342 = vrcp.pop %v1338
      %v1343 = vrcp.pop %v1341
      %v1344 = vmul.f32 %v1333, %v1342
      %v1345 = vmul.f32 %v1335, %v1343
      %v1346 = vpack.c.bf16 %v1345, %v1344
      %1347 = vrot.lane.b32.xlu0 %v1232, 56
      %v1348 = vpop.permute.xlu0 %1347
      %v1351 = vsel %vm1256, %v1346, 0
      %1353 = vmatpush.bf16.msra.mxu0 0
      %1354 = vmatpush.bf16.msra.mxu0 0
      %1355 = vmatpush.bf16.msra.mxu0 0
      %1356 = vmatpush.bf16.msra.mxu0 0
      %1357 = vmatpush.bf16.msra.mxu0 0
      %1358 = vmatpush.bf16.msra.mxu0 0
      %1359 = vmatpush.bf16.msra.mxu0 0
      %1360 = vmatpush.bf16.msra.mxu0 %v1348
      %1361 = vmatmul.bf16.gmra.mxu0 %v1351
      %v1362 = vpop.f32.mrf.mxu0
      %v1363 = vadd.f32 0.0, %v1362
      %v1364 = vpop.f32.mrf.mxu0
      %v1365 = vadd.f32 0.0, %v1364
      %1366 = vdwg.mxu0
      %1367 = vrot.lane.b32.xlu0 %v1227, 112
      %v1368 = vpop.permute.xlu0 %1367
      %1369 = vrot.lane.b32.xlu0 %v1232, 80
      %v1370 = vpop.permute.xlu0 %1369
      %v1372 = vsel %vm1235, %v1368, 0
      %v1375 = vsel %vm1235, %v1370, 0
      %1377 = vmatpush.bf16.xpose.msra.mxu0 0
      %1378 = vmatpush.bf16.xpose.msra.mxu0 0
      %1379 = vmatpush.bf16.xpose.msra.mxu0 0
      %1380 = vmatpush.bf16.xpose.msra.mxu0 0
      %1381 = vmatpush.bf16.xpose.msra.mxu0 0
      %1382 = vmatpush.bf16.xpose.msra.mxu0 0
      %1383 = vmatpush.bf16.xpose.msra.mxu0 0
      %1384 = vmatpush.bf16.xpose.msra.mxu0 %v1375
      %1385 = vmatmul.bf16.gmra.mxu0 %v1372
      %v1386 = vpop.f32.mrf.mxu0
      %v1387 = vadd.f32 0.0, %v1386
      %v1388 = vpop.f32.mrf.mxu0
      %v1389 = vadd.f32 0.0, %v1388
      %1390 = vdwg.mxu0
      %v1391 = vsel %vm1256, %v1387, -inf
      %1392 = vmax.xlane.f32.xlu0 %v1391
      %v1393 = vpop.xlane.xlu0 %1392
      %v1394 = vsel %vm1256, %v1389, -inf
      %1395 = vmax.xlane.f32.xlu0 %v1394
      %v1396 = vpop.xlane.xlu0 %1395
      %v1397 = vsub.f32 %v1387, %v1393
      %v1398 = vsub.f32 %v1389, %v1396
      %v1399 = vmul.f32 %v1397, 1.442695
      %v1400 = vpow.pop %v1399
      %v1401 = vmul.f32 %v1398, 1.442695
      %v1402 = vpow.pop %v1401
      %v1403 = vsel %vm1256, %v1400, 0.0
      %1404 = vadd.xlane.f32.xlu0 %v1403
      %v1405 = vpop.xlane.xlu0 %1404
      %v1406 = vsel %vm1256, %v1402, 0.0
      %1407 = vadd.xlane.f32.xlu0 %v1406
      %v1408 = vpop.xlane.xlu0 %1407
      %v1409 = vrcp.pop %v1405
      %v1410 = vrcp.pop %v1408
      %v1411 = vmul.f32 %v1400, %v1409
      %v1412 = vmul.f32 %v1402, %v1410
      %v1413 = vpack.c.bf16 %v1412, %v1411
      %1414 = vrot.lane.b32.xlu0 %v1232, 48
      %v1415 = vpop.permute.xlu0 %1414
      %v1418 = vsel %vm1256, %v1413, 0
      %1420 = vmatpush.bf16.msra.mxu0 0
      %1421 = vmatpush.bf16.msra.mxu0 0
      %1422 = vmatpush.bf16.msra.mxu0 0
      %1423 = vmatpush.bf16.msra.mxu0 0
      %1424 = vmatpush.bf16.msra.mxu0 0
      %1425 = vmatpush.bf16.msra.mxu0 0
      %1426 = vmatpush.bf16.msra.mxu0 0
      %1427 = vmatpush.bf16.msra.mxu0 %v1415
      %1428 = vmatmul.bf16.gmra.mxu0 %v1418
      %v1429 = vpop.f32.mrf.mxu0
      %v1430 = vadd.f32 0.0, %v1429
      %v1431 = vpop.f32.mrf.mxu0
      %v1432 = vadd.f32 0.0, %v1431
      %1433 = vdwg.mxu0
      %1434 = vrot.lane.b32.xlu0 %v1227, 104
      %v1435 = vpop.permute.xlu0 %1434
      %1436 = vrot.lane.b32.xlu0 %v1232, 72
      %v1437 = vpop.permute.xlu0 %1436
      %v1439 = vsel %vm1235, %v1435, 0
      %v1442 = vsel %vm1235, %v1437, 0
      %1444 = vmatpush.bf16.xpose.msra.mxu0 0
      %1445 = vmatpush.bf16.xpose.msra.mxu0 0
      %1446 = vmatpush.bf16.xpose.msra.mxu0 0
      %1447 = vmatpush.bf16.xpose.msra.mxu0 0
      %1448 = vmatpush.bf16.xpose.msra.mxu0 0
      %1449 = vmatpush.bf16.xpose.msra.mxu0 0
      %1450 = vmatpush.bf16.xpose.msra.mxu0 0
      %1451 = vmatpush.bf16.xpose.msra.mxu0 %v1442
      %1452 = vmatmul.bf16.gmra.mxu0 %v1439
      %v1453 = vpop.f32.mrf.mxu0
      %v1454 = vadd.f32 0.0, %v1453
      %v1455 = vpop.f32.mrf.mxu0
      %v1456 = vadd.f32 0.0, %v1455
      %1457 = vdwg.mxu0
      %v1458 = vsel %vm1256, %v1454, -inf
      %1459 = vmax.xlane.f32.xlu0 %v1458
      %v1460 = vpop.xlane.xlu0 %1459
      %v1461 = vsel %vm1256, %v1456, -inf
      %1462 = vmax.xlane.f32.xlu0 %v1461
      %v1463 = vpop.xlane.xlu0 %1462
      %v1464 = vsub.f32 %v1454, %v1460
      %v1465 = vsub.f32 %v1456, %v1463
      %v1466 = vmul.f32 %v1464, 1.442695
      %v1467 = vpow.pop %v1466
      %v1468 = vmul.f32 %v1465, 1.442695
      %v1469 = vpow.pop %v1468
      %v1470 = vsel %vm1256, %v1467, 0.0
      %1471 = vadd.xlane.f32.xlu0 %v1470
      %v1472 = vpop.xlane.xlu0 %1471
      %v1473 = vsel %vm1256, %v1469, 0.0
      %1474 = vadd.xlane.f32.xlu0 %v1473
      %v1475 = vpop.xlane.xlu0 %1474
      %v1476 = vrcp.pop %v1472
      %v1477 = vrcp.pop %v1475
      %v1478 = vmul.f32 %v1467, %v1476
      %v1479 = vmul.f32 %v1469, %v1477
      %v1480 = vpack.c.bf16 %v1479, %v1478
      %1481 = vrot.lane.b32.xlu0 %v1232, 40
      %v1482 = vpop.permute.xlu0 %1481
      %v1485 = vsel %vm1256, %v1480, 0
      %1487 = vmatpush.bf16.msra.mxu0 0
      %1488 = vmatpush.bf16.msra.mxu0 0
      %1489 = vmatpush.bf16.msra.mxu0 0
      %1490 = vmatpush.bf16.msra.mxu0 0
      %1491 = vmatpush.bf16.msra.mxu0 0
      %1492 = vmatpush.bf16.msra.mxu0 0
      %1493 = vmatpush.bf16.msra.mxu0 0
      %1494 = vmatpush.bf16.msra.mxu0 %v1482
      %1495 = vmatmul.bf16.gmra.mxu0 %v1485
      %v1496 = vpop.f32.mrf.mxu0
      %v1497 = vadd.f32 0.0, %v1496
      %v1498 = vpop.f32.mrf.mxu0
      %v1499 = vadd.f32 0.0, %v1498
      %1500 = vdwg.mxu0
      %1503 = vrot.lane.b32.xlu0 %v1363, 8
      %v1504 = vpop.permute.xlu0 %1503
      %1505 = vrot.lane.b32.xlu0 %v1365, 8
      %v1506 = vpop.permute.xlu0 %1505
      %1511 = vrot.lane.b32.xlu0 %v1430, 16
      %v1512 = vpop.permute.xlu0 %1511
      %1513 = vrot.lane.b32.xlu0 %v1432, 16
      %v1514 = vpop.permute.xlu0 %1513
      %1519 = vrot.lane.b32.xlu0 %v1497, 24
      %v1520 = vpop.permute.xlu0 %1519
      %1521 = vrot.lane.b32.xlu0 %v1499, 24
      %v1522 = vpop.permute.xlu0 %1521
      %v1525 = vsel %vm1235, %v1296, %v1504
      %v1526 = vsel %vm1235, %v1298, %v1506
      %v1527 = vsel %vm1256, %v1525, %v1512
      %v1528 = vsel %vm1256, %v1526, %v1514
      %vm1529 = vcmask 195584
      %v1530 = vsel %vm1529, %v1527, %v1520
      %v1531 = vsel %vm1529, %v1528, %v1522
      %v1532 = vpack.c.bf16 %v1531, %v1530
      %v1534 = vperm.slane %v1216, 0
      %v1540 = vunpack.c.l.b16 %v1212
      %v1541 = vunpack.c.l.b16 %v1213
      %v1542 = vunpack.c.l.b16 %v1214
      %v1543 = vunpack.c.l.b16 %v1215
      %v1544 = vpack.c.b16 %v1541, %v1540
      %v1545 = vpack.c.b16 %v1543, %v1542
      %v1549 = vsel %vm1116, %v1532, 0
      %1551 = vmatpush.bf16.msra.mxu0 0
      %1552 = vmatpush.bf16.msra.mxu0 0
      %1553 = vmatpush.bf16.msra.mxu0 0
      %1554 = vmatpush.bf16.msra.mxu0 0
      %1555 = vmatpush.bf16.msra.mxu0 0
      %1556 = vmatpush.bf16.msra.mxu0 0
      %1557 = vmatpush.bf16.msra.mxu0 %v1545
      %1558 = vmatpush.bf16.msra.mxu0 %v1544
      %1559 = vmatmul.bf16.gmra.mxu0 %v1549
      %v1560 = vpop.f32.mrf.mxu0
      %v1561 = vadd.f32 %v1534, %v1560
      %v1562 = vpop.f32.mrf.mxu0
      %v1563 = vadd.f32 %v1534, %v1562
      %1564 = vdwg.mxu0
      %v1565 = vadd.f32 %v1112, %v1561
      %v1566 = vadd.f32 %v1113, %v1563
      %v1567 = vld [vmem:[%s982 + $0x1] sm:$0x1]
      %v1568 = vld [vmem:[%s986 + $0x1] sm:$0x1]
      %v1569 = vsel %vm1116, %v1565, 0.0
      %1570 = vadd.xlane.f32.xlu0 %v1569
      %v1571 = vpop.xlane.xlu0 %1570
      %v1572 = vsel %vm1116, %v1566, 0.0
      %1573 = vadd.xlane.f32.xlu0 %v1572
      %v1574 = vpop.xlane.xlu0 %1573
      %v1575 = vmul.f32 %v1571, %v1129
      %v1576 = vmul.f32 %v1574, %v1129
      %v1577 = vsub.f32 %v1565, %v1575
      %v1578 = vsub.f32 %v1566, %v1576
      %v1579 = vmul.f32 %v1577, %v1577
      %v1580 = vmul.f32 %v1578, %v1578
      %v1581 = vsel %vm1116, %v1579, 0.0
      %1582 = vadd.xlane.f32.xlu0 %v1581
      %v1583 = vpop.xlane.xlu0 %1582
      %v1584 = vsel %vm1116, %v1580, 0.0
      %1585 = vadd.xlane.f32.xlu0 %v1584
      %v1586 = vpop.xlane.xlu0 %1585
      %v1587 = vmul.f32 %v1583, %v1129
      %v1588 = vmul.f32 %v1586, %v1129
      %v1589 = vadd.f32 %v1587, 1e-06
      %v1590 = vadd.f32 %v1588, 1e-06
      %v1591 = vrsqrt.pop %v1589
      %v1592 = vmul.f32 %v1591, %v1589
      %v1593 = vmul.f32 %v1592, %v1591
      %v1594 = vmul.f32 0.5, %v1593
      %v1595 = vsub.f32 1.5, %v1594
      %v1596 = vmul.f32 %v1591, %v1595
      %vm1597 = vweird.f32 %v1589
      %vm1598 = vweird.f32 %v1591
      %vm1599 = vmor %vm1597, %vm1598
      %v1600 = vsel %vm1599, %v1591, %v1596
      %v1601 = vrsqrt.pop %v1590
      %v1602 = vmul.f32 %v1601, %v1590
      %v1603 = vmul.f32 %v1602, %v1601
      %v1604 = vmul.f32 0.5, %v1603
      %v1605 = vsub.f32 1.5, %v1604
      %v1606 = vmul.f32 %v1601, %v1605
      %vm1607 = vweird.f32 %v1590
      %vm1608 = vweird.f32 %v1601
      %vm1609 = vmor %vm1607, %vm1608
      %v1610 = vsel %vm1609, %v1601, %v1606
      %v1611 = vmul.f32 %v1577, %v1600
      %v1612 = vmul.f32 %v1578, %v1610
      %v1613 = vperm.slane %v1567, 0
      %v1614 = vmul.f32 %v1611, %v1613
      %v1615 = vmul.f32 %v1612, %v1613
      %v1616 = vperm.slane %v1568, 0
      %v1617 = vadd.f32 %v1614, %v1616
      %v1618 = vadd.f32 %v1615, %v1616
      %v1619 = vpack.c.bf16 %v1618, %v1617
      %v1620 = vld [vmem:[%s1007] sm:$0xf]
      %v1621 = vld [vmem:[%s1007 + $0x4] sm:$0xf]
      %v1622 = vld [vmem:[%s1007 + $0x8] sm:$0xf]
      %v1623 = vld [vmem:[%s1007 + $0xc] sm:$0xf]
      %v1624 = vld [vmem:[%s1010] sm:$0x1]
      %v1626 = vperm.slane %v1624, 0
      %v1632 = vunpack.c.l.b16 %v1620
      %v1633 = vunpack.c.l.b16 %v1621
      %v1634 = vunpack.c.l.b16 %v1622
      %v1635 = vunpack.c.l.b16 %v1623
      %v1636 = vpack.c.b16 %v1633, %v1632
      %v1637 = vpack.c.b16 %v1635, %v1634
      %v1641 = vsel %vm1116, %v1619, 0
      %1643 = vmatpush.bf16.msra.mxu0 0
      %1644 = vmatpush.bf16.msra.mxu0 0
      %1645 = vmatpush.bf16.msra.mxu0 0
      %1646 = vmatpush.bf16.msra.mxu0 0
      %1647 = vmatpush.bf16.msra.mxu0 0
      %1648 = vmatpush.bf16.msra.mxu0 0
      %1649 = vmatpush.bf16.msra.mxu0 %v1637
      %1650 = vmatpush.bf16.msra.mxu0 %v1636
      %1651 = vmatmul.bf16.gmra.mxu0 %v1641
      %v1652 = vpop.f32.mrf.mxu0
      %v1653 = vadd.f32 %v1626, %v1652
      %v1654 = vpop.f32.mrf.mxu0
      %v1655 = vadd.f32 %v1626, %v1654
      %1656 = vdwg.mxu0
      %v1657 = vmul.f32 %v1653, %v1653
      %v1658 = vmul.f32 %v1655, %v1655
      %v1659 = vmul.f32 %v1653, %v1657
      %v1660 = vmul.f32 %v1655, %v1658
      %v1661 = vmul.f32 %v1659, 0.044715
      %v1662 = vmul.f32 %v1660, 0.044715
      %v1663 = vadd.f32 %v1653, %v1661
      %v1664 = vadd.f32 %v1655, %v1662
      %v1665 = vmul.f32 %v1663, 0.7978846
      %v1666 = vmul.f32 %v1664, 0.7978846
      %v1667 = vtanh.pop %v1665
      %v1668 = vtanh.pop %v1666
      %v1669 = vadd.f32 %v1667, 1.0
      %v1670 = vadd.f32 %v1668, 1.0
      %v1671 = vmul.f32 %v1669, 0.5
      %v1672 = vmul.f32 %v1670, 0.5
      %v1673 = vmul.f32 %v1653, %v1671
      %v1674 = vmul.f32 %v1655, %v1672
      %v1675 = vpack.c.bf16 %v1674, %v1673
      %v1676 = vld [vmem:[%s1015] sm:$0xf]
      %v1677 = vld [vmem:[%s1015 + $0x4] sm:$0xf]
      %v1678 = vld [vmem:[%s1015 + $0x8] sm:$0xf]
      %v1679 = vld [vmem:[%s1015 + $0xc] sm:$0xf]
      %v1680 = vld [vmem:[%s1015 + $0x10] sm:$0xf]
      %v1681 = vld [vmem:[%s1015 + $0x14] sm:$0xf]
      %v1682 = vld [vmem:[%s1015 + $0x18] sm:$0xf]
      %v1683 = vld [vmem:[%s1015 + $0x1c] sm:$0xf]
      %v1684 = vld [vmem:[%s1015 + $0x20] sm:$0xf]
      %v1685 = vld [vmem:[%s1015 + $0x24] sm:$0xf]
      %v1686 = vld [vmem:[%s1015 + $0x28] sm:$0xf]
      %v1687 = vld [vmem:[%s1015 + $0x2c] sm:$0xf]
      %v1688 = vld [vmem:[%s1015 + $0x30] sm:$0xf]
      %v1689 = vld [vmem:[%s1015 + $0x34] sm:$0xf]
      %v1690 = vld [vmem:[%s1015 + $0x38] sm:$0xf]
      %v1691 = vld [vmem:[%s1015 + $0x3c] sm:$0xf]
      %v1692 = vld [vmem:[%s1018] sm:$0x1]
      %v1694 = vperm.slane %v1692, 0
      %v1712 = vunpack.c.l.b16 %v1676
      %v1713 = vunpack.c.l.b16 %v1677
      %v1714 = vunpack.c.l.b16 %v1678
      %v1715 = vunpack.c.l.b16 %v1679
      %v1716 = vunpack.c.l.b16 %v1680
      %v1717 = vunpack.c.l.b16 %v1681
      %v1718 = vunpack.c.l.b16 %v1682
      %v1719 = vunpack.c.l.b16 %v1683
      %v1720 = vunpack.c.l.b16 %v1684
      %v1721 = vunpack.c.l.b16 %v1685
      %v1722 = vunpack.c.l.b16 %v1686
      %v1723 = vunpack.c.l.b16 %v1687
      %v1724 = vunpack.c.l.b16 %v1688
      %v1725 = vunpack.c.l.b16 %v1689
      %v1726 = vunpack.c.l.b16 %v1690
      %v1727 = vunpack.c.l.b16 %v1691
      %v1728 = vpack.c.b16 %v1713, %v1712
      %v1729 = vpack.c.b16 %v1715, %v1714
      %v1730 = vpack.c.b16 %v1717, %v1716
      %v1731 = vpack.c.b16 %v1719, %v1718
      %v1732 = vpack.c.b16 %v1721, %v1720
      %v1733 = vpack.c.b16 %v1723, %v1722
      %v1734 = vpack.c.b16 %v1725, %v1724
      %v1735 = vpack.c.b16 %v1727, %v1726
      %1744 = vmatpush.bf16.msra.mxu0 %v1735
      %1745 = vmatpush.bf16.msra.mxu0 %v1734
      %1746 = vmatpush.bf16.msra.mxu0 %v1733
      %1747 = vmatpush.bf16.msra.mxu0 %v1732
      %1748 = vmatpush.bf16.msra.mxu0 %v1731
      %1749 = vmatpush.bf16.msra.mxu0 %v1730
      %1750 = vmatpush.bf16.msra.mxu0 %v1729
      %1751 = vmatpush.bf16.msra.mxu0 %v1728
      %1752 = vmatmul.bf16.gmra.mxu0 %v1675
      %v1753 = vpop.f32.mrf.mxu0
      %v1754 = vadd.f32 %v1694, %v1753
      %v1755 = vpop.f32.mrf.mxu0
      %v1756 = vadd.f32 %v1694, %v1755
      %1757 = vdwg.mxu0
      %v1758 = vld [vmem:[%s1023] sm:$0xf]
      %v1759 = vld [vmem:[%s1023 + $0x4] sm:$0xf]
      %v1760 = vld [vmem:[%s1023 + $0x8] sm:$0xf]
      %v1761 = vld [vmem:[%s1023 + $0xc] sm:$0xf]
      %v1762 = vld [vmem:[%s1026] sm:$0x1]
      %v1764 = vperm.slane %v1762, 0
      %v1770 = vunpack.c.l.b16 %v1758
      %v1771 = vunpack.c.l.b16 %v1759
      %v1772 = vunpack.c.l.b16 %v1760
      %v1773 = vunpack.c.l.b16 %v1761
      %v1774 = vpack.c.b16 %v1771, %v1770
      %v1775 = vpack.c.b16 %v1773, %v1772
      %1778 = vmatpush.bf16.msra.mxu0 0
      %1779 = vmatpush.bf16.msra.mxu0 0
      %1780 = vmatpush.bf16.msra.mxu0 0
      %1781 = vmatpush.bf16.msra.mxu0 0
      %1782 = vmatpush.bf16.msra.mxu0 0
      %1783 = vmatpush.bf16.msra.mxu0 0
      %1784 = vmatpush.bf16.msra.mxu0 %v1775
      %1785 = vmatpush.bf16.msra.mxu0 %v1774
      %1786 = vmatmul.bf16.gmra.mxu0 %v1641
      %v1787 = vpop.f32.mrf.mxu0
      %v1788 = vadd.f32 %v1764, %v1787
      %v1789 = vpop.f32.mrf.mxu0
      %v1790 = vadd.f32 %v1764, %v1789
      %1791 = vdwg.mxu0
      %v1792 = vmul.f32 %v1788, %v1788
      %v1793 = vmul.f32 %v1790, %v1790
      %v1794 = vmul.f32 %v1788, %v1792
      %v1795 = vmul.f32 %v1790, %v1793
      %v1796 = vmul.f32 %v1794, 0.044715
      %v1797 = vmul.f32 %v1795, 0.044715
      %v1798 = vadd.f32 %v1788, %v1796
      %v1799 = vadd.f32 %v1790, %v1797
      %v1800 = vmul.f32 %v1798, 0.7978846
      %v1801 = vmul.f32 %v1799, 0.7978846
      %v1802 = vtanh.pop %v1800
      %v1803 = vtanh.pop %v1801
      %v1804 = vadd.f32 %v1802, 1.0
      %v1805 = vadd.f32 %v1803, 1.0
      %v1806 = vmul.f32 %v1804, 0.5
      %v1807 = vmul.f32 %v1805, 0.5
      %v1808 = vmul.f32 %v1788, %v1806
      %v1809 = vmul.f32 %v1790, %v1807
      %v1810 = vpack.c.bf16 %v1809, %v1808
      %v1811 = vld [vmem:[%s1030] sm:$0xf]
      %v1812 = vld [vmem:[%s1033] sm:$0x1]
      %v1814 = vperm.slane %v1812, 0
      %v1817 = vsel %vm1235, %v1810, 0
      %vm1819 = vcmask 1043456
      %v1821 = vsel %vm1819, %v1811, 0
      %1823 = vmatpush.bf16.msra.mxu0 0
      %1824 = vmatpush.bf16.msra.mxu0 0
      %1825 = vmatpush.bf16.msra.mxu0 0
      %1826 = vmatpush.bf16.msra.mxu0 0
      %1827 = vmatpush.bf16.msra.mxu0 0
      %1828 = vmatpush.bf16.msra.mxu0 0
      %1829 = vmatpush.bf16.msra.mxu0 0
      %1830 = vmatpush.bf16.msra.mxu0 %v1821
      %1831 = vmatmul.bf16.gmra.mxu0 %v1817
      %v1832 = vpop.f32.mrf.mxu0
      %v1833 = vadd.f32 %v1814, %v1832
      %v1834 = vpop.f32.mrf.mxu0
      %v1835 = vadd.f32 %v1814, %v1834
      %1836 = vdwg.mxu0
      %v1837 = vadd.f32 %v1565, %v1754
      %v1838 = vadd.f32 %v1566, %v1756
      %v1839 = vmul.f32 %v1833, 0.5
      %v1840 = vmul.f32 %v1835, 0.5
      %v1841 = vadd.f32 %v1837, %v1839
      %v1842 = vadd.f32 %v1838, %v1840
      %1843 = vst.msk [vmem:[#allocation2] sm:$0xff] %vm1116, %v1841
      %1844 = vst.msk [vmem:[#allocation2 + $0x8] sm:$0xff] %vm1116, %v1842
      %p1845 = scmp.eq.s32.totalorder %s42, 1
      // Predicated region
      $region129: #{forward.2} parent=123 // pred_check
        %p1846 = pneg %p1845
      $region130: #{forward.2} parent=123 // pred_check_branch
        %1848 = sbr.rel (%p1846) target = $region132
      $region131: #{forward.2} parent=123 // pred_region
        %v1849 = vpack.c.bf16 %v1842, %v1841
        %v1850 = vld [vmem:[%s18] sm:$0xf]
        %v1851 = vld [vmem:[%s18 + $0x4] sm:$0xf]
        %v1852 = vld [vmem:[%s18 + $0x8] sm:$0xf]
        %v1853 = vld [vmem:[%s18 + $0xc] sm:$0xf]
        %v1854 = vld [vmem:[%s19] sm:$0x1]
        %v1856 = vperm.slane %v1854, 0
        %v1862 = vunpack.c.l.b16 %v1850
        %v1863 = vunpack.c.l.b16 %v1851
        %v1864 = vunpack.c.l.b16 %v1852
        %v1865 = vunpack.c.l.b16 %v1853
        %v1866 = vpack.c.b16 %v1863, %v1862
        %v1867 = vpack.c.b16 %v1865, %v1864
        %v1871 = vsel %vm1116, %v1849, 0
        %1873 = vmatpush.bf16.msra.mxu0 0
        %1874 = vmatpush.bf16.msra.mxu0 0
        %1875 = vmatpush.bf16.msra.mxu0 0
        %1876 = vmatpush.bf16.msra.mxu0 0
        %1877 = vmatpush.bf16.msra.mxu0 0
        %1878 = vmatpush.bf16.msra.mxu0 0
        %1879 = vmatpush.bf16.msra.mxu0 %v1867
        %1880 = vmatpush.bf16.msra.mxu0 %v1866
        %1881 = vmatmul.bf16.gmra.mxu0 %v1871
        %v1882 = vpop.f32.mrf.mxu0
        %v1883 = vadd.f32 %v1856, %v1882
        %v1884 = vpop.f32.mrf.mxu0
        %v1885 = vadd.f32 %v1856, %v1884
        %1886 = vdwg.mxu0
        %v1887 = vld [vmem:[%s20] sm:$0x1]
        %v1888 = vld [vmem:[%s21] sm:$0x1]
        %v1889 = vsel %vm1116, %v1883, 0.0
        %1890 = vadd.xlane.f32.xlu0 %v1889
        %v1891 = vpop.xlane.xlu0 %1890
        %v1892 = vsel %vm1116, %v1885, 0.0
        %1893 = vadd.xlane.f32.xlu0 %v1892
        %v1894 = vpop.xlane.xlu0 %1893
        %v1895 = vmul.f32 %v1891, %v1129
        %v1896 = vmul.f32 %v1894, %v1129
        %v1897 = vsub.f32 %v1883, %v1895
        %v1898 = vsub.f32 %v1885, %v1896
        %v1899 = vmul.f32 %v1897, %v1897
        %v1900 = vmul.f32 %v1898, %v1898
        %v1901 = vsel %vm1116, %v1899, 0.0
        %1902 = vadd.xlane.f32.xlu0 %v1901
        %v1903 = vpop.xlane.xlu0 %1902
        %v1904 = vsel %vm1116, %v1900, 0.0
        %1905 = vadd.xlane.f32.xlu0 %v1904
        %v1906 = vpop.xlane.xlu0 %1905
        %v1907 = vmul.f32 %v1903, %v1129
        %v1908 = vmul.f32 %v1906, %v1129
        %v1909 = vadd.f32 %v1907, 1e-06
        %v1910 = vadd.f32 %v1908, 1e-06
        %v1911 = vrsqrt.pop %v1909
        %v1912 = vmul.f32 %v1911, %v1909
        %v1913 = vmul.f32 %v1912, %v1911
        %v1914 = vmul.f32 0.5, %v1913
        %v1915 = vsub.f32 1.5, %v1914
        %v1916 = vmul.f32 %v1911, %v1915
        %vm1917 = vweird.f32 %v1909
        %vm1918 = vweird.f32 %v1911
        %vm1919 = vmor %vm1917, %vm1918
        %v1920 = vsel %vm1919, %v1911, %v1916
        %v1921 = vrsqrt.pop %v1910
        %v1922 = vmul.f32 %v1921, %v1910
        %v1923 = vmul.f32 %v1922, %v1921
        %v1924 = vmul.f32 0.5, %v1923
        %v1925 = vsub.f32 1.5, %v1924
        %v1926 = vmul.f32 %v1921, %v1925
        %vm1927 = vweird.f32 %v1910
        %vm1928 = vweird.f32 %v1921
        %vm1929 = vmor %vm1927, %vm1928
        %v1930 = vsel %vm1929, %v1921, %v1926
        %v1931 = vmul.f32 %v1897, %v1920
        %v1932 = vmul.f32 %v1898, %v1930
        %v1934 = vperm.slane %v1887, 0
        %v1936 = vmul.f32 %v1931, %v1934
        %v1937 = vmul.f32 %v1932, %v1934
        %v1939 = vperm.slane %v1888, 0
        %v1941 = vadd.f32 %v1936, %v1939
        %v1942 = vadd.f32 %v1937, %v1939
        %v1943 = vpack.c.bf16 %v1942, %v1941
        %v1944 = vld [vmem:[%s22] sm:$0xf]
        %v1945 = vld [vmem:[%s22 + $0x4] sm:$0xf]
        %v1946 = vld [vmem:[%s22 + $0x8] sm:$0xf]
        %v1947 = vld [vmem:[%s22 + $0xc] sm:$0xf]
        %v1948 = vld [vmem:[%s23] sm:$0x1]
        %v1950 = vperm.slane %v1948, 0
        %v1956 = vunpack.c.l.b16 %v1944
        %v1957 = vunpack.c.l.b16 %v1945
        %v1958 = vunpack.c.l.b16 %v1946
        %v1959 = vunpack.c.l.b16 %v1947
        %v1960 = vpack.c.b16 %v1957, %v1956
        %v1961 = vpack.c.b16 %v1959, %v1958
        %v1965 = vsel %vm1116, %v1943, 0
        %1967 = vmatpush.bf16.msra.mxu0 0
        %1968 = vmatpush.bf16.msra.mxu0 0
        %1969 = vmatpush.bf16.msra.mxu0 0
        %1970 = vmatpush.bf16.msra.mxu0 0
        %1971 = vmatpush.bf16.msra.mxu0 0
        %1972 = vmatpush.bf16.msra.mxu0 0
        %1973 = vmatpush.bf16.msra.mxu0 %v1961
        %1974 = vmatpush.bf16.msra.mxu0 %v1960
        %1975 = vmatmul.bf16.gmra.mxu0 %v1965
        %v1976 = vpop.f32.mrf.mxu0
        %v1977 = vadd.f32 %v1950, %v1976
        %v1978 = vpop.f32.mrf.mxu0
        %v1979 = vadd.f32 %v1950, %v1978
        %1980 = vdwg.mxu0
        %v1981 = vld [vmem:[%s24] sm:$0x1]
        %v1982 = vld [vmem:[%s25] sm:$0x1]
        %v1983 = vsel %vm1116, %v1977, 0.0
        %1984 = vadd.xlane.f32.xlu0 %v1983
        %v1985 = vpop.xlane.xlu0 %1984
        %v1986 = vsel %vm1116, %v1979, 0.0
        %1987 = vadd.xlane.f32.xlu0 %v1986
        %v1988 = vpop.xlane.xlu0 %1987
        %v1989 = vmul.f32 %v1985, %v1129
        %v1990 = vmul.f32 %v1988, %v1129
        %v1991 = vsub.f32 %v1977, %v1989
        %v1992 = vsub.f32 %v1979, %v1990
        %v1993 = vmul.f32 %v1991, %v1991
        %v1994 = vmul.f32 %v1992, %v1992
        %v1995 = vsel %vm1116, %v1993, 0.0
        %1996 = vadd.xlane.f32.xlu0 %v1995
        %v1997 = vpop.xlane.xlu0 %1996
        %v1998 = vsel %vm1116, %v1994, 0.0
        %1999 = vadd.xlane.f32.xlu0 %v1998
        %v2000 = vpop.xlane.xlu0 %1999
        %v2001 = vmul.f32 %v1997, %v1129
        %v2002 = vmul.f32 %v2000, %v1129
        %v2003 = vadd.f32 %v2001, 1e-06
        %v2004 = vadd.f32 %v2002, 1e-06
        %v2005 = vrsqrt.pop %v2003
        %v2006 = vmul.f32 %v2005, %v2003
        %v2007 = vmul.f32 %v2006, %v2005
        %v2008 = vmul.f32 0.5, %v2007
        %v2009 = vsub.f32 1.5, %v2008
        %v2010 = vmul.f32 %v2005, %v2009
        %vm2011 = vweird.f32 %v2003
        %vm2012 = vweird.f32 %v2005
        %vm2013 = vmor %vm2011, %vm2012
        %v2014 = vsel %vm2013, %v2005, %v2010
        %v2015 = vrsqrt.pop %v2004
        %v2016 = vmul.f32 %v2015, %v2004
        %v2017 = vmul.f32 %v2016, %v2015
        %v2018 = vmul.f32 0.5, %v2017
        %v2019 = vsub.f32 1.5, %v2018
        %v2020 = vmul.f32 %v2015, %v2019
        %vm2021 = vweird.f32 %v2004
        %vm2022 = vweird.f32 %v2015
        %vm2023 = vmor %vm2021, %vm2022
        %v2024 = vsel %vm2023, %v2015, %v2020
        %v2025 = vmul.f32 %v1991, %v2014
        %v2026 = vmul.f32 %v1992, %v2024
        %v2028 = vperm.slane %v1981, 0
        %v2030 = vmul.f32 %v2025, %v2028
        %v2031 = vmul.f32 %v2026, %v2028
        %v2033 = vperm.slane %v1982, 0
        %v2035 = vadd.f32 %v2030, %v2033
        %v2036 = vadd.f32 %v2031, %v2033
        %2037 = vst.msk [vmem:[%s1038] sm:$0xff] %vm1116, %v2035
        %2038 = vst.msk [vmem:[%s1038 + $0x8] sm:$0xff] %vm1116, %v2036
      $region132: #{forward.2} parent=123 // pred_fallthru
        _
      %p2039 = scmp.lt.s32.totalorder %s41, 1
      %s2040 = scalar_select %p2039, %s41, 1
      %s2041 = smul.addr %s2040, 2
      %s2042 = smul.addr %s2041, 8
      %s2043 = scalar_lea.vmem %s26, %s2042
      // Predicated region
      $region133: #{forward.2} parent=123 // pred_check
        %p2044 = pneg %p688
      $region134: #{forward.2} parent=123 // pred_check_branch
        %2046 = sbr.rel (%p2044) target = $region136
      $region135: #{forward.2} parent=123 // pred_region
        _
      $region136: #{forward.2} parent=123 // pred_fallthru
        _
    $region124: #{forward.2} parent=5 // pred_fallthru
      _
    %p2047 = scmp.le.s32.totalorder 2, %s32
    // Predicated region
    $region137: #{forward.2} parent=5 // pred_check
      %p2048 = pneg %p2047
    $region138: #{forward.2} parent=5 // pred_check_branch
      %2050 = sbr.rel (%p2048) target = $region140
    $region139: #{forward.2} parent=5 // pred_region
      %s2051 = ssub.s32 %s32, 2
      // Predicated region
      $region141: #{forward.2} parent=139 // pred_check
        %p2052 = pneg %p694
      $region142: #{forward.2} parent=139 // pred_check_branch
        %2054 = sbr.rel (%p2052) target = $region144
      $region143: #{forward.2} parent=139 // pred_region
        %p2055 = scmp.lt.s32.totalorder %s43, 1
        %s2056 = scalar_select %p2055, %s43, 1
        %s2057 = smul.addr %s2056, 2
        %s2058 = smul.addr %s2057, 8
        %s2059 = scalar_lea.vmem %s26, %s2058
      $region144: #{forward.2} parent=139 // pred_fallthru
        _
    $region140: #{forward.2} parent=5 // pred_fallthru
      _
  $region6: #{forward.2} parent=0 // loop_footer
    %s36 = sadd.s32 1, %s32
  $region7: #{forward.2} parent=0 // loop_footer_branch
    %31 = sbr.rel target = $region3
  $region8: #{forward.2} parent=0 // loop_exit
    _

// kernel: forward.3
$region0: #{forward.3}
  #allocation0 [shape = 'u32[]', space=smem, size = 0x4, offset = 0x4, fixed_abs, tag = 'smem constant byte address 0x4 - core index']
  #allocation1 [shape = 'u32[72,128]{1,0:T(1,128)}', space=vmem, size = 0x9000, scoped, tag = 'internal scratch']
  %s0 = inlined_call_operand.vmem [shape: f32[2,16,32], index: 0, kind: input, shape index: {}]
  %s1 = inlined_call_operand.vmem [shape: f32[16,32], index: 1, kind: input, shape index: {}]
  %s2 = inlined_call_operand.vmem [shape: f32[1,32], index: 2, kind: input, shape index: {}]
  %s3 = inlined_call_operand.vmem [shape: f32[5,32], index: 3, kind: input, shape index: {}]
  %s4 = inlined_call_operand.vmem [shape: bf16[4,4,32,32], index: 4, kind: input, shape index: {}]
  %s5 = inlined_call_operand.vmem [shape: f32[4,4,1,32], index: 5, kind: input, shape index: {}]
  %s6 = inlined_call_operand.vmem [shape: f32[5,1,32], index: 6, kind: input, shape index: {}]
  %s7 = inlined_call_operand.vmem [shape: f32[5,1,32], index: 7, kind: input, shape index: {}]
  %s8 = inlined_call_operand.vmem [shape: bf16[32,128], index: 8, kind: input, shape index: {}]
  %s9 = inlined_call_operand.vmem [shape: f32[1,128], index: 9, kind: input, shape index: {}]
  %s10 = inlined_call_operand.vmem [shape: bf16[128,32], index: 10, kind: input, shape index: {}]
  %s11 = inlined_call_operand.vmem [shape: f32[1,32], index: 11, kind: input, shape index: {}]
  %s12 = inlined_call_operand.vmem [shape: bf16[32,8], index: 12, kind: input, shape index: {}]
  %s13 = inlined_call_operand.vmem [shape: f32[1,8], index: 13, kind: input, shape index: {}]
  %s14 = inlined_call_operand.vmem [shape: bf16[32,32], index: 14, kind: input, shape index: {}]
  %s15 = inlined_call_operand.vmem [shape: f32[1,32], index: 15, kind: input, shape index: {}]
  %s16 = inlined_call_operand.vmem [shape: bf16[32,8], index: 16, kind: input, shape index: {}]
  %s17 = inlined_call_operand.vmem [shape: f32[1,8], index: 17, kind: input, shape index: {}]
  %s18 = inlined_call_operand.vmem [shape: f32[16,1024], index: 18, kind: input, shape index: {}]
  %s19 = inlined_call_operand.vmem [shape: f32[2,1,1024], index: 19, kind: output, shape index: {}]
  %s20 = sld [smem:[#allocation0]]
  $region109: #{forward.3} parent=0
    _
  %s22 = ssub.s32 1, %s20
  %s23 = scalar_select 0, %s22, %s20
  loop: start=0, step=1, limit=4
  $region2: #{forward.3} parent=0 // loop_pre_header
    _
  $region3: #{forward.3} parent=0 // loop_header
    %s25 = sphi 0, %s29
    %p26 = scmp.ge.s32.totalorder %s25, 4
    %s35 = sphi 0, %s37
    %s38 = sphi 0, %s35
    %s39 = sphi 0, %s38
    %s55 = sphi 0, %s39
    %s59 = sphi 0, %s59
    %s61 = sphi 0, %s59
    %s62 = sphi 0, %s61
    %s76 = sphi 0, %s62
    %s80 = sphi 0, %s80
    %s82 = sphi 0, %s80
    %s83 = sphi 0, %s82
    %s97 = sphi 0, %s83
    %s101 = sphi 0, %s101
    %s103 = sphi 0, %s101
    %s104 = sphi 0, %s103
    %s118 = sphi 0, %s104
    %s122 = sphi 0, %s122
    %s124 = sphi 0, %s122
    %s125 = sphi 0, %s124
    %s139 = sphi 0, %s125
    %s143 = sphi 0, %s143
    %s145 = sphi 0, %s143
    %s146 = sphi 0, %s145
    %s160 = sphi 0, %s146
    %s164 = sphi 0, %s164
    %s166 = sphi 0, %s164
    %s167 = sphi 0, %s166
    %s181 = sphi 0, %s167
    %s185 = sphi 0, %s185
    %s187 = sphi 0, %s185
    %s188 = sphi 0, %s187
    %s202 = sphi 0, %s188
    %s206 = sphi 0, %s206
    %s208 = sphi 0, %s206
    %s209 = sphi 0, %s208
    %s223 = sphi 0, %s209
    %s227 = sphi 0, %s227
    %s229 = sphi 0, %s227
    %s230 = sphi 0, %s229
    %s244 = sphi 0, %s230
    %s248 = sphi 0, %s248
    %s250 = sphi 0, %s248
    %s251 = sphi 0, %s250
    %s265 = sphi 0, %s251
    %s269 = sphi 0, %s269
    %s271 = sphi 0, %s269
    %s272 = sphi 0, %s271
    %s286 = sphi 0, %s272
    %s290 = sphi 0, %s290
    %s292 = sphi 0, %s290
    %s293 = sphi 0, %s292
    %s307 = sphi 0, %s293
    %s311 = sphi 0, %s311
    %s313 = sphi 0, %s311
    %s314 = sphi 0, %s313
    %s328 = sphi 0, %s314
    %s332 = sphi 0, %s332
    %s334 = sphi 0, %s332
    %s335 = sphi 0, %s334
    %s349 = sphi 0, %s335
    %s353 = sphi 0, %s353
    %s355 = sphi 0, %s353
    %s356 = sphi 0, %s355
    %s370 = sphi 0, %s356
    %s374 = sphi 0, %s374
    %s376 = sphi 0, %s374
    %s377 = sphi 0, %s376
    %s391 = sphi 0, %s377
    %s395 = sphi 0, %s395
    %s397 = sphi 0, %s395
    %s398 = sphi 0, %s397
    %s412 = sphi 0, %s398
    %s416 = sphi 0, %s416
    %s418 = sphi 0, %s416
    %s419 = sphi 0, %s418
    %s433 = sphi 0, %s419
    %s439 = sphi 0, %s441
    %s442 = sphi 0, %s439
    %s443 = sphi 0, %s442
    %s459 = sphi 0, %s443
  $region4: #{forward.3} parent=0 // loop_header_branch
    %28 = sbr.rel (%p26) target = $region8
  $region5: #{forward.3} parent=0 // loop_body
    %s30 = ssub.s32 %s25, 1
    %s31 = ssub.s32 %s25, 2
    %s32 = sadd.s32 %s25, 1
    %s33 = ssub.s32 %s25, %s32
    %p34 = scmp.eq.s32.totalorder %s33, 0
    %s36 = sadd.s32 %s35, 1
    %s37 = scalar_select %p34, %s35, %s36
    %p40 = pneg %p34
    %p41 = scmp.eq.s32.totalorder %s25, 1
    %p42 = por %p40, %p41
    %p43 = scmp.ne.s32.totalorder %s35, %s38
    %p44 = scmp.eq.s32.totalorder %s25, 0
    %p45 = por %p43, %p44
    %p46 = scmp.ne.s32.totalorder %s35, %s38
    %p47 = scmp.eq.s32.totalorder %s30, 1
    %p48 = por %p46, %p47
    %p49 = scmp.ne.s32.totalorder %s38, %s39
    %p50 = scmp.eq.s32.totalorder %s30, 0
    %p51 = por %p49, %p50
    %p52 = scmp.ne.s32.totalorder %s38, %s39
    %p53 = scmp.eq.s32.totalorder %s31, 1
    %p54 = por %p52, %p53
    %p56 = scmp.ne.s32.totalorder %s39, %s55
    %p57 = scmp.eq.s32.totalorder %s31, 0
    %p58 = por %p56, %p57
    %s60 = sadd.s32 %s59, 1
    %p63 = scmp.eq.s32.totalorder %s25, 1
    %p64 = scmp.ne.s32.totalorder %s59, %s61
    %p65 = scmp.eq.s32.totalorder %s25, 0
    %p66 = por %p64, %p65
    %p67 = scmp.ne.s32.totalorder %s59, %s61
    %p68 = scmp.eq.s32.totalorder %s30, 1
    %p69 = por %p67, %p68
    %p70 = scmp.ne.s32.totalorder %s61, %s62
    %p71 = scmp.eq.s32.totalorder %s30, 0
    %p72 = por %p70, %p71
    %p73 = scmp.ne.s32.totalorder %s61, %s62
    %p74 = scmp.eq.s32.totalorder %s31, 1
    %p75 = por %p73, %p74
    %p77 = scmp.ne.s32.totalorder %s62, %s76
    %p78 = scmp.eq.s32.totalorder %s31, 0
    %p79 = por %p77, %p78
    %s81 = sadd.s32 %s80, 1
    %p84 = scmp.eq.s32.totalorder %s25, 1
    %p85 = scmp.ne.s32.totalorder %s80, %s82
    %p86 = scmp.eq.s32.totalorder %s25, 0
    %p87 = por %p85, %p86
    %p88 = scmp.ne.s32.totalorder %s80, %s82
    %p89 = scmp.eq.s32.totalorder %s30, 1
    %p90 = por %p88, %p89
    %p91 = scmp.ne.s32.totalorder %s82, %s83
    %p92 = scmp.eq.s32.totalorder %s30, 0
    %p93 = por %p91, %p92
    %p94 = scmp.ne.s32.totalorder %s82, %s83
    %p95 = scmp.eq.s32.totalorder %s31, 1
    %p96 = por %p94, %p95
    %p98 = scmp.ne.s32.totalorder %s83, %s97
    %p99 = scmp.eq.s32.totalorder %s31, 0
    %p100 = por %p98, %p99
    %s102 = sadd.s32 %s101, 1
    %p105 = scmp.eq.s32.totalorder %s25, 1
    %p106 = scmp.ne.s32.totalorder %s101, %s103
    %p107 = scmp.eq.s32.totalorder %s25, 0
    %p108 = por %p106, %p107
    %p109 = scmp.ne.s32.totalorder %s101, %s103
    %p110 = scmp.eq.s32.totalorder %s30, 1
    %p111 = por %p109, %p110
    %p112 = scmp.ne.s32.totalorder %s103, %s104
    %p113 = scmp.eq.s32.totalorder %s30, 0
    %p114 = por %p112, %p113
    %p115 = scmp.ne.s32.totalorder %s103, %s104
    %p116 = scmp.eq.s32.totalorder %s31, 1
    %p117 = por %p115, %p116
    %p119 = scmp.ne.s32.totalorder %s104, %s118
    %p120 = scmp.eq.s32.totalorder %s31, 0
    %p121 = por %p119, %p120
    %s123 = sadd.s32 %s122, 1
    %p126 = scmp.eq.s32.totalorder %s25, 1
    %p127 = scmp.ne.s32.totalorder %s122, %s124
    %p128 = scmp.eq.s32.totalorder %s25, 0
    %p129 = por %p127, %p128
    %p130 = scmp.ne.s32.totalorder %s122, %s124
    %p131 = scmp.eq.s32.totalorder %s30, 1
    %p132 = por %p130, %p131
    %p133 = scmp.ne.s32.totalorder %s124, %s125
    %p134 = scmp.eq.s32.totalorder %s30, 0
    %p135 = por %p133, %p134
    %p136 = scmp.ne.s32.totalorder %s124, %s125
    %p137 = scmp.eq.s32.totalorder %s31, 1
    %p138 = por %p136, %p137
    %p140 = scmp.ne.s32.totalorder %s125, %s139
    %p141 = scmp.eq.s32.totalorder %s31, 0
    %p142 = por %p140, %p141
    %s144 = sadd.s32 %s143, 1
    %p147 = scmp.eq.s32.totalorder %s25, 1
    %p148 = scmp.ne.s32.totalorder %s143, %s145
    %p149 = scmp.eq.s32.totalorder %s25, 0
    %p150 = por %p148, %p149
    %p151 = scmp.ne.s32.totalorder %s143, %s145
    %p152 = scmp.eq.s32.totalorder %s30, 1
    %p153 = por %p151, %p152
    %p154 = scmp.ne.s32.totalorder %s145, %s146
    %p155 = scmp.eq.s32.totalorder %s30, 0
    %p156 = por %p154, %p155
    %p157 = scmp.ne.s32.totalorder %s145, %s146
    %p158 = scmp.eq.s32.totalorder %s31, 1
    %p159 = por %p157, %p158
    %p161 = scmp.ne.s32.totalorder %s146, %s160
    %p162 = scmp.eq.s32.totalorder %s31, 0
    %p163 = por %p161, %p162
    %s165 = sadd.s32 %s164, 1
    %p168 = scmp.eq.s32.totalorder %s25, 1
    %p169 = scmp.ne.s32.totalorder %s164, %s166
    %p170 = scmp.eq.s32.totalorder %s25, 0
    %p171 = por %p169, %p170
    %p172 = scmp.ne.s32.totalorder %s164, %s166
    %p173 = scmp.eq.s32.totalorder %s30, 1
    %p174 = por %p172, %p173
    %p175 = scmp.ne.s32.totalorder %s166, %s167
    %p176 = scmp.eq.s32.totalorder %s30, 0
    %p177 = por %p175, %p176
    %p178 = scmp.ne.s32.totalorder %s166, %s167
    %p179 = scmp.eq.s32.totalorder %s31, 1
    %p180 = por %p178, %p179
    %p182 = scmp.ne.s32.totalorder %s167, %s181
    %p183 = scmp.eq.s32.totalorder %s31, 0
    %p184 = por %p182, %p183
    %s186 = sadd.s32 %s185, 1
    %p189 = scmp.eq.s32.totalorder %s25, 1
    %p190 = scmp.ne.s32.totalorder %s185, %s187
    %p191 = scmp.eq.s32.totalorder %s25, 0
    %p192 = por %p190, %p191
    %p193 = scmp.ne.s32.totalorder %s185, %s187
    %p194 = scmp.eq.s32.totalorder %s30, 1
    %p195 = por %p193, %p194
    %p196 = scmp.ne.s32.totalorder %s187, %s188
    %p197 = scmp.eq.s32.totalorder %s30, 0
    %p198 = por %p196, %p197
    %p199 = scmp.ne.s32.totalorder %s187, %s188
    %p200 = scmp.eq.s32.totalorder %s31, 1
    %p201 = por %p199, %p200
    %p203 = scmp.ne.s32.totalorder %s188, %s202
    %p204 = scmp.eq.s32.totalorder %s31, 0
    %p205 = por %p203, %p204
    %s207 = sadd.s32 %s206, 1
    %p210 = scmp.eq.s32.totalorder %s25, 1
    %p211 = scmp.ne.s32.totalorder %s206, %s208
    %p212 = scmp.eq.s32.totalorder %s25, 0
    %p213 = por %p211, %p212
    %p214 = scmp.ne.s32.totalorder %s206, %s208
    %p215 = scmp.eq.s32.totalorder %s30, 1
    %p216 = por %p214, %p215
    %p217 = scmp.ne.s32.totalorder %s208, %s209
    %p218 = scmp.eq.s32.totalorder %s30, 0
    %p219 = por %p217, %p218
    %p220 = scmp.ne.s32.totalorder %s208, %s209
    %p221 = scmp.eq.s32.totalorder %s31, 1
    %p222 = por %p220, %p221
    %p224 = scmp.ne.s32.totalorder %s209, %s223
    %p225 = scmp.eq.s32.totalorder %s31, 0
    %p226 = por %p224, %p225
    %s228 = sadd.s32 %s227, 1
    %p231 = scmp.eq.s32.totalorder %s25, 1
    %p232 = scmp.ne.s32.totalorder %s227, %s229
    %p233 = scmp.eq.s32.totalorder %s25, 0
    %p234 = por %p232, %p233
    %p235 = scmp.ne.s32.totalorder %s227, %s229
    %p236 = scmp.eq.s32.totalorder %s30, 1
    %p237 = por %p235, %p236
    %p238 = scmp.ne.s32.totalorder %s229, %s230
    %p239 = scmp.eq.s32.totalorder %s30, 0
    %p240 = por %p238, %p239
    %p241 = scmp.ne.s32.totalorder %s229, %s230
    %p242 = scmp.eq.s32.totalorder %s31, 1
    %p243 = por %p241, %p242
    %p245 = scmp.ne.s32.totalorder %s230, %s244
    %p246 = scmp.eq.s32.totalorder %s31, 0
    %p247 = por %p245, %p246
    %s249 = sadd.s32 %s248, 1
    %p252 = scmp.eq.s32.totalorder %s25, 1
    %p253 = scmp.ne.s32.totalorder %s248, %s250
    %p254 = scmp.eq.s32.totalorder %s25, 0
    %p255 = por %p253, %p254
    %p256 = scmp.ne.s32.totalorder %s248, %s250
    %p257 = scmp.eq.s32.totalorder %s30, 1
    %p258 = por %p256, %p257
    %p259 = scmp.ne.s32.totalorder %s250, %s251
    %p260 = scmp.eq.s32.totalorder %s30, 0
    %p261 = por %p259, %p260
    %p262 = scmp.ne.s32.totalorder %s250, %s251
    %p263 = scmp.eq.s32.totalorder %s31, 1
    %p264 = por %p262, %p263
    %p266 = scmp.ne.s32.totalorder %s251, %s265
    %p267 = scmp.eq.s32.totalorder %s31, 0
    %p268 = por %p266, %p267
    %s270 = sadd.s32 %s269, 1
    %p273 = scmp.eq.s32.totalorder %s25, 1
    %p274 = scmp.ne.s32.totalorder %s269, %s271
    %p275 = scmp.eq.s32.totalorder %s25, 0
    %p276 = por %p274, %p275
    %p277 = scmp.ne.s32.totalorder %s269, %s271
    %p278 = scmp.eq.s32.totalorder %s30, 1
    %p279 = por %p277, %p278
    %p280 = scmp.ne.s32.totalorder %s271, %s272
    %p281 = scmp.eq.s32.totalorder %s30, 0
    %p282 = por %p280, %p281
    %p283 = scmp.ne.s32.totalorder %s271, %s272
    %p284 = scmp.eq.s32.totalorder %s31, 1
    %p285 = por %p283, %p284
    %p287 = scmp.ne.s32.totalorder %s272, %s286
    %p288 = scmp.eq.s32.totalorder %s31, 0
    %p289 = por %p287, %p288
    %s291 = sadd.s32 %s290, 1
    %p294 = scmp.eq.s32.totalorder %s25, 1
    %p295 = scmp.ne.s32.totalorder %s290, %s292
    %p296 = scmp.eq.s32.totalorder %s25, 0
    %p297 = por %p295, %p296
    %p298 = scmp.ne.s32.totalorder %s290, %s292
    %p299 = scmp.eq.s32.totalorder %s30, 1
    %p300 = por %p298, %p299
    %p301 = scmp.ne.s32.totalorder %s292, %s293
    %p302 = scmp.eq.s32.totalorder %s30, 0
    %p303 = por %p301, %p302
    %p304 = scmp.ne.s32.totalorder %s292, %s293
    %p305 = scmp.eq.s32.totalorder %s31, 1
    %p306 = por %p304, %p305
    %p308 = scmp.ne.s32.totalorder %s293, %s307
    %p309 = scmp.eq.s32.totalorder %s31, 0
    %p310 = por %p308, %p309
    %s312 = sadd.s32 %s311, 1
    %p315 = scmp.eq.s32.totalorder %s25, 1
    %p316 = scmp.ne.s32.totalorder %s311, %s313
    %p317 = scmp.eq.s32.totalorder %s25, 0
    %p318 = por %p316, %p317
    %p319 = scmp.ne.s32.totalorder %s311, %s313
    %p320 = scmp.eq.s32.totalorder %s30, 1
    %p321 = por %p319, %p320
    %p322 = scmp.ne.s32.totalorder %s313, %s314
    %p323 = scmp.eq.s32.totalorder %s30, 0
    %p324 = por %p322, %p323
    %p325 = scmp.ne.s32.totalorder %s313, %s314
    %p326 = scmp.eq.s32.totalorder %s31, 1
    %p327 = por %p325, %p326
    %p329 = scmp.ne.s32.totalorder %s314, %s328
    %p330 = scmp.eq.s32.totalorder %s31, 0
    %p331 = por %p329, %p330
    %s333 = sadd.s32 %s332, 1
    %p336 = scmp.eq.s32.totalorder %s25, 1
    %p337 = scmp.ne.s32.totalorder %s332, %s334
    %p338 = scmp.eq.s32.totalorder %s25, 0
    %p339 = por %p337, %p338
    %p340 = scmp.ne.s32.totalorder %s332, %s334
    %p341 = scmp.eq.s32.totalorder %s30, 1
    %p342 = por %p340, %p341
    %p343 = scmp.ne.s32.totalorder %s334, %s335
    %p344 = scmp.eq.s32.totalorder %s30, 0
    %p345 = por %p343, %p344
    %p346 = scmp.ne.s32.totalorder %s334, %s335
    %p347 = scmp.eq.s32.totalorder %s31, 1
    %p348 = por %p346, %p347
    %p350 = scmp.ne.s32.totalorder %s335, %s349
    %p351 = scmp.eq.s32.totalorder %s31, 0
    %p352 = por %p350, %p351
    %s354 = sadd.s32 %s353, 1
    %p357 = scmp.eq.s32.totalorder %s25, 1
    %p358 = scmp.ne.s32.totalorder %s353, %s355
    %p359 = scmp.eq.s32.totalorder %s25, 0
    %p360 = por %p358, %p359
    %p361 = scmp.ne.s32.totalorder %s353, %s355
    %p362 = scmp.eq.s32.totalorder %s30, 1
    %p363 = por %p361, %p362
    %p364 = scmp.ne.s32.totalorder %s355, %s356
    %p365 = scmp.eq.s32.totalorder %s30, 0
    %p366 = por %p364, %p365
    %p367 = scmp.ne.s32.totalorder %s355, %s356
    %p368 = scmp.eq.s32.totalorder %s31, 1
    %p369 = por %p367, %p368
    %p371 = scmp.ne.s32.totalorder %s356, %s370
    %p372 = scmp.eq.s32.totalorder %s31, 0
    %p373 = por %p371, %p372
    %s375 = sadd.s32 %s374, 1
    %p378 = scmp.eq.s32.totalorder %s25, 1
    %p379 = scmp.ne.s32.totalorder %s374, %s376
    %p380 = scmp.eq.s32.totalorder %s25, 0
    %p381 = por %p379, %p380
    %p382 = scmp.ne.s32.totalorder %s374, %s376
    %p383 = scmp.eq.s32.totalorder %s30, 1
    %p384 = por %p382, %p383
    %p385 = scmp.ne.s32.totalorder %s376, %s377
    %p386 = scmp.eq.s32.totalorder %s30, 0
    %p387 = por %p385, %p386
    %p388 = scmp.ne.s32.totalorder %s376, %s377
    %p389 = scmp.eq.s32.totalorder %s31, 1
    %p390 = por %p388, %p389
    %p392 = scmp.ne.s32.totalorder %s377, %s391
    %p393 = scmp.eq.s32.totalorder %s31, 0
    %p394 = por %p392, %p393
    %s396 = sadd.s32 %s395, 1
    %p399 = scmp.eq.s32.totalorder %s25, 1
    %p400 = scmp.ne.s32.totalorder %s395, %s397
    %p401 = scmp.eq.s32.totalorder %s25, 0
    %p402 = por %p400, %p401
    %p403 = scmp.ne.s32.totalorder %s395, %s397
    %p404 = scmp.eq.s32.totalorder %s30, 1
    %p405 = por %p403, %p404
    %p406 = scmp.ne.s32.totalorder %s397, %s398
    %p407 = scmp.eq.s32.totalorder %s30, 0
    %p408 = por %p406, %p407
    %p409 = scmp.ne.s32.totalorder %s397, %s398
    %p410 = scmp.eq.s32.totalorder %s31, 1
    %p411 = por %p409, %p410
    %p413 = scmp.ne.s32.totalorder %s398, %s412
    %p414 = scmp.eq.s32.totalorder %s31, 0
    %p415 = por %p413, %p414
    %s417 = sadd.s32 %s416, 1
    %p420 = scmp.eq.s32.totalorder %s25, 1
    %p421 = scmp.ne.s32.totalorder %s416, %s418
    %p422 = scmp.eq.s32.totalorder %s25, 0
    %p423 = por %p421, %p422
    %p424 = scmp.ne.s32.totalorder %s416, %s418
    %p425 = scmp.eq.s32.totalorder %s30, 1
    %p426 = por %p424, %p425
    %p427 = scmp.ne.s32.totalorder %s418, %s419
    %p428 = scmp.eq.s32.totalorder %s30, 0
    %p429 = por %p427, %p428
    %p430 = scmp.ne.s32.totalorder %s418, %s419
    %p431 = scmp.eq.s32.totalorder %s31, 1
    %p432 = por %p430, %p431
    %p434 = scmp.ne.s32.totalorder %s419, %s433
    %p435 = scmp.eq.s32.totalorder %s31, 0
    %p436 = por %p434, %p435
    %s437 = ssub.s32 %s25, %s32
    %p438 = scmp.eq.s32.totalorder %s437, 0
    %s440 = sadd.s32 %s439, 1
    %s441 = scalar_select %p438, %s439, %s440
    %p444 = pneg %p438
    %p445 = scmp.eq.s32.totalorder %s25, 1
    %p446 = por %p444, %p445
    %p447 = scmp.ne.s32.totalorder %s439, %s442
    %p448 = scmp.eq.s32.totalorder %s25, 0
    %p449 = por %p447, %p448
    %p450 = scmp.ne.s32.totalorder %s439, %s442
    %p451 = scmp.eq.s32.totalorder %s30, 1
    %p452 = por %p450, %p451
    %p453 = scmp.ne.s32.totalorder %s442, %s443
    %p454 = scmp.eq.s32.totalorder %s30, 0
    %p455 = por %p453, %p454
    %p456 = scmp.ne.s32.totalorder %s442, %s443
    %p457 = scmp.eq.s32.totalorder %s31, 1
    %p458 = por %p456, %p457
    %p460 = scmp.ne.s32.totalorder %s443, %s459
    %p461 = scmp.eq.s32.totalorder %s31, 0
    %p462 = por %p460, %p461
    %p463 = scmp.le.s32.totalorder 1, %s25
    %p464 = scmp.lt.s32.totalorder %s25, 3
    %p465 = pnand %p463, %p464
    %p466 = pneg %p465
    // Predicated region
    $region9: #{forward.3} parent=5 // pred_check
      _
    $region10: #{forward.3} parent=5 // pred_check_branch
      %468 = sbr.rel (%p465) target = $region12
    $region11: #{forward.3} parent=5 // pred_region
      %s469 = ssub.s32 %s25, 1
      // Predicated region
      $region13: #{forward.3} parent=11 // pred_check
        %p470 = pneg %p72
      $region14: #{forward.3} parent=11 // pred_check_branch
        %472 = sbr.rel (%p470) target = $region16
      $region15: #{forward.3} parent=11 // pred_region
        _
      $region16: #{forward.3} parent=11 // pred_fallthru
        _
      // Predicated region
      $region17: #{forward.3} parent=11 // pred_check
        %p473 = pneg %p93
      $region18: #{forward.3} parent=11 // pred_check_branch
        %475 = sbr.rel (%p473) target = $region20
      $region19: #{forward.3} parent=11 // pred_region
        _
      $region20: #{forward.3} parent=11 // pred_fallthru
        _
      // Predicated region
      $region21: #{forward.3} parent=11 // pred_check
        %p476 = pneg %p114
      $region22: #{forward.3} parent=11 // pred_check_branch
        %478 = sbr.rel (%p476) target = $region24
      $region23: #{forward.3} parent=11 // pred_region
        _
      $region24: #{forward.3} parent=11 // pred_fallthru
        _
      // Predicated region
      $region25: #{forward.3} parent=11 // pred_check
        %p479 = pneg %p135
      $region26: #{forward.3} parent=11 // pred_check_branch
        %481 = sbr.rel (%p479) target = $region28
      $region27: #{forward.3} parent=11 // pred_region
        _
      $region28: #{forward.3} parent=11 // pred_fallthru
        _
      // Predicated region
      $region29: #{forward.3} parent=11 // pred_check
        %p482 = pneg %p156
      $region30: #{forward.3} parent=11 // pred_check_branch
        %484 = sbr.rel (%p482) target = $region32
      $region31: #{forward.3} parent=11 // pred_region
        _
      $region32: #{forward.3} parent=11 // pred_fallthru
        _
      // Predicated region
      $region33: #{forward.3} parent=11 // pred_check
        %p485 = pneg %p177
      $region34: #{forward.3} parent=11 // pred_check_branch
        %487 = sbr.rel (%p485) target = $region36
      $region35: #{forward.3} parent=11 // pred_region
        _
      $region36: #{forward.3} parent=11 // pred_fallthru
        _
      // Predicated region
      $region37: #{forward.3} parent=11 // pred_check
        %p488 = pneg %p198
      $region38: #{forward.3} parent=11 // pred_check_branch
        %490 = sbr.rel (%p488) target = $region40
      $region39: #{forward.3} parent=11 // pred_region
        _
      $region40: #{forward.3} parent=11 // pred_fallthru
        _
      // Predicated region
      $region41: #{forward.3} parent=11 // pred_check
        %p491 = pneg %p219
      $region42: #{forward.3} parent=11 // pred_check_branch
        %493 = sbr.rel (%p491) target = $region44
      $region43: #{forward.3} parent=11 // pred_region
        _
      $region44: #{forward.3} parent=11 // pred_fallthru
        _
      // Predicated region
      $region45: #{forward.3} parent=11 // pred_check
        %p494 = pneg %p240
      $region46: #{forward.3} parent=11 // pred_check_branch
        %496 = sbr.rel (%p494) target = $region48
      $region47: #{forward.3} parent=11 // pred_region
        _
      $region48: #{forward.3} parent=11 // pred_fallthru
        _
      // Predicated region
      $region49: #{forward.3} parent=11 // pred_check
        %p497 = pneg %p261
      $region50: #{forward.3} parent=11 // pred_check_branch
        %499 = sbr.rel (%p497) target = $region52
      $region51: #{forward.3} parent=11 // pred_region
        _
      $region52: #{forward.3} parent=11 // pred_fallthru
        _
      // Predicated region
      $region53: #{forward.3} parent=11 // pred_check
        %p500 = pneg %p282
      $region54: #{forward.3} parent=11 // pred_check_branch
        %502 = sbr.rel (%p500) target = $region56
      $region55: #{forward.3} parent=11 // pred_region
        _
      $region56: #{forward.3} parent=11 // pred_fallthru
        _
      // Predicated region
      $region57: #{forward.3} parent=11 // pred_check
        %p503 = pneg %p303
      $region58: #{forward.3} parent=11 // pred_check_branch
        %505 = sbr.rel (%p503) target = $region60
      $region59: #{forward.3} parent=11 // pred_region
        _
      $region60: #{forward.3} parent=11 // pred_fallthru
        _
      // Predicated region
      $region61: #{forward.3} parent=11 // pred_check
        %p506 = pneg %p324
      $region62: #{forward.3} parent=11 // pred_check_branch
        %508 = sbr.rel (%p506) target = $region64
      $region63: #{forward.3} parent=11 // pred_region
        _
      $region64: #{forward.3} parent=11 // pred_fallthru
        _
      // Predicated region
      $region65: #{forward.3} parent=11 // pred_check
        %p509 = pneg %p345
      $region66: #{forward.3} parent=11 // pred_check_branch
        %511 = sbr.rel (%p509) target = $region68
      $region67: #{forward.3} parent=11 // pred_region
        _
      $region68: #{forward.3} parent=11 // pred_fallthru
        _
      // Predicated region
      $region69: #{forward.3} parent=11 // pred_check
        %p512 = pneg %p366
      $region70: #{forward.3} parent=11 // pred_check_branch
        %514 = sbr.rel (%p512) target = $region72
      $region71: #{forward.3} parent=11 // pred_region
        _
      $region72: #{forward.3} parent=11 // pred_fallthru
        _
      // Predicated region
      $region73: #{forward.3} parent=11 // pred_check
        %p515 = pneg %p387
      $region74: #{forward.3} parent=11 // pred_check_branch
        %517 = sbr.rel (%p515) target = $region76
      $region75: #{forward.3} parent=11 // pred_region
        _
      $region76: #{forward.3} parent=11 // pred_fallthru
        _
      // Predicated region
      $region77: #{forward.3} parent=11 // pred_check
        %p518 = pneg %p408
      $region78: #{forward.3} parent=11 // pred_check_branch
        %520 = sbr.rel (%p518) target = $region80
      $region79: #{forward.3} parent=11 // pred_region
        _
      $region80: #{forward.3} parent=11 // pred_fallthru
        _
      // Predicated region
      $region81: #{forward.3} parent=11 // pred_check
        %p521 = pneg %p429
      $region82: #{forward.3} parent=11 // pred_check_branch
        %523 = sbr.rel (%p521) target = $region84
      $region83: #{forward.3} parent=11 // pred_region
        _
      $region84: #{forward.3} parent=11 // pred_fallthru
        _
    $region12: #{forward.3} parent=5 // pred_fallthru
      _
    %p524 = scmp.lt.s32.totalorder %s25, 2
    // Predicated region
    $region85: #{forward.3} parent=5 // pred_check
      %p525 = pneg %p524
    $region86: #{forward.3} parent=5 // pred_check_branch
      %527 = sbr.rel (%p525) target = $region88
    $region87: #{forward.3} parent=5 // pred_region
      // Predicated region
      $region89: #{forward.3} parent=87 // pred_check
        %p528 = pneg %p45
      $region90: #{forward.3} parent=87 // pred_check_branch
        %530 = sbr.rel (%p528) target = $region92
      $region91: #{forward.3} parent=87 // pred_region
        %p531 = scmp.lt.s32.totalorder %s25, 1
        %s532 = scalar_select %p531, %s25, 1
        %s533 = smul.addr %s532, 2
        %s534 = smul.addr %s533, 8
        %s535 = scalar_lea.vmem %s0, %s534
      $region92: #{forward.3} parent=87 // pred_fallthru
        _
    $region88: #{forward.3} parent=5 // pred_fallthru
      _
    %p536 = scmp.le.s32.totalorder 1, %s25
    %p537 = scmp.lt.s32.totalorder %s25, 3
    %p538 = pnand %p536, %p537
    %p539 = pneg %p538
    // Predicated region
    $region93: #{forward.3} parent=5 // pred_check
      _
    $region94: #{forward.3} parent=5 // pred_check_branch
      %541 = sbr.rel (%p538) target = $region96
    $region95: #{forward.3} parent=5 // pred_region
      %s542 = ssub.s32 %s25, 1
      %p543 = scmp.lt.s32.totalorder %s30, 1
      %s544 = scalar_select %p543, %s30, 1
      %s545 = smul.addr %s544, 2
      %s546 = smul.addr %s545, 8
      %s547 = scalar_lea.vmem %s0, %s546
      %p548 = pneg %p51
      %p549 = pneg %p48
      %p550 = pneg %p72
      %p551 = pneg %p69
      %p552 = pneg %p93
      %p553 = pneg %p90
      %p554 = pneg %p114
      %p555 = pneg %p111
      %p556 = pneg %p135
      %p557 = pneg %p132
      %p558 = pneg %p156
      %p559 = pneg %p153
      %p560 = pneg %p177
      %p561 = pneg %p174
      %p562 = pneg %p198
      %p563 = pneg %p195
      %p564 = pneg %p219
      %p565 = pneg %p216
      %p566 = pneg %p240
      %p567 = pneg %p237
      %p568 = pneg %p261
      %p569 = pneg %p258
      %p570 = pneg %p282
      %p571 = pneg %p279
      %p572 = pneg %p303
      %p573 = pneg %p300
      %p574 = pneg %p324
      %p575 = pneg %p321
      %p576 = pneg %p345
      %p577 = pneg %p342
      %p578 = pneg %p366
      %p579 = pneg %p363
      %p580 = pneg %p387
      %p581 = pneg %p384
      %p582 = pneg %p408
      %p583 = pneg %p405
      %p584 = pneg %p429
      %p585 = pneg %p426
      %p586 = pneg %p455
      %p587 = pneg %p452
      %p588 = scmp.lt.s32.totalorder %s30, 1
      %s589 = scalar_select %p588, %s30, 1
      %s590 = smul.addr %s589, 8
      %s591 = scalar_lea.vmem %s19, %s590
      %p592 = scmp.lt.s32.totalorder %s30, 1
      %s593 = scalar_select %p592, %s30, 1
      %s594 = smul.addr %s593, 2
      %s595 = smul.addr %s594, 8
      %s596 = scalar_lea.vmem %s0, %s595
      %p597 = scmp.lt.s32.totalorder %s30, 1
      %s598 = scalar_select %p597, %s30, 1
      %s599 = smul.addr %s598, 8
      %s600 = scalar_lea.vmem %s19, %s599
      %v602 = vld [vmem:[%s4] sm:$0xf]
      %v603 = vld [vmem:[%s4 + $0x4] sm:$0xf]
      %v604 = vld [vmem:[%s4 + $0x8] sm:$0xf]
      %v605 = vld [vmem:[%s4 + $0xc] sm:$0xf]
      %v606 = vld [vmem:[%s4 + $0x10] sm:$0xf]
      %v607 = vld [vmem:[%s4 + $0x14] sm:$0xf]
      %v608 = vld [vmem:[%s4 + $0x18] sm:$0xf]
      %v609 = vld [vmem:[%s4 + $0x1c] sm:$0xf]
      %v610 = vld [vmem:[%s4 + $0x20] sm:$0xf]
      %v611 = vld [vmem:[%s4 + $0x24] sm:$0xf]
      %v612 = vld [vmem:[%s4 + $0x28] sm:$0xf]
      %v613 = vld [vmem:[%s4 + $0x2c] sm:$0xf]
      %v614 = vld [vmem:[%s4 + $0x30] sm:$0xf]
      %v615 = vld [vmem:[%s4 + $0x34] sm:$0xf]
      %v616 = vld [vmem:[%s4 + $0x38] sm:$0xf]
      %v617 = vld [vmem:[%s4 + $0x3c] sm:$0xf]
      %v618 = vld [vmem:[%s4 + $0x40] sm:$0xf]
      %v619 = vld [vmem:[%s4 + $0x44] sm:$0xf]
      %v620 = vld [vmem:[%s4 + $0x48] sm:$0xf]
      %v621 = vld [vmem:[%s4 + $0x4c] sm:$0xf]
      %v622 = vld [vmem:[%s4 + $0x50] sm:$0xf]
      %v623 = vld [vmem:[%s4 + $0x54] sm:$0xf]
      %v624 = vld [vmem:[%s4 + $0x58] sm:$0xf]
      %v625 = vld [vmem:[%s4 + $0x5c] sm:$0xf]
      %v626 = vld [vmem:[%s4 + $0x60] sm:$0xf]
      %v627 = vld [vmem:[%s4 + $0x64] sm:$0xf]
      %v628 = vld [vmem:[%s4 + $0x68] sm:$0xf]
      %v629 = vld [vmem:[%s4 + $0x6c] sm:$0xf]
      %v630 = vld [vmem:[%s4 + $0x70] sm:$0xf]
      %v631 = vld [vmem:[%s4 + $0x74] sm:$0xf]
      %v632 = vld [vmem:[%s4 + $0x78] sm:$0xf]
      %v633 = vld [vmem:[%s4 + $0x7c] sm:$0xf]
      %v634 = vld [vmem:[%s4 + $0x80] sm:$0xf]
      %v635 = vld [vmem:[%s4 + $0x84] sm:$0xf]
      %v636 = vld [vmem:[%s4 + $0x88] sm:$0xf]
      %v637 = vld [vmem:[%s4 + $0x8c] sm:$0xf]
      %v638 = vld [vmem:[%s4 + $0x90] sm:$0xf]
      %v639 = vld [vmem:[%s4 + $0x94] sm:$0xf]
      %v640 = vld [vmem:[%s4 + $0x98] sm:$0xf]
      %v641 = vld [vmem:[%s4 + $0x9c] sm:$0xf]
      %v642 = vld [vmem:[%s4 + $0xa0] sm:$0xf]
      %v643 = vld [vmem:[%s4 + $0xa4] sm:$0xf]
      %v644 = vld [vmem:[%s4 + $0xa8] sm:$0xf]
      %v645 = vld [vmem:[%s4 + $0xac] sm:$0xf]
      %v646 = vld [vmem:[%s4 + $0xb0] sm:$0xf]
      %v647 = vld [vmem:[%s4 + $0xb4] sm:$0xf]
      %v648 = vld [vmem:[%s4 + $0xb8] sm:$0xf]
      %v649 = vld [vmem:[%s4 + $0xbc] sm:$0xf]
      %v650 = vld [vmem:[%s4 + $0xc0] sm:$0xf]
      %v651 = vld [vmem:[%s4 + $0xc4] sm:$0xf]
      %v652 = vld [vmem:[%s4 + $0xc8] sm:$0xf]
      %v653 = vld [vmem:[%s4 + $0xcc] sm:$0xf]
      %v654 = vld [vmem:[%s4 + $0xd0] sm:$0xf]
      %v655 = vld [vmem:[%s4 + $0xd4] sm:$0xf]
      %v656 = vld [vmem:[%s4 + $0xd8] sm:$0xf]
      %v657 = vld [vmem:[%s4 + $0xdc] sm:$0xf]
      %v658 = vld [vmem:[%s4 + $0xe0] sm:$0xf]
      %v659 = vld [vmem:[%s4 + $0xe4] sm:$0xf]
      %v660 = vld [vmem:[%s4 + $0xe8] sm:$0xf]
      %v661 = vld [vmem:[%s4 + $0xec] sm:$0xf]
      %v662 = vld [vmem:[%s4 + $0xf0] sm:$0xf]
      %v663 = vld [vmem:[%s4 + $0xf4] sm:$0xf]
      %v664 = vld [vmem:[%s4 + $0xf8] sm:$0xf]
      %v665 = vld [vmem:[%s4 + $0xfc] sm:$0xf]
      %v666 = vld [vmem:[%s5] sm:$0x1]
      %v667 = vld [vmem:[%s5 + $0x1] sm:$0x1]
      %v668 = vld [vmem:[%s5 + $0x2] sm:$0x1]
      %v669 = vld [vmem:[%s5 + $0x3] sm:$0x1]
      %v670 = vld [vmem:[%s5 + $0x4] sm:$0x1]
      %v671 = vld [vmem:[%s5 + $0x5] sm:$0x1]
      %v672 = vld [vmem:[%s5 + $0x6] sm:$0x1]
      %v673 = vld [vmem:[%s5 + $0x7] sm:$0x1]
      %v674 = vld [vmem:[%s5 + $0x8] sm:$0x1]
      %v675 = vld [vmem:[%s5 + $0x9] sm:$0x1]
      %v676 = vld [vmem:[%s5 + $0xa] sm:$0x1]
      %v677 = vld [vmem:[%s5 + $0xb] sm:$0x1]
      %v678 = vld [vmem:[%s5 + $0xc] sm:$0x1]
      %v679 = vld [vmem:[%s5 + $0xd] sm:$0x1]
      %v680 = vld [vmem:[%s5 + $0xe] sm:$0x1]
      %v681 = vld [vmem:[%s5 + $0xf] sm:$0x1]
      %v682 = vld [vmem:[%s6] sm:$0x1]
      %v683 = vld [vmem:[%s6 + $0x1] sm:$0x1]
      %v684 = vld [vmem:[%s6 + $0x2] sm:$0x1]
      %v685 = vld [vmem:[%s6 + $0x3] sm:$0x1]
      %v686 = vld [vmem:[%s6 + $0x4] sm:$0x1]
      %v687 = vld [vmem:[%s7] sm:$0x1]
      %v688 = vld [vmem:[%s7 + $0x1] sm:$0x1]
      %v689 = vld [vmem:[%s7 + $0x2] sm:$0x1]
      %v690 = vld [vmem:[%s7 + $0x3] sm:$0x1]
      %v691 = vld [vmem:[%s7 + $0x4] sm:$0x1]
      %v692 = vld [vmem:[%s596] sm:$0xff]
      %v693 = vld [vmem:[%s596 + $0x8] sm:$0xff]
      %v694 = vld [vmem:[%s2] sm:$0x1]
      %v696 = vperm.slane %v694, 0
      %v698 = vadd.f32 %v692, %v696
      %v699 = vadd.f32 %v693, %v696
      %v700 = vld [vmem:[%s1] sm:$0xff]
      %v701 = vld [vmem:[%s1 + $0x8] sm:$0xff]
      %v702 = vld [vmem:[%s3] sm:$0x1f]
      %v703 = vpack.c.bf16 %v702, %v702
      %v705 = vperm.slane %v666, 0
      %v711 = vunpack.c.l.b16 %v602
      %v712 = vunpack.c.l.b16 %v603
      %v713 = vunpack.c.l.b16 %v604
      %v714 = vunpack.c.l.b16 %v605
      %v715 = vpack.c.b16 %v712, %v711
      %v716 = vpack.c.b16 %v714, %v713
      %vm719 = vcmask 261120
      %v721 = vsel %vm719, %v703, 0
      %723 = vmatpush.bf16.msra.mxu0 0
      %724 = vmatpush.bf16.msra.mxu0 0
      %725 = vmatpush.bf16.msra.mxu0 0
      %726 = vmatpush.bf16.msra.mxu0 0
      %727 = vmatpush.bf16.msra.mxu0 0
      %728 = vmatpush.bf16.msra.mxu0 0
      %729 = vmatpush.bf16.msra.mxu0 %v716
      %730 = vmatpush.bf16.msra.mxu0 %v715
      %731 = vmatmul.bf16.gmra.mxu0 %v721
      %v732 = vpop.f32.mrf.mxu0
      %v733 = vadd.f32 %v705, %v732
      %v734 = vpop.f32.mrf.mxu0
      %735 = vdwg.mxu0
      %v737 = vperm.slane %v667, 0
      %v743 = vunpack.c.l.b16 %v606
      %v744 = vunpack.c.l.b16 %v607
      %v745 = vunpack.c.l.b16 %v608
      %v746 = vunpack.c.l.b16 %v609
      %v747 = vpack.c.b16 %v744, %v743
      %v748 = vpack.c.b16 %v746, %v745
      %751 = vmatpush.bf16.msra.mxu0 0
      %752 = vmatpush.bf16.msra.mxu0 0
      %753 = vmatpush.bf16.msra.mxu0 0
      %754 = vmatpush.bf16.msra.mxu0 0
      %755 = vmatpush.bf16.msra.mxu0 0
      %756 = vmatpush.bf16.msra.mxu0 0
      %757 = vmatpush.bf16.msra.mxu0 %v748
      %758 = vmatpush.bf16.msra.mxu0 %v747
      %759 = vmatmul.bf16.gmra.mxu0 %v721
      %v760 = vpop.f32.mrf.mxu0
      %v761 = vadd.f32 %v737, %v760
      %v762 = vpop.f32.mrf.mxu0
      %763 = vdwg.mxu0
      %v765 = vperm.slane %v668, 0
      %v771 = vunpack.c.l.b16 %v610
      %v772 = vunpack.c.l.b16 %v611
      %v773 = vunpack.c.l.b16 %v612
      %v774 = vunpack.c.l.b16 %v613
      %v775 = vpack.c.b16 %v772, %v771
      %v776 = vpack.c.b16 %v774, %v773
      %779 = vmatpush.bf16.msra.mxu0 0
      %780 = vmatpush.bf16.msra.mxu0 0
      %781 = vmatpush.bf16.msra.mxu0 0
      %782 = vmatpush.bf16.msra.mxu0 0
      %783 = vmatpush.bf16.msra.mxu0 0
      %784 = vmatpush.bf16.msra.mxu0 0
      %785 = vmatpush.bf16.msra.mxu0 %v776
      %786 = vmatpush.bf16.msra.mxu0 %v775
      %787 = vmatmul.bf16.gmra.mxu0 %v721
      %v788 = vpop.f32.mrf.mxu0
      %v789 = vadd.f32 %v765, %v788
      %v790 = vpop.f32.mrf.mxu0
      %791 = vdwg.mxu0
      %v792 = vmul.f32 %v733, 0.35355338
      %v793 = vpack.c.bf16 %v792, %v792
      %v794 = vpack.c.bf16 %v761, %v761
      %v795 = vpack.c.bf16 %v789, %v789
      %vm796 = vcmask 64512
      %v798 = vsel %vm796, %v793, 0
      %v801 = vsel %vm796, %v794, 0
      %803 = vmatpush.bf16.xpose.msra.mxu0 0
      %804 = vmatpush.bf16.xpose.msra.mxu0 0
      %805 = vmatpush.bf16.xpose.msra.mxu0 0
      %806 = vmatpush.bf16.xpose.msra.mxu0 0
      %807 = vmatpush.bf16.xpose.msra.mxu0 0
      %808 = vmatpush.bf16.xpose.msra.mxu0 0
      %809 = vmatpush.bf16.xpose.msra.mxu0 0
      %810 = vmatpush.bf16.xpose.msra.mxu0 %v801
      %811 = vmatmul.bf16.gmra.mxu0 %v798
      %v812 = vpop.f32.mrf.mxu0
      %v813 = vadd.f32 0.0, %v812
      %v814 = vpop.f32.mrf.mxu0
      %815 = vdwg.mxu0
      %vm816 = vcmask 36864
      %v817 = vsel %vm816, %v813, -inf
      %818 = vmax.xlane.f32.xlu0 %v817
      %v819 = vpop.xlane.xlu0 %818
      %v820 = vsub.f32 %v813, %v819
      %v821 = vmul.f32 %v820, 1.442695
      %v822 = vpow.pop %v821
      %v823 = vsel %vm816, %v822, 0.0
      %824 = vadd.xlane.f32.xlu0 %v823
      %v825 = vpop.xlane.xlu0 %824
      %v826 = vrcp.pop %v825
      %v827 = vmul.f32 %v822, %v826
      %v828 = vpack.c.bf16 %v827, %v827
      %vm829 = vcmask 39936
      %v831 = vsel %vm829, %v828, 0
      %vm833 = vcmask 1041408
      %vm834 = vcmask 1042432
      %v835 = vsel %vm833, 4294967295, 65535
      %v836 = vsel %vm834, %v835, 0
      %v838 = vand.u32 %v795, %v836
      %840 = vmatpush.bf16.msra.mxu0 0
      %841 = vmatpush.bf16.msra.mxu0 0
      %842 = vmatpush.bf16.msra.mxu0 0
      %843 = vmatpush.bf16.msra.mxu0 0
      %844 = vmatpush.bf16.msra.mxu0 0
      %845 = vmatpush.bf16.msra.mxu0 0
      %846 = vmatpush.bf16.msra.mxu0 0
      %847 = vmatpush.bf16.msra.mxu0 %v838
      %848 = vmatmul.bf16.gmra.mxu0 %v831
      %v849 = vpop.f32.mrf.mxu0
      %v850 = vadd.f32 0.0, %v849
      %v851 = vpop.f32.mrf.mxu0
      %852 = vdwg.mxu0
      %v854 = vunpack.c.l.b16 %v793
      %v855 = vpack.c.b16 %v854, %v854
      %856 = vrot.lane.b32.xlu0 %v855, 120
      %v857 = vpop.permute.xlu0 %856
      %v859 = vunpack.c.l.b16 %v794
      %v860 = vpack.c.b16 %v859, %v859
      %861 = vrot.lane.b32.xlu0 %v860, 120
      %v862 = vpop.permute.xlu0 %861
      %v864 = vsel %vm796, %v857, 0
      %v867 = vsel %vm796, %v862, 0
      %869 = vmatpush.bf16.xpose.msra.mxu0 0
      %870 = vmatpush.bf16.xpose.msra.mxu0 0
      %871 = vmatpush.bf16.xpose.msra.mxu0 0
      %872 = vmatpush.bf16.xpose.msra.mxu0 0
      %873 = vmatpush.bf16.xpose.msra.mxu0 0
      %874 = vmatpush.bf16.xpose.msra.mxu0 0
      %875 = vmatpush.bf16.xpose.msra.mxu0 0
      %876 = vmatpush.bf16.xpose.msra.mxu0 %v867
      %877 = vmatmul.bf16.gmra.mxu0 %v864
      %v878 = vpop.f32.mrf.mxu0
      %v879 = vadd.f32 0.0, %v878
      %v880 = vpop.f32.mrf.mxu0
      %881 = vdwg.mxu0
      %v882 = vsel %vm816, %v879, -inf
      %883 = vmax.xlane.f32.xlu0 %v882
      %v884 = vpop.xlane.xlu0 %883
      %v885 = vsub.f32 %v879, %v884
      %v886 = vmul.f32 %v885, 1.442695
      %v887 = vpow.pop %v886
      %v888 = vsel %vm816, %v887, 0.0
      %889 = vadd.xlane.f32.xlu0 %v888
      %v890 = vpop.xlane.xlu0 %889
      %v891 = vrcp.pop %v890
      %v892 = vmul.f32 %v887, %v891
      %v893 = vpack.c.bf16 %v892, %v892
      %v895 = vunpack.c.l.b16 %v795
      %v896 = vpack.c.b16 %v895, %v895
      %897 = vrot.lane.b32.xlu0 %v896, 120
      %v898 = vpop.permute.xlu0 %897
      %v900 = vsel %vm829, %v893, 0
      %v903 = vand.u32 %v898, %v836
      %905 = vmatpush.bf16.msra.mxu0 0
      %906 = vmatpush.bf16.msra.mxu0 0
      %907 = vmatpush.bf16.msra.mxu0 0
      %908 = vmatpush.bf16.msra.mxu0 0
      %909 = vmatpush.bf16.msra.mxu0 0
      %910 = vmatpush.bf16.msra.mxu0 0
      %911 = vmatpush.bf16.msra.mxu0 0
      %912 = vmatpush.bf16.msra.mxu0 %v903
      %913 = vmatmul.bf16.gmra.mxu0 %v900
      %v914 = vpop.f32.mrf.mxu0
      %v915 = vadd.f32 0.0, %v914
      %v916 = vpop.f32.mrf.mxu0
      %917 = vdwg.mxu0
      %918 = vrot.lane.b32.xlu0 %v855, 112
      %v919 = vpop.permute.xlu0 %918
      %920 = vrot.lane.b32.xlu0 %v860, 112
      %v921 = vpop.permute.xlu0 %920
      %v923 = vsel %vm796, %v919, 0
      %v926 = vsel %vm796, %v921, 0
      %928 = vmatpush.bf16.xpose.msra.mxu0 0
      %929 = vmatpush.bf16.xpose.msra.mxu0 0
      %930 = vmatpush.bf16.xpose.msra.mxu0 0
      %931 = vmatpush.bf16.xpose.msra.mxu0 0
      %932 = vmatpush.bf16.xpose.msra.mxu0 0
      %933 = vmatpush.bf16.xpose.msra.mxu0 0
      %934 = vmatpush.bf16.xpose.msra.mxu0 0
      %935 = vmatpush.bf16.xpose.msra.mxu0 %v926
      %936 = vmatmul.bf16.gmra.mxu0 %v923
      %v937 = vpop.f32.mrf.mxu0
      %v938 = vadd.f32 0.0, %v937
      %v939 = vpop.f32.mrf.mxu0
      %940 = vdwg.mxu0
      %v941 = vsel %vm816, %v938, -inf
      %942 = vmax.xlane.f32.xlu0 %v941
      %v943 = vpop.xlane.xlu0 %942
      %v944 = vsub.f32 %v938, %v943
      %v945 = vmul.f32 %v944, 1.442695
      %v946 = vpow.pop %v945
      %v947 = vsel %vm816, %v946, 0.0
      %948 = vadd.xlane.f32.xlu0 %v947
      %v949 = vpop.xlane.xlu0 %948
      %v950 = vrcp.pop %v949
      %v951 = vmul.f32 %v946, %v950
      %v952 = vpack.c.bf16 %v951, %v951
      %953 = vrot.lane.b32.xlu0 %v896, 112
      %v954 = vpop.permute.xlu0 %953
      %v956 = vsel %vm829, %v952, 0
      %v959 = vand.u32 %v954, %v836
      %961 = vmatpush.bf16.msra.mxu0 0
      %962 = vmatpush.bf16.msra.mxu0 0
      %963 = vmatpush.bf16.msra.mxu0 0
      %964 = vmatpush.bf16.msra.mxu0 0
      %965 = vmatpush.bf16.msra.mxu0 0
      %966 = vmatpush.bf16.msra.mxu0 0
      %967 = vmatpush.bf16.msra.mxu0 0
      %968 = vmatpush.bf16.msra.mxu0 %v959
      %969 = vmatmul.bf16.gmra.mxu0 %v956
      %v970 = vpop.f32.mrf.mxu0
      %v971 = vadd.f32 0.0, %v970
      %v972 = vpop.f32.mrf.mxu0
      %973 = vdwg.mxu0
      %974 = vrot.lane.b32.xlu0 %v855, 104
      %v975 = vpop.permute.xlu0 %974
      %976 = vrot.lane.b32.xlu0 %v860, 104
      %v977 = vpop.permute.xlu0 %976
      %v979 = vsel %vm796, %v975, 0
      %v982 = vsel %vm796, %v977, 0
      %984 = vmatpush.bf16.xpose.msra.mxu0 0
      %985 = vmatpush.bf16.xpose.msra.mxu0 0
      %986 = vmatpush.bf16.xpose.msra.mxu0 0
      %987 = vmatpush.bf16.xpose.msra.mxu0 0
      %988 = vmatpush.bf16.xpose.msra.mxu0 0
      %989 = vmatpush.bf16.xpose.msra.mxu0 0
      %990 = vmatpush.bf16.xpose.msra.mxu0 0
      %991 = vmatpush.bf16.xpose.msra.mxu0 %v982
      %992 = vmatmul.bf16.gmra.mxu0 %v979
      %v993 = vpop.f32.mrf.mxu0
      %v994 = vadd.f32 0.0, %v993
      %v995 = vpop.f32.mrf.mxu0
      %996 = vdwg.mxu0
      %v997 = vsel %vm816, %v994, -inf
      %998 = vmax.xlane.f32.xlu0 %v997
      %v999 = vpop.xlane.xlu0 %998
      %v1000 = vsub.f32 %v994, %v999
      %v1001 = vmul.f32 %v1000, 1.442695
      %v1002 = vpow.pop %v1001
      %v1003 = vsel %vm816, %v1002, 0.0
      %1004 = vadd.xlane.f32.xlu0 %v1003
      %v1005 = vpop.xlane.xlu0 %1004
      %v1006 = vrcp.pop %v1005
      %v1007 = vmul.f32 %v1002, %v1006
      %v1008 = vpack.c.bf16 %v1007, %v1007
      %1009 = vrot.lane.b32.xlu0 %v896, 104
      %v1010 = vpop.permute.xlu0 %1009
      %v1012 = vsel %vm829, %v1008, 0
      %v1015 = vand.u32 %v1010, %v836
      %1017 = vmatpush.bf16.msra.mxu0 0
      %1018 = vmatpush.bf16.msra.mxu0 0
      %1019 = vmatpush.bf16.msra.mxu0 0
      %1020 = vmatpush.bf16.msra.mxu0 0
      %1021 = vmatpush.bf16.msra.mxu0 0
      %1022 = vmatpush.bf16.msra.mxu0 0
      %1023 = vmatpush.bf16.msra.mxu0 0
      %1024 = vmatpush.bf16.msra.mxu0 %v1015
      %1025 = vmatmul.bf16.gmra.mxu0 %v1012
      %v1026 = vpop.f32.mrf.mxu0
      %v1027 = vadd.f32 0.0, %v1026
      %v1028 = vpop.f32.mrf.mxu0
      %1029 = vdwg.mxu0
      %1031 = vrot.lane.b32.xlu0 %v915, 8
      %v1032 = vpop.permute.xlu0 %1031
      %1035 = vrot.lane.b32.xlu0 %v971, 16
      %v1036 = vpop.permute.xlu0 %1035
      %1039 = vrot.lane.b32.xlu0 %v1027, 24
      %v1040 = vpop.permute.xlu0 %1039
      %v1042 = vsel %vm796, %v850, %v1032
      %vm1043 = vcmask 130048
      %v1044 = vsel %vm1043, %v1042, %v1036
      %vm1045 = vcmask 195584
      %v1046 = vsel %vm1045, %v1044, %v1040
      %v1047 = vpack.c.bf16 %v1046, %v1046
      %v1049 = vperm.slane %v669, 0
      %v1055 = vunpack.c.l.b16 %v614
      %v1056 = vunpack.c.l.b16 %v615
      %v1057 = vunpack.c.l.b16 %v616
      %v1058 = vunpack.c.l.b16 %v617
      %v1059 = vpack.c.b16 %v1056, %v1055
      %v1060 = vpack.c.b16 %v1058, %v1057
      %v1064 = vsel %vm719, %v1047, 0
      %1066 = vmatpush.bf16.msra.mxu0 0
      %1067 = vmatpush.bf16.msra.mxu0 0
      %1068 = vmatpush.bf16.msra.mxu0 0
      %1069 = vmatpush.bf16.msra.mxu0 0
      %1070 = vmatpush.bf16.msra.mxu0 0
      %1071 = vmatpush.bf16.msra.mxu0 0
      %1072 = vmatpush.bf16.msra.mxu0 %v1060
      %1073 = vmatpush.bf16.msra.mxu0 %v1059
      %1074 = vmatmul.bf16.gmra.mxu0 %v1064
      %v1075 = vpop.f32.mrf.mxu0
      %v1076 = vadd.f32 %v1049, %v1075
      %v1077 = vpop.f32.mrf.mxu0
      %1078 = vdwg.mxu0
      %v1079 = vadd.f32 %v702, %v1076
      %vm1080 = vcmask 258048
      %v1081 = vsel %vm1080, %v1079, 0.0
      %1082 = vadd.xlane.f32.xlu0 %v1081
      %v1083 = vpop.xlane.xlu0 %1082
      %v1084 = vrcp.pop 32.0
      %v1085 = vmul.f32 32.0, %v1084
      %v1086 = vsub.f32 1.0, %v1085
      %v1087 = vmul.f32 %v1084, %v1086
      %v1088 = vadd.f32 %v1084, %v1087
      %vm1089 = vweird.f32 %v1084
      %v1090 = vsel %vm1089, %v1084, %v1088
      %v1091 = vmul.f32 %v1083, %v1090
      %v1092 = vsub.f32 %v1079, %v1091
      %v1093 = vmul.f32 %v1092, %v1092
      %v1094 = vsel %vm1080, %v1093, 0.0
      %1095 = vadd.xlane.f32.xlu0 %v1094
      %v1096 = vpop.xlane.xlu0 %1095
      %v1097 = vmul.f32 %v1096, %v1090
      %v1098 = vadd.f32 %v1097, 1e-05
      %v1099 = vrsqrt.pop %v1098
      %v1100 = vmul.f32 %v1099, %v1098
      %v1101 = vmul.f32 %v1100, %v1099
      %v1102 = vmul.f32 0.5, %v1101
      %v1103 = vsub.f32 1.5, %v1102
      %v1104 = vmul.f32 %v1099, %v1103
      %vm1105 = vweird.f32 %v1098
      %vm1106 = vweird.f32 %v1099
      %vm1107 = vmor %vm1105, %vm1106
      %v1108 = vsel %vm1107, %v1099, %v1104
      %v1109 = vmul.f32 %v1092, %v1108
      %v1111 = vperm.slane %v682, 0
      %v1113 = vmul.f32 %v1109, %v1111
      %v1115 = vperm.slane %v687, 0
      %v1117 = vadd.f32 %v1113, %v1115
      %v1118 = vadd.f32 %v698, %v700
      %v1119 = vadd.f32 %v699, %v701
      %v1120 = vpack.c.bf16 %v1117, %v1117
      %v1122 = vperm.slane %v670, 0
      %v1128 = vunpack.c.l.b16 %v618
      %v1129 = vunpack.c.l.b16 %v619
      %v1130 = vunpack.c.l.b16 %v620
      %v1131 = vunpack.c.l.b16 %v621
      %v1132 = vpack.c.b16 %v1129, %v1128
      %v1133 = vpack.c.b16 %v1131, %v1130
      %v1137 = vsel %vm719, %v1120, 0
      %1139 = vmatpush.bf16.msra.mxu0 0
      %1140 = vmatpush.bf16.msra.mxu0 0
      %1141 = vmatpush.bf16.msra.mxu0 0
      %1142 = vmatpush.bf16.msra.mxu0 0
      %1143 = vmatpush.bf16.msra.mxu0 0
      %1144 = vmatpush.bf16.msra.mxu0 0
      %1145 = vmatpush.bf16.msra.mxu0 %v1133
      %1146 = vmatpush.bf16.msra.mxu0 %v1132
      %1147 = vmatmul.bf16.gmra.mxu0 %v1137
      %v1148 = vpop.f32.mrf.mxu0
      %v1149 = vadd.f32 %v1122, %v1148
      %v1150 = vpop.f32.mrf.mxu0
      %1151 = vdwg.mxu0
      %v1152 = vpack.c.bf16 %v1119, %v1118
      %v1154 = vperm.slane %v671, 0
      %v1160 = vunpack.c.l.b16 %v622
      %v1161 = vunpack.c.l.b16 %v623
      %v1162 = vunpack.c.l.b16 %v624
      %v1163 = vunpack.c.l.b16 %v625
      %v1164 = vpack.c.b16 %v1161, %v1160
      %v1165 = vpack.c.b16 %v1163, %v1162
      %v1169 = vsel %vm719, %v1152, 0
      %1171 = vmatpush.bf16.msra.mxu0 0
      %1172 = vmatpush.bf16.msra.mxu0 0
      %1173 = vmatpush.bf16.msra.mxu0 0
      %1174 = vmatpush.bf16.msra.mxu0 0
      %1175 = vmatpush.bf16.msra.mxu0 0
      %1176 = vmatpush.bf16.msra.mxu0 0
      %1177 = vmatpush.bf16.msra.mxu0 %v1165
      %1178 = vmatpush.bf16.msra.mxu0 %v1164
      %1179 = vmatmul.bf16.gmra.mxu0 %v1169
      %v1180 = vpop.f32.mrf.mxu0
      %v1181 = vadd.f32 %v1154, %v1180
      %v1182 = vpop.f32.mrf.mxu0
      %v1183 = vadd.f32 %v1154, %v1182
      %1184 = vdwg.mxu0
      %v1185 = vpack.c.bf16 %v699, %v698
      %v1187 = vperm.slane %v672, 0
      %v1193 = vunpack.c.l.b16 %v626
      %v1194 = vunpack.c.l.b16 %v627
      %v1195 = vunpack.c.l.b16 %v628
      %v1196 = vunpack.c.l.b16 %v629
      %v1197 = vpack.c.b16 %v1194, %v1193
      %v1198 = vpack.c.b16 %v1196, %v1195
      %v1202 = vsel %vm719, %v1185, 0
      %1204 = vmatpush.bf16.msra.mxu0 0
      %1205 = vmatpush.bf16.msra.mxu0 0
      %1206 = vmatpush.bf16.msra.mxu0 0
      %1207 = vmatpush.bf16.msra.mxu0 0
      %1208 = vmatpush.bf16.msra.mxu0 0
      %1209 = vmatpush.bf16.msra.mxu0 0
      %1210 = vmatpush.bf16.msra.mxu0 %v1198
      %1211 = vmatpush.bf16.msra.mxu0 %v1197
      %1212 = vmatmul.bf16.gmra.mxu0 %v1202
      %v1213 = vpop.f32.mrf.mxu0
      %v1214 = vadd.f32 %v1187, %v1213
      %v1215 = vpop.f32.mrf.mxu0
      %v1216 = vadd.f32 %v1187, %v1215
      %1217 = vdwg.mxu0
      %v1218 = vmul.f32 %v1149, 0.35355338
      %v1219 = vpack.c.bf16 %v1218, %v1218
      %v1220 = vpack.c.bf16 %v1181, %v1181
      %v1221 = vpack.c.bf16 %v1183, %v1183
      %v1222 = vpack.c.bf16 %v1214, %v1214
      %v1223 = vpack.c.bf16 %v1216, %v1216
      %v1226 = vunpack.c.l.b16 %v1220
      %v1227 = vunpack.c.l.b16 %v1221
      %v1228 = vpack.c.b16 %v1227, %v1226
      %v1230 = vsel %vm796, %v1219, 0
      %v1233 = vsel %vm796, %v1228, 0
      %1235 = vmatpush.bf16.xpose.msra.mxu0 0
      %1236 = vmatpush.bf16.xpose.msra.mxu0 0
      %1237 = vmatpush.bf16.xpose.msra.mxu0 0
      %1238 = vmatpush.bf16.xpose.msra.mxu0 0
      %1239 = vmatpush.bf16.xpose.msra.mxu0 0
      %1240 = vmatpush.bf16.xpose.msra.mxu0 0
      %1241 = vmatpush.bf16.xpose.msra.mxu0 0
      %1242 = vmatpush.bf16.xpose.msra.mxu0 %v1233
      %1243 = vmatmul.bf16.gmra.mxu0 %v1230
      %v1244 = vpop.f32.mrf.mxu0
      %v1245 = vadd.f32 0.0, %v1244
      %v1246 = vpop.f32.mrf.mxu0
      %1247 = vdwg.mxu0
      %vm1248 = vcmask 126976
      %v1249 = vsel %vm1248, %v1245, -inf
      %1250 = vmax.xlane.f32.xlu0 %v1249
      %v1251 = vpop.xlane.xlu0 %1250
      %v1252 = vsub.f32 %v1245, %v1251
      %v1253 = vmul.f32 %v1252, 1.442695
      %v1254 = vpow.pop %v1253
      %v1255 = vsel %vm1248, %v1254, 0.0
      %1256 = vadd.xlane.f32.xlu0 %v1255
      %v1257 = vpop.xlane.xlu0 %1256
      %v1258 = vrcp.pop %v1257
      %v1259 = vmul.f32 %v1254, %v1258
      %v1260 = vpack.c.bf16 %v1259, %v1259
      %v1263 = vunpack.c.l.b16 %v1222
      %v1264 = vunpack.c.l.b16 %v1223
      %v1265 = vpack.c.b16 %v1264, %v1263
      %v1268 = vsel %vm1043, %v1260, 0
      %1270 = vmatpush.bf16.msra.mxu0 0
      %1271 = vmatpush.bf16.msra.mxu0 0
      %1272 = vmatpush.bf16.msra.mxu0 0
      %1273 = vmatpush.bf16.msra.mxu0 0
      %1274 = vmatpush.bf16.msra.mxu0 0
      %1275 = vmatpush.bf16.msra.mxu0 0
      %1276 = vmatpush.bf16.msra.mxu0 0
      %1277 = vmatpush.bf16.msra.mxu0 %v1265
      %1278 = vmatmul.bf16.gmra.mxu0 %v1268
      %v1279 = vpop.f32.mrf.mxu0
      %v1280 = vadd.f32 0.0, %v1279
      %v1281 = vpop.f32.mrf.mxu0
      %1282 = vdwg.mxu0
      %v1284 = vunpack.c.l.b16 %v1219
      %v1285 = vpack.c.b16 %v1284, %v1284
      %1286 = vrot.lane.b32.xlu0 %v1285, 120
      %v1287 = vpop.permute.xlu0 %1286
      %1288 = vrot.lane.b32.xlu0 %v1228, 120
      %v1289 = vpop.permute.xlu0 %1288
      %v1291 = vsel %vm796, %v1287, 0
      %v1294 = vsel %vm796, %v1289, 0
      %1296 = vmatpush.bf16.xpose.msra.mxu0 0
      %1297 = vmatpush.bf16.xpose.msra.mxu0 0
      %1298 = vmatpush.bf16.xpose.msra.mxu0 0
      %1299 = vmatpush.bf16.xpose.msra.mxu0 0
      %1300 = vmatpush.bf16.xpose.msra.mxu0 0
      %1301 = vmatpush.bf16.xpose.msra.mxu0 0
      %1302 = vmatpush.bf16.xpose.msra.mxu0 0
      %1303 = vmatpush.bf16.xpose.msra.mxu0 %v1294
      %1304 = vmatmul.bf16.gmra.mxu0 %v1291
      %v1305 = vpop.f32.mrf.mxu0
      %v1306 = vadd.f32 0.0, %v1305
      %v1307 = vpop.f32.mrf.mxu0
      %1308 = vdwg.mxu0
      %v1309 = vsel %vm1248, %v1306, -inf
      %1310 = vmax.xlane.f32.xlu0 %v1309
      %v1311 = vpop.xlane.xlu0 %1310
      %v1312 = vsub.f32 %v1306, %v1311
      %v1313 = vmul.f32 %v1312, 1.442695
      %v1314 = vpow.pop %v1313
      %v1315 = vsel %vm1248, %v1314, 0.0
      %1316 = vadd.xlane.f32.xlu0 %v1315
      %v1317 = vpop.xlane.xlu0 %1316
      %v1318 = vrcp.pop %v1317
      %v1319 = vmul.f32 %v1314, %v1318
      %v1320 = vpack.c.bf16 %v1319, %v1319
      %1321 = vrot.lane.b32.xlu0 %v1265, 120
      %v1322 = vpop.permute.xlu0 %1321
      %v1325 = vsel %vm1043, %v1320, 0
      %1327 = vmatpush.bf16.msra.mxu0 0
      %1328 = vmatpush.bf16.msra.mxu0 0
      %1329 = vmatpush.bf16.msra.mxu0 0
      %1330 = vmatpush.bf16.msra.mxu0 0
      %1331 = vmatpush.bf16.msra.mxu0 0
      %1332 = vmatpush.bf16.msra.mxu0 0
      %1333 = vmatpush.bf16.msra.mxu0 0
      %1334 = vmatpush.bf16.msra.mxu0 %v1322
      %1335 = vmatmul.bf16.gmra.mxu0 %v1325
      %v1336 = vpop.f32.mrf.mxu0
      %v1337 = vadd.f32 0.0, %v1336
      %v1338 = vpop.f32.mrf.mxu0
      %1339 = vdwg.mxu0
      %1340 = vrot.lane.b32.xlu0 %v1285, 112
      %v1341 = vpop.permute.xlu0 %1340
      %1342 = vrot.lane.b32.xlu0 %v1228, 112
      %v1343 = vpop.permute.xlu0 %1342
      %v1345 = vsel %vm796, %v1341, 0
      %v1348 = vsel %vm796, %v1343, 0
      %1350 = vmatpush.bf16.xpose.msra.mxu0 0
      %1351 = vmatpush.bf16.xpose.msra.mxu0 0
      %1352 = vmatpush.bf16.xpose.msra.mxu0 0
      %1353 = vmatpush.bf16.xpose.msra.mxu0 0
      %1354 = vmatpush.bf16.xpose.msra.mxu0 0
      %1355 = vmatpush.bf16.xpose.msra.mxu0 0
      %1356 = vmatpush.bf16.xpose.msra.mxu0 0
      %1357 = vmatpush.bf16.xpose.msra.mxu0 %v1348
      %1358 = vmatmul.bf16.gmra.mxu0 %v1345
      %v1359 = vpop.f32.mrf.mxu0
      %v1360 = vadd.f32 0.0, %v1359
      %v1361 = vpop.f32.mrf.mxu0
      %1362 = vdwg.mxu0
      %v1363 = vsel %vm1248, %v1360, -inf
      %1364 = vmax.xlane.f32.xlu0 %v1363
      %v1365 = vpop.xlane.xlu0 %1364
      %v1366 = vsub.f32 %v1360, %v1365
      %v1367 = vmul.f32 %v1366, 1.442695
      %v1368 = vpow.pop %v1367
      %v1369 = vsel %vm1248, %v1368, 0.0
      %1370 = vadd.xlane.f32.xlu0 %v1369
      %v1371 = vpop.xlane.xlu0 %1370
      %v1372 = vrcp.pop %v1371
      %v1373 = vmul.f32 %v1368, %v1372
      %v1374 = vpack.c.bf16 %v1373, %v1373
      %1375 = vrot.lane.b32.xlu0 %v1265, 112
      %v1376 = vpop.permute.xlu0 %1375
      %v1379 = vsel %vm1043, %v1374, 0
      %1381 = vmatpush.bf16.msra.mxu0 0
      %1382 = vmatpush.bf16.msra.mxu0 0
      %1383 = vmatpush.bf16.msra.mxu0 0
      %1384 = vmatpush.bf16.msra.mxu0 0
      %1385 = vmatpush.bf16.msra.mxu0 0
      %1386 = vmatpush.bf16.msra.mxu0 0
      %1387 = vmatpush.bf16.msra.mxu0 0
      %1388 = vmatpush.bf16.msra.mxu0 %v1376
      %1389 = vmatmul.bf16.gmra.mxu0 %v1379
      %v1390 = vpop.f32.mrf.mxu0
      %v1391 = vadd.f32 0.0, %v1390
      %v1392 = vpop.f32.mrf.mxu0
      %1393 = vdwg.mxu0
      %1394 = vrot.lane.b32.xlu0 %v1285, 104
      %v1395 = vpop.permute.xlu0 %1394
      %1396 = vrot.lane.b32.xlu0 %v1228, 104
      %v1397 = vpop.permute.xlu0 %1396
      %v1399 = vsel %vm796, %v1395, 0
      %v1402 = vsel %vm796, %v1397, 0
      %1404 = vmatpush.bf16.xpose.msra.mxu0 0
      %1405 = vmatpush.bf16.xpose.msra.mxu0 0
      %1406 = vmatpush.bf16.xpose.msra.mxu0 0
      %1407 = vmatpush.bf16.xpose.msra.mxu0 0
      %1408 = vmatpush.bf16.xpose.msra.mxu0 0
      %1409 = vmatpush.bf16.xpose.msra.mxu0 0
      %1410 = vmatpush.bf16.xpose.msra.mxu0 0
      %1411 = vmatpush.bf16.xpose.msra.mxu0 %v1402
      %1412 = vmatmul.bf16.gmra.mxu0 %v1399
      %v1413 = vpop.f32.mrf.mxu0
      %v1414 = vadd.f32 0.0, %v1413
      %v1415 = vpop.f32.mrf.mxu0
      %1416 = vdwg.mxu0
      %v1417 = vsel %vm1248, %v1414, -inf
      %1418 = vmax.xlane.f32.xlu0 %v1417
      %v1419 = vpop.xlane.xlu0 %1418
      %v1420 = vsub.f32 %v1414, %v1419
      %v1421 = vmul.f32 %v1420, 1.442695
      %v1422 = vpow.pop %v1421
      %v1423 = vsel %vm1248, %v1422, 0.0
      %1424 = vadd.xlane.f32.xlu0 %v1423
      %v1425 = vpop.xlane.xlu0 %1424
      %v1426 = vrcp.pop %v1425
      %v1427 = vmul.f32 %v1422, %v1426
      %v1428 = vpack.c.bf16 %v1427, %v1427
      %1429 = vrot.lane.b32.xlu0 %v1265, 104
      %v1430 = vpop.permute.xlu0 %1429
      %v1433 = vsel %vm1043, %v1428, 0
      %1435 = vmatpush.bf16.msra.mxu0 0
      %1436 = vmatpush.bf16.msra.mxu0 0
      %1437 = vmatpush.bf16.msra.mxu0 0
      %1438 = vmatpush.bf16.msra.mxu0 0
      %1439 = vmatpush.bf16.msra.mxu0 0
      %1440 = vmatpush.bf16.msra.mxu0 0
      %1441 = vmatpush.bf16.msra.mxu0 0
      %1442 = vmatpush.bf16.msra.mxu0 %v1430
      %1443 = vmatmul.bf16.gmra.mxu0 %v1433
      %v1444 = vpop.f32.mrf.mxu0
      %v1445 = vadd.f32 0.0, %v1444
      %v1446 = vpop.f32.mrf.mxu0
      %1447 = vdwg.mxu0
      %1449 = vrot.lane.b32.xlu0 %v1337, 8
      %v1450 = vpop.permute.xlu0 %1449
      %1453 = vrot.lane.b32.xlu0 %v1391, 16
      %v1454 = vpop.permute.xlu0 %1453
      %1457 = vrot.lane.b32.xlu0 %v1445, 24
      %v1458 = vpop.permute.xlu0 %1457
      %v1460 = vsel %vm796, %v1280, %v1450
      %v1461 = vsel %vm1043, %v1460, %v1454
      %v1462 = vsel %vm1045, %v1461, %v1458
      %v1463 = vpack.c.bf16 %v1462, %v1462
      %v1465 = vperm.slane %v673, 0
      %v1471 = vunpack.c.l.b16 %v630
      %v1472 = vunpack.c.l.b16 %v631
      %v1473 = vunpack.c.l.b16 %v632
      %v1474 = vunpack.c.l.b16 %v633
      %v1475 = vpack.c.b16 %v1472, %v1471
      %v1476 = vpack.c.b16 %v1474, %v1473
      %v1480 = vsel %vm719, %v1463, 0
      %1482 = vmatpush.bf16.msra.mxu0 0
      %1483 = vmatpush.bf16.msra.mxu0 0
      %1484 = vmatpush.bf16.msra.mxu0 0
      %1485 = vmatpush.bf16.msra.mxu0 0
      %1486 = vmatpush.bf16.msra.mxu0 0
      %1487 = vmatpush.bf16.msra.mxu0 0
      %1488 = vmatpush.bf16.msra.mxu0 %v1476
      %1489 = vmatpush.bf16.msra.mxu0 %v1475
      %1490 = vmatmul.bf16.gmra.mxu0 %v1480
      %v1491 = vpop.f32.mrf.mxu0
      %v1492 = vadd.f32 %v1465, %v1491
      %v1493 = vpop.f32.mrf.mxu0
      %1494 = vdwg.mxu0
      %v1495 = vadd.f32 %v1117, %v1492
      %v1496 = vsel %vm1080, %v1495, 0.0
      %1497 = vadd.xlane.f32.xlu0 %v1496
      %v1498 = vpop.xlane.xlu0 %1497
      %v1499 = vmul.f32 %v1498, %v1090
      %v1500 = vsub.f32 %v1495, %v1499
      %v1501 = vmul.f32 %v1500, %v1500
      %v1502 = vsel %vm1080, %v1501, 0.0
      %1503 = vadd.xlane.f32.xlu0 %v1502
      %v1504 = vpop.xlane.xlu0 %1503
      %v1505 = vmul.f32 %v1504, %v1090
      %v1506 = vadd.f32 %v1505, 1e-05
      %v1507 = vrsqrt.pop %v1506
      %v1508 = vmul.f32 %v1507, %v1506
      %v1509 = vmul.f32 %v1508, %v1507
      %v1510 = vmul.f32 0.5, %v1509
      %v1511 = vsub.f32 1.5, %v1510
      %v1512 = vmul.f32 %v1507, %v1511
      %vm1513 = vweird.f32 %v1506
      %vm1514 = vweird.f32 %v1507
      %vm1515 = vmor %vm1513, %vm1514
      %v1516 = vsel %vm1515, %v1507, %v1512
      %v1517 = vmul.f32 %v1500, %v1516
      %v1519 = vperm.slane %v683, 0
      %v1521 = vmul.f32 %v1517, %v1519
      %v1523 = vperm.slane %v688, 0
      %v1525 = vadd.f32 %v1521, %v1523
      %v1526 = vpack.c.bf16 %v1525, %v1525
      %v1527 = vld [vmem:[%s8] sm:$0xf]
      %v1528 = vld [vmem:[%s8 + $0x4] sm:$0xf]
      %v1529 = vld [vmem:[%s8 + $0x8] sm:$0xf]
      %v1530 = vld [vmem:[%s8 + $0xc] sm:$0xf]
      %v1531 = vld [vmem:[%s9] sm:$0x1]
      %v1533 = vperm.slane %v1531, 0
      %v1539 = vunpack.c.l.b16 %v1527
      %v1540 = vunpack.c.l.b16 %v1528
      %v1541 = vunpack.c.l.b16 %v1529
      %v1542 = vunpack.c.l.b16 %v1530
      %v1543 = vpack.c.b16 %v1540, %v1539
      %v1544 = vpack.c.b16 %v1542, %v1541
      %v1548 = vsel %vm719, %v1526, 0
      %1550 = vmatpush.bf16.msra.mxu0 0
      %1551 = vmatpush.bf16.msra.mxu0 0
      %1552 = vmatpush.bf16.msra.mxu0 0
      %1553 = vmatpush.bf16.msra.mxu0 0
      %1554 = vmatpush.bf16.msra.mxu0 0
      %1555 = vmatpush.bf16.msra.mxu0 0
      %1556 = vmatpush.bf16.msra.mxu0 %v1544
      %1557 = vmatpush.bf16.msra.mxu0 %v1543
      %1558 = vmatmul.bf16.gmra.mxu0 %v1548
      %v1559 = vpop.f32.mrf.mxu0
      %v1560 = vadd.f32 %v1533, %v1559
      %v1561 = vpop.f32.mrf.mxu0
      %1562 = vdwg.mxu0
      %v1563 = vmul.f32 %v1560, %v1560
      %v1564 = vmul.f32 %v1560, %v1563
      %v1565 = vmul.f32 %v1564, 0.044715
      %v1566 = vadd.f32 %v1560, %v1565
      %v1567 = vmul.f32 %v1566, 0.7978846
      %v1568 = vtanh.pop %v1567
      %v1569 = vadd.f32 %v1568, 1.0
      %v1570 = vmul.f32 %v1569, 0.5
      %v1571 = vmul.f32 %v1560, %v1570
      %v1572 = vpack.c.bf16 %v1571, %v1571
      %v1573 = vld [vmem:[%s10] sm:$0xf]
      %v1574 = vld [vmem:[%s10 + $0x4] sm:$0xf]
      %v1575 = vld [vmem:[%s10 + $0x8] sm:$0xf]
      %v1576 = vld [vmem:[%s10 + $0xc] sm:$0xf]
      %v1577 = vld [vmem:[%s10 + $0x10] sm:$0xf]
      %v1578 = vld [vmem:[%s10 + $0x14] sm:$0xf]
      %v1579 = vld [vmem:[%s10 + $0x18] sm:$0xf]
      %v1580 = vld [vmem:[%s10 + $0x1c] sm:$0xf]
      %v1581 = vld [vmem:[%s10 + $0x20] sm:$0xf]
      %v1582 = vld [vmem:[%s10 + $0x24] sm:$0xf]
      %v1583 = vld [vmem:[%s10 + $0x28] sm:$0xf]
      %v1584 = vld [vmem:[%s10 + $0x2c] sm:$0xf]
      %v1585 = vld [vmem:[%s10 + $0x30] sm:$0xf]
      %v1586 = vld [vmem:[%s10 + $0x34] sm:$0xf]
      %v1587 = vld [vmem:[%s10 + $0x38] sm:$0xf]
      %v1588 = vld [vmem:[%s10 + $0x3c] sm:$0xf]
      %v1589 = vld [vmem:[%s11] sm:$0x1]
      %v1591 = vperm.slane %v1589, 0
      %v1609 = vunpack.c.l.b16 %v1573
      %v1610 = vunpack.c.l.b16 %v1574
      %v1611 = vunpack.c.l.b16 %v1575
      %v1612 = vunpack.c.l.b16 %v1576
      %v1613 = vunpack.c.l.b16 %v1577
      %v1614 = vunpack.c.l.b16 %v1578
      %v1615 = vunpack.c.l.b16 %v1579
      %v1616 = vunpack.c.l.b16 %v1580
      %v1617 = vunpack.c.l.b16 %v1581
      %v1618 = vunpack.c.l.b16 %v1582
      %v1619 = vunpack.c.l.b16 %v1583
      %v1620 = vunpack.c.l.b16 %v1584
      %v1621 = vunpack.c.l.b16 %v1585
      %v1622 = vunpack.c.l.b16 %v1586
      %v1623 = vunpack.c.l.b16 %v1587
      %v1624 = vunpack.c.l.b16 %v1588
      %v1625 = vpack.c.b16 %v1610, %v1609
      %v1626 = vpack.c.b16 %v1612, %v1611
      %v1627 = vpack.c.b16 %v1614, %v1613
      %v1628 = vpack.c.b16 %v1616, %v1615
      %v1629 = vpack.c.b16 %v1618, %v1617
      %v1630 = vpack.c.b16 %v1620, %v1619
      %v1631 = vpack.c.b16 %v1622, %v1621
      %v1632 = vpack.c.b16 %v1624, %v1623
      %1641 = vmatpush.bf16.msra.mxu0 %v1632
      %1642 = vmatpush.bf16.msra.mxu0 %v1631
      %1643 = vmatpush.bf16.msra.mxu0 %v1630
      %1644 = vmatpush.bf16.msra.mxu0 %v1629
      %1645 = vmatpush.bf16.msra.mxu0 %v1628
      %1646 = vmatpush.bf16.msra.mxu0 %v1627
      %1647 = vmatpush.bf16.msra.mxu0 %v1626
      %1648 = vmatpush.bf16.msra.mxu0 %v1625
      %1649 = vmatmul.bf16.gmra.mxu0 %v1572
      %v1650 = vpop.f32.mrf.mxu0
      %v1651 = vadd.f32 %v1591, %v1650
      %v1652 = vpop.f32.mrf.mxu0
      %1653 = vdwg.mxu0
      %v1654 = vadd.f32 %v1525, %v1651
      %v1655 = vsel %vm1080, %v1654, 0.0
      %1656 = vadd.xlane.f32.xlu0 %v1655
      %v1657 = vpop.xlane.xlu0 %1656
      %v1658 = vmul.f32 %v1657, %v1090
      %v1659 = vsub.f32 %v1654, %v1658
      %v1660 = vmul.f32 %v1659, %v1659
      %v1661 = vsel %vm1080, %v1660, 0.0
      %1662 = vadd.xlane.f32.xlu0 %v1661
      %v1663 = vpop.xlane.xlu0 %1662
      %v1664 = vmul.f32 %v1663, %v1090
      %v1665 = vadd.f32 %v1664, 1e-05
      %v1666 = vrsqrt.pop %v1665
      %v1667 = vmul.f32 %v1666, %v1665
      %v1668 = vmul.f32 %v1667, %v1666
      %v1669 = vmul.f32 0.5, %v1668
      %v1670 = vsub.f32 1.5, %v1669
      %v1671 = vmul.f32 %v1666, %v1670
      %vm1672 = vweird.f32 %v1665
      %vm1673 = vweird.f32 %v1666
      %vm1674 = vmor %vm1672, %vm1673
      %v1675 = vsel %vm1674, %v1666, %v1671
      %v1676 = vmul.f32 %v1659, %v1675
      %v1678 = vperm.slane %v684, 0
      %v1680 = vmul.f32 %v1676, %v1678
      %v1682 = vperm.slane %v689, 0
      %v1684 = vadd.f32 %v1680, %v1682
      %v1686 = vperm.slane %v674, 0
      %v1692 = vunpack.c.l.b16 %v634
      %v1693 = vunpack.c.l.b16 %v635
      %v1694 = vunpack.c.l.b16 %v636
      %v1695 = vunpack.c.l.b16 %v637
      %v1696 = vpack.c.b16 %v1693, %v1692
      %v1697 = vpack.c.b16 %v1695, %v1694
      %1700 = vmatpush.bf16.msra.mxu0 0
      %1701 = vmatpush.bf16.msra.mxu0 0
      %1702 = vmatpush.bf16.msra.mxu0 0
      %1703 = vmatpush.bf16.msra.mxu0 0
      %1704 = vmatpush.bf16.msra.mxu0 0
      %1705 = vmatpush.bf16.msra.mxu0 0
      %1706 = vmatpush.bf16.msra.mxu0 %v1697
      %1707 = vmatpush.bf16.msra.mxu0 %v1696
      %1708 = vmatmul.bf16.gmra.mxu0 %v1169
      %v1709 = vpop.f32.mrf.mxu0
      %v1710 = vadd.f32 %v1686, %v1709
      %v1711 = vpop.f32.mrf.mxu0
      %v1712 = vadd.f32 %v1686, %v1711
      %1713 = vdwg.mxu0
      %v1714 = vpack.c.bf16 %v1684, %v1684
      %v1716 = vperm.slane %v675, 0
      %v1722 = vunpack.c.l.b16 %v638
      %v1723 = vunpack.c.l.b16 %v639
      %v1724 = vunpack.c.l.b16 %v640
      %v1725 = vunpack.c.l.b16 %v641
      %v1726 = vpack.c.b16 %v1723, %v1722
      %v1727 = vpack.c.b16 %v1725, %v1724
      %v1731 = vsel %vm719, %v1714, 0
      %1733 = vmatpush.bf16.msra.mxu0 0
      %1734 = vmatpush.bf16.msra.mxu0 0
      %1735 = vmatpush.bf16.msra.mxu0 0
      %1736 = vmatpush.bf16.msra.mxu0 0
      %1737 = vmatpush.bf16.msra.mxu0 0
      %1738 = vmatpush.bf16.msra.mxu0 0
      %1739 = vmatpush.bf16.msra.mxu0 %v1727
      %1740 = vmatpush.bf16.msra.mxu0 %v1726
      %1741 = vmatmul.bf16.gmra.mxu0 %v1731
      %v1742 = vpop.f32.mrf.mxu0
      %v1743 = vadd.f32 %v1716, %v1742
      %v1744 = vpop.f32.mrf.mxu0
      %1745 = vdwg.mxu0
      %v1747 = vperm.slane %v676, 0
      %v1753 = vunpack.c.l.b16 %v642
      %v1754 = vunpack.c.l.b16 %v643
      %v1755 = vunpack.c.l.b16 %v644
      %v1756 = vunpack.c.l.b16 %v645
      %v1757 = vpack.c.b16 %v1754, %v1753
      %v1758 = vpack.c.b16 %v1756, %v1755
      %1761 = vmatpush.bf16.msra.mxu0 0
      %1762 = vmatpush.bf16.msra.mxu0 0
      %1763 = vmatpush.bf16.msra.mxu0 0
      %1764 = vmatpush.bf16.msra.mxu0 0
      %1765 = vmatpush.bf16.msra.mxu0 0
      %1766 = vmatpush.bf16.msra.mxu0 0
      %1767 = vmatpush.bf16.msra.mxu0 %v1758
      %1768 = vmatpush.bf16.msra.mxu0 %v1757
      %1769 = vmatmul.bf16.gmra.mxu0 %v1731
      %v1770 = vpop.f32.mrf.mxu0
      %v1771 = vadd.f32 %v1747, %v1770
      %v1772 = vpop.f32.mrf.mxu0
      %1773 = vdwg.mxu0
      %v1774 = vmul.f32 %v1710, 0.35355338
      %v1775 = vmul.f32 %v1712, 0.35355338
      %v1776 = vpack.c.bf16 %v1774, %v1774
      %v1777 = vpack.c.bf16 %v1775, %v1775
      %v1778 = vpack.c.bf16 %v1743, %v1743
      %v1779 = vpack.c.bf16 %v1771, %v1771
      %v1782 = vunpack.c.l.b16 %v1776
      %v1783 = vunpack.c.l.b16 %v1777
      %v1784 = vpack.c.b16 %v1783, %v1782
      %v1786 = vsel %vm796, %v1784, 0
      %v1789 = vsel %vm796, %v1778, 0
      %1791 = vmatpush.bf16.xpose.msra.mxu0 0
      %1792 = vmatpush.bf16.xpose.msra.mxu0 0
      %1793 = vmatpush.bf16.xpose.msra.mxu0 0
      %1794 = vmatpush.bf16.xpose.msra.mxu0 0
      %1795 = vmatpush.bf16.xpose.msra.mxu0 0
      %1796 = vmatpush.bf16.xpose.msra.mxu0 0
      %1797 = vmatpush.bf16.xpose.msra.mxu0 0
      %1798 = vmatpush.bf16.xpose.msra.mxu0 %v1789
      %1799 = vmatmul.bf16.gmra.mxu0 %v1786
      %v1800 = vpop.f32.mrf.mxu0
      %v1801 = vadd.f32 0.0, %v1800
      %v1802 = vpop.f32.mrf.mxu0
      %v1803 = vadd.f32 0.0, %v1802
      %1804 = vdwg.mxu0
      %v1805 = vsel %vm829, %v1801, -inf
      %1806 = vmax.xlane.f32.xlu0 %v1805
      %v1807 = vpop.xlane.xlu0 %1806
      %v1808 = vsel %vm829, %v1803, -inf
      %1809 = vmax.xlane.f32.xlu0 %v1808
      %v1810 = vpop.xlane.xlu0 %1809
      %v1811 = vsub.f32 %v1801, %v1807
      %v1812 = vsub.f32 %v1803, %v1810
      %v1813 = vmul.f32 %v1811, 1.442695
      %v1814 = vpow.pop %v1813
      %v1815 = vmul.f32 %v1812, 1.442695
      %v1816 = vpow.pop %v1815
      %v1817 = vsel %vm829, %v1814, 0.0
      %1818 = vadd.xlane.f32.xlu0 %v1817
      %v1819 = vpop.xlane.xlu0 %1818
      %v1820 = vsel %vm829, %v1816, 0.0
      %1821 = vadd.xlane.f32.xlu0 %v1820
      %v1822 = vpop.xlane.xlu0 %1821
      %v1823 = vrcp.pop %v1819
      %v1824 = vrcp.pop %v1822
      %v1825 = vmul.f32 %v1814, %v1823
      %v1826 = vmul.f32 %v1816, %v1824
      %v1827 = vpack.c.bf16 %v1826, %v1825
      %v1829 = vsel %vm829, %v1827, 0
      %v1832 = vand.u32 %v1779, %v836
      %1834 = vmatpush.bf16.msra.mxu0 0
      %1835 = vmatpush.bf16.msra.mxu0 0
      %1836 = vmatpush.bf16.msra.mxu0 0
      %1837 = vmatpush.bf16.msra.mxu0 0
      %1838 = vmatpush.bf16.msra.mxu0 0
      %1839 = vmatpush.bf16.msra.mxu0 0
      %1840 = vmatpush.bf16.msra.mxu0 0
      %1841 = vmatpush.bf16.msra.mxu0 %v1832
      %1842 = vmatmul.bf16.gmra.mxu0 %v1829
      %v1843 = vpop.f32.mrf.mxu0
      %v1844 = vadd.f32 0.0, %v1843
      %v1845 = vpop.f32.mrf.mxu0
      %v1846 = vadd.f32 0.0, %v1845
      %1847 = vdwg.mxu0
      %1848 = vrot.lane.b32.xlu0 %v1784, 120
      %v1849 = vpop.permute.xlu0 %1848
      %v1851 = vunpack.c.l.b16 %v1778
      %v1852 = vpack.c.b16 %v1851, %v1851
      %1853 = vrot.lane.b32.xlu0 %v1852, 120
      %v1854 = vpop.permute.xlu0 %1853
      %v1856 = vsel %vm796, %v1849, 0
      %v1859 = vsel %vm796, %v1854, 0
      %1861 = vmatpush.bf16.xpose.msra.mxu0 0
      %1862 = vmatpush.bf16.xpose.msra.mxu0 0
      %1863 = vmatpush.bf16.xpose.msra.mxu0 0
      %1864 = vmatpush.bf16.xpose.msra.mxu0 0
      %1865 = vmatpush.bf16.xpose.msra.mxu0 0
      %1866 = vmatpush.bf16.xpose.msra.mxu0 0
      %1867 = vmatpush.bf16.xpose.msra.mxu0 0
      %1868 = vmatpush.bf16.xpose.msra.mxu0 %v1859
      %1869 = vmatmul.bf16.gmra.mxu0 %v1856
      %v1870 = vpop.f32.mrf.mxu0
      %v1871 = vadd.f32 0.0, %v1870
      %v1872 = vpop.f32.mrf.mxu0
      %v1873 = vadd.f32 0.0, %v1872
      %1874 = vdwg.mxu0
      %v1875 = vsel %vm829, %v1871, -inf
      %1876 = vmax.xlane.f32.xlu0 %v1875
      %v1877 = vpop.xlane.xlu0 %1876
      %v1878 = vsel %vm829, %v1873, -inf
      %1879 = vmax.xlane.f32.xlu0 %v1878
      %v1880 = vpop.xlane.xlu0 %1879
      %v1881 = vsub.f32 %v1871, %v1877
      %v1882 = vsub.f32 %v1873, %v1880
      %v1883 = vmul.f32 %v1881, 1.442695
      %v1884 = vpow.pop %v1883
      %v1885 = vmul.f32 %v1882, 1.442695
      %v1886 = vpow.pop %v1885
      %v1887 = vsel %vm829, %v1884, 0.0
      %1888 = vadd.xlane.f32.xlu0 %v1887
      %v1889 = vpop.xlane.xlu0 %1888
      %v1890 = vsel %vm829, %v1886, 0.0
      %1891 = vadd.xlane.f32.xlu0 %v1890
      %v1892 = vpop.xlane.xlu0 %1891
      %v1893 = vrcp.pop %v1889
      %v1894 = vrcp.pop %v1892
      %v1895 = vmul.f32 %v1884, %v1893
      %v1896 = vmul.f32 %v1886, %v1894
      %v1897 = vpack.c.bf16 %v1896, %v1895
      %v1899 = vunpack.c.l.b16 %v1779
      %v1900 = vpack.c.b16 %v1899, %v1899
      %1901 = vrot.lane.b32.xlu0 %v1900, 120
      %v1902 = vpop.permute.xlu0 %1901
      %v1904 = vsel %vm829, %v1897, 0
      %v1907 = vand.u32 %v1902, %v836
      %1909 = vmatpush.bf16.msra.mxu0 0
      %1910 = vmatpush.bf16.msra.mxu0 0
      %1911 = vmatpush.bf16.msra.mxu0 0
      %1912 = vmatpush.bf16.msra.mxu0 0
      %1913 = vmatpush.bf16.msra.mxu0 0
      %1914 = vmatpush.bf16.msra.mxu0 0
      %1915 = vmatpush.bf16.msra.mxu0 0
      %1916 = vmatpush.bf16.msra.mxu0 %v1907
      %1917 = vmatmul.bf16.gmra.mxu0 %v1904
      %v1918 = vpop.f32.mrf.mxu0
      %v1919 = vadd.f32 0.0, %v1918
      %v1920 = vpop.f32.mrf.mxu0
      %v1921 = vadd.f32 0.0, %v1920
      %1922 = vdwg.mxu0
      %1923 = vrot.lane.b32.xlu0 %v1784, 112
      %v1924 = vpop.permute.xlu0 %1923
      %1925 = vrot.lane.b32.xlu0 %v1852, 112
      %v1926 = vpop.permute.xlu0 %1925
      %v1928 = vsel %vm796, %v1924, 0
      %v1931 = vsel %vm796, %v1926, 0
      %1933 = vmatpush.bf16.xpose.msra.mxu0 0
      %1934 = vmatpush.bf16.xpose.msra.mxu0 0
      %1935 = vmatpush.bf16.xpose.msra.mxu0 0
      %1936 = vmatpush.bf16.xpose.msra.mxu0 0
      %1937 = vmatpush.bf16.xpose.msra.mxu0 0
      %1938 = vmatpush.bf16.xpose.msra.mxu0 0
      %1939 = vmatpush.bf16.xpose.msra.mxu0 0
      %1940 = vmatpush.bf16.xpose.msra.mxu0 %v1931
      %1941 = vmatmul.bf16.gmra.mxu0 %v1928
      %v1942 = vpop.f32.mrf.mxu0
      %v1943 = vadd.f32 0.0, %v1942
      %v1944 = vpop.f32.mrf.mxu0
      %v1945 = vadd.f32 0.0, %v1944
      %1946 = vdwg.mxu0
      %v1947 = vsel %vm829, %v1943, -inf
      %1948 = vmax.xlane.f32.xlu0 %v1947
      %v1949 = vpop.xlane.xlu0 %1948
      %v1950 = vsel %vm829, %v1945, -inf
      %1951 = vmax.xlane.f32.xlu0 %v1950
      %v1952 = vpop.xlane.xlu0 %1951
      %v1953 = vsub.f32 %v1943, %v1949
      %v1954 = vsub.f32 %v1945, %v1952
      %v1955 = vmul.f32 %v1953, 1.442695
      %v1956 = vpow.pop %v1955
      %v1957 = vmul.f32 %v1954, 1.442695
      %v1958 = vpow.pop %v1957
      %v1959 = vsel %vm829, %v1956, 0.0
      %1960 = vadd.xlane.f32.xlu0 %v1959
      %v1961 = vpop.xlane.xlu0 %1960
      %v1962 = vsel %vm829, %v1958, 0.0
      %1963 = vadd.xlane.f32.xlu0 %v1962
      %v1964 = vpop.xlane.xlu0 %1963
      %v1965 = vrcp.pop %v1961
      %v1966 = vrcp.pop %v1964
      %v1967 = vmul.f32 %v1956, %v1965
      %v1968 = vmul.f32 %v1958, %v1966
      %v1969 = vpack.c.bf16 %v1968, %v1967
      %1970 = vrot.lane.b32.xlu0 %v1900, 112
      %v1971 = vpop.permute.xlu0 %1970
      %v1973 = vsel %vm829, %v1969, 0
      %v1976 = vand.u32 %v1971, %v836
      %1978 = vmatpush.bf16.msra.mxu0 0
      %1979 = vmatpush.bf16.msra.mxu0 0
      %1980 = vmatpush.bf16.msra.mxu0 0
      %1981 = vmatpush.bf16.msra.mxu0 0
      %1982 = vmatpush.bf16.msra.mxu0 0
      %1983 = vmatpush.bf16.msra.mxu0 0
      %1984 = vmatpush.bf16.msra.mxu0 0
      %1985 = vmatpush.bf16.msra.mxu0 %v1976
      %1986 = vmatmul.bf16.gmra.mxu0 %v1973
      %v1987 = vpop.f32.mrf.mxu0
      %v1988 = vadd.f32 0.0, %v1987
      %v1989 = vpop.f32.mrf.mxu0
      %v1990 = vadd.f32 0.0, %v1989
      %1991 = vdwg.mxu0
      %1992 = vrot.lane.b32.xlu0 %v1784, 104
      %v1993 = vpop.permute.xlu0 %1992
      %1994 = vrot.lane.b32.xlu0 %v1852, 104
      %v1995 = vpop.permute.xlu0 %1994
      %v1997 = vsel %vm796, %v1993, 0
      %v2000 = vsel %vm796, %v1995, 0
      %2002 = vmatpush.bf16.xpose.msra.mxu0 0
      %2003 = vmatpush.bf16.xpose.msra.mxu0 0
      %2004 = vmatpush.bf16.xpose.msra.mxu0 0
      %2005 = vmatpush.bf16.xpose.msra.mxu0 0
      %2006 = vmatpush.bf16.xpose.msra.mxu0 0
      %2007 = vmatpush.bf16.xpose.msra.mxu0 0
      %2008 = vmatpush.bf16.xpose.msra.mxu0 0
      %2009 = vmatpush.bf16.xpose.msra.mxu0 %v2000
      %2010 = vmatmul.bf16.gmra.mxu0 %v1997
      %v2011 = vpop.f32.mrf.mxu0
      %v2012 = vadd.f32 0.0, %v2011
      %v2013 = vpop.f32.mrf.mxu0
      %v2014 = vadd.f32 0.0, %v2013
      %2015 = vdwg.mxu0
      %v2016 = vsel %vm829, %v2012, -inf
      %2017 = vmax.xlane.f32.xlu0 %v2016
      %v2018 = vpop.xlane.xlu0 %2017
      %v2019 = vsel %vm829, %v2014, -inf
      %2020 = vmax.xlane.f32.xlu0 %v2019
      %v2021 = vpop.xlane.xlu0 %2020
      %v2022 = vsub.f32 %v2012, %v2018
      %v2023 = vsub.f32 %v2014, %v2021
      %v2024 = vmul.f32 %v2022, 1.442695
      %v2025 = vpow.pop %v2024
      %v2026 = vmul.f32 %v2023, 1.442695
      %v2027 = vpow.pop %v2026
      %v2028 = vsel %vm829, %v2025, 0.0
      %2029 = vadd.xlane.f32.xlu0 %v2028
      %v2030 = vpop.xlane.xlu0 %2029
      %v2031 = vsel %vm829, %v2027, 0.0
      %2032 = vadd.xlane.f32.xlu0 %v2031
      %v2033 = vpop.xlane.xlu0 %2032
      %v2034 = vrcp.pop %v2030
      %v2035 = vrcp.pop %v2033
      %v2036 = vmul.f32 %v2025, %v2034
      %v2037 = vmul.f32 %v2027, %v2035
      %v2038 = vpack.c.bf16 %v2037, %v2036
      %2039 = vrot.lane.b32.xlu0 %v1900, 104
      %v2040 = vpop.permute.xlu0 %2039
      %v2042 = vsel %vm829, %v2038, 0
      %v2045 = vand.u32 %v2040, %v836
      %2047 = vmatpush.bf16.msra.mxu0 0
      %2048 = vmatpush.bf16.msra.mxu0 0
      %2049 = vmatpush.bf16.msra.mxu0 0
      %2050 = vmatpush.bf16.msra.mxu0 0
      %2051 = vmatpush.bf16.msra.mxu0 0
      %2052 = vmatpush.bf16.msra.mxu0 0
      %2053 = vmatpush.bf16.msra.mxu0 0
      %2054 = vmatpush.bf16.msra.mxu0 %v2045
      %2055 = vmatmul.bf16.gmra.mxu0 %v2042
      %v2056 = vpop.f32.mrf.mxu0
      %v2057 = vadd.f32 0.0, %v2056
      %v2058 = vpop.f32.mrf.mxu0
      %v2059 = vadd.f32 0.0, %v2058
      %2060 = vdwg.mxu0
      %2063 = vrot.lane.b32.xlu0 %v1919, 8
      %v2064 = vpop.permute.xlu0 %2063
      %2065 = vrot.lane.b32.xlu0 %v1921, 8
      %v2066 = vpop.permute.xlu0 %2065
      %2071 = vrot.lane.b32.xlu0 %v1988, 16
      %v2072 = vpop.permute.xlu0 %2071
      %2073 = vrot.lane.b32.xlu0 %v1990, 16
      %v2074 = vpop.permute.xlu0 %2073
      %2079 = vrot.lane.b32.xlu0 %v2057, 24
      %v2080 = vpop.permute.xlu0 %2079
      %2081 = vrot.lane.b32.xlu0 %v2059, 24
      %v2082 = vpop.permute.xlu0 %2081
      %v2085 = vsel %vm796, %v1844, %v2064
      %v2086 = vsel %vm796, %v1846, %v2066
      %v2087 = vsel %vm1043, %v2085, %v2072
      %v2088 = vsel %vm1043, %v2086, %v2074
      %v2089 = vsel %vm1045, %v2087, %v2080
      %v2090 = vsel %vm1045, %v2088, %v2082
      %v2091 = vpack.c.bf16 %v2090, %v2089
      %v2093 = vperm.slane %v677, 0
      %v2099 = vunpack.c.l.b16 %v646
      %v2100 = vunpack.c.l.b16 %v647
      %v2101 = vunpack.c.l.b16 %v648
      %v2102 = vunpack.c.l.b16 %v649
      %v2103 = vpack.c.b16 %v2100, %v2099
      %v2104 = vpack.c.b16 %v2102, %v2101
      %v2108 = vsel %vm719, %v2091, 0
      %2110 = vmatpush.bf16.msra.mxu0 0
      %2111 = vmatpush.bf16.msra.mxu0 0
      %2112 = vmatpush.bf16.msra.mxu0 0
      %2113 = vmatpush.bf16.msra.mxu0 0
      %2114 = vmatpush.bf16.msra.mxu0 0
      %2115 = vmatpush.bf16.msra.mxu0 0
      %2116 = vmatpush.bf16.msra.mxu0 %v2104
      %2117 = vmatpush.bf16.msra.mxu0 %v2103
      %2118 = vmatmul.bf16.gmra.mxu0 %v2108
      %v2119 = vpop.f32.mrf.mxu0
      %v2120 = vadd.f32 %v2093, %v2119
      %v2121 = vpop.f32.mrf.mxu0
      %v2122 = vadd.f32 %v2093, %v2121
      %2123 = vdwg.mxu0
      %v2124 = vadd.f32 %v698, %v2120
      %v2125 = vadd.f32 %v699, %v2122
      %v2126 = vsel %vm719, %v2124, 0.0
      %2127 = vadd.xlane.f32.xlu0 %v2126
      %v2128 = vpop.xlane.xlu0 %2127
      %v2129 = vsel %vm719, %v2125, 0.0
      %2130 = vadd.xlane.f32.xlu0 %v2129
      %v2131 = vpop.xlane.xlu0 %2130
      %v2132 = vmul.f32 %v2128, %v1090
      %v2133 = vmul.f32 %v2131, %v1090
      %v2134 = vsub.f32 %v2124, %v2132
      %v2135 = vsub.f32 %v2125, %v2133
      %v2136 = vmul.f32 %v2134, %v2134
      %v2137 = vmul.f32 %v2135, %v2135
      %v2138 = vsel %vm719, %v2136, 0.0
      %2139 = vadd.xlane.f32.xlu0 %v2138
      %v2140 = vpop.xlane.xlu0 %2139
      %v2141 = vsel %vm719, %v2137, 0.0
      %2142 = vadd.xlane.f32.xlu0 %v2141
      %v2143 = vpop.xlane.xlu0 %2142
      %v2144 = vmul.f32 %v2140, %v1090
      %v2145 = vmul.f32 %v2143, %v1090
      %v2146 = vadd.f32 %v2144, 1e-05
      %v2147 = vadd.f32 %v2145, 1e-05
      %v2148 = vrsqrt.pop %v2146
      %v2149 = vmul.f32 %v2148, %v2146
      %v2150 = vmul.f32 %v2149, %v2148
      %v2151 = vmul.f32 0.5, %v2150
      %v2152 = vsub.f32 1.5, %v2151
      %v2153 = vmul.f32 %v2148, %v2152
      %vm2154 = vweird.f32 %v2146
      %vm2155 = vweird.f32 %v2148
      %vm2156 = vmor %vm2154, %vm2155
      %v2157 = vsel %vm2156, %v2148, %v2153
      %v2158 = vrsqrt.pop %v2147
      %v2159 = vmul.f32 %v2158, %v2147
      %v2160 = vmul.f32 %v2159, %v2158
      %v2161 = vmul.f32 0.5, %v2160
      %v2162 = vsub.f32 1.5, %v2161
      %v2163 = vmul.f32 %v2158, %v2162
      %vm2164 = vweird.f32 %v2147
      %vm2165 = vweird.f32 %v2158
      %vm2166 = vmor %vm2164, %vm2165
      %v2167 = vsel %vm2166, %v2158, %v2163
      %v2168 = vmul.f32 %v2134, %v2157
      %v2169 = vmul.f32 %v2135, %v2167
      %v2171 = vperm.slane %v685, 0
      %v2173 = vmul.f32 %v2168, %v2171
      %v2174 = vmul.f32 %v2169, %v2171
      %v2176 = vperm.slane %v690, 0
      %v2178 = vadd.f32 %v2173, %v2176
      %v2179 = vadd.f32 %v2174, %v2176
      %v2180 = vadd.f32 %v2178, %v700
      %v2181 = vadd.f32 %v2179, %v701
      %v2183 = vperm.slane %v678, 0
      %v2189 = vunpack.c.l.b16 %v650
      %v2190 = vunpack.c.l.b16 %v651
      %v2191 = vunpack.c.l.b16 %v652
      %v2192 = vunpack.c.l.b16 %v653
      %v2193 = vpack.c.b16 %v2190, %v2189
      %v2194 = vpack.c.b16 %v2192, %v2191
      %2197 = vmatpush.bf16.msra.mxu0 0
      %2198 = vmatpush.bf16.msra.mxu0 0
      %2199 = vmatpush.bf16.msra.mxu0 0
      %2200 = vmatpush.bf16.msra.mxu0 0
      %2201 = vmatpush.bf16.msra.mxu0 0
      %2202 = vmatpush.bf16.msra.mxu0 0
      %2203 = vmatpush.bf16.msra.mxu0 %v2194
      %2204 = vmatpush.bf16.msra.mxu0 %v2193
      %2205 = vmatmul.bf16.gmra.mxu0 %v1731
      %v2206 = vpop.f32.mrf.mxu0
      %v2207 = vadd.f32 %v2183, %v2206
      %v2208 = vpop.f32.mrf.mxu0
      %2209 = vdwg.mxu0
      %v2210 = vpack.c.bf16 %v2181, %v2180
      %v2212 = vperm.slane %v679, 0
      %v2218 = vunpack.c.l.b16 %v654
      %v2219 = vunpack.c.l.b16 %v655
      %v2220 = vunpack.c.l.b16 %v656
      %v2221 = vunpack.c.l.b16 %v657
      %v2222 = vpack.c.b16 %v2219, %v2218
      %v2223 = vpack.c.b16 %v2221, %v2220
      %v2227 = vsel %vm719, %v2210, 0
      %2229 = vmatpush.bf16.msra.mxu0 0
      %2230 = vmatpush.bf16.msra.mxu0 0
      %2231 = vmatpush.bf16.msra.mxu0 0
      %2232 = vmatpush.bf16.msra.mxu0 0
      %2233 = vmatpush.bf16.msra.mxu0 0
      %2234 = vmatpush.bf16.msra.mxu0 0
      %2235 = vmatpush.bf16.msra.mxu0 %v2223
      %2236 = vmatpush.bf16.msra.mxu0 %v2222
      %2237 = vmatmul.bf16.gmra.mxu0 %v2227
      %v2238 = vpop.f32.mrf.mxu0
      %v2239 = vadd.f32 %v2212, %v2238
      %v2240 = vpop.f32.mrf.mxu0
      %v2241 = vadd.f32 %v2212, %v2240
      %2242 = vdwg.mxu0
      %v2243 = vpack.c.bf16 %v2179, %v2178
      %v2245 = vperm.slane %v680, 0
      %v2251 = vunpack.c.l.b16 %v658
      %v2252 = vunpack.c.l.b16 %v659
      %v2253 = vunpack.c.l.b16 %v660
      %v2254 = vunpack.c.l.b16 %v661
      %v2255 = vpack.c.b16 %v2252, %v2251
      %v2256 = vpack.c.b16 %v2254, %v2253
      %v2260 = vsel %vm719, %v2243, 0
      %2262 = vmatpush.bf16.msra.mxu0 0
      %2263 = vmatpush.bf16.msra.mxu0 0
      %2264 = vmatpush.bf16.msra.mxu0 0
      %2265 = vmatpush.bf16.msra.mxu0 0
      %2266 = vmatpush.bf16.msra.mxu0 0
      %2267 = vmatpush.bf16.msra.mxu0 0
      %2268 = vmatpush.bf16.msra.mxu0 %v2256
      %2269 = vmatpush.bf16.msra.mxu0 %v2255
      %2270 = vmatmul.bf16.gmra.mxu0 %v2260
      %v2271 = vpop.f32.mrf.mxu0
      %v2272 = vadd.f32 %v2245, %v2271
      %v2273 = vpop.f32.mrf.mxu0
      %v2274 = vadd.f32 %v2245, %v2273
      %2275 = vdwg.mxu0
      %v2276 = vmul.f32 %v2207, 0.35355338
      %v2277 = vpack.c.bf16 %v2276, %v2276
      %v2278 = vpack.c.bf16 %v2239, %v2239
      %v2279 = vpack.c.bf16 %v2241, %v2241
      %v2280 = vpack.c.bf16 %v2272, %v2272
      %v2281 = vpack.c.bf16 %v2274, %v2274
      %v2284 = vunpack.c.l.b16 %v2278
      %v2285 = vunpack.c.l.b16 %v2279
      %v2286 = vpack.c.b16 %v2285, %v2284
      %v2288 = vsel %vm796, %v2277, 0
      %v2291 = vsel %vm796, %v2286, 0
      %2293 = vmatpush.bf16.xpose.msra.mxu0 0
      %2294 = vmatpush.bf16.xpose.msra.mxu0 0
      %2295 = vmatpush.bf16.xpose.msra.mxu0 0
      %2296 = vmatpush.bf16.xpose.msra.mxu0 0
      %2297 = vmatpush.bf16.xpose.msra.mxu0 0
      %2298 = vmatpush.bf16.xpose.msra.mxu0 0
      %2299 = vmatpush.bf16.xpose.msra.mxu0 0
      %2300 = vmatpush.bf16.xpose.msra.mxu0 %v2291
      %2301 = vmatmul.bf16.gmra.mxu0 %v2288
      %v2302 = vpop.f32.mrf.mxu0
      %v2303 = vadd.f32 0.0, %v2302
      %v2304 = vpop.f32.mrf.mxu0
      %2305 = vdwg.mxu0
      %v2306 = vsel %vm1248, %v2303, -inf
      %2307 = vmax.xlane.f32.xlu0 %v2306
      %v2308 = vpop.xlane.xlu0 %2307
      %v2309 = vsub.f32 %v2303, %v2308
      %v2310 = vmul.f32 %v2309, 1.442695
      %v2311 = vpow.pop %v2310
      %v2312 = vsel %vm1248, %v2311, 0.0
      %2313 = vadd.xlane.f32.xlu0 %v2312
      %v2314 = vpop.xlane.xlu0 %2313
      %v2315 = vrcp.pop %v2314
      %v2316 = vmul.f32 %v2311, %v2315
      %v2317 = vpack.c.bf16 %v2316, %v2316
      %v2320 = vunpack.c.l.b16 %v2280
      %v2321 = vunpack.c.l.b16 %v2281
      %v2322 = vpack.c.b16 %v2321, %v2320
      %v2325 = vsel %vm1043, %v2317, 0
      %2327 = vmatpush.bf16.msra.mxu0 0
      %2328 = vmatpush.bf16.msra.mxu0 0
      %2329 = vmatpush.bf16.msra.mxu0 0
      %2330 = vmatpush.bf16.msra.mxu0 0
      %2331 = vmatpush.bf16.msra.mxu0 0
      %2332 = vmatpush.bf16.msra.mxu0 0
      %2333 = vmatpush.bf16.msra.mxu0 0
      %2334 = vmatpush.bf16.msra.mxu0 %v2322
      %2335 = vmatmul.bf16.gmra.mxu0 %v2325
      %v2336 = vpop.f32.mrf.mxu0
      %v2337 = vadd.f32 0.0, %v2336
      %v2338 = vpop.f32.mrf.mxu0
      %2339 = vdwg.mxu0
      %v2341 = vunpack.c.l.b16 %v2277
      %v2342 = vpack.c.b16 %v2341, %v2341
      %2343 = vrot.lane.b32.xlu0 %v2342, 120
      %v2344 = vpop.permute.xlu0 %2343
      %2345 = vrot.lane.b32.xlu0 %v2286, 120
      %v2346 = vpop.permute.xlu0 %2345
      %v2348 = vsel %vm796, %v2344, 0
      %v2351 = vsel %vm796, %v2346, 0
      %2353 = vmatpush.bf16.xpose.msra.mxu0 0
      %2354 = vmatpush.bf16.xpose.msra.mxu0 0
      %2355 = vmatpush.bf16.xpose.msra.mxu0 0
      %2356 = vmatpush.bf16.xpose.msra.mxu0 0
      %2357 = vmatpush.bf16.xpose.msra.mxu0 0
      %2358 = vmatpush.bf16.xpose.msra.mxu0 0
      %2359 = vmatpush.bf16.xpose.msra.mxu0 0
      %2360 = vmatpush.bf16.xpose.msra.mxu0 %v2351
      %2361 = vmatmul.bf16.gmra.mxu0 %v2348
      %v2362 = vpop.f32.mrf.mxu0
      %v2363 = vadd.f32 0.0, %v2362
      %v2364 = vpop.f32.mrf.mxu0
      %2365 = vdwg.mxu0
      %v2366 = vsel %vm1248, %v2363, -inf
      %2367 = vmax.xlane.f32.xlu0 %v2366
      %v2368 = vpop.xlane.xlu0 %2367
      %v2369 = vsub.f32 %v2363, %v2368
      %v2370 = vmul.f32 %v2369, 1.442695
      %v2371 = vpow.pop %v2370
      %v2372 = vsel %vm1248, %v2371, 0.0
      %2373 = vadd.xlane.f32.xlu0 %v2372
      %v2374 = vpop.xlane.xlu0 %2373
      %v2375 = vrcp.pop %v2374
      %v2376 = vmul.f32 %v2371, %v2375
      %v2377 = vpack.c.bf16 %v2376, %v2376
      %2378 = vrot.lane.b32.xlu0 %v2322, 120
      %v2379 = vpop.permute.xlu0 %2378
      %v2382 = vsel %vm1043, %v2377, 0
      %2384 = vmatpush.bf16.msra.mxu0 0
      %2385 = vmatpush.bf16.msra.mxu0 0
      %2386 = vmatpush.bf16.msra.mxu0 0
      %2387 = vmatpush.bf16.msra.mxu0 0
      %2388 = vmatpush.bf16.msra.mxu0 0
      %2389 = vmatpush.bf16.msra.mxu0 0
      %2390 = vmatpush.bf16.msra.mxu0 0
      %2391 = vmatpush.bf16.msra.mxu0 %v2379
      %2392 = vmatmul.bf16.gmra.mxu0 %v2382
      %v2393 = vpop.f32.mrf.mxu0
      %v2394 = vadd.f32 0.0, %v2393
      %v2395 = vpop.f32.mrf.mxu0
      %2396 = vdwg.mxu0
      %2397 = vrot.lane.b32.xlu0 %v2342, 112
      %v2398 = vpop.permute.xlu0 %2397
      %2399 = vrot.lane.b32.xlu0 %v2286, 112
      %v2400 = vpop.permute.xlu0 %2399
      %v2402 = vsel %vm796, %v2398, 0
      %v2405 = vsel %vm796, %v2400, 0
      %2407 = vmatpush.bf16.xpose.msra.mxu0 0
      %2408 = vmatpush.bf16.xpose.msra.mxu0 0
      %2409 = vmatpush.bf16.xpose.msra.mxu0 0
      %2410 = vmatpush.bf16.xpose.msra.mxu0 0
      %2411 = vmatpush.bf16.xpose.msra.mxu0 0
      %2412 = vmatpush.bf16.xpose.msra.mxu0 0
      %2413 = vmatpush.bf16.xpose.msra.mxu0 0
      %2414 = vmatpush.bf16.xpose.msra.mxu0 %v2405
      %2415 = vmatmul.bf16.gmra.mxu0 %v2402
      %v2416 = vpop.f32.mrf.mxu0
      %v2417 = vadd.f32 0.0, %v2416
      %v2418 = vpop.f32.mrf.mxu0
      %2419 = vdwg.mxu0
      %v2420 = vsel %vm1248, %v2417, -inf
      %2421 = vmax.xlane.f32.xlu0 %v2420
      %v2422 = vpop.xlane.xlu0 %2421
      %v2423 = vsub.f32 %v2417, %v2422
      %v2424 = vmul.f32 %v2423, 1.442695
      %v2425 = vpow.pop %v2424
      %v2426 = vsel %vm1248, %v2425, 0.0
      %2427 = vadd.xlane.f32.xlu0 %v2426
      %v2428 = vpop.xlane.xlu0 %2427
      %v2429 = vrcp.pop %v2428
      %v2430 = vmul.f32 %v2425, %v2429
      %v2431 = vpack.c.bf16 %v2430, %v2430
      %2432 = vrot.lane.b32.xlu0 %v2322, 112
      %v2433 = vpop.permute.xlu0 %2432
      %v2436 = vsel %vm1043, %v2431, 0
      %2438 = vmatpush.bf16.msra.mxu0 0
      %2439 = vmatpush.bf16.msra.mxu0 0
      %2440 = vmatpush.bf16.msra.mxu0 0
      %2441 = vmatpush.bf16.msra.mxu0 0
      %2442 = vmatpush.bf16.msra.mxu0 0
      %2443 = vmatpush.bf16.msra.mxu0 0
      %2444 = vmatpush.bf16.msra.mxu0 0
      %2445 = vmatpush.bf16.msra.mxu0 %v2433
      %2446 = vmatmul.bf16.gmra.mxu0 %v2436
      %v2447 = vpop.f32.mrf.mxu0
      %v2448 = vadd.f32 0.0, %v2447
      %v2449 = vpop.f32.mrf.mxu0
      %2450 = vdwg.mxu0
      %2451 = vrot.lane.b32.xlu0 %v2342, 104
      %v2452 = vpop.permute.xlu0 %2451
      %2453 = vrot.lane.b32.xlu0 %v2286, 104
      %v2454 = vpop.permute.xlu0 %2453
      %v2456 = vsel %vm796, %v2452, 0
      %v2459 = vsel %vm796, %v2454, 0
      %2461 = vmatpush.bf16.xpose.msra.mxu0 0
      %2462 = vmatpush.bf16.xpose.msra.mxu0 0
      %2463 = vmatpush.bf16.xpose.msra.mxu0 0
      %2464 = vmatpush.bf16.xpose.msra.mxu0 0
      %2465 = vmatpush.bf16.xpose.msra.mxu0 0
      %2466 = vmatpush.bf16.xpose.msra.mxu0 0
      %2467 = vmatpush.bf16.xpose.msra.mxu0 0
      %2468 = vmatpush.bf16.xpose.msra.mxu0 %v2459
      %2469 = vmatmul.bf16.gmra.mxu0 %v2456
      %v2470 = vpop.f32.mrf.mxu0
      %v2471 = vadd.f32 0.0, %v2470
      %v2472 = vpop.f32.mrf.mxu0
      %2473 = vdwg.mxu0
      %v2474 = vsel %vm1248, %v2471, -inf
      %2475 = vmax.xlane.f32.xlu0 %v2474
      %v2476 = vpop.xlane.xlu0 %2475
      %v2477 = vsub.f32 %v2471, %v2476
      %v2478 = vmul.f32 %v2477, 1.442695
      %v2479 = vpow.pop %v2478
      %v2480 = vsel %vm1248, %v2479, 0.0
      %2481 = vadd.xlane.f32.xlu0 %v2480
      %v2482 = vpop.xlane.xlu0 %2481
      %v2483 = vrcp.pop %v2482
      %v2484 = vmul.f32 %v2479, %v2483
      %v2485 = vpack.c.bf16 %v2484, %v2484
      %2486 = vrot.lane.b32.xlu0 %v2322, 104
      %v2487 = vpop.permute.xlu0 %2486
      %v2490 = vsel %vm1043, %v2485, 0
      %2492 = vmatpush.bf16.msra.mxu0 0
      %2493 = vmatpush.bf16.msra.mxu0 0
      %2494 = vmatpush.bf16.msra.mxu0 0
      %2495 = vmatpush.bf16.msra.mxu0 0
      %2496 = vmatpush.bf16.msra.mxu0 0
      %2497 = vmatpush.bf16.msra.mxu0 0
      %2498 = vmatpush.bf16.msra.mxu0 0
      %2499 = vmatpush.bf16.msra.mxu0 %v2487
      %2500 = vmatmul.bf16.gmra.mxu0 %v2490
      %v2501 = vpop.f32.mrf.mxu0
      %v2502 = vadd.f32 0.0, %v2501
      %v2503 = vpop.f32.mrf.mxu0
      %2504 = vdwg.mxu0
      %2506 = vrot.lane.b32.xlu0 %v2394, 8
      %v2507 = vpop.permute.xlu0 %2506
      %2510 = vrot.lane.b32.xlu0 %v2448, 16
      %v2511 = vpop.permute.xlu0 %2510
      %2514 = vrot.lane.b32.xlu0 %v2502, 24
      %v2515 = vpop.permute.xlu0 %2514
      %v2517 = vsel %vm796, %v2337, %v2507
      %v2518 = vsel %vm1043, %v2517, %v2511
      %v2519 = vsel %vm1045, %v2518, %v2515
      %v2520 = vpack.c.bf16 %v2519, %v2519
      %v2522 = vperm.slane %v681, 0
      %v2528 = vunpack.c.l.b16 %v662
      %v2529 = vunpack.c.l.b16 %v663
      %v2530 = vunpack.c.l.b16 %v664
      %v2531 = vunpack.c.l.b16 %v665
      %v2532 = vpack.c.b16 %v2529, %v2528
      %v2533 = vpack.c.b16 %v2531, %v2530
      %v2537 = vsel %vm719, %v2520, 0
      %2539 = vmatpush.bf16.msra.mxu0 0
      %2540 = vmatpush.bf16.msra.mxu0 0
      %2541 = vmatpush.bf16.msra.mxu0 0
      %2542 = vmatpush.bf16.msra.mxu0 0
      %2543 = vmatpush.bf16.msra.mxu0 0
      %2544 = vmatpush.bf16.msra.mxu0 0
      %2545 = vmatpush.bf16.msra.mxu0 %v2533
      %2546 = vmatpush.bf16.msra.mxu0 %v2532
      %2547 = vmatmul.bf16.gmra.mxu0 %v2537
      %v2548 = vpop.f32.mrf.mxu0
      %v2549 = vadd.f32 %v2522, %v2548
      %v2550 = vpop.f32.mrf.mxu0
      %2551 = vdwg.mxu0
      %v2552 = vadd.f32 %v1684, %v2549
      %v2553 = vsel %vm1080, %v2552, 0.0
      %2554 = vadd.xlane.f32.xlu0 %v2553
      %v2555 = vpop.xlane.xlu0 %2554
      %v2556 = vmul.f32 %v2555, %v1090
      %v2557 = vsub.f32 %v2552, %v2556
      %v2558 = vmul.f32 %v2557, %v2557
      %v2559 = vsel %vm1080, %v2558, 0.0
      %2560 = vadd.xlane.f32.xlu0 %v2559
      %v2561 = vpop.xlane.xlu0 %2560
      %v2562 = vmul.f32 %v2561, %v1090
      %v2563 = vadd.f32 %v2562, 1e-05
      %v2564 = vrsqrt.pop %v2563
      %v2565 = vmul.f32 %v2564, %v2563
      %v2566 = vmul.f32 %v2565, %v2564
      %v2567 = vmul.f32 0.5, %v2566
      %v2568 = vsub.f32 1.5, %v2567
      %v2569 = vmul.f32 %v2564, %v2568
      %vm2570 = vweird.f32 %v2563
      %vm2571 = vweird.f32 %v2564
      %vm2572 = vmor %vm2570, %vm2571
      %v2573 = vsel %vm2572, %v2564, %v2569
      %v2574 = vmul.f32 %v2557, %v2573
      %v2576 = vperm.slane %v686, 0
      %v2578 = vmul.f32 %v2574, %v2576
      %v2580 = vperm.slane %v691, 0
      %v2582 = vadd.f32 %v2578, %v2580
      %v2583 = vld [vmem:[%s12] sm:$0xf]
      %v2584 = vld [vmem:[%s12 + $0x4] sm:$0xf]
      %v2585 = vld [vmem:[%s12 + $0x8] sm:$0xf]
      %v2586 = vld [vmem:[%s12 + $0xc] sm:$0xf]
      %v2587 = vld [vmem:[%s13] sm:$0x1]
      %v2589 = vperm.slane %v2587, 0
      %v2595 = vunpack.c.l.b16 %v2583
      %v2596 = vunpack.c.l.b16 %v2584
      %v2597 = vunpack.c.l.b16 %v2585
      %v2598 = vunpack.c.l.b16 %v2586
      %v2599 = vpack.c.b16 %v2596, %v2595
      %v2600 = vpack.c.b16 %v2598, %v2597
      %2603 = vmatpush.bf16.msra.mxu0 0
      %2604 = vmatpush.bf16.msra.mxu0 0
      %2605 = vmatpush.bf16.msra.mxu0 0
      %2606 = vmatpush.bf16.msra.mxu0 0
      %2607 = vmatpush.bf16.msra.mxu0 0
      %2608 = vmatpush.bf16.msra.mxu0 0
      %2609 = vmatpush.bf16.msra.mxu0 %v2600
      %2610 = vmatpush.bf16.msra.mxu0 %v2599
      %2611 = vmatmul.bf16.gmra.mxu0 %v2260
      %v2612 = vpop.f32.mrf.mxu0
      %v2613 = vadd.f32 %v2589, %v2612
      %v2614 = vpop.f32.mrf.mxu0
      %v2615 = vadd.f32 %v2589, %v2614
      %2616 = vdwg.mxu0
      %v2617 = vmul.f32 %v2613, %v2613
      %v2618 = vmul.f32 %v2615, %v2615
      %v2619 = vmul.f32 %v2613, %v2617
      %v2620 = vmul.f32 %v2615, %v2618
      %v2621 = vmul.f32 %v2619, 0.044715
      %v2622 = vmul.f32 %v2620, 0.044715
      %v2623 = vadd.f32 %v2613, %v2621
      %v2624 = vadd.f32 %v2615, %v2622
      %v2625 = vmul.f32 %v2623, 0.7978846
      %v2626 = vmul.f32 %v2624, 0.7978846
      %v2627 = vtanh.pop %v2625
      %v2628 = vtanh.pop %v2626
      %v2629 = vadd.f32 %v2627, 1.0
      %v2630 = vadd.f32 %v2628, 1.0
      %v2631 = vmul.f32 %v2629, 0.5
      %v2632 = vmul.f32 %v2630, 0.5
      %v2633 = vmul.f32 %v2613, %v2631
      %v2634 = vmul.f32 %v2615, %v2632
      %v2635 = vpack.c.bf16 %v2582, %v2582
      %v2636 = vld [vmem:[%s14] sm:$0xf]
      %v2637 = vld [vmem:[%s14 + $0x4] sm:$0xf]
      %v2638 = vld [vmem:[%s14 + $0x8] sm:$0xf]
      %v2639 = vld [vmem:[%s14 + $0xc] sm:$0xf]
      %v2640 = vld [vmem:[%s15] sm:$0x1]
      %v2642 = vperm.slane %v2640, 0
      %v2648 = vunpack.c.l.b16 %v2636
      %v2649 = vunpack.c.l.b16 %v2637
      %v2650 = vunpack.c.l.b16 %v2638
      %v2651 = vunpack.c.l.b16 %v2639
      %v2652 = vpack.c.b16 %v2649, %v2648
      %v2653 = vpack.c.b16 %v2651, %v2650
      %v2657 = vsel %vm719, %v2635, 0
      %2659 = vmatpush.bf16.msra.mxu0 0
      %2660 = vmatpush.bf16.msra.mxu0 0
      %2661 = vmatpush.bf16.msra.mxu0 0
      %2662 = vmatpush.bf16.msra.mxu0 0
      %2663 = vmatpush.bf16.msra.mxu0 0
      %2664 = vmatpush.bf16.msra.mxu0 0
      %2665 = vmatpush.bf16.msra.mxu0 %v2653
      %2666 = vmatpush.bf16.msra.mxu0 %v2652
      %2667 = vmatmul.bf16.gmra.mxu0 %v2657
      %v2668 = vpop.f32.mrf.mxu0
      %v2669 = vadd.f32 %v2642, %v2668
      %v2670 = vpop.f32.mrf.mxu0
      %2671 = vdwg.mxu0
      %v2672 = vmul.f32 %v2669, %v2669
      %v2673 = vmul.f32 %v2669, %v2672
      %v2674 = vmul.f32 %v2673, 0.044715
      %v2675 = vadd.f32 %v2669, %v2674
      %v2676 = vmul.f32 %v2675, 0.7978846
      %v2677 = vtanh.pop %v2676
      %v2678 = vadd.f32 %v2677, 1.0
      %v2679 = vmul.f32 %v2678, 0.5
      %v2680 = vmul.f32 %v2669, %v2679
      %v2681 = vpack.c.bf16 %v2680, %v2680
      %v2682 = vld [vmem:[%s16] sm:$0xf]
      %v2683 = vld [vmem:[%s16 + $0x4] sm:$0xf]
      %v2684 = vld [vmem:[%s16 + $0x8] sm:$0xf]
      %v2685 = vld [vmem:[%s16 + $0xc] sm:$0xf]
      %v2686 = vld [vmem:[%s17] sm:$0x1]
      %v2688 = vperm.slane %v2686, 0
      %v2694 = vunpack.c.l.b16 %v2682
      %v2695 = vunpack.c.l.b16 %v2683
      %v2696 = vunpack.c.l.b16 %v2684
      %v2697 = vunpack.c.l.b16 %v2685
      %v2698 = vpack.c.b16 %v2695, %v2694
      %v2699 = vpack.c.b16 %v2697, %v2696
      %v2703 = vsel %vm719, %v2681, 0
      %2705 = vmatpush.bf16.msra.mxu0 0
      %2706 = vmatpush.bf16.msra.mxu0 0
      %2707 = vmatpush.bf16.msra.mxu0 0
      %2708 = vmatpush.bf16.msra.mxu0 0
      %2709 = vmatpush.bf16.msra.mxu0 0
      %2710 = vmatpush.bf16.msra.mxu0 0
      %2711 = vmatpush.bf16.msra.mxu0 %v2699
      %2712 = vmatpush.bf16.msra.mxu0 %v2698
      %2713 = vmatmul.bf16.gmra.mxu0 %v2703
      %v2714 = vpop.f32.mrf.mxu0
      %v2715 = vadd.f32 %v2688, %v2714
      %v2716 = vpop.f32.mrf.mxu0
      %2717 = vdwg.mxu0
      %v2719 = vrot.slane %v2715, 1
      %v2720 = vsel %vm796, %v2719, 0
      %v2723 = vsel %vm796, %v2633, 0
      %v2726 = vsel %vm796, %v2634, 0
      %2728 = vmatpush.xpose.msra.mxu0 0.0
      %2729 = vmatpush.xpose.msra.mxu0 0.0
      %2730 = vmatpush.xpose.msra.mxu0 0.0
      %2731 = vmatpush.xpose.msra.mxu0 0.0
      %2732 = vmatpush.xpose.msra.mxu0 0.0
      %2733 = vmatpush.xpose.msra.mxu0 0.0
      %2734 = vmatpush.xpose.msra.mxu0 0.0
      %2735 = vmatpush.xpose.msra.mxu0 0.0
      %2736 = vmatpush.xpose.msra.mxu0 0.0
      %2737 = vmatpush.xpose.msra.mxu0 0.0
      %2738 = vmatpush.xpose.msra.mxu0 0.0
      %2739 = vmatpush.xpose.msra.mxu0 0.0
      %2740 = vmatpush.xpose.msra.mxu0 0.0
      %2741 = vmatpush.xpose.msra.mxu0 0.0
      %2742 = vmatpush.xpose.msra.mxu0 %v2726
      %2743 = vmatpush.xpose.msra.mxu0 %v2723
      %2744 = vmatmul.f32.gmra.mxu0 %v2720
      %v2745 = vpop.f32.mrf.mxu0
      %v2746 = vadd.f32 0.0, %v2745
      %2747 = vdwg.mxu0
      %v2748 = vld [vmem:[%s18] sm:$0xff]
      %v2749 = vld [vmem:[%s18 + $0x8] sm:$0xff]
      %v2750 = vld [vmem:[%s18 + $0x10] sm:$0xff]
      %v2751 = vld [vmem:[%s18 + $0x18] sm:$0xff]
      %v2752 = vld [vmem:[%s18 + $0x20] sm:$0xff]
      %v2753 = vld [vmem:[%s18 + $0x28] sm:$0xff]
      %v2754 = vld [vmem:[%s18 + $0x30] sm:$0xff]
      %v2755 = vld [vmem:[%s18 + $0x38] sm:$0xff]
      %v2756 = vld [vmem:[%s18 + $0x40] sm:$0xff]
      %v2757 = vld [vmem:[%s18 + $0x48] sm:$0xff]
      %v2758 = vld [vmem:[%s18 + $0x50] sm:$0xff]
      %v2759 = vld [vmem:[%s18 + $0x58] sm:$0xff]
      %v2760 = vld [vmem:[%s18 + $0x60] sm:$0xff]
      %v2761 = vld [vmem:[%s18 + $0x68] sm:$0xff]
      %v2762 = vld [vmem:[%s18 + $0x70] sm:$0xff]
      %v2763 = vld [vmem:[%s18 + $0x78] sm:$0xff]
      %v2765 = vsel %vm1043, %v2746, 0
      %2767 = vmatpush.msra.mxu0 0.0
      %2768 = vmatpush.msra.mxu0 0.0
      %2769 = vmatpush.msra.mxu0 0.0
      %2770 = vmatpush.msra.mxu0 0.0
      %2771 = vmatpush.msra.mxu0 0.0
      %2772 = vmatpush.msra.mxu0 0.0
      %2773 = vmatpush.msra.mxu0 0.0
      %2774 = vmatpush.msra.mxu0 0.0
      %2775 = vmatpush.msra.mxu0 0.0
      %2776 = vmatpush.msra.mxu0 0.0
      %2777 = vmatpush.msra.mxu0 0.0
      %2778 = vmatpush.msra.mxu0 0.0
      %2779 = vmatpush.msra.mxu0 0.0
      %2780 = vmatpush.msra.mxu0 0.0
      %2781 = vmatpush.msra.mxu0 %v2756
      %2782 = vmatpush.msra.mxu0 %v2748
      %2783 = vmatmul.f32.gmra.mxu0 %v2765
      %v2784 = vpop.f32.mrf.mxu0
      %v2785 = vadd.f32 0.0, %v2784
      %2786 = vdwg.mxu0
      %2787 = vmatpush.msra.mxu0 0.0
      %2788 = vmatpush.msra.mxu0 0.0
      %2789 = vmatpush.msra.mxu0 0.0
      %2790 = vmatpush.msra.mxu0 0.0
      %2791 = vmatpush.msra.mxu0 0.0
      %2792 = vmatpush.msra.mxu0 0.0
      %2793 = vmatpush.msra.mxu0 0.0
      %2794 = vmatpush.msra.mxu0 0.0
      %2795 = vmatpush.msra.mxu0 0.0
      %2796 = vmatpush.msra.mxu0 0.0
      %2797 = vmatpush.msra.mxu0 0.0
      %2798 = vmatpush.msra.mxu0 0.0
      %2799 = vmatpush.msra.mxu0 0.0
      %2800 = vmatpush.msra.mxu0 0.0
      %2801 = vmatpush.msra.mxu0 %v2757
      %2802 = vmatpush.msra.mxu0 %v2749
      %2803 = vmatmul.f32.gmra.mxu0 %v2765
      %v2804 = vpop.f32.mrf.mxu0
      %v2805 = vadd.f32 0.0, %v2804
      %2806 = vdwg.mxu0
      %2807 = vmatpush.msra.mxu0 0.0
      %2808 = vmatpush.msra.mxu0 0.0
      %2809 = vmatpush.msra.mxu0 0.0
      %2810 = vmatpush.msra.mxu0 0.0
      %2811 = vmatpush.msra.mxu0 0.0
      %2812 = vmatpush.msra.mxu0 0.0
      %2813 = vmatpush.msra.mxu0 0.0
      %2814 = vmatpush.msra.mxu0 0.0
      %2815 = vmatpush.msra.mxu0 0.0
      %2816 = vmatpush.msra.mxu0 0.0
      %2817 = vmatpush.msra.mxu0 0.0
      %2818 = vmatpush.msra.mxu0 0.0
      %2819 = vmatpush.msra.mxu0 0.0
      %2820 = vmatpush.msra.mxu0 0.0
      %2821 = vmatpush.msra.mxu0 %v2758
      %2822 = vmatpush.msra.mxu0 %v2750
      %2823 = vmatmul.f32.gmra.mxu0 %v2765
      %v2824 = vpop.f32.mrf.mxu0
      %v2825 = vadd.f32 0.0, %v2824
      %2826 = vdwg.mxu0
      %2827 = vmatpush.msra.mxu0 0.0
      %2828 = vmatpush.msra.mxu0 0.0
      %2829 = vmatpush.msra.mxu0 0.0
      %2830 = vmatpush.msra.mxu0 0.0
      %2831 = vmatpush.msra.mxu0 0.0
      %2832 = vmatpush.msra.mxu0 0.0
      %2833 = vmatpush.msra.mxu0 0.0
      %2834 = vmatpush.msra.mxu0 0.0
      %2835 = vmatpush.msra.mxu0 0.0
      %2836 = vmatpush.msra.mxu0 0.0
      %2837 = vmatpush.msra.mxu0 0.0
      %2838 = vmatpush.msra.mxu0 0.0
      %2839 = vmatpush.msra.mxu0 0.0
      %2840 = vmatpush.msra.mxu0 0.0
      %2841 = vmatpush.msra.mxu0 %v2759
      %2842 = vmatpush.msra.mxu0 %v2751
      %2843 = vmatmul.f32.gmra.mxu0 %v2765
      %v2844 = vpop.f32.mrf.mxu0
      %v2845 = vadd.f32 0.0, %v2844
      %2846 = vdwg.mxu0
      %2847 = vmatpush.msra.mxu0 0.0
      %2848 = vmatpush.msra.mxu0 0.0
      %2849 = vmatpush.msra.mxu0 0.0
      %2850 = vmatpush.msra.mxu0 0.0
      %2851 = vmatpush.msra.mxu0 0.0
      %2852 = vmatpush.msra.mxu0 0.0
      %2853 = vmatpush.msra.mxu0 0.0
      %2854 = vmatpush.msra.mxu0 0.0
      %2855 = vmatpush.msra.mxu0 0.0
      %2856 = vmatpush.msra.mxu0 0.0
      %2857 = vmatpush.msra.mxu0 0.0
      %2858 = vmatpush.msra.mxu0 0.0
      %2859 = vmatpush.msra.mxu0 0.0
      %2860 = vmatpush.msra.mxu0 0.0
      %2861 = vmatpush.msra.mxu0 %v2760
      %2862 = vmatpush.msra.mxu0 %v2752
      %2863 = vmatmul.f32.gmra.mxu0 %v2765
      %v2864 = vpop.f32.mrf.mxu0
      %v2865 = vadd.f32 0.0, %v2864
      %2866 = vdwg.mxu0
      %2867 = vmatpush.msra.mxu0 0.0
      %2868 = vmatpush.msra.mxu0 0.0
      %2869 = vmatpush.msra.mxu0 0.0
      %2870 = vmatpush.msra.mxu0 0.0
      %2871 = vmatpush.msra.mxu0 0.0
      %2872 = vmatpush.msra.mxu0 0.0
      %2873 = vmatpush.msra.mxu0 0.0
      %2874 = vmatpush.msra.mxu0 0.0
      %2875 = vmatpush.msra.mxu0 0.0
      %2876 = vmatpush.msra.mxu0 0.0
      %2877 = vmatpush.msra.mxu0 0.0
      %2878 = vmatpush.msra.mxu0 0.0
      %2879 = vmatpush.msra.mxu0 0.0
      %2880 = vmatpush.msra.mxu0 0.0
      %2881 = vmatpush.msra.mxu0 %v2761
      %2882 = vmatpush.msra.mxu0 %v2753
      %2883 = vmatmul.f32.gmra.mxu0 %v2765
      %v2884 = vpop.f32.mrf.mxu0
      %v2885 = vadd.f32 0.0, %v2884
      %2886 = vdwg.mxu0
      %2887 = vmatpush.msra.mxu0 0.0
      %2888 = vmatpush.msra.mxu0 0.0
      %2889 = vmatpush.msra.mxu0 0.0
      %2890 = vmatpush.msra.mxu0 0.0
      %2891 = vmatpush.msra.mxu0 0.0
      %2892 = vmatpush.msra.mxu0 0.0
      %2893 = vmatpush.msra.mxu0 0.0
      %2894 = vmatpush.msra.mxu0 0.0
      %2895 = vmatpush.msra.mxu0 0.0
      %2896 = vmatpush.msra.mxu0 0.0
      %2897 = vmatpush.msra.mxu0 0.0
      %2898 = vmatpush.msra.mxu0 0.0
      %2899 = vmatpush.msra.mxu0 0.0
      %2900 = vmatpush.msra.mxu0 0.0
      %2901 = vmatpush.msra.mxu0 %v2762
      %2902 = vmatpush.msra.mxu0 %v2754
      %2903 = vmatmul.f32.gmra.mxu0 %v2765
      %v2904 = vpop.f32.mrf.mxu0
      %v2905 = vadd.f32 0.0, %v2904
      %2906 = vdwg.mxu0
      %2907 = vmatpush.msra.mxu0 0.0
      %2908 = vmatpush.msra.mxu0 0.0
      %2909 = vmatpush.msra.mxu0 0.0
      %2910 = vmatpush.msra.mxu0 0.0
      %2911 = vmatpush.msra.mxu0 0.0
      %2912 = vmatpush.msra.mxu0 0.0
      %2913 = vmatpush.msra.mxu0 0.0
      %2914 = vmatpush.msra.mxu0 0.0
      %2915 = vmatpush.msra.mxu0 0.0
      %2916 = vmatpush.msra.mxu0 0.0
      %2917 = vmatpush.msra.mxu0 0.0
      %2918 = vmatpush.msra.mxu0 0.0
      %2919 = vmatpush.msra.mxu0 0.0
      %2920 = vmatpush.msra.mxu0 0.0
      %2921 = vmatpush.msra.mxu0 %v2763
      %2922 = vmatpush.msra.mxu0 %v2755
      %2923 = vmatmul.f32.gmra.mxu0 %v2765
      %v2924 = vpop.f32.mrf.mxu0
      %v2925 = vadd.f32 0.0, %v2924
      %2926 = vdwg.mxu0
      %v2935 = vrot.slane %v2805, 7
      %v2936 = vrot.slane %v2825, 6
      %v2937 = vrot.slane %v2845, 5
      %v2938 = vrot.slane %v2865, 4
      %v2939 = vrot.slane %v2885, 3
      %v2940 = vrot.slane %v2905, 2
      %v2941 = vrot.slane %v2925, 1
      %vm2942 = vcmask 1040384
      %v2943 = vsel %vm2942, %v2785, %v2935
      %vm2944 = vcmask 1042434
      %v2945 = vsel %vm2944, %v2936, %v2937
      %v2946 = vsel %vm833, %v2943, %v2945
      %vm2947 = vcmask 1044484
      %v2948 = vsel %vm2947, %v2938, %v2939
      %vm2949 = vcmask 1046534
      %v2950 = vsel %vm2949, %v2940, %v2941
      %vm2951 = vcmask 1045508
      %v2952 = vsel %vm2951, %v2948, %v2950
      %vm2953 = vcmask 1043456
      %v2954 = vsel %vm2953, %v2946, %v2952
      %2956 = vst [vmem:[%s600] sm:$0xff] %v2954
      %p2957 = scmp.lt.s32.totalorder %s30, 1
      %s2958 = scalar_select %p2957, %s30, 1
      %s2959 = smul.addr %s2958, 8
      %s2960 = scalar_lea.vmem %s19, %s2959
      // Predicated region
      $region97: #{forward.3} parent=95 // pred_check
        %p2961 = pneg %p452
      $region98: #{forward.3} parent=95 // pred_check_branch
        %2963 = sbr.rel (%p2961) target = $region100
      $region99: #{forward.3} parent=95 // pred_region
        _
      $region100: #{forward.3} parent=95 // pred_fallthru
        _
    $region96: #{forward.3} parent=5 // pred_fallthru
      _
    %p2964 = scmp.le.s32.totalorder 2, %s25
    // Predicated region
    $region101: #{forward.3} parent=5 // pred_check
      %p2965 = pneg %p2964
    $region102: #{forward.3} parent=5 // pred_check_branch
      %2967 = sbr.rel (%p2965) target = $region104
    $region103: #{forward.3} parent=5 // pred_region
      %s2968 = ssub.s32 %s25, 2
      // Predicated region
      $region105: #{forward.3} parent=103 // pred_check
        %p2969 = pneg %p458
      $region106: #{forward.3} parent=103 // pred_check_branch
        %2971 = sbr.rel (%p2969) target = $region108
      $region107: #{forward.3} parent=103 // pred_region
        %p2972 = scmp.lt.s32.totalorder %s31, 1
        %s2973 = scalar_select %p2972, %s31, 1
        %s2974 = smul.addr %s2973, 8
        %s2975 = scalar_lea.vmem %s19, %s2974
      $region108: #{forward.3} parent=103 // pred_fallthru
        _
    $region104: #{forward.3} parent=5 // pred_fallthru
      _
  $region6: #{forward.3} parent=0 // loop_footer
    %s29 = sadd.s32 1, %s25
  $region7: #{forward.3} parent=0 // loop_footer_branch
    %24 = sbr.rel target = $region3
  $region8: #{forward.3} parent=0 // loop_exit
    _

</llo_original>
